<compile_context>
chip_gen: v7x
topology: tpu7x:2x2x1
jax: 0.10.0
libtpu: 0.0.40
codegen_flags: <defaults>
</compile_context>

<pallas_src>
import functools

import jax
import jax.numpy as jnp
from jax.experimental import pallas as pl
from jax.experimental.pallas import tpu as pltpu

EPS = 1e-5


def _round_up(x, m):
    return ((x + m - 1) // m) * m


# ----------------------------- Pallas kernel ------------------------------ #
def _fused_matmul_kernel(a_ref, b_ref, bias_ref, o_ref, *, activation):
    # (TM, K) bf16 @ (K, TN) bf16 on the MXU, f32 accumulation.
    acc = jnp.dot(a_ref[...], b_ref[...], preferred_element_type=jnp.float32)
    y = acc + bias_ref[...]                      # folded-BN bias (f32 epilogue)
    if activation == "relu":
        y = jnp.maximum(y, 0.0)
    elif activation == "tanh":
        y = jnp.tanh(y)
    o_ref[...] = y.astype(o_ref.dtype)


def fused_matmul(a, b, bias, activation, out_dtype=jnp.float32):
    """act(a @ b + bias).  a:[M,K], b:[K,N] (BN scale pre-folded), bias:[N]."""
    M, K = a.shape
    K2, N = b.shape
    assert K == K2

    # M tile: round up to the 8-sublane granule only (no 128 over-padding).
    m_pad = _round_up(M, 8)
    tm = m_pad if m_pad <= 256 else 256
    m_pad = _round_up(m_pad, tm)
    # N tile of 128 -> multiple grid points for wide layers (v7x: both TCs).
    n_pad = _round_up(N, 128)
    tn = 128

    a_p = a.astype(jnp.bfloat16)
    if m_pad != M:
        a_p = jnp.pad(a_p, ((0, m_pad - M), (0, 0)))
    b_p = b.astype(jnp.bfloat16)
    if n_pad != N:
        b_p = jnp.pad(b_p, ((0, 0), (0, n_pad - N)))
    bias_p = bias.astype(jnp.float32).reshape(1, N)
    if n_pad != N:
        bias_p = jnp.pad(bias_p, ((0, 0), (0, n_pad - N)))

    out = pl.pallas_call(
        functools.partial(_fused_matmul_kernel, activation=activation),
        out_shape=jax.ShapeDtypeStruct((m_pad, n_pad), out_dtype),
        grid=(m_pad // tm, n_pad // tn),
        in_specs=[
            pl.BlockSpec((tm, K), lambda i, j: (i, 0)),
            pl.BlockSpec((K, tn), lambda i, j: (0, j)),
            pl.BlockSpec((1, tn), lambda i, j: (0, j)),
        ],
        out_specs=pl.BlockSpec((tm, tn), lambda i, j: (i, j)),
        compiler_params=pltpu.CompilerParams(
            dimension_semantics=("parallel", "parallel"),
            vmem_limit_bytes=32 * 1024 * 1024,
        ),
    )(a_p, b_p, bias_p)
    if m_pad != M or n_pad != N:
        out = out[:M, :N]
    return out


# ------------------------------ JAX glue ---------------------------------- #
def im2col_nhwc(x, kh, kw, stride, pad):
    """x: [N, H, W, C] -> patches [N*Ho*Wo, kh*kw*C] (kh, kw, C layout)."""
    n, h, w, c = x.shape
    xp = jnp.pad(x, ((0, 0), (pad, pad), (pad, pad), (0, 0)))
    ho = (h + 2 * pad - kh) // stride + 1
    wo = (w + 2 * pad - kw) // stride + 1
    cols = []
    for i in range(kh):
        for j in range(kw):
            cols.append(xp[:, i:i + stride * ho:stride, j:j + stride * wo:stride, :])
    p = jnp.stack(cols, axis=3)                       # [N, Ho, Wo, kh*kw, C]
    return p.reshape(n * ho * wo, kh * kw * c), ho, wo


def conv2d_bn_act(x, w, scale, bias, stride, pad, activation, out_dtype):
    """x: [N, H, W, Cin]; w: [Cout, Cin, kh, kw] (PyTorch Conv2d layout)."""
    co, ci, kh, kw = w.shape
    a, ho, wo = im2col_nhwc(x.astype(jnp.bfloat16), kh, kw, stride, pad)
    b = w.transpose(2, 3, 1, 0).reshape(kh * kw * ci, co)   # K = (kh, kw, ci)
    b = b * scale[None, :]                                   # fold BN scale
    out = fused_matmul(a, b, bias, activation, out_dtype)
    return out.reshape(x.shape[0], ho, wo, co)


def conv_transpose2d_bn_act(x, w, scale, bias, activation, out_dtype):
    """ConvTranspose2d(k=4, s=2, p=1) via sub-pixel (pixel-shuffle) conv.

    x: [N, H, W, Cin]; w: [Cin, Cout, 4, 4] (PyTorch ConvTranspose2d layout).
    Output y[2i+ph, 2j+pw] only touches original-kernel taps
    kh = 3 + ph - 2*di, kw = 3 + pw - 2*dj over a 3x3 (pad=1) window (di, dj)
    of the input around (i, j).  So one stride-1 3x3 conv producing 4*Cout
    parity channels + depth-to-space reproduces the transposed conv exactly.
    """
    ci, co, _, _ = w.shape
    n, h, w_in, _ = x.shape

    blocks = []
    for ph in range(2):
        for pw in range(2):
            rows = []
            for di in range(3):
                taps = []
                for dj in range(3):
                    kh = 3 + ph - 2 * di
                    kw = 3 + pw - 2 * dj
                    if 0 <= kh < 4 and 0 <= kw < 4:
                        taps.append(w[:, :, kh, kw])         # [Ci, Co]
                    else:
                        taps.append(jnp.zeros((ci, co), w.dtype))
                rows.append(jnp.stack(taps, axis=0))         # [3(dj), Ci, Co]
            blocks.append(jnp.stack(rows, axis=0))           # [3(di), 3(dj), Ci, Co]
    wp = jnp.stack(blocks, axis=0)                           # [4(par), 3, 3, Ci, Co]
    wp = wp.transpose(1, 2, 3, 0, 4).reshape(9 * ci, 4 * co)  # K=(di,dj,ci); cols=(par,co)
    wp = wp * jnp.tile(scale, 4)[None, :]                     # fold BN scale
    bias4 = jnp.tile(bias, 4)

    a, _, _ = im2col_nhwc(x.astype(jnp.bfloat16), 3, 3, stride=1, pad=1)
    out = fused_matmul(a, wp, bias4, activation, out_dtype)   # [N*H*W, 4*Co]
    out = out.reshape(n, h, w_in, 2, 2, co)                   # (.., ph, pw, co)
    out = out.transpose(0, 1, 3, 2, 4, 5).reshape(n, 2 * h, 2 * w_in, co)
    return out


def bn_fold(gamma, beta, mean, var):
    s = gamma / jnp.sqrt(var + EPS)
    return s, beta - mean * s


# --------------------------- parameters / model ---------------------------- #
def init_params(key):
    def conv_w(k, shape):
        fan_in = shape[1] * shape[2] * shape[3]
        bound = 1.0 / jnp.sqrt(fan_in)
        return jax.random.uniform(k, shape, jnp.float32, -bound, bound)

    ks = jax.random.split(key, 6)
    p = {
        # encoder Conv2d weights: [Cout, Cin, 4, 4]
        "e1_w": conv_w(ks[0], (64, 3, 4, 4)),
        "e2_w": conv_w(ks[1], (128, 64, 4, 4)),
        "e3_w": conv_w(ks[2], (256, 128, 4, 4)),
        # decoder ConvTranspose2d weights: [Cin, Cout, 4, 4]
        "d1_w": conv_w(ks[3], (256, 128, 4, 4)),
        "d2_w": conv_w(ks[4], (128, 64, 4, 4)),
        "d3_w": conv_w(ks[5], (64, 3, 4, 4)),
    }
    # BatchNorm params/buffers at PyTorch __init__ defaults.
    for name, ch in [("bn_e1", 64), ("bn_e2", 128), ("bn_e3", 256),
                     ("bn_d1", 128), ("bn_d2", 64)]:
        p[name + "_g"] = jnp.ones((ch,), jnp.float32)
        p[name + "_b"] = jnp.zeros((ch,), jnp.float32)
        p[name + "_m"] = jnp.zeros((ch,), jnp.float32)
        p[name + "_v"] = jnp.ones((ch,), jnp.float32)
    return p


def generator_forward(x, p):
    # NCHW -> NHWC once at the network boundary.
    h = x.transpose(0, 2, 3, 1)
    # --- encoder ---
    s, b = bn_fold(p["bn_e1_g"], p["bn_e1_b"], p["bn_e1_m"], p["bn_e1_v"])
    h = conv2d_bn_act(h, p["e1_w"], s, b, 2, 1, "relu", jnp.bfloat16)
    s, b = bn_fold(p["bn_e2_g"], p["bn_e2_b"], p["bn_e2_m"], p["bn_e2_v"])
    h = conv2d_bn_act(h, p["e2_w"], s, b, 2, 1, "relu", jnp.bfloat16)
    s, b = bn_fold(p["bn_e3_g"], p["bn_e3_b"], p["bn_e3_m"], p["bn_e3_v"])
    h = conv2d_bn_act(h, p["e3_w"], s, b, 2, 1, "relu", jnp.bfloat16)
    # --- decoder ---
    s, b = bn_fold(p["bn_d1_g"], p["bn_d1_b"], p["bn_d1_m"], p["bn_d1_v"])
    h = conv_transpose2d_bn_act(h, p["d1_w"], s, b, "relu", jnp.bfloat16)
    s, b = bn_fold(p["bn_d2_g"], p["bn_d2_b"], p["bn_d2_m"], p["bn_d2_v"])
    h = conv_transpose2d_bn_act(h, p["d2_w"], s, b, "relu", jnp.bfloat16)
    # last layer: no BatchNorm, Tanh activation, f32 output
    ones3 = jnp.ones((3,), jnp.float32)
    zeros3 = jnp.zeros((3,), jnp.float32)
    out = conv_transpose2d_bn_act(h, p["d3_w"], ones3, zeros3, "tanh", jnp.float32)
    return out.transpose(0, 3, 1, 2)        # NHWC -> NCHW


# --------------------------- pure-JAX reference ---------------------------- #
def reference_forward(x, p):
    dn = ("NCHW", "OIHW", "NCHW")

    def conv(x, w, stride, pad):
        return jax.lax.conv_general_dilated(
            x, w, (stride, stride), ((pad, pad), (pad, pad)),
            dimension_numbers=dn)

    def convT(x, w, stride, pad):
        k = w.shape[2]
        w_eq = jnp.flip(w, (2, 3)).transpose(1, 0, 2, 3)   # [Cout, Cin, kh, kw]
        return jax.lax.conv_general_dilated(
            x, w_eq, (1, 1), ((k - 1 - pad, k - 1 - pad),) * 2,
            lhs_dilation=(stride, stride), dimension_numbers=dn)

    def bn(h, name):
        s, b = bn_fold(p[name + "_g"], p[name + "_b"], p[name + "_m"], p[name + "_v"])
        return h * s[None, :, None, None] + b[None, :, None, None]

    h = jnp.maximum(bn(conv(x, p["e1_w"], 2, 1), "bn_e1"), 0.0)
    h = jnp.maximum(bn(conv(h, p["e2_w"], 2, 1), "bn_e2"), 0.0)
    h = jnp.maximum(bn(conv(h, p["e3_w"], 2, 1), "bn_e3"), 0.0)
    h = jnp.maximum(bn(convT(h, p["d1_w"], 2, 1), "bn_d1"), 0.0)
    h = jnp.maximum(bn(convT(h, p["d2_w"], 2, 1), "bn_d2"), 0.0)
    return jnp.tanh(convT(h, p["d3_w"], 2, 1))


if __name__ == "__main__":
    key = jax.random.PRNGKey(0)
    k_param, k_input = jax.random.split(key)
    params = init_params(k_param)

    x = jax.random.normal(k_input, (2, 3, 16, 16), jnp.float32)  # NCHW

    fwd = jax.jit(generator_forward)
    out = jax.block_until_ready(fwd(x, params))

    assert out.shape == (2, 3, 16, 16), out.shape
    assert out.dtype == jnp.float32
    assert bool(jnp.all(jnp.isfinite(out)))
    assert bool(jnp.all(jnp.abs(out) <= 1.0))  # tanh range

    # Numerics cross-check vs. f32 XLA reference (bf16 operands -> loose atol).
    ref = jax.block_until_ready(jax.jit(reference_forward)(x, params))
    max_err = float(jnp.max(jnp.abs(out - ref)))
    assert max_err < 5e-2, max_err

    print("KERNEL_OK")
</pallas_src>

<mosaic_0001>
module attributes {stable_mosaic.version = 11 : i64} {
  func.func @_fused_matmul_kernel(%arg0: i32, %arg1: i32, %arg2: memref<128x48xbf16, #tpu.memory_space<vmem>>, %arg3: memref<48x128xbf16, #tpu.memory_space<vmem>>, %arg4: memref<1x128xf32, #tpu.memory_space<vmem>>, %arg5: memref<128x128xbf16, #tpu.memory_space<vmem>>) attributes {dimension_semantics = [#tpu.dimension_semantics<parallel>, #tpu.dimension_semantics<parallel>], iteration_bounds = array<i64: 1, 1>, scalar_prefetch = 0 : i64, scratch_operands = 0 : i64, tpu.core_type = #tpu.core_type<tc>, window_params = [{transform_indices = @transform_0, window_bounds = array<i64: 128, 48>}, {transform_indices = @transform_1, window_bounds = array<i64: 48, 128>}, {transform_indices = @transform_2, window_bounds = array<i64: 1, 128>}, {transform_indices = @transform_3, window_bounds = array<i64: 128, 128>}]} {
    %c0 = arith.constant 0 : index
    %c0_0 = arith.constant 0 : index
    %0 = vector.load %arg2[%c0, %c0_0] : memref<128x48xbf16, #tpu.memory_space<vmem>>, vector<128x48xbf16>
    %c0_1 = arith.constant 0 : index
    %c0_2 = arith.constant 0 : index
    %1 = vector.load %arg3[%c0_1, %c0_2] : memref<48x128xbf16, #tpu.memory_space<vmem>>, vector<48x128xbf16>
    %cst = arith.constant dense<0.000000e+00> : vector<128x128xf32>
    %2 = tpu.matmul %0, %1, %cst {dimension_numbers = #tpu.dot_dimension_numbers<[1], [0], [0], [1], [0, 0, 1, 1], [], []>} : vector<128x48xbf16>, vector<48x128xbf16>, vector<128x128xf32> -> vector<128x128xf32>
    %c0_3 = arith.constant 0 : index
    %c0_4 = arith.constant 0 : index
    %3 = vector.load %arg4[%c0_3, %c0_4] : memref<1x128xf32, #tpu.memory_space<vmem>>, vector<1x128xf32>
    %4 = vector.broadcast %3 : vector<1x128xf32> to vector<128x128xf32>
    %5 = arith.addf %2, %4 : vector<128x128xf32>
    %cst_5 = arith.constant 0.000000e+00 : f32
    %6 = vector.broadcast %cst_5 : f32 to vector<128x128xf32>
    %7 = arith.maximumf %5, %6 : vector<128x128xf32>
    %8 = arith.truncf %7 : vector<128x128xf32> to vector<128x128xbf16>
    %c0_6 = arith.constant 0 : index
    %c0_7 = arith.constant 0 : index
    %9 = vector.load %arg5[%c0_6, %c0_7] : memref<128x128xbf16, #tpu.memory_space<vmem>>, vector<128x128xbf16>
    tpu.vector_store %arg5[%c0_6, %c0_7], %8 {strides = array<i32>} : memref<128x128xbf16, #tpu.memory_space<vmem>>, vector<128x128xbf16>,
    return
  }
  func.func @transform_0(%arg0: i32, %arg1: i32) -> (i32, i32) {
    %c0_i32 = arith.constant 0 : i32
    %c0_i32_0 = arith.constant 0 : i32
    return %arg0, %c0_i32 : i32, i32
  }
  func.func @transform_1(%arg0: i32, %arg1: i32) -> (i32, i32) {
    %c0_i32 = arith.constant 0 : i32
    %c0_i32_0 = arith.constant 0 : i32
    return %c0_i32, %arg1 : i32, i32
  }
  func.func @transform_2(%arg0: i32, %arg1: i32) -> (i32, i32) {
    %c0_i32 = arith.constant 0 : i32
    %c0_i32_0 = arith.constant 0 : i32
    return %c0_i32, %arg1 : i32, i32
  }
  func.func @transform_3(%arg0: i32, %arg1: i32) -> (i32, i32) {
    %c0_i32 = arith.constant 0 : i32
    return %arg0, %arg1 : i32, i32
  }
}

module attributes {stable_mosaic.version = 11 : i64} {
  func.func @_fused_matmul_kernel(%arg0: i32, %arg1: i32, %arg2: memref<32x1024xbf16, #tpu.memory_space<vmem>>, %arg3: memref<1024x128xbf16, #tpu.memory_space<vmem>>, %arg4: memref<1x128xf32, #tpu.memory_space<vmem>>, %arg5: memref<32x128xbf16, #tpu.memory_space<vmem>>) attributes {dimension_semantics = [#tpu.dimension_semantics<parallel>, #tpu.dimension_semantics<parallel>], iteration_bounds = array<i64: 1, 1>, scalar_prefetch = 0 : i64, scratch_operands = 0 : i64, tpu.core_type = #tpu.core_type<tc>, window_params = [{transform_indices = @transform_0, window_bounds = array<i64: 32, 1024>}, {transform_indices = @transform_1, window_bounds = array<i64: 1024, 128>}, {transform_indices = @transform_2, window_bounds = array<i64: 1, 128>}, {transform_indices = @transform_3, window_bounds = array<i64: 32, 128>}]} {
    %c0 = arith.constant 0 : index
    %c0_0 = arith.constant 0 : index
    %0 = vector.load %arg2[%c0, %c0_0] : memref<32x1024xbf16, #tpu.memory_space<vmem>>, vector<32x1024xbf16>
    %c0_1 = arith.constant 0 : index
    %c0_2 = arith.constant 0 : index
    %1 = vector.load %arg3[%c0_1, %c0_2] : memref<1024x128xbf16, #tpu.memory_space<vmem>>, vector<1024x128xbf16>
    %cst = arith.constant dense<0.000000e+00> : vector<32x128xf32>
    %2 = tpu.matmul %0, %1, %cst {dimension_numbers = #tpu.dot_dimension_numbers<[1], [0], [0], [1], [0, 0, 1, 1], [], []>} : vector<32x1024xbf16>, vector<1024x128xbf16>, vector<32x128xf32> -> vector<32x128xf32>
    %c0_3 = arith.constant 0 : index
    %c0_4 = arith.constant 0 : index
    %3 = vector.load %arg4[%c0_3, %c0_4] : memref<1x128xf32, #tpu.memory_space<vmem>>, vector<1x128xf32>
    %4 = vector.broadcast %3 : vector<1x128xf32> to vector<32x128xf32>
    %5 = arith.addf %2, %4 : vector<32x128xf32>
    %cst_5 = arith.constant 0.000000e+00 : f32
    %6 = vector.broadcast %cst_5 : f32 to vector<32x128xf32>
    %7 = arith.maximumf %5, %6 : vector<32x128xf32>
    %8 = arith.truncf %7 : vector<32x128xf32> to vector<32x128xbf16>
    %c0_6 = arith.constant 0 : index
    %c0_7 = arith.constant 0 : index
    %9 = vector.load %arg5[%c0_6, %c0_7] : memref<32x128xbf16, #tpu.memory_space<vmem>>, vector<32x128xbf16>
    tpu.vector_store %arg5[%c0_6, %c0_7], %8 {strides = array<i32>} : memref<32x128xbf16, #tpu.memory_space<vmem>>, vector<32x128xbf16>,
    return
  }
  func.func @transform_0(%arg0: i32, %arg1: i32) -> (i32, i32) {
    %c0_i32 = arith.constant 0 : i32
    %c0_i32_0 = arith.constant 0 : i32
    return %arg0, %c0_i32 : i32, i32
  }
  func.func @transform_1(%arg0: i32, %arg1: i32) -> (i32, i32) {
    %c0_i32 = arith.constant 0 : i32
    %c0_i32_0 = arith.constant 0 : i32
    return %c0_i32, %arg1 : i32, i32
  }
  func.func @transform_2(%arg0: i32, %arg1: i32) -> (i32, i32) {
    %c0_i32 = arith.constant 0 : i32
    %c0_i32_0 = arith.constant 0 : i32
    return %c0_i32, %arg1 : i32, i32
  }
  func.func @transform_3(%arg0: i32, %arg1: i32) -> (i32, i32) {
    %c0_i32 = arith.constant 0 : i32
    return %arg0, %arg1 : i32, i32
  }
}

module attributes {stable_mosaic.version = 11 : i64} {
  func.func @_fused_matmul_kernel(%arg0: i32, %arg1: i32, %arg2: memref<8x2048xbf16, #tpu.memory_space<vmem>>, %arg3: memref<2048x128xbf16, #tpu.memory_space<vmem>>, %arg4: memref<1x128xf32, #tpu.memory_space<vmem>>, %arg5: memref<8x128xbf16, #tpu.memory_space<vmem>>) attributes {dimension_semantics = [#tpu.dimension_semantics<parallel>, #tpu.dimension_semantics<parallel>], iteration_bounds = array<i64: 1, 2>, scalar_prefetch = 0 : i64, scratch_operands = 0 : i64, tpu.core_type = #tpu.core_type<tc>, window_params = [{transform_indices = @transform_0, window_bounds = array<i64: 8, 2048>}, {transform_indices = @transform_1, window_bounds = array<i64: 2048, 128>}, {transform_indices = @transform_2, window_bounds = array<i64: 1, 128>}, {transform_indices = @transform_3, window_bounds = array<i64: 8, 128>}]} {
    %c0 = arith.constant 0 : index
    %c0_0 = arith.constant 0 : index
    %0 = vector.load %arg2[%c0, %c0_0] : memref<8x2048xbf16, #tpu.memory_space<vmem>>, vector<8x2048xbf16>
    %c0_1 = arith.constant 0 : index
    %c0_2 = arith.constant 0 : index
    %1 = vector.load %arg3[%c0_1, %c0_2] : memref<2048x128xbf16, #tpu.memory_space<vmem>>, vector<2048x128xbf16>
    %cst = arith.constant dense<0.000000e+00> : vector<8x128xf32>
    %2 = tpu.matmul %0, %1, %cst {dimension_numbers = #tpu.dot_dimension_numbers<[1], [0], [0], [1], [0, 0, 1, 1], [], []>} : vector<8x2048xbf16>, vector<2048x128xbf16>, vector<8x128xf32> -> vector<8x128xf32>
    %c0_3 = arith.constant 0 : index
    %c0_4 = arith.constant 0 : index
    %3 = vector.load %arg4[%c0_3, %c0_4] : memref<1x128xf32, #tpu.memory_space<vmem>>, vector<1x128xf32>
    %4 = vector.broadcast %3 : vector<1x128xf32> to vector<8x128xf32>
    %5 = arith.addf %2, %4 : vector<8x128xf32>
    %cst_5 = arith.constant 0.000000e+00 : f32
    %6 = vector.broadcast %cst_5 : f32 to vector<8x128xf32>
    %7 = arith.maximumf %5, %6 : vector<8x128xf32>
    %8 = arith.truncf %7 : vector<8x128xf32> to vector<8x128xbf16>
    %c0_6 = arith.constant 0 : index
    %c0_7 = arith.constant 0 : index
    %9 = vector.load %arg5[%c0_6, %c0_7] : memref<8x128xbf16, #tpu.memory_space<vmem>>, vector<8x128xbf16>
    tpu.vector_store %arg5[%c0_6, %c0_7], %8 {strides = array<i32>} : memref<8x128xbf16, #tpu.memory_space<vmem>>, vector<8x128xbf16>,
    return
  }
  func.func @transform_0(%arg0: i32, %arg1: i32) -> (i32, i32) {
    %c0_i32 = arith.constant 0 : i32
    %c0_i32_0 = arith.constant 0 : i32
    return %arg0, %c0_i32 : i32, i32
  }
  func.func @transform_1(%arg0: i32, %arg1: i32) -> (i32, i32) {
    %c0_i32 = arith.constant 0 : i32
    %c0_i32_0 = arith.constant 0 : i32
    return %c0_i32, %arg1 : i32, i32
  }
  func.func @transform_2(%arg0: i32, %arg1: i32) -> (i32, i32) {
    %c0_i32 = arith.constant 0 : i32
    %c0_i32_0 = arith.constant 0 : i32
    return %c0_i32, %arg1 : i32, i32
  }
  func.func @transform_3(%arg0: i32, %arg1: i32) -> (i32, i32) {
    %c0_i32 = arith.constant 0 : i32
    return %arg0, %arg1 : i32, i32
  }
}

module attributes {stable_mosaic.version = 11 : i64} {
  func.func @_fused_matmul_kernel(%arg0: i32, %arg1: i32, %arg2: memref<8x2304xbf16, #tpu.memory_space<vmem>>, %arg3: memref<2304x128xbf16, #tpu.memory_space<vmem>>, %arg4: memref<1x128xf32, #tpu.memory_space<vmem>>, %arg5: memref<8x128xbf16, #tpu.memory_space<vmem>>) attributes {dimension_semantics = [#tpu.dimension_semantics<parallel>, #tpu.dimension_semantics<parallel>], iteration_bounds = array<i64: 1, 4>, scalar_prefetch = 0 : i64, scratch_operands = 0 : i64, tpu.core_type = #tpu.core_type<tc>, window_params = [{transform_indices = @transform_0, window_bounds = array<i64: 8, 2304>}, {transform_indices = @transform_1, window_bounds = array<i64: 2304, 128>}, {transform_indices = @transform_2, window_bounds = array<i64: 1, 128>}, {transform_indices = @transform_3, window_bounds = array<i64: 8, 128>}]} {
    %c0 = arith.constant 0 : index
    %c0_0 = arith.constant 0 : index
    %0 = vector.load %arg2[%c0, %c0_0] : memref<8x2304xbf16, #tpu.memory_space<vmem>>, vector<8x2304xbf16>
    %c0_1 = arith.constant 0 : index
    %c0_2 = arith.constant 0 : index
    %1 = vector.load %arg3[%c0_1, %c0_2] : memref<2304x128xbf16, #tpu.memory_space<vmem>>, vector<2304x128xbf16>
    %cst = arith.constant dense<0.000000e+00> : vector<8x128xf32>
    %2 = tpu.matmul %0, %1, %cst {dimension_numbers = #tpu.dot_dimension_numbers<[1], [0], [0], [1], [0, 0, 1, 1], [], []>} : vector<8x2304xbf16>, vector<2304x128xbf16>, vector<8x128xf32> -> vector<8x128xf32>
    %c0_3 = arith.constant 0 : index
    %c0_4 = arith.constant 0 : index
    %3 = vector.load %arg4[%c0_3, %c0_4] : memref<1x128xf32, #tpu.memory_space<vmem>>, vector<1x128xf32>
    %4 = vector.broadcast %3 : vector<1x128xf32> to vector<8x128xf32>
    %5 = arith.addf %2, %4 : vector<8x128xf32>
    %cst_5 = arith.constant 0.000000e+00 : f32
    %6 = vector.broadcast %cst_5 : f32 to vector<8x128xf32>
    %7 = arith.maximumf %5, %6 : vector<8x128xf32>
    %8 = arith.truncf %7 : vector<8x128xf32> to vector<8x128xbf16>
    %c0_6 = arith.constant 0 : index
    %c0_7 = arith.constant 0 : index
    %9 = vector.load %arg5[%c0_6, %c0_7] : memref<8x128xbf16, #tpu.memory_space<vmem>>, vector<8x128xbf16>
    tpu.vector_store %arg5[%c0_6, %c0_7], %8 {strides = array<i32>} : memref<8x128xbf16, #tpu.memory_space<vmem>>, vector<8x128xbf16>,
    return
  }
  func.func @transform_0(%arg0: i32, %arg1: i32) -> (i32, i32) {
    %c0_i32 = arith.constant 0 : i32
    %c0_i32_0 = arith.constant 0 : i32
    return %arg0, %c0_i32 : i32, i32
  }
  func.func @transform_1(%arg0: i32, %arg1: i32) -> (i32, i32) {
    %c0_i32 = arith.constant 0 : i32
    %c0_i32_0 = arith.constant 0 : i32
    return %c0_i32, %arg1 : i32, i32
  }
  func.func @transform_2(%arg0: i32, %arg1: i32) -> (i32, i32) {
    %c0_i32 = arith.constant 0 : i32
    %c0_i32_0 = arith.constant 0 : i32
    return %c0_i32, %arg1 : i32, i32
  }
  func.func @transform_3(%arg0: i32, %arg1: i32) -> (i32, i32) {
    %c0_i32 = arith.constant 0 : i32
    return %arg0, %arg1 : i32, i32
  }
}

module attributes {stable_mosaic.version = 11 : i64} {
  func.func @_fused_matmul_kernel(%arg0: i32, %arg1: i32, %arg2: memref<32x1152xbf16, #tpu.memory_space<vmem>>, %arg3: memref<1152x128xbf16, #tpu.memory_space<vmem>>, %arg4: memref<1x128xf32, #tpu.memory_space<vmem>>, %arg5: memref<32x128xbf16, #tpu.memory_space<vmem>>) attributes {dimension_semantics = [#tpu.dimension_semantics<parallel>, #tpu.dimension_semantics<parallel>], iteration_bounds = array<i64: 1, 2>, scalar_prefetch = 0 : i64, scratch_operands = 0 : i64, tpu.core_type = #tpu.core_type<tc>, window_params = [{transform_indices = @transform_0, window_bounds = array<i64: 32, 1152>}, {transform_indices = @transform_1, window_bounds = array<i64: 1152, 128>}, {transform_indices = @transform_2, window_bounds = array<i64: 1, 128>}, {transform_indices = @transform_3, window_bounds = array<i64: 32, 128>}]} {
    %c0 = arith.constant 0 : index
    %c0_0 = arith.constant 0 : index
    %0 = vector.load %arg2[%c0, %c0_0] : memref<32x1152xbf16, #tpu.memory_space<vmem>>, vector<32x1152xbf16>
    %c0_1 = arith.constant 0 : index
    %c0_2 = arith.constant 0 : index
    %1 = vector.load %arg3[%c0_1, %c0_2] : memref<1152x128xbf16, #tpu.memory_space<vmem>>, vector<1152x128xbf16>
    %cst = arith.constant dense<0.000000e+00> : vector<32x128xf32>
    %2 = tpu.matmul %0, %1, %cst {dimension_numbers = #tpu.dot_dimension_numbers<[1], [0], [0], [1], [0, 0, 1, 1], [], []>} : vector<32x1152xbf16>, vector<1152x128xbf16>, vector<32x128xf32> -> vector<32x128xf32>
    %c0_3 = arith.constant 0 : index
    %c0_4 = arith.constant 0 : index
    %3 = vector.load %arg4[%c0_3, %c0_4] : memref<1x128xf32, #tpu.memory_space<vmem>>, vector<1x128xf32>
    %4 = vector.broadcast %3 : vector<1x128xf32> to vector<32x128xf32>
    %5 = arith.addf %2, %4 : vector<32x128xf32>
    %cst_5 = arith.constant 0.000000e+00 : f32
    %6 = vector.broadcast %cst_5 : f32 to vector<32x128xf32>
    %7 = arith.maximumf %5, %6 : vector<32x128xf32>
    %8 = arith.truncf %7 : vector<32x128xf32> to vector<32x128xbf16>
    %c0_6 = arith.constant 0 : index
    %c0_7 = arith.constant 0 : index
    %9 = vector.load %arg5[%c0_6, %c0_7] : memref<32x128xbf16, #tpu.memory_space<vmem>>, vector<32x128xbf16>
    tpu.vector_store %arg5[%c0_6, %c0_7], %8 {strides = array<i32>} : memref<32x128xbf16, #tpu.memory_space<vmem>>, vector<32x128xbf16>,
    return
  }
  func.func @transform_0(%arg0: i32, %arg1: i32) -> (i32, i32) {
    %c0_i32 = arith.constant 0 : i32
    %c0_i32_0 = arith.constant 0 : i32
    return %arg0, %c0_i32 : i32, i32
  }
  func.func @transform_1(%arg0: i32, %arg1: i32) -> (i32, i32) {
    %c0_i32 = arith.constant 0 : i32
    %c0_i32_0 = arith.constant 0 : i32
    return %c0_i32, %arg1 : i32, i32
  }
  func.func @transform_2(%arg0: i32, %arg1: i32) -> (i32, i32) {
    %c0_i32 = arith.constant 0 : i32
    %c0_i32_0 = arith.constant 0 : i32
    return %c0_i32, %arg1 : i32, i32
  }
  func.func @transform_3(%arg0: i32, %arg1: i32) -> (i32, i32) {
    %c0_i32 = arith.constant 0 : i32
    return %arg0, %arg1 : i32, i32
  }
}

module attributes {stable_mosaic.version = 11 : i64} {
  func.func @_fused_matmul_kernel(%arg0: i32, %arg1: i32, %arg2: memref<128x576xbf16, #tpu.memory_space<vmem>>, %arg3: memref<576x128xbf16, #tpu.memory_space<vmem>>, %arg4: memref<1x128xf32, #tpu.memory_space<vmem>>, %arg5: memref<128x128xf32, #tpu.memory_space<vmem>>) attributes {dimension_semantics = [#tpu.dimension_semantics<parallel>, #tpu.dimension_semantics<parallel>], iteration_bounds = array<i64: 1, 1>, scalar_prefetch = 0 : i64, scratch_operands = 0 : i64, tpu.core_type = #tpu.core_type<tc>, window_params = [{transform_indices = @transform_0, window_bounds = array<i64: 128, 576>}, {transform_indices = @transform_1, window_bounds = array<i64: 576, 128>}, {transform_indices = @transform_2, window_bounds = array<i64: 1, 128>}, {transform_indices = @transform_3, window_bounds = array<i64: 128, 128>}]} {
    %c0 = arith.constant 0 : index
    %c0_0 = arith.constant 0 : index
    %0 = vector.load %arg2[%c0, %c0_0] : memref<128x576xbf16, #tpu.memory_space<vmem>>, vector<128x576xbf16>
    %c0_1 = arith.constant 0 : index
    %c0_2 = arith.constant 0 : index
    %1 = vector.load %arg3[%c0_1, %c0_2] : memref<576x128xbf16, #tpu.memory_space<vmem>>, vector<576x128xbf16>
    %cst = arith.constant dense<0.000000e+00> : vector<128x128xf32>
    %2 = tpu.matmul %0, %1, %cst {dimension_numbers = #tpu.dot_dimension_numbers<[1], [0], [0], [1], [0, 0, 1, 1], [], []>} : vector<128x576xbf16>, vector<576x128xbf16>, vector<128x128xf32> -> vector<128x128xf32>
    %c0_3 = arith.constant 0 : index
    %c0_4 = arith.constant 0 : index
    %3 = vector.load %arg4[%c0_3, %c0_4] : memref<1x128xf32, #tpu.memory_space<vmem>>, vector<1x128xf32>
    %4 = vector.broadcast %3 : vector<1x128xf32> to vector<128x128xf32>
    %5 = arith.addf %2, %4 : vector<128x128xf32>
    %6 = math.tanh %5 : vector<128x128xf32>
    %c0_5 = arith.constant 0 : index
    %c0_6 = arith.constant 0 : index
    %7 = vector.load %arg5[%c0_5, %c0_6] : memref<128x128xf32, #tpu.memory_space<vmem>>, vector<128x128xf32>
    tpu.vector_store %arg5[%c0_5, %c0_6], %6 {strides = array<i32>} : memref<128x128xf32, #tpu.memory_space<vmem>>, vector<128x128xf32>,
    return
  }
  func.func @transform_0(%arg0: i32, %arg1: i32) -> (i32, i32) {
    %c0_i32 = arith.constant 0 : i32
    %c0_i32_0 = arith.constant 0 : i32
    return %arg0, %c0_i32 : i32, i32
  }
  func.func @transform_1(%arg0: i32, %arg1: i32) -> (i32, i32) {
    %c0_i32 = arith.constant 0 : i32
    %c0_i32_0 = arith.constant 0 : i32
    return %c0_i32, %arg1 : i32, i32
  }
  func.func @transform_2(%arg0: i32, %arg1: i32) -> (i32, i32) {
    %c0_i32 = arith.constant 0 : i32
    %c0_i32_0 = arith.constant 0 : i32
    return %c0_i32, %arg1 : i32, i32
  }
  func.func @transform_3(%arg0: i32, %arg1: i32) -> (i32, i32) {
    %c0_i32 = arith.constant 0 : i32
    return %arg0, %arg1 : i32, i32
  }
}

</mosaic_0001>

<llo_original>
// kernel: generator_forward.6
$region0: #{generator_forward.6}
  #allocation0 [shape = 'u32[]', space=smem, size = 0x4, offset = 0x4, fixed_abs, tag = 'smem constant byte address 0x4 - core index']
  #allocation1 [shape = 'u32[144,128]{1,0:T(1,128)}', space=vmem, size = 0x12000, scoped, tag = 'internal scratch']
  %s0 = inlined_call_operand.vmem [shape: bf16[128,48], index: 0, kind: input, shape index: {}]
  %s1 = inlined_call_operand.vmem [shape: bf16[48,128], index: 1, kind: input, shape index: {}]
  %s2 = inlined_call_operand.vmem [shape: f32[1,128], index: 2, kind: input, shape index: {}]
  %s3 = inlined_call_operand.vmem [shape: bf16[128,128], index: 3, kind: output, shape index: {}]
  %s4 = sld [smem:[#allocation0]]
  $region22: #{generator_forward.6} parent=0
    _
  %s6 = ssub.s32 1, %s4
  %s7 = scalar_select 0, %s6, %s4
  // Predicated region
  $region2: #{generator_forward.6} parent=0 // pred_check
    _
  $region3: #{generator_forward.6} parent=0 // pred_check_branch
    %9 = sbr.rel (0) target = $region5
  $region4: #{generator_forward.6} parent=0 // pred_region
    _
  $region5: #{generator_forward.6} parent=0 // pred_fallthru
    _
  // Predicated region
  $region6: #{generator_forward.6} parent=0 // pred_check
    _
  $region7: #{generator_forward.6} parent=0 // pred_check_branch
    %11 = sbr.rel (0) target = $region9
  $region8: #{generator_forward.6} parent=0 // pred_region
    _
  $region9: #{generator_forward.6} parent=0 // pred_fallthru
    _
  // Predicated region
  $region10: #{generator_forward.6} parent=0 // pred_check
    _
  $region11: #{generator_forward.6} parent=0 // pred_check_branch
    %13 = sbr.rel (0) target = $region13
  $region12: #{generator_forward.6} parent=0 // pred_region
    _
  $region13: #{generator_forward.6} parent=0 // pred_fallthru
    _
  %v15 = vld [vmem:[%s0] sm:$0xf]
  %v16 = vld [vmem:[%s0 + $0x4] sm:$0xf]
  %v17 = vld [vmem:[%s0 + $0x8] sm:$0xf]
  %v18 = vld [vmem:[%s0 + $0xc] sm:$0xf]
  %v19 = vld [vmem:[%s0 + $0x10] sm:$0xf]
  %v20 = vld [vmem:[%s0 + $0x14] sm:$0xf]
  %v21 = vld [vmem:[%s0 + $0x18] sm:$0xf]
  %v22 = vld [vmem:[%s0 + $0x1c] sm:$0xf]
  %v23 = vld [vmem:[%s0 + $0x20] sm:$0xf]
  %v24 = vld [vmem:[%s0 + $0x24] sm:$0xf]
  %v25 = vld [vmem:[%s0 + $0x28] sm:$0xf]
  %v26 = vld [vmem:[%s0 + $0x2c] sm:$0xf]
  %v27 = vld [vmem:[%s0 + $0x30] sm:$0xf]
  %v28 = vld [vmem:[%s0 + $0x34] sm:$0xf]
  %v29 = vld [vmem:[%s0 + $0x38] sm:$0xf]
  %v30 = vld [vmem:[%s0 + $0x3c] sm:$0xf]
  %v31 = vld [vmem:[%s1] sm:$0xf]
  %v32 = vld [vmem:[%s1 + $0x4] sm:$0xf]
  %v33 = vld [vmem:[%s1 + $0x8] sm:$0xf]
  %v34 = vld [vmem:[%s1 + $0xc] sm:$0xf]
  %v35 = vld [vmem:[%s1 + $0x10] sm:$0xf]
  %v36 = vld [vmem:[%s1 + $0x14] sm:$0xf]
  %v37 = vld [vmem:[%s2] sm:$0x1]
  %v39 = vlaneseq
  %v40 = vshrl.u32 %v39, 7
  %v41 = vsub.s32 0, %v40
  %v42 = vrot.slane %v37, %v41
  %v60 = vunpack.c.l.b16 %v15
  %v61 = vunpack.c.l.b16 %v16
  %v62 = vunpack.c.l.b16 %v17
  %v63 = vunpack.c.l.b16 %v18
  %v64 = vunpack.c.l.b16 %v19
  %v65 = vunpack.c.l.b16 %v20
  %v66 = vunpack.c.l.b16 %v21
  %v67 = vunpack.c.l.b16 %v22
  %v68 = vunpack.c.l.b16 %v23
  %v69 = vunpack.c.l.b16 %v24
  %v70 = vunpack.c.l.b16 %v25
  %v71 = vunpack.c.l.b16 %v26
  %v72 = vunpack.c.l.b16 %v27
  %v73 = vunpack.c.l.b16 %v28
  %v74 = vunpack.c.l.b16 %v29
  %v75 = vunpack.c.l.b16 %v30
  %v76 = vpack.c.b16 %v61, %v60
  %v77 = vpack.c.b16 %v63, %v62
  %v78 = vpack.c.b16 %v65, %v64
  %v79 = vpack.c.b16 %v67, %v66
  %v80 = vpack.c.b16 %v69, %v68
  %v81 = vpack.c.b16 %v71, %v70
  %v82 = vpack.c.b16 %v73, %v72
  %v83 = vpack.c.b16 %v75, %v74
  %v90 = vunpack.c.l.b16 %v31
  %v91 = vunpack.c.l.b16 %v32
  %v92 = vunpack.c.l.b16 %v33
  %v93 = vunpack.c.l.b16 %v34
  %v94 = vunpack.c.l.b16 %v35
  %v95 = vunpack.c.l.b16 %v36
  %v96 = vpack.c.b16 %v91, %v90
  %v97 = vpack.c.b16 %v93, %v92
  %v98 = vpack.c.b16 %v95, %v94
  %vm102 = vcmask 392192
  %v104 = vsel %vm102, %v76, 0
  %v107 = vsel %vm102, %v77, 0
  %v110 = vsel %vm102, %v78, 0
  %v113 = vsel %vm102, %v79, 0
  %v116 = vsel %vm102, %v80, 0
  %v119 = vsel %vm102, %v81, 0
  %v122 = vsel %vm102, %v82, 0
  %v125 = vsel %vm102, %v83, 0
  %127 = vmatprep.subr.bf16.mxu0 0
  %128 = vmatpush1.bf16.msra.mxu0 %v96
  %129 = vmatprep.subr.bf16.mxu0 0
  %130 = vmatpush1.bf16.msra.mxu0 %v97
  %131 = vmatprep.subr.bf16.mxu0 0
  %132 = vmatpush1.bf16.msra.mxu0 %v98
  %133 = vmatprep.subr.bf16.mxu0 0
  %134 = vmatpush1.bf16.msra.mxu0 0
  %135 = vmatprep.subr.bf16.mxu0 0
  %136 = vmatpush1.bf16.msra.mxu0 0
  %137 = vmatprep.subr.bf16.mxu0 0
  %138 = vmatpush1.bf16.msra.mxu0 0
  %139 = vmatprep.subr.bf16.mxu0 0
  %140 = vmatpush1.bf16.msra.mxu0 0
  %141 = vmatprep.subr.bf16.mxu0 0
  %142 = vmatpush1.bf16.msra.mxu0 0
  %143 = vmatprep.subr.bf16.mxu0 0
  %144 = vmatpush1.bf16.msra.mxu0 0
  %145 = vmatprep.subr.bf16.mxu0 0
  %146 = vmatpush1.bf16.msra.mxu0 0
  %147 = vmatprep.subr.bf16.mxu0 0
  %148 = vmatpush1.bf16.msra.mxu0 0
  %149 = vmatprep.subr.bf16.mxu0 0
  %150 = vmatpush1.bf16.msra.mxu0 0
  %151 = vmatprep.subr.bf16.mxu0 0
  %152 = vmatpush1.bf16.msra.mxu0 0
  %153 = vmatprep.subr.bf16.mxu0 0
  %154 = vmatpush1.bf16.msra.mxu0 0
  %155 = vmatprep.subr.bf16.mxu0 0
  %156 = vmatpush1.bf16.msra.mxu0 0
  %157 = vmatprep.subr.bf16.mxu0 0
  %158 = vmatpush1.bf16.msra.mxu0 0
  %159 = vmatprep.mubr.bf16.mxu0 0
  %160 = vmatmul.mubr.bf16.gmra.mrb[0].mxu0 %v104
  %v161 = vpop.f32.mrb[0].mxu0
  %v162 = vadd.f32 %v42, %v161
  %v163 = vpop.f32.mrb[0].mxu0
  %v164 = vpop.f32.mrb[0].mxu0
  %v165 = vadd.f32 %v42, %v164
  %v166 = vpop.f32.mrb[0].mxu0
  %167 = vmatprep.mubr.bf16.mxu0 0
  %168 = vmatmul.mubr.bf16.gmra.mrb[0].mxu0 %v107
  %v169 = vpop.f32.mrb[0].mxu0
  %v170 = vadd.f32 %v42, %v169
  %v171 = vpop.f32.mrb[0].mxu0
  %v172 = vpop.f32.mrb[0].mxu0
  %v173 = vadd.f32 %v42, %v172
  %v174 = vpop.f32.mrb[0].mxu0
  %175 = vmatprep.mubr.bf16.mxu0 0
  %176 = vmatmul.mubr.bf16.gmra.mrb[0].mxu0 %v110
  %v177 = vpop.f32.mrb[0].mxu0
  %v178 = vadd.f32 %v42, %v177
  %v179 = vpop.f32.mrb[0].mxu0
  %v180 = vpop.f32.mrb[0].mxu0
  %v181 = vadd.f32 %v42, %v180
  %v182 = vpop.f32.mrb[0].mxu0
  %183 = vmatprep.mubr.bf16.mxu0 0
  %184 = vmatmul.mubr.bf16.gmra.mrb[0].mxu0 %v113
  %v185 = vpop.f32.mrb[0].mxu0
  %v186 = vadd.f32 %v42, %v185
  %v187 = vpop.f32.mrb[0].mxu0
  %v188 = vpop.f32.mrb[0].mxu0
  %v189 = vadd.f32 %v42, %v188
  %v190 = vpop.f32.mrb[0].mxu0
  %191 = vmatprep.mubr.bf16.mxu0 0
  %192 = vmatmul.mubr.bf16.gmra.mrb[0].mxu0 %v116
  %v193 = vpop.f32.mrb[0].mxu0
  %v194 = vadd.f32 %v42, %v193
  %v195 = vpop.f32.mrb[0].mxu0
  %v196 = vpop.f32.mrb[0].mxu0
  %v197 = vadd.f32 %v42, %v196
  %v198 = vpop.f32.mrb[0].mxu0
  %199 = vmatprep.mubr.bf16.mxu0 0
  %200 = vmatmul.mubr.bf16.gmra.mrb[0].mxu0 %v119
  %v201 = vpop.f32.mrb[0].mxu0
  %v202 = vadd.f32 %v42, %v201
  %v203 = vpop.f32.mrb[0].mxu0
  %v204 = vpop.f32.mrb[0].mxu0
  %v205 = vadd.f32 %v42, %v204
  %v206 = vpop.f32.mrb[0].mxu0
  %207 = vmatprep.mubr.bf16.mxu0 0
  %208 = vmatmul.mubr.bf16.gmra.mrb[0].mxu0 %v122
  %v209 = vpop.f32.mrb[0].mxu0
  %v210 = vadd.f32 %v42, %v209
  %v211 = vpop.f32.mrb[0].mxu0
  %v212 = vpop.f32.mrb[0].mxu0
  %v213 = vadd.f32 %v42, %v212
  %v214 = vpop.f32.mrb[0].mxu0
  %215 = vmatprep.mubr.bf16.mxu0 0
  %216 = vmatmul.mubr.bf16.gmra.mrb[0].mxu0 %v125
  %v217 = vpop.f32.mrb[0].mxu0
  %v218 = vadd.f32 %v42, %v217
  %v219 = vpop.f32.mrb[0].mxu0
  %v220 = vpop.f32.mrb[0].mxu0
  %v221 = vadd.f32 %v42, %v220
  %v222 = vpop.f32.mrb[0].mxu0
  %223 = vdwg.mxu0
  %v224 = vmax.f32 %v162, 0.0
  %v225 = vmax.f32 %v165, 0.0
  %v226 = vmax.f32 %v170, 0.0
  %v227 = vmax.f32 %v173, 0.0
  %v228 = vmax.f32 %v178, 0.0
  %v229 = vmax.f32 %v181, 0.0
  %v230 = vmax.f32 %v186, 0.0
  %v231 = vmax.f32 %v189, 0.0
  %v232 = vmax.f32 %v194, 0.0
  %v233 = vmax.f32 %v197, 0.0
  %v234 = vmax.f32 %v202, 0.0
  %v235 = vmax.f32 %v205, 0.0
  %v236 = vmax.f32 %v210, 0.0
  %v237 = vmax.f32 %v213, 0.0
  %v238 = vmax.f32 %v218, 0.0
  %v239 = vmax.f32 %v221, 0.0
  %v240 = vpack.c.bf16 %v225, %v224
  %v241 = vpack.c.bf16 %v227, %v226
  %v242 = vpack.c.bf16 %v229, %v228
  %v243 = vpack.c.bf16 %v231, %v230
  %v244 = vpack.c.bf16 %v233, %v232
  %v245 = vpack.c.bf16 %v235, %v234
  %v246 = vpack.c.bf16 %v237, %v236
  %v247 = vpack.c.bf16 %v239, %v238
  %v256 = vunpack.c.l.b16 %v240
  %v257 = vunpack.c.h.b16 %v240
  %v258 = vunpack.c.l.b16 %v241
  %v259 = vunpack.c.h.b16 %v241
  %v260 = vunpack.c.l.b16 %v242
  %v261 = vunpack.c.h.b16 %v242
  %v262 = vunpack.c.l.b16 %v243
  %v263 = vunpack.c.h.b16 %v243
  %v264 = vunpack.c.l.b16 %v244
  %v265 = vunpack.c.h.b16 %v244
  %v266 = vunpack.c.l.b16 %v245
  %v267 = vunpack.c.h.b16 %v245
  %v268 = vunpack.c.l.b16 %v246
  %v269 = vunpack.c.h.b16 %v246
  %v270 = vunpack.c.l.b16 %v247
  %v271 = vunpack.c.h.b16 %v247
  %v272 = vpack.c.b16 %v256, %v256
  %v273 = vpack.c.b16 %v257, %v257
  %v274 = vpack.c.b16 %v258, %v258
  %v275 = vpack.c.b16 %v259, %v259
  %v276 = vpack.c.b16 %v260, %v260
  %v277 = vpack.c.b16 %v261, %v261
  %v278 = vpack.c.b16 %v262, %v262
  %v279 = vpack.c.b16 %v263, %v263
  %v280 = vpack.c.b16 %v264, %v264
  %v281 = vpack.c.b16 %v265, %v265
  %v282 = vpack.c.b16 %v266, %v266
  %v283 = vpack.c.b16 %v267, %v267
  %v284 = vpack.c.b16 %v268, %v268
  %v285 = vpack.c.b16 %v269, %v269
  %v286 = vpack.c.b16 %v270, %v270
  %v287 = vpack.c.b16 %v271, %v271
  %304 = vst [vmem:[%s3] sm:$0xf] %v272
  %305 = vst [vmem:[%s3 + $0x4] sm:$0xf] %v273
  %306 = vst [vmem:[%s3 + $0x8] sm:$0xf] %v274
  %307 = vst [vmem:[%s3 + $0xc] sm:$0xf] %v275
  %308 = vst [vmem:[%s3 + $0x10] sm:$0xf] %v276
  %309 = vst [vmem:[%s3 + $0x14] sm:$0xf] %v277
  %310 = vst [vmem:[%s3 + $0x18] sm:$0xf] %v278
  %311 = vst [vmem:[%s3 + $0x1c] sm:$0xf] %v279
  %312 = vst [vmem:[%s3 + $0x20] sm:$0xf] %v280
  %313 = vst [vmem:[%s3 + $0x24] sm:$0xf] %v281
  %314 = vst [vmem:[%s3 + $0x28] sm:$0xf] %v282
  %315 = vst [vmem:[%s3 + $0x2c] sm:$0xf] %v283
  %316 = vst [vmem:[%s3 + $0x30] sm:$0xf] %v284
  %317 = vst [vmem:[%s3 + $0x34] sm:$0xf] %v285
  %318 = vst [vmem:[%s3 + $0x38] sm:$0xf] %v286
  %319 = vst [vmem:[%s3 + $0x3c] sm:$0xf] %v287
  // Predicated region
  $region14: #{generator_forward.6} parent=0 // pred_check
    _
  $region15: #{generator_forward.6} parent=0 // pred_check_branch
    %321 = sbr.rel (0) target = $region17
  $region16: #{generator_forward.6} parent=0 // pred_region
    _
  $region17: #{generator_forward.6} parent=0 // pred_fallthru
    _
  // Predicated region
  $region18: #{generator_forward.6} parent=0 // pred_check
    _
  $region19: #{generator_forward.6} parent=0 // pred_check_branch
    %323 = sbr.rel (0) target = $region21
  $region20: #{generator_forward.6} parent=0 // pred_region
    _
  $region21: #{generator_forward.6} parent=0 // pred_fallthru
    _

// kernel: generator_forward.7
$region0: #{generator_forward.7}
  #allocation0 [shape = 'u32[]', space=smem, size = 0x4, offset = 0x4, fixed_abs, tag = 'smem constant byte address 0x4 - core index']
  #allocation1 [shape = 'u32[144,128]{1,0:T(1,128)}', space=vmem, size = 0x12000, scoped, tag = 'internal scratch']
  %s0 = inlined_call_operand.vmem [shape: bf16[32,1024], index: 0, kind: input, shape index: {}]
  %s1 = inlined_call_operand.vmem [shape: bf16[1024,128], index: 1, kind: input, shape index: {}]
  %s2 = inlined_call_operand.vmem [shape: f32[1,128], index: 2, kind: input, shape index: {}]
  %s3 = inlined_call_operand.vmem [shape: bf16[32,128], index: 3, kind: output, shape index: {}]
  %s4 = sld [smem:[#allocation0]]
  $region22: #{generator_forward.7} parent=0
    _
  %s6 = ssub.s32 1, %s4
  %s7 = scalar_select 0, %s6, %s4
  // Predicated region
  $region2: #{generator_forward.7} parent=0 // pred_check
    _
  $region3: #{generator_forward.7} parent=0 // pred_check_branch
    %9 = sbr.rel (0) target = $region5
  $region4: #{generator_forward.7} parent=0 // pred_region
    _
  $region5: #{generator_forward.7} parent=0 // pred_fallthru
    _
  // Predicated region
  $region6: #{generator_forward.7} parent=0 // pred_check
    _
  $region7: #{generator_forward.7} parent=0 // pred_check_branch
    %11 = sbr.rel (0) target = $region9
  $region8: #{generator_forward.7} parent=0 // pred_region
    _
  $region9: #{generator_forward.7} parent=0 // pred_fallthru
    _
  // Predicated region
  $region10: #{generator_forward.7} parent=0 // pred_check
    _
  $region11: #{generator_forward.7} parent=0 // pred_check_branch
    %13 = sbr.rel (0) target = $region13
  $region12: #{generator_forward.7} parent=0 // pred_region
    _
  $region13: #{generator_forward.7} parent=0 // pred_fallthru
    _
  %v15 = vld [vmem:[%s0] sm:$0xff]
  %v16 = vld [vmem:[%s0 + $0x8] sm:$0xff]
  %v17 = vld [vmem:[%s0 + $0x10] sm:$0xff]
  %v18 = vld [vmem:[%s0 + $0x18] sm:$0xff]
  %v19 = vld [vmem:[%s0 + $0x20] sm:$0xff]
  %v20 = vld [vmem:[%s0 + $0x28] sm:$0xff]
  %v21 = vld [vmem:[%s0 + $0x30] sm:$0xff]
  %v22 = vld [vmem:[%s0 + $0x38] sm:$0xff]
  %v23 = vld [vmem:[%s0 + $0x40] sm:$0xff]
  %v24 = vld [vmem:[%s0 + $0x48] sm:$0xff]
  %v25 = vld [vmem:[%s0 + $0x50] sm:$0xff]
  %v26 = vld [vmem:[%s0 + $0x58] sm:$0xff]
  %v27 = vld [vmem:[%s0 + $0x60] sm:$0xff]
  %v28 = vld [vmem:[%s0 + $0x68] sm:$0xff]
  %v29 = vld [vmem:[%s0 + $0x70] sm:$0xff]
  %v30 = vld [vmem:[%s0 + $0x78] sm:$0xff]
  %v31 = vld [vmem:[%s1] sm:$0xf]
  %v32 = vld [vmem:[%s1 + $0x4] sm:$0xf]
  %v33 = vld [vmem:[%s1 + $0x8] sm:$0xf]
  %v34 = vld [vmem:[%s1 + $0xc] sm:$0xf]
  %v35 = vld [vmem:[%s1 + $0x10] sm:$0xf]
  %v36 = vld [vmem:[%s1 + $0x14] sm:$0xf]
  %v37 = vld [vmem:[%s1 + $0x18] sm:$0xf]
  %v38 = vld [vmem:[%s1 + $0x1c] sm:$0xf]
  %v39 = vld [vmem:[%s1 + $0x20] sm:$0xf]
  %v40 = vld [vmem:[%s1 + $0x24] sm:$0xf]
  %v41 = vld [vmem:[%s1 + $0x28] sm:$0xf]
  %v42 = vld [vmem:[%s1 + $0x2c] sm:$0xf]
  %v43 = vld [vmem:[%s1 + $0x30] sm:$0xf]
  %v44 = vld [vmem:[%s1 + $0x34] sm:$0xf]
  %v45 = vld [vmem:[%s1 + $0x38] sm:$0xf]
  %v46 = vld [vmem:[%s1 + $0x3c] sm:$0xf]
  %v47 = vld [vmem:[%s1 + $0x40] sm:$0xf]
  %v48 = vld [vmem:[%s1 + $0x44] sm:$0xf]
  %v49 = vld [vmem:[%s1 + $0x48] sm:$0xf]
  %v50 = vld [vmem:[%s1 + $0x4c] sm:$0xf]
  %v51 = vld [vmem:[%s1 + $0x50] sm:$0xf]
  %v52 = vld [vmem:[%s1 + $0x54] sm:$0xf]
  %v53 = vld [vmem:[%s1 + $0x58] sm:$0xf]
  %v54 = vld [vmem:[%s1 + $0x5c] sm:$0xf]
  %v55 = vld [vmem:[%s1 + $0x60] sm:$0xf]
  %v56 = vld [vmem:[%s1 + $0x64] sm:$0xf]
  %v57 = vld [vmem:[%s1 + $0x68] sm:$0xf]
  %v58 = vld [vmem:[%s1 + $0x6c] sm:$0xf]
  %v59 = vld [vmem:[%s1 + $0x70] sm:$0xf]
  %v60 = vld [vmem:[%s1 + $0x74] sm:$0xf]
  %v61 = vld [vmem:[%s1 + $0x78] sm:$0xf]
  %v62 = vld [vmem:[%s1 + $0x7c] sm:$0xf]
  %v63 = vld [vmem:[%s1 + $0x80] sm:$0xf]
  %v64 = vld [vmem:[%s1 + $0x84] sm:$0xf]
  %v65 = vld [vmem:[%s1 + $0x88] sm:$0xf]
  %v66 = vld [vmem:[%s1 + $0x8c] sm:$0xf]
  %v67 = vld [vmem:[%s1 + $0x90] sm:$0xf]
  %v68 = vld [vmem:[%s1 + $0x94] sm:$0xf]
  %v69 = vld [vmem:[%s1 + $0x98] sm:$0xf]
  %v70 = vld [vmem:[%s1 + $0x9c] sm:$0xf]
  %v71 = vld [vmem:[%s1 + $0xa0] sm:$0xf]
  %v72 = vld [vmem:[%s1 + $0xa4] sm:$0xf]
  %v73 = vld [vmem:[%s1 + $0xa8] sm:$0xf]
  %v74 = vld [vmem:[%s1 + $0xac] sm:$0xf]
  %v75 = vld [vmem:[%s1 + $0xb0] sm:$0xf]
  %v76 = vld [vmem:[%s1 + $0xb4] sm:$0xf]
  %v77 = vld [vmem:[%s1 + $0xb8] sm:$0xf]
  %v78 = vld [vmem:[%s1 + $0xbc] sm:$0xf]
  %v79 = vld [vmem:[%s1 + $0xc0] sm:$0xf]
  %v80 = vld [vmem:[%s1 + $0xc4] sm:$0xf]
  %v81 = vld [vmem:[%s1 + $0xc8] sm:$0xf]
  %v82 = vld [vmem:[%s1 + $0xcc] sm:$0xf]
  %v83 = vld [vmem:[%s1 + $0xd0] sm:$0xf]
  %v84 = vld [vmem:[%s1 + $0xd4] sm:$0xf]
  %v85 = vld [vmem:[%s1 + $0xd8] sm:$0xf]
  %v86 = vld [vmem:[%s1 + $0xdc] sm:$0xf]
  %v87 = vld [vmem:[%s1 + $0xe0] sm:$0xf]
  %v88 = vld [vmem:[%s1 + $0xe4] sm:$0xf]
  %v89 = vld [vmem:[%s1 + $0xe8] sm:$0xf]
  %v90 = vld [vmem:[%s1 + $0xec] sm:$0xf]
  %v91 = vld [vmem:[%s1 + $0xf0] sm:$0xf]
  %v92 = vld [vmem:[%s1 + $0xf4] sm:$0xf]
  %v93 = vld [vmem:[%s1 + $0xf8] sm:$0xf]
  %v94 = vld [vmem:[%s1 + $0xfc] sm:$0xf]
  %v95 = vld [vmem:[%s1 + $0x100] sm:$0xf]
  %v96 = vld [vmem:[%s1 + $0x104] sm:$0xf]
  %v97 = vld [vmem:[%s1 + $0x108] sm:$0xf]
  %v98 = vld [vmem:[%s1 + $0x10c] sm:$0xf]
  %v99 = vld [vmem:[%s1 + $0x110] sm:$0xf]
  %v100 = vld [vmem:[%s1 + $0x114] sm:$0xf]
  %v101 = vld [vmem:[%s1 + $0x118] sm:$0xf]
  %v102 = vld [vmem:[%s1 + $0x11c] sm:$0xf]
  %v103 = vld [vmem:[%s1 + $0x120] sm:$0xf]
  %v104 = vld [vmem:[%s1 + $0x124] sm:$0xf]
  %v105 = vld [vmem:[%s1 + $0x128] sm:$0xf]
  %v106 = vld [vmem:[%s1 + $0x12c] sm:$0xf]
  %v107 = vld [vmem:[%s1 + $0x130] sm:$0xf]
  %v108 = vld [vmem:[%s1 + $0x134] sm:$0xf]
  %v109 = vld [vmem:[%s1 + $0x138] sm:$0xf]
  %v110 = vld [vmem:[%s1 + $0x13c] sm:$0xf]
  %v111 = vld [vmem:[%s1 + $0x140] sm:$0xf]
  %v112 = vld [vmem:[%s1 + $0x144] sm:$0xf]
  %v113 = vld [vmem:[%s1 + $0x148] sm:$0xf]
  %v114 = vld [vmem:[%s1 + $0x14c] sm:$0xf]
  %v115 = vld [vmem:[%s1 + $0x150] sm:$0xf]
  %v116 = vld [vmem:[%s1 + $0x154] sm:$0xf]
  %v117 = vld [vmem:[%s1 + $0x158] sm:$0xf]
  %v118 = vld [vmem:[%s1 + $0x15c] sm:$0xf]
  %v119 = vld [vmem:[%s1 + $0x160] sm:$0xf]
  %v120 = vld [vmem:[%s1 + $0x164] sm:$0xf]
  %v121 = vld [vmem:[%s1 + $0x168] sm:$0xf]
  %v122 = vld [vmem:[%s1 + $0x16c] sm:$0xf]
  %v123 = vld [vmem:[%s1 + $0x170] sm:$0xf]
  %v124 = vld [vmem:[%s1 + $0x174] sm:$0xf]
  %v125 = vld [vmem:[%s1 + $0x178] sm:$0xf]
  %v126 = vld [vmem:[%s1 + $0x17c] sm:$0xf]
  %v127 = vld [vmem:[%s1 + $0x180] sm:$0xf]
  %v128 = vld [vmem:[%s1 + $0x184] sm:$0xf]
  %v129 = vld [vmem:[%s1 + $0x188] sm:$0xf]
  %v130 = vld [vmem:[%s1 + $0x18c] sm:$0xf]
  %v131 = vld [vmem:[%s1 + $0x190] sm:$0xf]
  %v132 = vld [vmem:[%s1 + $0x194] sm:$0xf]
  %v133 = vld [vmem:[%s1 + $0x198] sm:$0xf]
  %v134 = vld [vmem:[%s1 + $0x19c] sm:$0xf]
  %v135 = vld [vmem:[%s1 + $0x1a0] sm:$0xf]
  %v136 = vld [vmem:[%s1 + $0x1a4] sm:$0xf]
  %v137 = vld [vmem:[%s1 + $0x1a8] sm:$0xf]
  %v138 = vld [vmem:[%s1 + $0x1ac] sm:$0xf]
  %v139 = vld [vmem:[%s1 + $0x1b0] sm:$0xf]
  %v140 = vld [vmem:[%s1 + $0x1b4] sm:$0xf]
  %v141 = vld [vmem:[%s1 + $0x1b8] sm:$0xf]
  %v142 = vld [vmem:[%s1 + $0x1bc] sm:$0xf]
  %v143 = vld [vmem:[%s1 + $0x1c0] sm:$0xf]
  %v144 = vld [vmem:[%s1 + $0x1c4] sm:$0xf]
  %v145 = vld [vmem:[%s1 + $0x1c8] sm:$0xf]
  %v146 = vld [vmem:[%s1 + $0x1cc] sm:$0xf]
  %v147 = vld [vmem:[%s1 + $0x1d0] sm:$0xf]
  %v148 = vld [vmem:[%s1 + $0x1d4] sm:$0xf]
  %v149 = vld [vmem:[%s1 + $0x1d8] sm:$0xf]
  %v150 = vld [vmem:[%s1 + $0x1dc] sm:$0xf]
  %v151 = vld [vmem:[%s1 + $0x1e0] sm:$0xf]
  %v152 = vld [vmem:[%s1 + $0x1e4] sm:$0xf]
  %v153 = vld [vmem:[%s1 + $0x1e8] sm:$0xf]
  %v154 = vld [vmem:[%s1 + $0x1ec] sm:$0xf]
  %v155 = vld [vmem:[%s1 + $0x1f0] sm:$0xf]
  %v156 = vld [vmem:[%s1 + $0x1f4] sm:$0xf]
  %v157 = vld [vmem:[%s1 + $0x1f8] sm:$0xf]
  %v158 = vld [vmem:[%s1 + $0x1fc] sm:$0xf]
  %v159 = vld [vmem:[%s2] sm:$0x1]
  %v161 = vlaneseq
  %v162 = vshrl.u32 %v161, 7
  %v163 = vsub.s32 0, %v162
  %v164 = vrot.slane %v159, %v163
  %v182 = vunpack.c.l.b16 %v15
  %v183 = vunpack.c.h.b16 %v15
  %v184 = vunpack.c.l.b16 %v16
  %v185 = vunpack.c.h.b16 %v16
  %v186 = vunpack.c.l.b16 %v17
  %v187 = vunpack.c.h.b16 %v17
  %v188 = vunpack.c.l.b16 %v18
  %v189 = vunpack.c.h.b16 %v18
  %v190 = vunpack.c.l.b16 %v19
  %v191 = vunpack.c.h.b16 %v19
  %v192 = vunpack.c.l.b16 %v20
  %v193 = vunpack.c.h.b16 %v20
  %v194 = vunpack.c.l.b16 %v21
  %v195 = vunpack.c.h.b16 %v21
  %v196 = vunpack.c.l.b16 %v22
  %v197 = vunpack.c.h.b16 %v22
  %v198 = vunpack.c.l.b16 %v23
  %v199 = vunpack.c.h.b16 %v23
  %v200 = vunpack.c.l.b16 %v24
  %v201 = vunpack.c.h.b16 %v24
  %v202 = vunpack.c.l.b16 %v25
  %v203 = vunpack.c.h.b16 %v25
  %v204 = vunpack.c.l.b16 %v26
  %v205 = vunpack.c.h.b16 %v26
  %v206 = vunpack.c.l.b16 %v27
  %v207 = vunpack.c.h.b16 %v27
  %v208 = vunpack.c.l.b16 %v28
  %v209 = vunpack.c.h.b16 %v28
  %v210 = vunpack.c.l.b16 %v29
  %v211 = vunpack.c.h.b16 %v29
  %v212 = vunpack.c.l.b16 %v30
  %v213 = vunpack.c.h.b16 %v30
  %v214 = vpack.c.b16 %v190, %v182
  %v215 = vpack.c.b16 %v191, %v183
  %v216 = vpack.c.b16 %v192, %v184
  %v217 = vpack.c.b16 %v193, %v185
  %v218 = vpack.c.b16 %v194, %v186
  %v219 = vpack.c.b16 %v195, %v187
  %v220 = vpack.c.b16 %v196, %v188
  %v221 = vpack.c.b16 %v197, %v189
  %v222 = vpack.c.b16 %v206, %v198
  %v223 = vpack.c.b16 %v207, %v199
  %v224 = vpack.c.b16 %v208, %v200
  %v225 = vpack.c.b16 %v209, %v201
  %v226 = vpack.c.b16 %v210, %v202
  %v227 = vpack.c.b16 %v211, %v203
  %v228 = vpack.c.b16 %v212, %v204
  %v229 = vpack.c.b16 %v213, %v205
  %v374 = vunpack.c.l.b16 %v31
  %v375 = vunpack.c.l.b16 %v32
  %v376 = vunpack.c.l.b16 %v33
  %v377 = vunpack.c.l.b16 %v34
  %v378 = vunpack.c.l.b16 %v35
  %v379 = vunpack.c.l.b16 %v36
  %v380 = vunpack.c.l.b16 %v37
  %v381 = vunpack.c.l.b16 %v38
  %v382 = vunpack.c.l.b16 %v39
  %v383 = vunpack.c.l.b16 %v40
  %v384 = vunpack.c.l.b16 %v41
  %v385 = vunpack.c.l.b16 %v42
  %v386 = vunpack.c.l.b16 %v43
  %v387 = vunpack.c.l.b16 %v44
  %v388 = vunpack.c.l.b16 %v45
  %v389 = vunpack.c.l.b16 %v46
  %v390 = vunpack.c.l.b16 %v47
  %v391 = vunpack.c.l.b16 %v48
  %v392 = vunpack.c.l.b16 %v49
  %v393 = vunpack.c.l.b16 %v50
  %v394 = vunpack.c.l.b16 %v51
  %v395 = vunpack.c.l.b16 %v52
  %v396 = vunpack.c.l.b16 %v53
  %v397 = vunpack.c.l.b16 %v54
  %v398 = vunpack.c.l.b16 %v55
  %v399 = vunpack.c.l.b16 %v56
  %v400 = vunpack.c.l.b16 %v57
  %v401 = vunpack.c.l.b16 %v58
  %v402 = vunpack.c.l.b16 %v59
  %v403 = vunpack.c.l.b16 %v60
  %v404 = vunpack.c.l.b16 %v61
  %v405 = vunpack.c.l.b16 %v62
  %v406 = vunpack.c.l.b16 %v63
  %v407 = vunpack.c.l.b16 %v64
  %v408 = vunpack.c.l.b16 %v65
  %v409 = vunpack.c.l.b16 %v66
  %v410 = vunpack.c.l.b16 %v67
  %v411 = vunpack.c.l.b16 %v68
  %v412 = vunpack.c.l.b16 %v69
  %v413 = vunpack.c.l.b16 %v70
  %v414 = vunpack.c.l.b16 %v71
  %v415 = vunpack.c.l.b16 %v72
  %v416 = vunpack.c.l.b16 %v73
  %v417 = vunpack.c.l.b16 %v74
  %v418 = vunpack.c.l.b16 %v75
  %v419 = vunpack.c.l.b16 %v76
  %v420 = vunpack.c.l.b16 %v77
  %v421 = vunpack.c.l.b16 %v78
  %v422 = vunpack.c.l.b16 %v79
  %v423 = vunpack.c.l.b16 %v80
  %v424 = vunpack.c.l.b16 %v81
  %v425 = vunpack.c.l.b16 %v82
  %v426 = vunpack.c.l.b16 %v83
  %v427 = vunpack.c.l.b16 %v84
  %v428 = vunpack.c.l.b16 %v85
  %v429 = vunpack.c.l.b16 %v86
  %v430 = vunpack.c.l.b16 %v87
  %v431 = vunpack.c.l.b16 %v88
  %v432 = vunpack.c.l.b16 %v89
  %v433 = vunpack.c.l.b16 %v90
  %v434 = vunpack.c.l.b16 %v91
  %v435 = vunpack.c.l.b16 %v92
  %v436 = vunpack.c.l.b16 %v93
  %v437 = vunpack.c.l.b16 %v94
  %v438 = vunpack.c.l.b16 %v95
  %v439 = vunpack.c.l.b16 %v96
  %v440 = vunpack.c.l.b16 %v97
  %v441 = vunpack.c.l.b16 %v98
  %v442 = vunpack.c.l.b16 %v99
  %v443 = vunpack.c.l.b16 %v100
  %v444 = vunpack.c.l.b16 %v101
  %v445 = vunpack.c.l.b16 %v102
  %v446 = vunpack.c.l.b16 %v103
  %v447 = vunpack.c.l.b16 %v104
  %v448 = vunpack.c.l.b16 %v105
  %v449 = vunpack.c.l.b16 %v106
  %v450 = vunpack.c.l.b16 %v107
  %v451 = vunpack.c.l.b16 %v108
  %v452 = vunpack.c.l.b16 %v109
  %v453 = vunpack.c.l.b16 %v110
  %v454 = vunpack.c.l.b16 %v111
  %v455 = vunpack.c.l.b16 %v112
  %v456 = vunpack.c.l.b16 %v113
  %v457 = vunpack.c.l.b16 %v114
  %v458 = vunpack.c.l.b16 %v115
  %v459 = vunpack.c.l.b16 %v116
  %v460 = vunpack.c.l.b16 %v117
  %v461 = vunpack.c.l.b16 %v118
  %v462 = vunpack.c.l.b16 %v119
  %v463 = vunpack.c.l.b16 %v120
  %v464 = vunpack.c.l.b16 %v121
  %v465 = vunpack.c.l.b16 %v122
  %v466 = vunpack.c.l.b16 %v123
  %v467 = vunpack.c.l.b16 %v124
  %v468 = vunpack.c.l.b16 %v125
  %v469 = vunpack.c.l.b16 %v126
  %v470 = vunpack.c.l.b16 %v127
  %v471 = vunpack.c.l.b16 %v128
  %v472 = vunpack.c.l.b16 %v129
  %v473 = vunpack.c.l.b16 %v130
  %v474 = vunpack.c.l.b16 %v131
  %v475 = vunpack.c.l.b16 %v132
  %v476 = vunpack.c.l.b16 %v133
  %v477 = vunpack.c.l.b16 %v134
  %v478 = vunpack.c.l.b16 %v135
  %v479 = vunpack.c.l.b16 %v136
  %v480 = vunpack.c.l.b16 %v137
  %v481 = vunpack.c.l.b16 %v138
  %v482 = vunpack.c.l.b16 %v139
  %v483 = vunpack.c.l.b16 %v140
  %v484 = vunpack.c.l.b16 %v141
  %v485 = vunpack.c.l.b16 %v142
  %v486 = vunpack.c.l.b16 %v143
  %v487 = vunpack.c.l.b16 %v144
  %v488 = vunpack.c.l.b16 %v145
  %v489 = vunpack.c.l.b16 %v146
  %v490 = vunpack.c.l.b16 %v147
  %v491 = vunpack.c.l.b16 %v148
  %v492 = vunpack.c.l.b16 %v149
  %v493 = vunpack.c.l.b16 %v150
  %v494 = vunpack.c.l.b16 %v151
  %v495 = vunpack.c.l.b16 %v152
  %v496 = vunpack.c.l.b16 %v153
  %v497 = vunpack.c.l.b16 %v154
  %v498 = vunpack.c.l.b16 %v155
  %v499 = vunpack.c.l.b16 %v156
  %v500 = vunpack.c.l.b16 %v157
  %v501 = vunpack.c.l.b16 %v158
  %v502 = vpack.c.b16 %v375, %v374
  %v503 = vpack.c.b16 %v377, %v376
  %v504 = vpack.c.b16 %v379, %v378
  %v505 = vpack.c.b16 %v381, %v380
  %v506 = vpack.c.b16 %v383, %v382
  %v507 = vpack.c.b16 %v385, %v384
  %v508 = vpack.c.b16 %v387, %v386
  %v509 = vpack.c.b16 %v389, %v388
  %v510 = vpack.c.b16 %v391, %v390
  %v511 = vpack.c.b16 %v393, %v392
  %v512 = vpack.c.b16 %v395, %v394
  %v513 = vpack.c.b16 %v397, %v396
  %v514 = vpack.c.b16 %v399, %v398
  %v515 = vpack.c.b16 %v401, %v400
  %v516 = vpack.c.b16 %v403, %v402
  %v517 = vpack.c.b16 %v405, %v404
  %v518 = vpack.c.b16 %v407, %v406
  %v519 = vpack.c.b16 %v409, %v408
  %v520 = vpack.c.b16 %v411, %v410
  %v521 = vpack.c.b16 %v413, %v412
  %v522 = vpack.c.b16 %v415, %v414
  %v523 = vpack.c.b16 %v417, %v416
  %v524 = vpack.c.b16 %v419, %v418
  %v525 = vpack.c.b16 %v421, %v420
  %v526 = vpack.c.b16 %v423, %v422
  %v527 = vpack.c.b16 %v425, %v424
  %v528 = vpack.c.b16 %v427, %v426
  %v529 = vpack.c.b16 %v429, %v428
  %v530 = vpack.c.b16 %v431, %v430
  %v531 = vpack.c.b16 %v433, %v432
  %v532 = vpack.c.b16 %v435, %v434
  %v533 = vpack.c.b16 %v437, %v436
  %v534 = vpack.c.b16 %v439, %v438
  %v535 = vpack.c.b16 %v441, %v440
  %v536 = vpack.c.b16 %v443, %v442
  %v537 = vpack.c.b16 %v445, %v444
  %v538 = vpack.c.b16 %v447, %v446
  %v539 = vpack.c.b16 %v449, %v448
  %v540 = vpack.c.b16 %v451, %v450
  %v541 = vpack.c.b16 %v453, %v452
  %v542 = vpack.c.b16 %v455, %v454
  %v543 = vpack.c.b16 %v457, %v456
  %v544 = vpack.c.b16 %v459, %v458
  %v545 = vpack.c.b16 %v461, %v460
  %v546 = vpack.c.b16 %v463, %v462
  %v547 = vpack.c.b16 %v465, %v464
  %v548 = vpack.c.b16 %v467, %v466
  %v549 = vpack.c.b16 %v469, %v468
  %v550 = vpack.c.b16 %v471, %v470
  %v551 = vpack.c.b16 %v473, %v472
  %v552 = vpack.c.b16 %v475, %v474
  %v553 = vpack.c.b16 %v477, %v476
  %v554 = vpack.c.b16 %v479, %v478
  %v555 = vpack.c.b16 %v481, %v480
  %v556 = vpack.c.b16 %v483, %v482
  %v557 = vpack.c.b16 %v485, %v484
  %v558 = vpack.c.b16 %v487, %v486
  %v559 = vpack.c.b16 %v489, %v488
  %v560 = vpack.c.b16 %v491, %v490
  %v561 = vpack.c.b16 %v493, %v492
  %v562 = vpack.c.b16 %v495, %v494
  %v563 = vpack.c.b16 %v497, %v496
  %v564 = vpack.c.b16 %v499, %v498
  %v565 = vpack.c.b16 %v501, %v500
  %630 = vmatprep.subr.bf16.mxu0 0
  %631 = vmatpush1.bf16.msra.mxu0 %v502
  %632 = vmatprep.subr.bf16.mxu0 0
  %633 = vmatpush1.bf16.msra.mxu0 %v503
  %634 = vmatprep.subr.bf16.mxu0 0
  %635 = vmatpush1.bf16.msra.mxu0 %v504
  %636 = vmatprep.subr.bf16.mxu0 0
  %637 = vmatpush1.bf16.msra.mxu0 %v505
  %638 = vmatprep.subr.bf16.mxu0 0
  %639 = vmatpush1.bf16.msra.mxu0 %v506
  %640 = vmatprep.subr.bf16.mxu0 0
  %641 = vmatpush1.bf16.msra.mxu0 %v507
  %642 = vmatprep.subr.bf16.mxu0 0
  %643 = vmatpush1.bf16.msra.mxu0 %v508
  %644 = vmatprep.subr.bf16.mxu0 0
  %645 = vmatpush1.bf16.msra.mxu0 %v509
  %646 = vmatprep.subr.bf16.mxu0 0
  %647 = vmatpush1.bf16.msra.mxu0 %v510
  %648 = vmatprep.subr.bf16.mxu0 0
  %649 = vmatpush1.bf16.msra.mxu0 %v511
  %650 = vmatprep.subr.bf16.mxu0 0
  %651 = vmatpush1.bf16.msra.mxu0 %v512
  %652 = vmatprep.subr.bf16.mxu0 0
  %653 = vmatpush1.bf16.msra.mxu0 %v513
  %654 = vmatprep.subr.bf16.mxu0 0
  %655 = vmatpush1.bf16.msra.mxu0 %v514
  %656 = vmatprep.subr.bf16.mxu0 0
  %657 = vmatpush1.bf16.msra.mxu0 %v515
  %658 = vmatprep.subr.bf16.mxu0 0
  %659 = vmatpush1.bf16.msra.mxu0 %v516
  %660 = vmatprep.subr.bf16.mxu0 0
  %661 = vmatpush1.bf16.msra.mxu0 %v517
  %662 = vmatprep.mubr.bf16.mxu0 %v215
  %663 = vmatmul.mubr.bf16.gmra.mrb[0].mxu0 %v214
  %v664 = vpop.f32.mrb[0].mxu0
  %v665 = vadd.f32 %v164, %v664
  %v666 = vpop.f32.mrb[0].mxu0
  %v667 = vpop.f32.mrb[0].mxu0
  %v668 = vadd.f32 %v164, %v667
  %v669 = vpop.f32.mrb[0].mxu0
  %670 = vmatprep.mubr.bf16.mxu0 %v223
  %671 = vmatmul.mubr.bf16.gmra.mrb[0].mxu0 %v222
  %v672 = vpop.f32.mrb[0].mxu0
  %v673 = vadd.f32 %v164, %v672
  %v674 = vpop.f32.mrb[0].mxu0
  %v675 = vpop.f32.mrb[0].mxu0
  %v676 = vadd.f32 %v164, %v675
  %v677 = vpop.f32.mrb[0].mxu0
  %678 = vdwg.mxu0
  %679 = vmatprep.subr.bf16.mxu0 0
  %680 = vmatpush1.bf16.msra.mxu0 %v518
  %681 = vmatprep.subr.bf16.mxu0 0
  %682 = vmatpush1.bf16.msra.mxu0 %v519
  %683 = vmatprep.subr.bf16.mxu0 0
  %684 = vmatpush1.bf16.msra.mxu0 %v520
  %685 = vmatprep.subr.bf16.mxu0 0
  %686 = vmatpush1.bf16.msra.mxu0 %v521
  %687 = vmatprep.subr.bf16.mxu0 0
  %688 = vmatpush1.bf16.msra.mxu0 %v522
  %689 = vmatprep.subr.bf16.mxu0 0
  %690 = vmatpush1.bf16.msra.mxu0 %v523
  %691 = vmatprep.subr.bf16.mxu0 0
  %692 = vmatpush1.bf16.msra.mxu0 %v524
  %693 = vmatprep.subr.bf16.mxu0 0
  %694 = vmatpush1.bf16.msra.mxu0 %v525
  %695 = vmatprep.subr.bf16.mxu0 0
  %696 = vmatpush1.bf16.msra.mxu0 %v526
  %697 = vmatprep.subr.bf16.mxu0 0
  %698 = vmatpush1.bf16.msra.mxu0 %v527
  %699 = vmatprep.subr.bf16.mxu0 0
  %700 = vmatpush1.bf16.msra.mxu0 %v528
  %701 = vmatprep.subr.bf16.mxu0 0
  %702 = vmatpush1.bf16.msra.mxu0 %v529
  %703 = vmatprep.subr.bf16.mxu0 0
  %704 = vmatpush1.bf16.msra.mxu0 %v530
  %705 = vmatprep.subr.bf16.mxu0 0
  %706 = vmatpush1.bf16.msra.mxu0 %v531
  %707 = vmatprep.subr.bf16.mxu0 0
  %708 = vmatpush1.bf16.msra.mxu0 %v532
  %709 = vmatprep.subr.bf16.mxu0 0
  %710 = vmatpush1.bf16.msra.mxu0 %v533
  %711 = vmatprep.mubr.bf16.mxu0 %v217
  %712 = vmatmul.mubr.bf16.gmra.mrb[0].mxu0 %v216
  %v713 = vpop.f32.mrb[0].mxu0
  %v714 = vadd.f32 %v665, %v713
  %v715 = vpop.f32.mrb[0].mxu0
  %v716 = vpop.f32.mrb[0].mxu0
  %v717 = vadd.f32 %v668, %v716
  %v718 = vpop.f32.mrb[0].mxu0
  %719 = vmatprep.mubr.bf16.mxu0 %v225
  %720 = vmatmul.mubr.bf16.gmra.mrb[0].mxu0 %v224
  %v721 = vpop.f32.mrb[0].mxu0
  %v722 = vadd.f32 %v673, %v721
  %v723 = vpop.f32.mrb[0].mxu0
  %v724 = vpop.f32.mrb[0].mxu0
  %v725 = vadd.f32 %v676, %v724
  %v726 = vpop.f32.mrb[0].mxu0
  %727 = vdwg.mxu0
  %728 = vmatprep.subr.bf16.mxu0 0
  %729 = vmatpush1.bf16.msra.mxu0 %v534
  %730 = vmatprep.subr.bf16.mxu0 0
  %731 = vmatpush1.bf16.msra.mxu0 %v535
  %732 = vmatprep.subr.bf16.mxu0 0
  %733 = vmatpush1.bf16.msra.mxu0 %v536
  %734 = vmatprep.subr.bf16.mxu0 0
  %735 = vmatpush1.bf16.msra.mxu0 %v537
  %736 = vmatprep.subr.bf16.mxu0 0
  %737 = vmatpush1.bf16.msra.mxu0 %v538
  %738 = vmatprep.subr.bf16.mxu0 0
  %739 = vmatpush1.bf16.msra.mxu0 %v539
  %740 = vmatprep.subr.bf16.mxu0 0
  %741 = vmatpush1.bf16.msra.mxu0 %v540
  %742 = vmatprep.subr.bf16.mxu0 0
  %743 = vmatpush1.bf16.msra.mxu0 %v541
  %744 = vmatprep.subr.bf16.mxu0 0
  %745 = vmatpush1.bf16.msra.mxu0 %v542
  %746 = vmatprep.subr.bf16.mxu0 0
  %747 = vmatpush1.bf16.msra.mxu0 %v543
  %748 = vmatprep.subr.bf16.mxu0 0
  %749 = vmatpush1.bf16.msra.mxu0 %v544
  %750 = vmatprep.subr.bf16.mxu0 0
  %751 = vmatpush1.bf16.msra.mxu0 %v545
  %752 = vmatprep.subr.bf16.mxu0 0
  %753 = vmatpush1.bf16.msra.mxu0 %v546
  %754 = vmatprep.subr.bf16.mxu0 0
  %755 = vmatpush1.bf16.msra.mxu0 %v547
  %756 = vmatprep.subr.bf16.mxu0 0
  %757 = vmatpush1.bf16.msra.mxu0 %v548
  %758 = vmatprep.subr.bf16.mxu0 0
  %759 = vmatpush1.bf16.msra.mxu0 %v549
  %760 = vmatprep.mubr.bf16.mxu0 %v219
  %761 = vmatmul.mubr.bf16.gmra.mrb[0].mxu0 %v218
  %v762 = vpop.f32.mrb[0].mxu0
  %v763 = vadd.f32 %v714, %v762
  %v764 = vpop.f32.mrb[0].mxu0
  %v765 = vpop.f32.mrb[0].mxu0
  %v766 = vadd.f32 %v717, %v765
  %v767 = vpop.f32.mrb[0].mxu0
  %768 = vmatprep.mubr.bf16.mxu0 %v227
  %769 = vmatmul.mubr.bf16.gmra.mrb[0].mxu0 %v226
  %v770 = vpop.f32.mrb[0].mxu0
  %v771 = vadd.f32 %v722, %v770
  %v772 = vpop.f32.mrb[0].mxu0
  %v773 = vpop.f32.mrb[0].mxu0
  %v774 = vadd.f32 %v725, %v773
  %v775 = vpop.f32.mrb[0].mxu0
  %776 = vdwg.mxu0
  %777 = vmatprep.subr.bf16.mxu0 0
  %778 = vmatpush1.bf16.msra.mxu0 %v550
  %779 = vmatprep.subr.bf16.mxu0 0
  %780 = vmatpush1.bf16.msra.mxu0 %v551
  %781 = vmatprep.subr.bf16.mxu0 0
  %782 = vmatpush1.bf16.msra.mxu0 %v552
  %783 = vmatprep.subr.bf16.mxu0 0
  %784 = vmatpush1.bf16.msra.mxu0 %v553
  %785 = vmatprep.subr.bf16.mxu0 0
  %786 = vmatpush1.bf16.msra.mxu0 %v554
  %787 = vmatprep.subr.bf16.mxu0 0
  %788 = vmatpush1.bf16.msra.mxu0 %v555
  %789 = vmatprep.subr.bf16.mxu0 0
  %790 = vmatpush1.bf16.msra.mxu0 %v556
  %791 = vmatprep.subr.bf16.mxu0 0
  %792 = vmatpush1.bf16.msra.mxu0 %v557
  %793 = vmatprep.subr.bf16.mxu0 0
  %794 = vmatpush1.bf16.msra.mxu0 %v558
  %795 = vmatprep.subr.bf16.mxu0 0
  %796 = vmatpush1.bf16.msra.mxu0 %v559
  %797 = vmatprep.subr.bf16.mxu0 0
  %798 = vmatpush1.bf16.msra.mxu0 %v560
  %799 = vmatprep.subr.bf16.mxu0 0
  %800 = vmatpush1.bf16.msra.mxu0 %v561
  %801 = vmatprep.subr.bf16.mxu0 0
  %802 = vmatpush1.bf16.msra.mxu0 %v562
  %803 = vmatprep.subr.bf16.mxu0 0
  %804 = vmatpush1.bf16.msra.mxu0 %v563
  %805 = vmatprep.subr.bf16.mxu0 0
  %806 = vmatpush1.bf16.msra.mxu0 %v564
  %807 = vmatprep.subr.bf16.mxu0 0
  %808 = vmatpush1.bf16.msra.mxu0 %v565
  %809 = vmatprep.mubr.bf16.mxu0 %v221
  %810 = vmatmul.mubr.bf16.gmra.mrb[0].mxu0 %v220
  %v811 = vpop.f32.mrb[0].mxu0
  %v812 = vadd.f32 %v763, %v811
  %v813 = vpop.f32.mrb[0].mxu0
  %v814 = vpop.f32.mrb[0].mxu0
  %v815 = vadd.f32 %v766, %v814
  %v816 = vpop.f32.mrb[0].mxu0
  %817 = vmatprep.mubr.bf16.mxu0 %v229
  %818 = vmatmul.mubr.bf16.gmra.mrb[0].mxu0 %v228
  %v819 = vpop.f32.mrb[0].mxu0
  %v820 = vadd.f32 %v771, %v819
  %v821 = vpop.f32.mrb[0].mxu0
  %v822 = vpop.f32.mrb[0].mxu0
  %v823 = vadd.f32 %v774, %v822
  %v824 = vpop.f32.mrb[0].mxu0
  %825 = vdwg.mxu0
  %v826 = vmax.f32 %v812, 0.0
  %v827 = vmax.f32 %v815, 0.0
  %v828 = vmax.f32 %v820, 0.0
  %v829 = vmax.f32 %v823, 0.0
  %v830 = vpack.c.bf16 %v827, %v826
  %v831 = vpack.c.bf16 %v829, %v828
  %v834 = vunpack.c.l.b16 %v830
  %v835 = vunpack.c.h.b16 %v830
  %v836 = vunpack.c.l.b16 %v831
  %v837 = vunpack.c.h.b16 %v831
  %v838 = vpack.c.b16 %v834, %v834
  %v839 = vpack.c.b16 %v835, %v835
  %v840 = vpack.c.b16 %v836, %v836
  %v841 = vpack.c.b16 %v837, %v837
  %846 = vst [vmem:[%s3] sm:$0xf] %v838
  %847 = vst [vmem:[%s3 + $0x4] sm:$0xf] %v839
  %848 = vst [vmem:[%s3 + $0x8] sm:$0xf] %v840
  %849 = vst [vmem:[%s3 + $0xc] sm:$0xf] %v841
  // Predicated region
  $region14: #{generator_forward.7} parent=0 // pred_check
    _
  $region15: #{generator_forward.7} parent=0 // pred_check_branch
    %851 = sbr.rel (0) target = $region17
  $region16: #{generator_forward.7} parent=0 // pred_region
    _
  $region17: #{generator_forward.7} parent=0 // pred_fallthru
    _
  // Predicated region
  $region18: #{generator_forward.7} parent=0 // pred_check
    _
  $region19: #{generator_forward.7} parent=0 // pred_check_branch
    %853 = sbr.rel (0) target = $region21
  $region20: #{generator_forward.7} parent=0 // pred_region
    _
  $region21: #{generator_forward.7} parent=0 // pred_fallthru
    _

// kernel: generator_forward.8
$region0: #{generator_forward.8}
  #allocation0 [shape = 'u32[]', space=smem, size = 0x4, offset = 0x4, fixed_abs, tag = 'smem constant byte address 0x4 - core index']
  #allocation1 [shape = 'u32[144,128]{1,0:T(1,128)}', space=vmem, size = 0x12000, scoped, tag = 'internal scratch']
  %s0 = inlined_call_operand.vmem [shape: bf16[8,2048], index: 0, kind: input, shape index: {}]
  %s1 = inlined_call_operand.vmem [shape: bf16[2048,256], index: 1, kind: input, shape index: {}]
  %s2 = inlined_call_operand.vmem [shape: f32[1,256], index: 2, kind: input, shape index: {}]
  %s3 = inlined_call_operand.vmem [shape: bf16[8,256], index: 3, kind: output, shape index: {}]
  %s4 = sld [smem:[#allocation0]]
  $region86: #{generator_forward.8} parent=0
    _
  %s6 = ssub.s32 1, %s4
  %s7 = scalar_select 0, %s6, %s4
  $region1: #{generator_forward.8} parent=0
    #allocation2 [shape = 'u8[1048576]{0}', space=vmem, size = 0x100000, scoped, tag = 'input window, operand 1']
    loop: start=0, step=1, limit=4
    $region2: #{generator_forward.8} parent=1 // loop_pre_header
      _
    $region3: #{generator_forward.8} parent=1 // loop_header
      %s9 = sphi 0, %s13
      %p10 = scmp.ge.s32.totalorder %s9, 4
      %s16 = sphi 0, %s28
      %s17 = sphi 0, %s24
      %s18 = sphi 0, %s16
      %s19 = sphi 0, %s17
      %s20 = sphi 0, %s18
      %s21 = sphi 0, %s19
      %s31 = sphi 0, %s33
      %s34 = sphi 0, %s31
      %s35 = sphi 0, %s34
      %s51 = sphi 0, %s35
      %s57 = sphi 0, %s59
      %s60 = sphi 0, %s57
      %s61 = sphi 0, %s60
      %s77 = sphi 0, %s61
      %s83 = sphi 0, %s85
      %s86 = sphi 0, %s83
      %s87 = sphi 0, %s86
      %s103 = sphi 0, %s87
      %s111 = sphi 0, %s113
      %s114 = sphi 0, %s111
      %s115 = sphi 0, %s114
      %s131 = sphi 0, %s115
    $region4: #{generator_forward.8} parent=1 // loop_header_branch
      %12 = sbr.rel (%p10) target = $region8
    $region5: #{generator_forward.8} parent=1 // loop_body
      %s14 = ssub.s32 %s9, 1
      %s15 = ssub.s32 %s9, 2
      %s22 = sadd.s32 1, %s17
      %p23 = scmp.ge.s32.totalorder %s22, 2
      %s24 = scalar_select %p23, 0, %s22
      %s25 = sadd.s32 1, %s16
      %s26 = scalar_select %p23, %s25, %s16
      %p27 = scmp.ge.s32.totalorder %s26, 1
      %s28 = scalar_select %p27, 0, %s26
      %s29 = ssub.s32 %s16, %s28
      %p30 = scmp.eq.s32.totalorder %s29, 0
      %s32 = sadd.s32 %s31, 1
      %s33 = scalar_select %p30, %s31, %s32
      %p36 = pneg %p30
      %p37 = scmp.eq.s32.totalorder %s9, 1
      %p38 = por %p36, %p37
      %p39 = scmp.ne.s32.totalorder %s31, %s34
      %p40 = scmp.eq.s32.totalorder %s9, 0
      %p41 = por %p39, %p40
      %p42 = scmp.ne.s32.totalorder %s31, %s34
      %p43 = scmp.eq.s32.totalorder %s14, 1
      %p44 = por %p42, %p43
      %p45 = scmp.ne.s32.totalorder %s34, %s35
      %p46 = scmp.eq.s32.totalorder %s14, 0
      %p47 = por %p45, %p46
      %p48 = scmp.ne.s32.totalorder %s34, %s35
      %p49 = scmp.eq.s32.totalorder %s15, 1
      %p50 = por %p48, %p49
      %p52 = scmp.ne.s32.totalorder %s35, %s51
      %p53 = scmp.eq.s32.totalorder %s15, 0
      %p54 = por %p52, %p53
      %s55 = ssub.s32 %s17, %s24
      %p56 = scmp.eq.s32.totalorder %s55, 0
      %s58 = sadd.s32 %s57, 1
      %s59 = scalar_select %p56, %s57, %s58
      %p62 = pneg %p56
      %p63 = scmp.eq.s32.totalorder %s9, 1
      %p64 = por %p62, %p63
      %p65 = scmp.ne.s32.totalorder %s57, %s60
      %p66 = scmp.eq.s32.totalorder %s9, 0
      %p67 = por %p65, %p66
      %p68 = scmp.ne.s32.totalorder %s57, %s60
      %p69 = scmp.eq.s32.totalorder %s14, 1
      %p70 = por %p68, %p69
      %p71 = scmp.ne.s32.totalorder %s60, %s61
      %p72 = scmp.eq.s32.totalorder %s14, 0
      %p73 = por %p71, %p72
      %p74 = scmp.ne.s32.totalorder %s60, %s61
      %p75 = scmp.eq.s32.totalorder %s15, 1
      %p76 = por %p74, %p75
      %p78 = scmp.ne.s32.totalorder %s61, %s77
      %p79 = scmp.eq.s32.totalorder %s15, 0
      %p80 = por %p78, %p79
      %s81 = ssub.s32 %s17, %s24
      %p82 = scmp.eq.s32.totalorder %s81, 0
      %s84 = sadd.s32 %s83, 1
      %s85 = scalar_select %p82, %s83, %s84
      %p88 = pneg %p82
      %p89 = scmp.eq.s32.totalorder %s9, 1
      %p90 = por %p88, %p89
      %p91 = scmp.ne.s32.totalorder %s83, %s86
      %p92 = scmp.eq.s32.totalorder %s9, 0
      %p93 = por %p91, %p92
      %p94 = scmp.ne.s32.totalorder %s83, %s86
      %p95 = scmp.eq.s32.totalorder %s14, 1
      %p96 = por %p94, %p95
      %p97 = scmp.ne.s32.totalorder %s86, %s87
      %p98 = scmp.eq.s32.totalorder %s14, 0
      %p99 = por %p97, %p98
      %p100 = scmp.ne.s32.totalorder %s86, %s87
      %p101 = scmp.eq.s32.totalorder %s15, 1
      %p102 = por %p100, %p101
      %p104 = scmp.ne.s32.totalorder %s87, %s103
      %p105 = scmp.eq.s32.totalorder %s15, 0
      %p106 = por %p104, %p105
      %s107 = ssub.s32 %s16, %s28
      %s108 = ssub.s32 %s17, %s24
      %s109 = sor.u32 %s107, %s108
      %p110 = scmp.eq.s32.totalorder %s109, 0
      %s112 = sadd.s32 %s111, 1
      %s113 = scalar_select %p110, %s111, %s112
      %p116 = pneg %p110
      %p117 = scmp.eq.s32.totalorder %s9, 1
      %p118 = por %p116, %p117
      %p119 = scmp.ne.s32.totalorder %s111, %s114
      %p120 = scmp.eq.s32.totalorder %s9, 0
      %p121 = por %p119, %p120
      %p122 = scmp.ne.s32.totalorder %s111, %s114
      %p123 = scmp.eq.s32.totalorder %s14, 1
      %p124 = por %p122, %p123
      %p125 = scmp.ne.s32.totalorder %s114, %s115
      %p126 = scmp.eq.s32.totalorder %s14, 0
      %p127 = por %p125, %p126
      %p128 = scmp.ne.s32.totalorder %s114, %s115
      %p129 = scmp.eq.s32.totalorder %s15, 1
      %p130 = por %p128, %p129
      %p132 = scmp.ne.s32.totalorder %s115, %s131
      %p133 = scmp.eq.s32.totalorder %s15, 0
      %p134 = por %p132, %p133
      %p135 = scmp.le.s32.totalorder 1, %s9
      %p136 = scmp.lt.s32.totalorder %s9, 3
      %p137 = pnand %p135, %p136
      %p138 = pneg %p137
      // Predicated region
      $region9: #{generator_forward.8} parent=5 // pred_check
        _
      $region10: #{generator_forward.8} parent=5 // pred_check_branch
        %140 = sbr.rel (%p137) target = $region12
      $region11: #{generator_forward.8} parent=5 // pred_region
        %s141 = ssub.s32 %s9, 1
        // Predicated region
        $region13: #{generator_forward.8} parent=11 // pred_check
          %p142 = pneg %p47
        $region14: #{generator_forward.8} parent=11 // pred_check_branch
          %144 = sbr.rel (%p142) target = $region16
        $region15: #{generator_forward.8} parent=11 // pred_region
          %p145 = scmp.lt.s32.totalorder %s18, 0
          %s146 = scalar_select %p145, %s18, 0
          %s147 = smul.addr %s146, 16
          %s148 = smul.addr %s147, 4
          %s149 = scalar_lea.vmem %s0, %s148
        $region16: #{generator_forward.8} parent=11 // pred_fallthru
          _
      $region12: #{generator_forward.8} parent=5 // pred_fallthru
        _
      %p150 = scmp.lt.s32.totalorder %s9, 2
      // Predicated region
      $region17: #{generator_forward.8} parent=5 // pred_check
        %p151 = pneg %p150
      $region18: #{generator_forward.8} parent=5 // pred_check_branch
        %153 = sbr.rel (%p151) target = $region20
      $region19: #{generator_forward.8} parent=5 // pred_region
        // Predicated region
        $region21: #{generator_forward.8} parent=19 // pred_check
          %p154 = pneg %p67
        $region22: #{generator_forward.8} parent=19 // pred_check_branch
          %156 = sbr.rel (%p154) target = $region24
        $region23: #{generator_forward.8} parent=19 // pred_region
          %s157 = sand.u32 %s57, 1
          %s158 = sand.u32 %s57, 1
          %s159 = smul.addr %s158, 1024
          %s160 = scalar_lea.vmem [#allocation2], %s159
          %s161 = smul.addr %s17, 4
          %s162 = scalar_lea.vmem %s1, %s161
          // Predicated region
          $region25: #{generator_forward.8} parent=23 // pred_check
            _
          $region26: #{generator_forward.8} parent=23 // pred_check_branch
            %164 = sbr.rel (0) target = $region28
          $region27: #{generator_forward.8} parent=23 // pred_region
            // Predicated region
            $region29: #{generator_forward.8} parent=27 // pred_check
              _
            $region30: #{generator_forward.8} parent=27 // pred_check_branch
              %166 = sbr.rel target = $region32
            $region31: #{generator_forward.8} parent=27 // pred_region
              // Predicated region
              $region44: #{generator_forward.8} parent=31 // pred_check
                _
              $region45: #{generator_forward.8} parent=31 // pred_check_branch
                %691 = sbr.rel (0) target = $region47
              $region46: #{generator_forward.8} parent=31 // pred_region
                loop: start=0, step=1, limit=1
                $region48: #{generator_forward.8} parent=46 // loop_pre_header
                  _
                $region49: #{generator_forward.8} parent=46 // loop_header
                  %s693 = sphi 0, %s697
                  %p694 = scmp.ge.s32.totalorder %s693, 1
                  %s698 = sphi %s162, %s162
                  %s699 = sphi %s160, %s160
                $region50: #{generator_forward.8} parent=46 // loop_header_branch
                  %696 = sbr.rel (%p694) target = $region54
                $region51: #{generator_forward.8} parent=46 // loop_body
                  _
                $region52: #{generator_forward.8} parent=46 // loop_footer
                  %s697 = sadd.s32 1, %s693
                $region53: #{generator_forward.8} parent=46 // loop_footer_branch
                  %692 = sbr.rel target = $region49
                $region54: #{generator_forward.8} parent=46 // loop_exit
                  _
                loop: start=0, step=1, limit=1
                $region55: #{generator_forward.8} parent=46 // loop_pre_header
                  _
                $region56: #{generator_forward.8} parent=46 // loop_header
                  %s702 = sphi 0, %s706
                  %p703 = scmp.ge.s32.totalorder %s702, 1
                  %s707 = sphi %s162, %s162
                  %s708 = sphi %s160, %s160
                $region57: #{generator_forward.8} parent=46 // loop_header_branch
                  %705 = sbr.rel (%p703) target = $region61
                $region58: #{generator_forward.8} parent=46 // loop_body
                  %v709 = vld [vmem:[%s707] sm:$0xf]
                  %710 = vst [vmem:[%s708] sm:$0xf] %v709
                  %v711 = vld [vmem:[%s707 + $0x8] sm:$0xf]
                  %712 = vst [vmem:[%s708 + $0x4] sm:$0xf] %v711
                  %v713 = vld [vmem:[%s707 + $0x10] sm:$0xf]
                  %714 = vst [vmem:[%s708 + $0x8] sm:$0xf] %v713
                  %v715 = vld [vmem:[%s707 + $0x18] sm:$0xf]
                  %716 = vst [vmem:[%s708 + $0xc] sm:$0xf] %v715
                  %v717 = vld [vmem:[%s707 + $0x20] sm:$0xf]
                  %718 = vst [vmem:[%s708 + $0x10] sm:$0xf] %v717
                  %v719 = vld [vmem:[%s707 + $0x28] sm:$0xf]
                  %720 = vst [vmem:[%s708 + $0x14] sm:$0xf] %v719
                  %v721 = vld [vmem:[%s707 + $0x30] sm:$0xf]
                  %722 = vst [vmem:[%s708 + $0x18] sm:$0xf] %v721
                  %v723 = vld [vmem:[%s707 + $0x38] sm:$0xf]
                  %724 = vst [vmem:[%s708 + $0x1c] sm:$0xf] %v723
                  %v725 = vld [vmem:[%s707 + $0x40] sm:$0xf]
                  %726 = vst [vmem:[%s708 + $0x20] sm:$0xf] %v725
                  %v727 = vld [vmem:[%s707 + $0x48] sm:$0xf]
                  %728 = vst [vmem:[%s708 + $0x24] sm:$0xf] %v727
                  %v729 = vld [vmem:[%s707 + $0x50] sm:$0xf]
                  %730 = vst [vmem:[%s708 + $0x28] sm:$0xf] %v729
                  %v731 = vld [vmem:[%s707 + $0x58] sm:$0xf]
                  %732 = vst [vmem:[%s708 + $0x2c] sm:$0xf] %v731
                  %v733 = vld [vmem:[%s707 + $0x60] sm:$0xf]
                  %734 = vst [vmem:[%s708 + $0x30] sm:$0xf] %v733
                  %v735 = vld [vmem:[%s707 + $0x68] sm:$0xf]
                  %736 = vst [vmem:[%s708 + $0x34] sm:$0xf] %v735
                  %v737 = vld [vmem:[%s707 + $0x70] sm:$0xf]
                  %738 = vst [vmem:[%s708 + $0x38] sm:$0xf] %v737
                  %v739 = vld [vmem:[%s707 + $0x78] sm:$0xf]
                  %740 = vst [vmem:[%s708 + $0x3c] sm:$0xf] %v739
                  %v741 = vld [vmem:[%s707 + $0x80] sm:$0xf]
                  %742 = vst [vmem:[%s708 + $0x40] sm:$0xf] %v741
                  %v743 = vld [vmem:[%s707 + $0x88] sm:$0xf]
                  %744 = vst [vmem:[%s708 + $0x44] sm:$0xf] %v743
                  %v745 = vld [vmem:[%s707 + $0x90] sm:$0xf]
                  %746 = vst [vmem:[%s708 + $0x48] sm:$0xf] %v745
                  %v747 = vld [vmem:[%s707 + $0x98] sm:$0xf]
                  %748 = vst [vmem:[%s708 + $0x4c] sm:$0xf] %v747
                  %v749 = vld [vmem:[%s707 + $0xa0] sm:$0xf]
                  %750 = vst [vmem:[%s708 + $0x50] sm:$0xf] %v749
                  %v751 = vld [vmem:[%s707 + $0xa8] sm:$0xf]
                  %752 = vst [vmem:[%s708 + $0x54] sm:$0xf] %v751
                  %v753 = vld [vmem:[%s707 + $0xb0] sm:$0xf]
                  %754 = vst [vmem:[%s708 + $0x58] sm:$0xf] %v753
                  %v755 = vld [vmem:[%s707 + $0xb8] sm:$0xf]
                  %756 = vst [vmem:[%s708 + $0x5c] sm:$0xf] %v755
                  %v757 = vld [vmem:[%s707 + $0xc0] sm:$0xf]
                  %758 = vst [vmem:[%s708 + $0x60] sm:$0xf] %v757
                  %v759 = vld [vmem:[%s707 + $0xc8] sm:$0xf]
                  %760 = vst [vmem:[%s708 + $0x64] sm:$0xf] %v759
                  %v761 = vld [vmem:[%s707 + $0xd0] sm:$0xf]
                  %762 = vst [vmem:[%s708 + $0x68] sm:$0xf] %v761
                  %v763 = vld [vmem:[%s707 + $0xd8] sm:$0xf]
                  %764 = vst [vmem:[%s708 + $0x6c] sm:$0xf] %v763
                  %v765 = vld [vmem:[%s707 + $0xe0] sm:$0xf]
                  %766 = vst [vmem:[%s708 + $0x70] sm:$0xf] %v765
                  %v767 = vld [vmem:[%s707 + $0xe8] sm:$0xf]
                  %768 = vst [vmem:[%s708 + $0x74] sm:$0xf] %v767
                  %v769 = vld [vmem:[%s707 + $0xf0] sm:$0xf]
                  %770 = vst [vmem:[%s708 + $0x78] sm:$0xf] %v769
                  %v771 = vld [vmem:[%s707 + $0xf8] sm:$0xf]
                  %772 = vst [vmem:[%s708 + $0x7c] sm:$0xf] %v771
                  %v773 = vld [vmem:[%s707 + $0x100] sm:$0xf]
                  %774 = vst [vmem:[%s708 + $0x80] sm:$0xf] %v773
                  %v775 = vld [vmem:[%s707 + $0x108] sm:$0xf]
                  %776 = vst [vmem:[%s708 + $0x84] sm:$0xf] %v775
                  %v777 = vld [vmem:[%s707 + $0x110] sm:$0xf]
                  %778 = vst [vmem:[%s708 + $0x88] sm:$0xf] %v777
                  %v779 = vld [vmem:[%s707 + $0x118] sm:$0xf]
                  %780 = vst [vmem:[%s708 + $0x8c] sm:$0xf] %v779
                  %v781 = vld [vmem:[%s707 + $0x120] sm:$0xf]
                  %782 = vst [vmem:[%s708 + $0x90] sm:$0xf] %v781
                  %v783 = vld [vmem:[%s707 + $0x128] sm:$0xf]
                  %784 = vst [vmem:[%s708 + $0x94] sm:$0xf] %v783
                  %v785 = vld [vmem:[%s707 + $0x130] sm:$0xf]
                  %786 = vst [vmem:[%s708 + $0x98] sm:$0xf] %v785
                  %v787 = vld [vmem:[%s707 + $0x138] sm:$0xf]
                  %788 = vst [vmem:[%s708 + $0x9c] sm:$0xf] %v787
                  %v789 = vld [vmem:[%s707 + $0x140] sm:$0xf]
                  %790 = vst [vmem:[%s708 + $0xa0] sm:$0xf] %v789
                  %v791 = vld [vmem:[%s707 + $0x148] sm:$0xf]
                  %792 = vst [vmem:[%s708 + $0xa4] sm:$0xf] %v791
                  %v793 = vld [vmem:[%s707 + $0x150] sm:$0xf]
                  %794 = vst [vmem:[%s708 + $0xa8] sm:$0xf] %v793
                  %v795 = vld [vmem:[%s707 + $0x158] sm:$0xf]
                  %796 = vst [vmem:[%s708 + $0xac] sm:$0xf] %v795
                  %v797 = vld [vmem:[%s707 + $0x160] sm:$0xf]
                  %798 = vst [vmem:[%s708 + $0xb0] sm:$0xf] %v797
                  %v799 = vld [vmem:[%s707 + $0x168] sm:$0xf]
                  %800 = vst [vmem:[%s708 + $0xb4] sm:$0xf] %v799
                  %v801 = vld [vmem:[%s707 + $0x170] sm:$0xf]
                  %802 = vst [vmem:[%s708 + $0xb8] sm:$0xf] %v801
                  %v803 = vld [vmem:[%s707 + $0x178] sm:$0xf]
                  %804 = vst [vmem:[%s708 + $0xbc] sm:$0xf] %v803
                  %v805 = vld [vmem:[%s707 + $0x180] sm:$0xf]
                  %806 = vst [vmem:[%s708 + $0xc0] sm:$0xf] %v805
                  %v807 = vld [vmem:[%s707 + $0x188] sm:$0xf]
                  %808 = vst [vmem:[%s708 + $0xc4] sm:$0xf] %v807
                  %v809 = vld [vmem:[%s707 + $0x190] sm:$0xf]
                  %810 = vst [vmem:[%s708 + $0xc8] sm:$0xf] %v809
                  %v811 = vld [vmem:[%s707 + $0x198] sm:$0xf]
                  %812 = vst [vmem:[%s708 + $0xcc] sm:$0xf] %v811
                  %v813 = vld [vmem:[%s707 + $0x1a0] sm:$0xf]
                  %814 = vst [vmem:[%s708 + $0xd0] sm:$0xf] %v813
                  %v815 = vld [vmem:[%s707 + $0x1a8] sm:$0xf]
                  %816 = vst [vmem:[%s708 + $0xd4] sm:$0xf] %v815
                  %v817 = vld [vmem:[%s707 + $0x1b0] sm:$0xf]
                  %818 = vst [vmem:[%s708 + $0xd8] sm:$0xf] %v817
                  %v819 = vld [vmem:[%s707 + $0x1b8] sm:$0xf]
                  %820 = vst [vmem:[%s708 + $0xdc] sm:$0xf] %v819
                  %v821 = vld [vmem:[%s707 + $0x1c0] sm:$0xf]
                  %822 = vst [vmem:[%s708 + $0xe0] sm:$0xf] %v821
                  %v823 = vld [vmem:[%s707 + $0x1c8] sm:$0xf]
                  %824 = vst [vmem:[%s708 + $0xe4] sm:$0xf] %v823
                  %v825 = vld [vmem:[%s707 + $0x1d0] sm:$0xf]
                  %826 = vst [vmem:[%s708 + $0xe8] sm:$0xf] %v825
                  %v827 = vld [vmem:[%s707 + $0x1d8] sm:$0xf]
                  %828 = vst [vmem:[%s708 + $0xec] sm:$0xf] %v827
                  %v829 = vld [vmem:[%s707 + $0x1e0] sm:$0xf]
                  %830 = vst [vmem:[%s708 + $0xf0] sm:$0xf] %v829
                  %v831 = vld [vmem:[%s707 + $0x1e8] sm:$0xf]
                  %832 = vst [vmem:[%s708 + $0xf4] sm:$0xf] %v831
                  %v833 = vld [vmem:[%s707 + $0x1f0] sm:$0xf]
                  %834 = vst [vmem:[%s708 + $0xf8] sm:$0xf] %v833
                  %v835 = vld [vmem:[%s707 + $0x1f8] sm:$0xf]
                  %836 = vst [vmem:[%s708 + $0xfc] sm:$0xf] %v835
                  %v837 = vld [vmem:[%s707 + $0x200] sm:$0xf]
                  %838 = vst [vmem:[%s708 + $0x100] sm:$0xf] %v837
                  %v839 = vld [vmem:[%s707 + $0x208] sm:$0xf]
                  %840 = vst [vmem:[%s708 + $0x104] sm:$0xf] %v839
                  %v841 = vld [vmem:[%s707 + $0x210] sm:$0xf]
                  %842 = vst [vmem:[%s708 + $0x108] sm:$0xf] %v841
                  %v843 = vld [vmem:[%s707 + $0x218] sm:$0xf]
                  %844 = vst [vmem:[%s708 + $0x10c] sm:$0xf] %v843
                  %v845 = vld [vmem:[%s707 + $0x220] sm:$0xf]
                  %846 = vst [vmem:[%s708 + $0x110] sm:$0xf] %v845
                  %v847 = vld [vmem:[%s707 + $0x228] sm:$0xf]
                  %848 = vst [vmem:[%s708 + $0x114] sm:$0xf] %v847
                  %v849 = vld [vmem:[%s707 + $0x230] sm:$0xf]
                  %850 = vst [vmem:[%s708 + $0x118] sm:$0xf] %v849
                  %v851 = vld [vmem:[%s707 + $0x238] sm:$0xf]
                  %852 = vst [vmem:[%s708 + $0x11c] sm:$0xf] %v851
                  %v853 = vld [vmem:[%s707 + $0x240] sm:$0xf]
                  %854 = vst [vmem:[%s708 + $0x120] sm:$0xf] %v853
                  %v855 = vld [vmem:[%s707 + $0x248] sm:$0xf]
                  %856 = vst [vmem:[%s708 + $0x124] sm:$0xf] %v855
                  %v857 = vld [vmem:[%s707 + $0x250] sm:$0xf]
                  %858 = vst [vmem:[%s708 + $0x128] sm:$0xf] %v857
                  %v859 = vld [vmem:[%s707 + $0x258] sm:$0xf]
                  %860 = vst [vmem:[%s708 + $0x12c] sm:$0xf] %v859
                  %v861 = vld [vmem:[%s707 + $0x260] sm:$0xf]
                  %862 = vst [vmem:[%s708 + $0x130] sm:$0xf] %v861
                  %v863 = vld [vmem:[%s707 + $0x268] sm:$0xf]
                  %864 = vst [vmem:[%s708 + $0x134] sm:$0xf] %v863
                  %v865 = vld [vmem:[%s707 + $0x270] sm:$0xf]
                  %866 = vst [vmem:[%s708 + $0x138] sm:$0xf] %v865
                  %v867 = vld [vmem:[%s707 + $0x278] sm:$0xf]
                  %868 = vst [vmem:[%s708 + $0x13c] sm:$0xf] %v867
                  %v869 = vld [vmem:[%s707 + $0x280] sm:$0xf]
                  %870 = vst [vmem:[%s708 + $0x140] sm:$0xf] %v869
                  %v871 = vld [vmem:[%s707 + $0x288] sm:$0xf]
                  %872 = vst [vmem:[%s708 + $0x144] sm:$0xf] %v871
                  %v873 = vld [vmem:[%s707 + $0x290] sm:$0xf]
                  %874 = vst [vmem:[%s708 + $0x148] sm:$0xf] %v873
                  %v875 = vld [vmem:[%s707 + $0x298] sm:$0xf]
                  %876 = vst [vmem:[%s708 + $0x14c] sm:$0xf] %v875
                  %v877 = vld [vmem:[%s707 + $0x2a0] sm:$0xf]
                  %878 = vst [vmem:[%s708 + $0x150] sm:$0xf] %v877
                  %v879 = vld [vmem:[%s707 + $0x2a8] sm:$0xf]
                  %880 = vst [vmem:[%s708 + $0x154] sm:$0xf] %v879
                  %v881 = vld [vmem:[%s707 + $0x2b0] sm:$0xf]
                  %882 = vst [vmem:[%s708 + $0x158] sm:$0xf] %v881
                  %v883 = vld [vmem:[%s707 + $0x2b8] sm:$0xf]
                  %884 = vst [vmem:[%s708 + $0x15c] sm:$0xf] %v883
                  %v885 = vld [vmem:[%s707 + $0x2c0] sm:$0xf]
                  %886 = vst [vmem:[%s708 + $0x160] sm:$0xf] %v885
                  %v887 = vld [vmem:[%s707 + $0x2c8] sm:$0xf]
                  %888 = vst [vmem:[%s708 + $0x164] sm:$0xf] %v887
                  %v889 = vld [vmem:[%s707 + $0x2d0] sm:$0xf]
                  %890 = vst [vmem:[%s708 + $0x168] sm:$0xf] %v889
                  %v891 = vld [vmem:[%s707 + $0x2d8] sm:$0xf]
                  %892 = vst [vmem:[%s708 + $0x16c] sm:$0xf] %v891
                  %v893 = vld [vmem:[%s707 + $0x2e0] sm:$0xf]
                  %894 = vst [vmem:[%s708 + $0x170] sm:$0xf] %v893
                  %v895 = vld [vmem:[%s707 + $0x2e8] sm:$0xf]
                  %896 = vst [vmem:[%s708 + $0x174] sm:$0xf] %v895
                  %v897 = vld [vmem:[%s707 + $0x2f0] sm:$0xf]
                  %898 = vst [vmem:[%s708 + $0x178] sm:$0xf] %v897
                  %v899 = vld [vmem:[%s707 + $0x2f8] sm:$0xf]
                  %900 = vst [vmem:[%s708 + $0x17c] sm:$0xf] %v899
                  %v901 = vld [vmem:[%s707 + $0x300] sm:$0xf]
                  %902 = vst [vmem:[%s708 + $0x180] sm:$0xf] %v901
                  %v903 = vld [vmem:[%s707 + $0x308] sm:$0xf]
                  %904 = vst [vmem:[%s708 + $0x184] sm:$0xf] %v903
                  %v905 = vld [vmem:[%s707 + $0x310] sm:$0xf]
                  %906 = vst [vmem:[%s708 + $0x188] sm:$0xf] %v905
                  %v907 = vld [vmem:[%s707 + $0x318] sm:$0xf]
                  %908 = vst [vmem:[%s708 + $0x18c] sm:$0xf] %v907
                  %v909 = vld [vmem:[%s707 + $0x320] sm:$0xf]
                  %910 = vst [vmem:[%s708 + $0x190] sm:$0xf] %v909
                  %v911 = vld [vmem:[%s707 + $0x328] sm:$0xf]
                  %912 = vst [vmem:[%s708 + $0x194] sm:$0xf] %v911
                  %v913 = vld [vmem:[%s707 + $0x330] sm:$0xf]
                  %914 = vst [vmem:[%s708 + $0x198] sm:$0xf] %v913
                  %v915 = vld [vmem:[%s707 + $0x338] sm:$0xf]
                  %916 = vst [vmem:[%s708 + $0x19c] sm:$0xf] %v915
                  %v917 = vld [vmem:[%s707 + $0x340] sm:$0xf]
                  %918 = vst [vmem:[%s708 + $0x1a0] sm:$0xf] %v917
                  %v919 = vld [vmem:[%s707 + $0x348] sm:$0xf]
                  %920 = vst [vmem:[%s708 + $0x1a4] sm:$0xf] %v919
                  %v921 = vld [vmem:[%s707 + $0x350] sm:$0xf]
                  %922 = vst [vmem:[%s708 + $0x1a8] sm:$0xf] %v921
                  %v923 = vld [vmem:[%s707 + $0x358] sm:$0xf]
                  %924 = vst [vmem:[%s708 + $0x1ac] sm:$0xf] %v923
                  %v925 = vld [vmem:[%s707 + $0x360] sm:$0xf]
                  %926 = vst [vmem:[%s708 + $0x1b0] sm:$0xf] %v925
                  %v927 = vld [vmem:[%s707 + $0x368] sm:$0xf]
                  %928 = vst [vmem:[%s708 + $0x1b4] sm:$0xf] %v927
                  %v929 = vld [vmem:[%s707 + $0x370] sm:$0xf]
                  %930 = vst [vmem:[%s708 + $0x1b8] sm:$0xf] %v929
                  %v931 = vld [vmem:[%s707 + $0x378] sm:$0xf]
                  %932 = vst [vmem:[%s708 + $0x1bc] sm:$0xf] %v931
                  %v933 = vld [vmem:[%s707 + $0x380] sm:$0xf]
                  %934 = vst [vmem:[%s708 + $0x1c0] sm:$0xf] %v933
                  %v935 = vld [vmem:[%s707 + $0x388] sm:$0xf]
                  %936 = vst [vmem:[%s708 + $0x1c4] sm:$0xf] %v935
                  %v937 = vld [vmem:[%s707 + $0x390] sm:$0xf]
                  %938 = vst [vmem:[%s708 + $0x1c8] sm:$0xf] %v937
                  %v939 = vld [vmem:[%s707 + $0x398] sm:$0xf]
                  %940 = vst [vmem:[%s708 + $0x1cc] sm:$0xf] %v939
                  %v941 = vld [vmem:[%s707 + $0x3a0] sm:$0xf]
                  %942 = vst [vmem:[%s708 + $0x1d0] sm:$0xf] %v941
                  %v943 = vld [vmem:[%s707 + $0x3a8] sm:$0xf]
                  %944 = vst [vmem:[%s708 + $0x1d4] sm:$0xf] %v943
                  %v945 = vld [vmem:[%s707 + $0x3b0] sm:$0xf]
                  %946 = vst [vmem:[%s708 + $0x1d8] sm:$0xf] %v945
                  %v947 = vld [vmem:[%s707 + $0x3b8] sm:$0xf]
                  %948 = vst [vmem:[%s708 + $0x1dc] sm:$0xf] %v947
                  %v949 = vld [vmem:[%s707 + $0x3c0] sm:$0xf]
                  %950 = vst [vmem:[%s708 + $0x1e0] sm:$0xf] %v949
                  %v951 = vld [vmem:[%s707 + $0x3c8] sm:$0xf]
                  %952 = vst [vmem:[%s708 + $0x1e4] sm:$0xf] %v951
                  %v953 = vld [vmem:[%s707 + $0x3d0] sm:$0xf]
                  %954 = vst [vmem:[%s708 + $0x1e8] sm:$0xf] %v953
                  %v955 = vld [vmem:[%s707 + $0x3d8] sm:$0xf]
                  %956 = vst [vmem:[%s708 + $0x1ec] sm:$0xf] %v955
                  %v957 = vld [vmem:[%s707 + $0x3e0] sm:$0xf]
                  %958 = vst [vmem:[%s708 + $0x1f0] sm:$0xf] %v957
                  %v959 = vld [vmem:[%s707 + $0x3e8] sm:$0xf]
                  %960 = vst [vmem:[%s708 + $0x1f4] sm:$0xf] %v959
                  %v961 = vld [vmem:[%s707 + $0x3f0] sm:$0xf]
                  %962 = vst [vmem:[%s708 + $0x1f8] sm:$0xf] %v961
                  %v963 = vld [vmem:[%s707 + $0x3f8] sm:$0xf]
                  %964 = vst [vmem:[%s708 + $0x1fc] sm:$0xf] %v963
                  %v965 = vld [vmem:[%s707 + $0x400] sm:$0xf]
                  %966 = vst [vmem:[%s708 + $0x200] sm:$0xf] %v965
                  %v967 = vld [vmem:[%s707 + $0x408] sm:$0xf]
                  %968 = vst [vmem:[%s708 + $0x204] sm:$0xf] %v967
                  %v969 = vld [vmem:[%s707 + $0x410] sm:$0xf]
                  %970 = vst [vmem:[%s708 + $0x208] sm:$0xf] %v969
                  %v971 = vld [vmem:[%s707 + $0x418] sm:$0xf]
                  %972 = vst [vmem:[%s708 + $0x20c] sm:$0xf] %v971
                  %v973 = vld [vmem:[%s707 + $0x420] sm:$0xf]
                  %974 = vst [vmem:[%s708 + $0x210] sm:$0xf] %v973
                  %v975 = vld [vmem:[%s707 + $0x428] sm:$0xf]
                  %976 = vst [vmem:[%s708 + $0x214] sm:$0xf] %v975
                  %v977 = vld [vmem:[%s707 + $0x430] sm:$0xf]
                  %978 = vst [vmem:[%s708 + $0x218] sm:$0xf] %v977
                  %v979 = vld [vmem:[%s707 + $0x438] sm:$0xf]
                  %980 = vst [vmem:[%s708 + $0x21c] sm:$0xf] %v979
                  %v981 = vld [vmem:[%s707 + $0x440] sm:$0xf]
                  %982 = vst [vmem:[%s708 + $0x220] sm:$0xf] %v981
                  %v983 = vld [vmem:[%s707 + $0x448] sm:$0xf]
                  %984 = vst [vmem:[%s708 + $0x224] sm:$0xf] %v983
                  %v985 = vld [vmem:[%s707 + $0x450] sm:$0xf]
                  %986 = vst [vmem:[%s708 + $0x228] sm:$0xf] %v985
                  %v987 = vld [vmem:[%s707 + $0x458] sm:$0xf]
                  %988 = vst [vmem:[%s708 + $0x22c] sm:$0xf] %v987
                  %v989 = vld [vmem:[%s707 + $0x460] sm:$0xf]
                  %990 = vst [vmem:[%s708 + $0x230] sm:$0xf] %v989
                  %v991 = vld [vmem:[%s707 + $0x468] sm:$0xf]
                  %992 = vst [vmem:[%s708 + $0x234] sm:$0xf] %v991
                  %v993 = vld [vmem:[%s707 + $0x470] sm:$0xf]
                  %994 = vst [vmem:[%s708 + $0x238] sm:$0xf] %v993
                  %v995 = vld [vmem:[%s707 + $0x478] sm:$0xf]
                  %996 = vst [vmem:[%s708 + $0x23c] sm:$0xf] %v995
                  %v997 = vld [vmem:[%s707 + $0x480] sm:$0xf]
                  %998 = vst [vmem:[%s708 + $0x240] sm:$0xf] %v997
                  %v999 = vld [vmem:[%s707 + $0x488] sm:$0xf]
                  %1000 = vst [vmem:[%s708 + $0x244] sm:$0xf] %v999
                  %v1001 = vld [vmem:[%s707 + $0x490] sm:$0xf]
                  %1002 = vst [vmem:[%s708 + $0x248] sm:$0xf] %v1001
                  %v1003 = vld [vmem:[%s707 + $0x498] sm:$0xf]
                  %1004 = vst [vmem:[%s708 + $0x24c] sm:$0xf] %v1003
                  %v1005 = vld [vmem:[%s707 + $0x4a0] sm:$0xf]
                  %1006 = vst [vmem:[%s708 + $0x250] sm:$0xf] %v1005
                  %v1007 = vld [vmem:[%s707 + $0x4a8] sm:$0xf]
                  %1008 = vst [vmem:[%s708 + $0x254] sm:$0xf] %v1007
                  %v1009 = vld [vmem:[%s707 + $0x4b0] sm:$0xf]
                  %1010 = vst [vmem:[%s708 + $0x258] sm:$0xf] %v1009
                  %v1011 = vld [vmem:[%s707 + $0x4b8] sm:$0xf]
                  %1012 = vst [vmem:[%s708 + $0x25c] sm:$0xf] %v1011
                  %v1013 = vld [vmem:[%s707 + $0x4c0] sm:$0xf]
                  %1014 = vst [vmem:[%s708 + $0x260] sm:$0xf] %v1013
                  %v1015 = vld [vmem:[%s707 + $0x4c8] sm:$0xf]
                  %1016 = vst [vmem:[%s708 + $0x264] sm:$0xf] %v1015
                  %v1017 = vld [vmem:[%s707 + $0x4d0] sm:$0xf]
                  %1018 = vst [vmem:[%s708 + $0x268] sm:$0xf] %v1017
                  %v1019 = vld [vmem:[%s707 + $0x4d8] sm:$0xf]
                  %1020 = vst [vmem:[%s708 + $0x26c] sm:$0xf] %v1019
                  %v1021 = vld [vmem:[%s707 + $0x4e0] sm:$0xf]
                  %1022 = vst [vmem:[%s708 + $0x270] sm:$0xf] %v1021
                  %v1023 = vld [vmem:[%s707 + $0x4e8] sm:$0xf]
                  %1024 = vst [vmem:[%s708 + $0x274] sm:$0xf] %v1023
                  %v1025 = vld [vmem:[%s707 + $0x4f0] sm:$0xf]
                  %1026 = vst [vmem:[%s708 + $0x278] sm:$0xf] %v1025
                  %v1027 = vld [vmem:[%s707 + $0x4f8] sm:$0xf]
                  %1028 = vst [vmem:[%s708 + $0x27c] sm:$0xf] %v1027
                  %v1029 = vld [vmem:[%s707 + $0x500] sm:$0xf]
                  %1030 = vst [vmem:[%s708 + $0x280] sm:$0xf] %v1029
                  %v1031 = vld [vmem:[%s707 + $0x508] sm:$0xf]
                  %1032 = vst [vmem:[%s708 + $0x284] sm:$0xf] %v1031
                  %v1033 = vld [vmem:[%s707 + $0x510] sm:$0xf]
                  %1034 = vst [vmem:[%s708 + $0x288] sm:$0xf] %v1033
                  %v1035 = vld [vmem:[%s707 + $0x518] sm:$0xf]
                  %1036 = vst [vmem:[%s708 + $0x28c] sm:$0xf] %v1035
                  %v1037 = vld [vmem:[%s707 + $0x520] sm:$0xf]
                  %1038 = vst [vmem:[%s708 + $0x290] sm:$0xf] %v1037
                  %v1039 = vld [vmem:[%s707 + $0x528] sm:$0xf]
                  %1040 = vst [vmem:[%s708 + $0x294] sm:$0xf] %v1039
                  %v1041 = vld [vmem:[%s707 + $0x530] sm:$0xf]
                  %1042 = vst [vmem:[%s708 + $0x298] sm:$0xf] %v1041
                  %v1043 = vld [vmem:[%s707 + $0x538] sm:$0xf]
                  %1044 = vst [vmem:[%s708 + $0x29c] sm:$0xf] %v1043
                  %v1045 = vld [vmem:[%s707 + $0x540] sm:$0xf]
                  %1046 = vst [vmem:[%s708 + $0x2a0] sm:$0xf] %v1045
                  %v1047 = vld [vmem:[%s707 + $0x548] sm:$0xf]
                  %1048 = vst [vmem:[%s708 + $0x2a4] sm:$0xf] %v1047
                  %v1049 = vld [vmem:[%s707 + $0x550] sm:$0xf]
                  %1050 = vst [vmem:[%s708 + $0x2a8] sm:$0xf] %v1049
                  %v1051 = vld [vmem:[%s707 + $0x558] sm:$0xf]
                  %1052 = vst [vmem:[%s708 + $0x2ac] sm:$0xf] %v1051
                  %v1053 = vld [vmem:[%s707 + $0x560] sm:$0xf]
                  %1054 = vst [vmem:[%s708 + $0x2b0] sm:$0xf] %v1053
                  %v1055 = vld [vmem:[%s707 + $0x568] sm:$0xf]
                  %1056 = vst [vmem:[%s708 + $0x2b4] sm:$0xf] %v1055
                  %v1057 = vld [vmem:[%s707 + $0x570] sm:$0xf]
                  %1058 = vst [vmem:[%s708 + $0x2b8] sm:$0xf] %v1057
                  %v1059 = vld [vmem:[%s707 + $0x578] sm:$0xf]
                  %1060 = vst [vmem:[%s708 + $0x2bc] sm:$0xf] %v1059
                  %v1061 = vld [vmem:[%s707 + $0x580] sm:$0xf]
                  %1062 = vst [vmem:[%s708 + $0x2c0] sm:$0xf] %v1061
                  %v1063 = vld [vmem:[%s707 + $0x588] sm:$0xf]
                  %1064 = vst [vmem:[%s708 + $0x2c4] sm:$0xf] %v1063
                  %v1065 = vld [vmem:[%s707 + $0x590] sm:$0xf]
                  %1066 = vst [vmem:[%s708 + $0x2c8] sm:$0xf] %v1065
                  %v1067 = vld [vmem:[%s707 + $0x598] sm:$0xf]
                  %1068 = vst [vmem:[%s708 + $0x2cc] sm:$0xf] %v1067
                  %v1069 = vld [vmem:[%s707 + $0x5a0] sm:$0xf]
                  %1070 = vst [vmem:[%s708 + $0x2d0] sm:$0xf] %v1069
                  %v1071 = vld [vmem:[%s707 + $0x5a8] sm:$0xf]
                  %1072 = vst [vmem:[%s708 + $0x2d4] sm:$0xf] %v1071
                  %v1073 = vld [vmem:[%s707 + $0x5b0] sm:$0xf]
                  %1074 = vst [vmem:[%s708 + $0x2d8] sm:$0xf] %v1073
                  %v1075 = vld [vmem:[%s707 + $0x5b8] sm:$0xf]
                  %1076 = vst [vmem:[%s708 + $0x2dc] sm:$0xf] %v1075
                  %v1077 = vld [vmem:[%s707 + $0x5c0] sm:$0xf]
                  %1078 = vst [vmem:[%s708 + $0x2e0] sm:$0xf] %v1077
                  %v1079 = vld [vmem:[%s707 + $0x5c8] sm:$0xf]
                  %1080 = vst [vmem:[%s708 + $0x2e4] sm:$0xf] %v1079
                  %v1081 = vld [vmem:[%s707 + $0x5d0] sm:$0xf]
                  %1082 = vst [vmem:[%s708 + $0x2e8] sm:$0xf] %v1081
                  %v1083 = vld [vmem:[%s707 + $0x5d8] sm:$0xf]
                  %1084 = vst [vmem:[%s708 + $0x2ec] sm:$0xf] %v1083
                  %v1085 = vld [vmem:[%s707 + $0x5e0] sm:$0xf]
                  %1086 = vst [vmem:[%s708 + $0x2f0] sm:$0xf] %v1085
                  %v1087 = vld [vmem:[%s707 + $0x5e8] sm:$0xf]
                  %1088 = vst [vmem:[%s708 + $0x2f4] sm:$0xf] %v1087
                  %v1089 = vld [vmem:[%s707 + $0x5f0] sm:$0xf]
                  %1090 = vst [vmem:[%s708 + $0x2f8] sm:$0xf] %v1089
                  %v1091 = vld [vmem:[%s707 + $0x5f8] sm:$0xf]
                  %1092 = vst [vmem:[%s708 + $0x2fc] sm:$0xf] %v1091
                  %v1093 = vld [vmem:[%s707 + $0x600] sm:$0xf]
                  %1094 = vst [vmem:[%s708 + $0x300] sm:$0xf] %v1093
                  %v1095 = vld [vmem:[%s707 + $0x608] sm:$0xf]
                  %1096 = vst [vmem:[%s708 + $0x304] sm:$0xf] %v1095
                  %v1097 = vld [vmem:[%s707 + $0x610] sm:$0xf]
                  %1098 = vst [vmem:[%s708 + $0x308] sm:$0xf] %v1097
                  %v1099 = vld [vmem:[%s707 + $0x618] sm:$0xf]
                  %1100 = vst [vmem:[%s708 + $0x30c] sm:$0xf] %v1099
                  %v1101 = vld [vmem:[%s707 + $0x620] sm:$0xf]
                  %1102 = vst [vmem:[%s708 + $0x310] sm:$0xf] %v1101
                  %v1103 = vld [vmem:[%s707 + $0x628] sm:$0xf]
                  %1104 = vst [vmem:[%s708 + $0x314] sm:$0xf] %v1103
                  %v1105 = vld [vmem:[%s707 + $0x630] sm:$0xf]
                  %1106 = vst [vmem:[%s708 + $0x318] sm:$0xf] %v1105
                  %v1107 = vld [vmem:[%s707 + $0x638] sm:$0xf]
                  %1108 = vst [vmem:[%s708 + $0x31c] sm:$0xf] %v1107
                  %v1109 = vld [vmem:[%s707 + $0x640] sm:$0xf]
                  %1110 = vst [vmem:[%s708 + $0x320] sm:$0xf] %v1109
                  %v1111 = vld [vmem:[%s707 + $0x648] sm:$0xf]
                  %1112 = vst [vmem:[%s708 + $0x324] sm:$0xf] %v1111
                  %v1113 = vld [vmem:[%s707 + $0x650] sm:$0xf]
                  %1114 = vst [vmem:[%s708 + $0x328] sm:$0xf] %v1113
                  %v1115 = vld [vmem:[%s707 + $0x658] sm:$0xf]
                  %1116 = vst [vmem:[%s708 + $0x32c] sm:$0xf] %v1115
                  %v1117 = vld [vmem:[%s707 + $0x660] sm:$0xf]
                  %1118 = vst [vmem:[%s708 + $0x330] sm:$0xf] %v1117
                  %v1119 = vld [vmem:[%s707 + $0x668] sm:$0xf]
                  %1120 = vst [vmem:[%s708 + $0x334] sm:$0xf] %v1119
                  %v1121 = vld [vmem:[%s707 + $0x670] sm:$0xf]
                  %1122 = vst [vmem:[%s708 + $0x338] sm:$0xf] %v1121
                  %v1123 = vld [vmem:[%s707 + $0x678] sm:$0xf]
                  %1124 = vst [vmem:[%s708 + $0x33c] sm:$0xf] %v1123
                  %v1125 = vld [vmem:[%s707 + $0x680] sm:$0xf]
                  %1126 = vst [vmem:[%s708 + $0x340] sm:$0xf] %v1125
                  %v1127 = vld [vmem:[%s707 + $0x688] sm:$0xf]
                  %1128 = vst [vmem:[%s708 + $0x344] sm:$0xf] %v1127
                  %v1129 = vld [vmem:[%s707 + $0x690] sm:$0xf]
                  %1130 = vst [vmem:[%s708 + $0x348] sm:$0xf] %v1129
                  %v1131 = vld [vmem:[%s707 + $0x698] sm:$0xf]
                  %1132 = vst [vmem:[%s708 + $0x34c] sm:$0xf] %v1131
                  %v1133 = vld [vmem:[%s707 + $0x6a0] sm:$0xf]
                  %1134 = vst [vmem:[%s708 + $0x350] sm:$0xf] %v1133
                  %v1135 = vld [vmem:[%s707 + $0x6a8] sm:$0xf]
                  %1136 = vst [vmem:[%s708 + $0x354] sm:$0xf] %v1135
                  %v1137 = vld [vmem:[%s707 + $0x6b0] sm:$0xf]
                  %1138 = vst [vmem:[%s708 + $0x358] sm:$0xf] %v1137
                  %v1139 = vld [vmem:[%s707 + $0x6b8] sm:$0xf]
                  %1140 = vst [vmem:[%s708 + $0x35c] sm:$0xf] %v1139
                  %v1141 = vld [vmem:[%s707 + $0x6c0] sm:$0xf]
                  %1142 = vst [vmem:[%s708 + $0x360] sm:$0xf] %v1141
                  %v1143 = vld [vmem:[%s707 + $0x6c8] sm:$0xf]
                  %1144 = vst [vmem:[%s708 + $0x364] sm:$0xf] %v1143
                  %v1145 = vld [vmem:[%s707 + $0x6d0] sm:$0xf]
                  %1146 = vst [vmem:[%s708 + $0x368] sm:$0xf] %v1145
                  %v1147 = vld [vmem:[%s707 + $0x6d8] sm:$0xf]
                  %1148 = vst [vmem:[%s708 + $0x36c] sm:$0xf] %v1147
                  %v1149 = vld [vmem:[%s707 + $0x6e0] sm:$0xf]
                  %1150 = vst [vmem:[%s708 + $0x370] sm:$0xf] %v1149
                  %v1151 = vld [vmem:[%s707 + $0x6e8] sm:$0xf]
                  %1152 = vst [vmem:[%s708 + $0x374] sm:$0xf] %v1151
                  %v1153 = vld [vmem:[%s707 + $0x6f0] sm:$0xf]
                  %1154 = vst [vmem:[%s708 + $0x378] sm:$0xf] %v1153
                  %v1155 = vld [vmem:[%s707 + $0x6f8] sm:$0xf]
                  %1156 = vst [vmem:[%s708 + $0x37c] sm:$0xf] %v1155
                  %v1157 = vld [vmem:[%s707 + $0x700] sm:$0xf]
                  %1158 = vst [vmem:[%s708 + $0x380] sm:$0xf] %v1157
                  %v1159 = vld [vmem:[%s707 + $0x708] sm:$0xf]
                  %1160 = vst [vmem:[%s708 + $0x384] sm:$0xf] %v1159
                  %v1161 = vld [vmem:[%s707 + $0x710] sm:$0xf]
                  %1162 = vst [vmem:[%s708 + $0x388] sm:$0xf] %v1161
                  %v1163 = vld [vmem:[%s707 + $0x718] sm:$0xf]
                  %1164 = vst [vmem:[%s708 + $0x38c] sm:$0xf] %v1163
                  %v1165 = vld [vmem:[%s707 + $0x720] sm:$0xf]
                  %1166 = vst [vmem:[%s708 + $0x390] sm:$0xf] %v1165
                  %v1167 = vld [vmem:[%s707 + $0x728] sm:$0xf]
                  %1168 = vst [vmem:[%s708 + $0x394] sm:$0xf] %v1167
                  %v1169 = vld [vmem:[%s707 + $0x730] sm:$0xf]
                  %1170 = vst [vmem:[%s708 + $0x398] sm:$0xf] %v1169
                  %v1171 = vld [vmem:[%s707 + $0x738] sm:$0xf]
                  %1172 = vst [vmem:[%s708 + $0x39c] sm:$0xf] %v1171
                  %v1173 = vld [vmem:[%s707 + $0x740] sm:$0xf]
                  %1174 = vst [vmem:[%s708 + $0x3a0] sm:$0xf] %v1173
                  %v1175 = vld [vmem:[%s707 + $0x748] sm:$0xf]
                  %1176 = vst [vmem:[%s708 + $0x3a4] sm:$0xf] %v1175
                  %v1177 = vld [vmem:[%s707 + $0x750] sm:$0xf]
                  %1178 = vst [vmem:[%s708 + $0x3a8] sm:$0xf] %v1177
                  %v1179 = vld [vmem:[%s707 + $0x758] sm:$0xf]
                  %1180 = vst [vmem:[%s708 + $0x3ac] sm:$0xf] %v1179
                  %v1181 = vld [vmem:[%s707 + $0x760] sm:$0xf]
                  %1182 = vst [vmem:[%s708 + $0x3b0] sm:$0xf] %v1181
                  %v1183 = vld [vmem:[%s707 + $0x768] sm:$0xf]
                  %1184 = vst [vmem:[%s708 + $0x3b4] sm:$0xf] %v1183
                  %v1185 = vld [vmem:[%s707 + $0x770] sm:$0xf]
                  %1186 = vst [vmem:[%s708 + $0x3b8] sm:$0xf] %v1185
                  %v1187 = vld [vmem:[%s707 + $0x778] sm:$0xf]
                  %1188 = vst [vmem:[%s708 + $0x3bc] sm:$0xf] %v1187
                  %v1189 = vld [vmem:[%s707 + $0x780] sm:$0xf]
                  %1190 = vst [vmem:[%s708 + $0x3c0] sm:$0xf] %v1189
                  %v1191 = vld [vmem:[%s707 + $0x788] sm:$0xf]
                  %1192 = vst [vmem:[%s708 + $0x3c4] sm:$0xf] %v1191
                  %v1193 = vld [vmem:[%s707 + $0x790] sm:$0xf]
                  %1194 = vst [vmem:[%s708 + $0x3c8] sm:$0xf] %v1193
                  %v1195 = vld [vmem:[%s707 + $0x798] sm:$0xf]
                  %1196 = vst [vmem:[%s708 + $0x3cc] sm:$0xf] %v1195
                  %v1197 = vld [vmem:[%s707 + $0x7a0] sm:$0xf]
                  %1198 = vst [vmem:[%s708 + $0x3d0] sm:$0xf] %v1197
                  %v1199 = vld [vmem:[%s707 + $0x7a8] sm:$0xf]
                  %1200 = vst [vmem:[%s708 + $0x3d4] sm:$0xf] %v1199
                  %v1201 = vld [vmem:[%s707 + $0x7b0] sm:$0xf]
                  %1202 = vst [vmem:[%s708 + $0x3d8] sm:$0xf] %v1201
                  %v1203 = vld [vmem:[%s707 + $0x7b8] sm:$0xf]
                  %1204 = vst [vmem:[%s708 + $0x3dc] sm:$0xf] %v1203
                  %v1205 = vld [vmem:[%s707 + $0x7c0] sm:$0xf]
                  %1206 = vst [vmem:[%s708 + $0x3e0] sm:$0xf] %v1205
                  %v1207 = vld [vmem:[%s707 + $0x7c8] sm:$0xf]
                  %1208 = vst [vmem:[%s708 + $0x3e4] sm:$0xf] %v1207
                  %v1209 = vld [vmem:[%s707 + $0x7d0] sm:$0xf]
                  %1210 = vst [vmem:[%s708 + $0x3e8] sm:$0xf] %v1209
                  %v1211 = vld [vmem:[%s707 + $0x7d8] sm:$0xf]
                  %1212 = vst [vmem:[%s708 + $0x3ec] sm:$0xf] %v1211
                  %v1213 = vld [vmem:[%s707 + $0x7e0] sm:$0xf]
                  %1214 = vst [vmem:[%s708 + $0x3f0] sm:$0xf] %v1213
                  %v1215 = vld [vmem:[%s707 + $0x7e8] sm:$0xf]
                  %1216 = vst [vmem:[%s708 + $0x3f4] sm:$0xf] %v1215
                  %v1217 = vld [vmem:[%s707 + $0x7f0] sm:$0xf]
                  %1218 = vst [vmem:[%s708 + $0x3f8] sm:$0xf] %v1217
                  %v1219 = vld [vmem:[%s707 + $0x7f8] sm:$0xf]
                  %1220 = vst [vmem:[%s708 + $0x3fc] sm:$0xf] %v1219
                $region59: #{generator_forward.8} parent=46 // loop_footer
                  %s706 = sadd.s32 1, %s702
                $region60: #{generator_forward.8} parent=46 // loop_footer_branch
                  %701 = sbr.rel target = $region56
                $region61: #{generator_forward.8} parent=46 // loop_exit
                  _
              $region47: #{generator_forward.8} parent=31 // pred_fallthru
                _
            $region32: #{generator_forward.8} parent=27 // pred_fallthru
              _
            // Predicated region
            $region33: #{generator_forward.8} parent=27 // pred_check
              _
            $region34: #{generator_forward.8} parent=27 // pred_check_branch
              %168 = sbr.rel (0) target = $region36
            $region35: #{generator_forward.8} parent=27 // pred_region
              loop: start=0, step=1, limit=1
              $region37: #{generator_forward.8} parent=35 // loop_pre_header
                _
              $region38: #{generator_forward.8} parent=35 // loop_header
                %s171 = sphi 0, %s175
                %p172 = scmp.ge.s32.totalorder %s171, 1
                %s176 = sphi %s162, %s162
                %s177 = sphi %s160, %s160
              $region39: #{generator_forward.8} parent=35 // loop_header_branch
                %174 = sbr.rel (%p172) target = $region43
              $region40: #{generator_forward.8} parent=35 // loop_body
                %v178 = vld [vmem:[%s176] sm:$0xf]
                %179 = vst [vmem:[%s177] sm:$0xf] %v178
                %v180 = vld [vmem:[%s176 + $0x8] sm:$0xf]
                %181 = vst [vmem:[%s177 + $0x4] sm:$0xf] %v180
                %v182 = vld [vmem:[%s176 + $0x10] sm:$0xf]
                %183 = vst [vmem:[%s177 + $0x8] sm:$0xf] %v182
                %v184 = vld [vmem:[%s176 + $0x18] sm:$0xf]
                %185 = vst [vmem:[%s177 + $0xc] sm:$0xf] %v184
                %v186 = vld [vmem:[%s176 + $0x20] sm:$0xf]
                %187 = vst [vmem:[%s177 + $0x10] sm:$0xf] %v186
                %v188 = vld [vmem:[%s176 + $0x28] sm:$0xf]
                %189 = vst [vmem:[%s177 + $0x14] sm:$0xf] %v188
                %v190 = vld [vmem:[%s176 + $0x30] sm:$0xf]
                %191 = vst [vmem:[%s177 + $0x18] sm:$0xf] %v190
                %v192 = vld [vmem:[%s176 + $0x38] sm:$0xf]
                %193 = vst [vmem:[%s177 + $0x1c] sm:$0xf] %v192
                %v194 = vld [vmem:[%s176 + $0x40] sm:$0xf]
                %195 = vst [vmem:[%s177 + $0x20] sm:$0xf] %v194
                %v196 = vld [vmem:[%s176 + $0x48] sm:$0xf]
                %197 = vst [vmem:[%s177 + $0x24] sm:$0xf] %v196
                %v198 = vld [vmem:[%s176 + $0x50] sm:$0xf]
                %199 = vst [vmem:[%s177 + $0x28] sm:$0xf] %v198
                %v200 = vld [vmem:[%s176 + $0x58] sm:$0xf]
                %201 = vst [vmem:[%s177 + $0x2c] sm:$0xf] %v200
                %v202 = vld [vmem:[%s176 + $0x60] sm:$0xf]
                %203 = vst [vmem:[%s177 + $0x30] sm:$0xf] %v202
                %v204 = vld [vmem:[%s176 + $0x68] sm:$0xf]
                %205 = vst [vmem:[%s177 + $0x34] sm:$0xf] %v204
                %v206 = vld [vmem:[%s176 + $0x70] sm:$0xf]
                %207 = vst [vmem:[%s177 + $0x38] sm:$0xf] %v206
                %v208 = vld [vmem:[%s176 + $0x78] sm:$0xf]
                %209 = vst [vmem:[%s177 + $0x3c] sm:$0xf] %v208
                %v210 = vld [vmem:[%s176 + $0x80] sm:$0xf]
                %211 = vst [vmem:[%s177 + $0x40] sm:$0xf] %v210
                %v212 = vld [vmem:[%s176 + $0x88] sm:$0xf]
                %213 = vst [vmem:[%s177 + $0x44] sm:$0xf] %v212
                %v214 = vld [vmem:[%s176 + $0x90] sm:$0xf]
                %215 = vst [vmem:[%s177 + $0x48] sm:$0xf] %v214
                %v216 = vld [vmem:[%s176 + $0x98] sm:$0xf]
                %217 = vst [vmem:[%s177 + $0x4c] sm:$0xf] %v216
                %v218 = vld [vmem:[%s176 + $0xa0] sm:$0xf]
                %219 = vst [vmem:[%s177 + $0x50] sm:$0xf] %v218
                %v220 = vld [vmem:[%s176 + $0xa8] sm:$0xf]
                %221 = vst [vmem:[%s177 + $0x54] sm:$0xf] %v220
                %v222 = vld [vmem:[%s176 + $0xb0] sm:$0xf]
                %223 = vst [vmem:[%s177 + $0x58] sm:$0xf] %v222
                %v224 = vld [vmem:[%s176 + $0xb8] sm:$0xf]
                %225 = vst [vmem:[%s177 + $0x5c] sm:$0xf] %v224
                %v226 = vld [vmem:[%s176 + $0xc0] sm:$0xf]
                %227 = vst [vmem:[%s177 + $0x60] sm:$0xf] %v226
                %v228 = vld [vmem:[%s176 + $0xc8] sm:$0xf]
                %229 = vst [vmem:[%s177 + $0x64] sm:$0xf] %v228
                %v230 = vld [vmem:[%s176 + $0xd0] sm:$0xf]
                %231 = vst [vmem:[%s177 + $0x68] sm:$0xf] %v230
                %v232 = vld [vmem:[%s176 + $0xd8] sm:$0xf]
                %233 = vst [vmem:[%s177 + $0x6c] sm:$0xf] %v232
                %v234 = vld [vmem:[%s176 + $0xe0] sm:$0xf]
                %235 = vst [vmem:[%s177 + $0x70] sm:$0xf] %v234
                %v236 = vld [vmem:[%s176 + $0xe8] sm:$0xf]
                %237 = vst [vmem:[%s177 + $0x74] sm:$0xf] %v236
                %v238 = vld [vmem:[%s176 + $0xf0] sm:$0xf]
                %239 = vst [vmem:[%s177 + $0x78] sm:$0xf] %v238
                %v240 = vld [vmem:[%s176 + $0xf8] sm:$0xf]
                %241 = vst [vmem:[%s177 + $0x7c] sm:$0xf] %v240
                %v242 = vld [vmem:[%s176 + $0x100] sm:$0xf]
                %243 = vst [vmem:[%s177 + $0x80] sm:$0xf] %v242
                %v244 = vld [vmem:[%s176 + $0x108] sm:$0xf]
                %245 = vst [vmem:[%s177 + $0x84] sm:$0xf] %v244
                %v246 = vld [vmem:[%s176 + $0x110] sm:$0xf]
                %247 = vst [vmem:[%s177 + $0x88] sm:$0xf] %v246
                %v248 = vld [vmem:[%s176 + $0x118] sm:$0xf]
                %249 = vst [vmem:[%s177 + $0x8c] sm:$0xf] %v248
                %v250 = vld [vmem:[%s176 + $0x120] sm:$0xf]
                %251 = vst [vmem:[%s177 + $0x90] sm:$0xf] %v250
                %v252 = vld [vmem:[%s176 + $0x128] sm:$0xf]
                %253 = vst [vmem:[%s177 + $0x94] sm:$0xf] %v252
                %v254 = vld [vmem:[%s176 + $0x130] sm:$0xf]
                %255 = vst [vmem:[%s177 + $0x98] sm:$0xf] %v254
                %v256 = vld [vmem:[%s176 + $0x138] sm:$0xf]
                %257 = vst [vmem:[%s177 + $0x9c] sm:$0xf] %v256
                %v258 = vld [vmem:[%s176 + $0x140] sm:$0xf]
                %259 = vst [vmem:[%s177 + $0xa0] sm:$0xf] %v258
                %v260 = vld [vmem:[%s176 + $0x148] sm:$0xf]
                %261 = vst [vmem:[%s177 + $0xa4] sm:$0xf] %v260
                %v262 = vld [vmem:[%s176 + $0x150] sm:$0xf]
                %263 = vst [vmem:[%s177 + $0xa8] sm:$0xf] %v262
                %v264 = vld [vmem:[%s176 + $0x158] sm:$0xf]
                %265 = vst [vmem:[%s177 + $0xac] sm:$0xf] %v264
                %v266 = vld [vmem:[%s176 + $0x160] sm:$0xf]
                %267 = vst [vmem:[%s177 + $0xb0] sm:$0xf] %v266
                %v268 = vld [vmem:[%s176 + $0x168] sm:$0xf]
                %269 = vst [vmem:[%s177 + $0xb4] sm:$0xf] %v268
                %v270 = vld [vmem:[%s176 + $0x170] sm:$0xf]
                %271 = vst [vmem:[%s177 + $0xb8] sm:$0xf] %v270
                %v272 = vld [vmem:[%s176 + $0x178] sm:$0xf]
                %273 = vst [vmem:[%s177 + $0xbc] sm:$0xf] %v272
                %v274 = vld [vmem:[%s176 + $0x180] sm:$0xf]
                %275 = vst [vmem:[%s177 + $0xc0] sm:$0xf] %v274
                %v276 = vld [vmem:[%s176 + $0x188] sm:$0xf]
                %277 = vst [vmem:[%s177 + $0xc4] sm:$0xf] %v276
                %v278 = vld [vmem:[%s176 + $0x190] sm:$0xf]
                %279 = vst [vmem:[%s177 + $0xc8] sm:$0xf] %v278
                %v280 = vld [vmem:[%s176 + $0x198] sm:$0xf]
                %281 = vst [vmem:[%s177 + $0xcc] sm:$0xf] %v280
                %v282 = vld [vmem:[%s176 + $0x1a0] sm:$0xf]
                %283 = vst [vmem:[%s177 + $0xd0] sm:$0xf] %v282
                %v284 = vld [vmem:[%s176 + $0x1a8] sm:$0xf]
                %285 = vst [vmem:[%s177 + $0xd4] sm:$0xf] %v284
                %v286 = vld [vmem:[%s176 + $0x1b0] sm:$0xf]
                %287 = vst [vmem:[%s177 + $0xd8] sm:$0xf] %v286
                %v288 = vld [vmem:[%s176 + $0x1b8] sm:$0xf]
                %289 = vst [vmem:[%s177 + $0xdc] sm:$0xf] %v288
                %v290 = vld [vmem:[%s176 + $0x1c0] sm:$0xf]
                %291 = vst [vmem:[%s177 + $0xe0] sm:$0xf] %v290
                %v292 = vld [vmem:[%s176 + $0x1c8] sm:$0xf]
                %293 = vst [vmem:[%s177 + $0xe4] sm:$0xf] %v292
                %v294 = vld [vmem:[%s176 + $0x1d0] sm:$0xf]
                %295 = vst [vmem:[%s177 + $0xe8] sm:$0xf] %v294
                %v296 = vld [vmem:[%s176 + $0x1d8] sm:$0xf]
                %297 = vst [vmem:[%s177 + $0xec] sm:$0xf] %v296
                %v298 = vld [vmem:[%s176 + $0x1e0] sm:$0xf]
                %299 = vst [vmem:[%s177 + $0xf0] sm:$0xf] %v298
                %v300 = vld [vmem:[%s176 + $0x1e8] sm:$0xf]
                %301 = vst [vmem:[%s177 + $0xf4] sm:$0xf] %v300
                %v302 = vld [vmem:[%s176 + $0x1f0] sm:$0xf]
                %303 = vst [vmem:[%s177 + $0xf8] sm:$0xf] %v302
                %v304 = vld [vmem:[%s176 + $0x1f8] sm:$0xf]
                %305 = vst [vmem:[%s177 + $0xfc] sm:$0xf] %v304
                %v306 = vld [vmem:[%s176 + $0x200] sm:$0xf]
                %307 = vst [vmem:[%s177 + $0x100] sm:$0xf] %v306
                %v308 = vld [vmem:[%s176 + $0x208] sm:$0xf]
                %309 = vst [vmem:[%s177 + $0x104] sm:$0xf] %v308
                %v310 = vld [vmem:[%s176 + $0x210] sm:$0xf]
                %311 = vst [vmem:[%s177 + $0x108] sm:$0xf] %v310
                %v312 = vld [vmem:[%s176 + $0x218] sm:$0xf]
                %313 = vst [vmem:[%s177 + $0x10c] sm:$0xf] %v312
                %v314 = vld [vmem:[%s176 + $0x220] sm:$0xf]
                %315 = vst [vmem:[%s177 + $0x110] sm:$0xf] %v314
                %v316 = vld [vmem:[%s176 + $0x228] sm:$0xf]
                %317 = vst [vmem:[%s177 + $0x114] sm:$0xf] %v316
                %v318 = vld [vmem:[%s176 + $0x230] sm:$0xf]
                %319 = vst [vmem:[%s177 + $0x118] sm:$0xf] %v318
                %v320 = vld [vmem:[%s176 + $0x238] sm:$0xf]
                %321 = vst [vmem:[%s177 + $0x11c] sm:$0xf] %v320
                %v322 = vld [vmem:[%s176 + $0x240] sm:$0xf]
                %323 = vst [vmem:[%s177 + $0x120] sm:$0xf] %v322
                %v324 = vld [vmem:[%s176 + $0x248] sm:$0xf]
                %325 = vst [vmem:[%s177 + $0x124] sm:$0xf] %v324
                %v326 = vld [vmem:[%s176 + $0x250] sm:$0xf]
                %327 = vst [vmem:[%s177 + $0x128] sm:$0xf] %v326
                %v328 = vld [vmem:[%s176 + $0x258] sm:$0xf]
                %329 = vst [vmem:[%s177 + $0x12c] sm:$0xf] %v328
                %v330 = vld [vmem:[%s176 + $0x260] sm:$0xf]
                %331 = vst [vmem:[%s177 + $0x130] sm:$0xf] %v330
                %v332 = vld [vmem:[%s176 + $0x268] sm:$0xf]
                %333 = vst [vmem:[%s177 + $0x134] sm:$0xf] %v332
                %v334 = vld [vmem:[%s176 + $0x270] sm:$0xf]
                %335 = vst [vmem:[%s177 + $0x138] sm:$0xf] %v334
                %v336 = vld [vmem:[%s176 + $0x278] sm:$0xf]
                %337 = vst [vmem:[%s177 + $0x13c] sm:$0xf] %v336
                %v338 = vld [vmem:[%s176 + $0x280] sm:$0xf]
                %339 = vst [vmem:[%s177 + $0x140] sm:$0xf] %v338
                %v340 = vld [vmem:[%s176 + $0x288] sm:$0xf]
                %341 = vst [vmem:[%s177 + $0x144] sm:$0xf] %v340
                %v342 = vld [vmem:[%s176 + $0x290] sm:$0xf]
                %343 = vst [vmem:[%s177 + $0x148] sm:$0xf] %v342
                %v344 = vld [vmem:[%s176 + $0x298] sm:$0xf]
                %345 = vst [vmem:[%s177 + $0x14c] sm:$0xf] %v344
                %v346 = vld [vmem:[%s176 + $0x2a0] sm:$0xf]
                %347 = vst [vmem:[%s177 + $0x150] sm:$0xf] %v346
                %v348 = vld [vmem:[%s176 + $0x2a8] sm:$0xf]
                %349 = vst [vmem:[%s177 + $0x154] sm:$0xf] %v348
                %v350 = vld [vmem:[%s176 + $0x2b0] sm:$0xf]
                %351 = vst [vmem:[%s177 + $0x158] sm:$0xf] %v350
                %v352 = vld [vmem:[%s176 + $0x2b8] sm:$0xf]
                %353 = vst [vmem:[%s177 + $0x15c] sm:$0xf] %v352
                %v354 = vld [vmem:[%s176 + $0x2c0] sm:$0xf]
                %355 = vst [vmem:[%s177 + $0x160] sm:$0xf] %v354
                %v356 = vld [vmem:[%s176 + $0x2c8] sm:$0xf]
                %357 = vst [vmem:[%s177 + $0x164] sm:$0xf] %v356
                %v358 = vld [vmem:[%s176 + $0x2d0] sm:$0xf]
                %359 = vst [vmem:[%s177 + $0x168] sm:$0xf] %v358
                %v360 = vld [vmem:[%s176 + $0x2d8] sm:$0xf]
                %361 = vst [vmem:[%s177 + $0x16c] sm:$0xf] %v360
                %v362 = vld [vmem:[%s176 + $0x2e0] sm:$0xf]
                %363 = vst [vmem:[%s177 + $0x170] sm:$0xf] %v362
                %v364 = vld [vmem:[%s176 + $0x2e8] sm:$0xf]
                %365 = vst [vmem:[%s177 + $0x174] sm:$0xf] %v364
                %v366 = vld [vmem:[%s176 + $0x2f0] sm:$0xf]
                %367 = vst [vmem:[%s177 + $0x178] sm:$0xf] %v366
                %v368 = vld [vmem:[%s176 + $0x2f8] sm:$0xf]
                %369 = vst [vmem:[%s177 + $0x17c] sm:$0xf] %v368
                %v370 = vld [vmem:[%s176 + $0x300] sm:$0xf]
                %371 = vst [vmem:[%s177 + $0x180] sm:$0xf] %v370
                %v372 = vld [vmem:[%s176 + $0x308] sm:$0xf]
                %373 = vst [vmem:[%s177 + $0x184] sm:$0xf] %v372
                %v374 = vld [vmem:[%s176 + $0x310] sm:$0xf]
                %375 = vst [vmem:[%s177 + $0x188] sm:$0xf] %v374
                %v376 = vld [vmem:[%s176 + $0x318] sm:$0xf]
                %377 = vst [vmem:[%s177 + $0x18c] sm:$0xf] %v376
                %v378 = vld [vmem:[%s176 + $0x320] sm:$0xf]
                %379 = vst [vmem:[%s177 + $0x190] sm:$0xf] %v378
                %v380 = vld [vmem:[%s176 + $0x328] sm:$0xf]
                %381 = vst [vmem:[%s177 + $0x194] sm:$0xf] %v380
                %v382 = vld [vmem:[%s176 + $0x330] sm:$0xf]
                %383 = vst [vmem:[%s177 + $0x198] sm:$0xf] %v382
                %v384 = vld [vmem:[%s176 + $0x338] sm:$0xf]
                %385 = vst [vmem:[%s177 + $0x19c] sm:$0xf] %v384
                %v386 = vld [vmem:[%s176 + $0x340] sm:$0xf]
                %387 = vst [vmem:[%s177 + $0x1a0] sm:$0xf] %v386
                %v388 = vld [vmem:[%s176 + $0x348] sm:$0xf]
                %389 = vst [vmem:[%s177 + $0x1a4] sm:$0xf] %v388
                %v390 = vld [vmem:[%s176 + $0x350] sm:$0xf]
                %391 = vst [vmem:[%s177 + $0x1a8] sm:$0xf] %v390
                %v392 = vld [vmem:[%s176 + $0x358] sm:$0xf]
                %393 = vst [vmem:[%s177 + $0x1ac] sm:$0xf] %v392
                %v394 = vld [vmem:[%s176 + $0x360] sm:$0xf]
                %395 = vst [vmem:[%s177 + $0x1b0] sm:$0xf] %v394
                %v396 = vld [vmem:[%s176 + $0x368] sm:$0xf]
                %397 = vst [vmem:[%s177 + $0x1b4] sm:$0xf] %v396
                %v398 = vld [vmem:[%s176 + $0x370] sm:$0xf]
                %399 = vst [vmem:[%s177 + $0x1b8] sm:$0xf] %v398
                %v400 = vld [vmem:[%s176 + $0x378] sm:$0xf]
                %401 = vst [vmem:[%s177 + $0x1bc] sm:$0xf] %v400
                %v402 = vld [vmem:[%s176 + $0x380] sm:$0xf]
                %403 = vst [vmem:[%s177 + $0x1c0] sm:$0xf] %v402
                %v404 = vld [vmem:[%s176 + $0x388] sm:$0xf]
                %405 = vst [vmem:[%s177 + $0x1c4] sm:$0xf] %v404
                %v406 = vld [vmem:[%s176 + $0x390] sm:$0xf]
                %407 = vst [vmem:[%s177 + $0x1c8] sm:$0xf] %v406
                %v408 = vld [vmem:[%s176 + $0x398] sm:$0xf]
                %409 = vst [vmem:[%s177 + $0x1cc] sm:$0xf] %v408
                %v410 = vld [vmem:[%s176 + $0x3a0] sm:$0xf]
                %411 = vst [vmem:[%s177 + $0x1d0] sm:$0xf] %v410
                %v412 = vld [vmem:[%s176 + $0x3a8] sm:$0xf]
                %413 = vst [vmem:[%s177 + $0x1d4] sm:$0xf] %v412
                %v414 = vld [vmem:[%s176 + $0x3b0] sm:$0xf]
                %415 = vst [vmem:[%s177 + $0x1d8] sm:$0xf] %v414
                %v416 = vld [vmem:[%s176 + $0x3b8] sm:$0xf]
                %417 = vst [vmem:[%s177 + $0x1dc] sm:$0xf] %v416
                %v418 = vld [vmem:[%s176 + $0x3c0] sm:$0xf]
                %419 = vst [vmem:[%s177 + $0x1e0] sm:$0xf] %v418
                %v420 = vld [vmem:[%s176 + $0x3c8] sm:$0xf]
                %421 = vst [vmem:[%s177 + $0x1e4] sm:$0xf] %v420
                %v422 = vld [vmem:[%s176 + $0x3d0] sm:$0xf]
                %423 = vst [vmem:[%s177 + $0x1e8] sm:$0xf] %v422
                %v424 = vld [vmem:[%s176 + $0x3d8] sm:$0xf]
                %425 = vst [vmem:[%s177 + $0x1ec] sm:$0xf] %v424
                %v426 = vld [vmem:[%s176 + $0x3e0] sm:$0xf]
                %427 = vst [vmem:[%s177 + $0x1f0] sm:$0xf] %v426
                %v428 = vld [vmem:[%s176 + $0x3e8] sm:$0xf]
                %429 = vst [vmem:[%s177 + $0x1f4] sm:$0xf] %v428
                %v430 = vld [vmem:[%s176 + $0x3f0] sm:$0xf]
                %431 = vst [vmem:[%s177 + $0x1f8] sm:$0xf] %v430
                %v432 = vld [vmem:[%s176 + $0x3f8] sm:$0xf]
                %433 = vst [vmem:[%s177 + $0x1fc] sm:$0xf] %v432
                %v434 = vld [vmem:[%s176 + $0x400] sm:$0xf]
                %435 = vst [vmem:[%s177 + $0x200] sm:$0xf] %v434
                %v436 = vld [vmem:[%s176 + $0x408] sm:$0xf]
                %437 = vst [vmem:[%s177 + $0x204] sm:$0xf] %v436
                %v438 = vld [vmem:[%s176 + $0x410] sm:$0xf]
                %439 = vst [vmem:[%s177 + $0x208] sm:$0xf] %v438
                %v440 = vld [vmem:[%s176 + $0x418] sm:$0xf]
                %441 = vst [vmem:[%s177 + $0x20c] sm:$0xf] %v440
                %v442 = vld [vmem:[%s176 + $0x420] sm:$0xf]
                %443 = vst [vmem:[%s177 + $0x210] sm:$0xf] %v442
                %v444 = vld [vmem:[%s176 + $0x428] sm:$0xf]
                %445 = vst [vmem:[%s177 + $0x214] sm:$0xf] %v444
                %v446 = vld [vmem:[%s176 + $0x430] sm:$0xf]
                %447 = vst [vmem:[%s177 + $0x218] sm:$0xf] %v446
                %v448 = vld [vmem:[%s176 + $0x438] sm:$0xf]
                %449 = vst [vmem:[%s177 + $0x21c] sm:$0xf] %v448
                %v450 = vld [vmem:[%s176 + $0x440] sm:$0xf]
                %451 = vst [vmem:[%s177 + $0x220] sm:$0xf] %v450
                %v452 = vld [vmem:[%s176 + $0x448] sm:$0xf]
                %453 = vst [vmem:[%s177 + $0x224] sm:$0xf] %v452
                %v454 = vld [vmem:[%s176 + $0x450] sm:$0xf]
                %455 = vst [vmem:[%s177 + $0x228] sm:$0xf] %v454
                %v456 = vld [vmem:[%s176 + $0x458] sm:$0xf]
                %457 = vst [vmem:[%s177 + $0x22c] sm:$0xf] %v456
                %v458 = vld [vmem:[%s176 + $0x460] sm:$0xf]
                %459 = vst [vmem:[%s177 + $0x230] sm:$0xf] %v458
                %v460 = vld [vmem:[%s176 + $0x468] sm:$0xf]
                %461 = vst [vmem:[%s177 + $0x234] sm:$0xf] %v460
                %v462 = vld [vmem:[%s176 + $0x470] sm:$0xf]
                %463 = vst [vmem:[%s177 + $0x238] sm:$0xf] %v462
                %v464 = vld [vmem:[%s176 + $0x478] sm:$0xf]
                %465 = vst [vmem:[%s177 + $0x23c] sm:$0xf] %v464
                %v466 = vld [vmem:[%s176 + $0x480] sm:$0xf]
                %467 = vst [vmem:[%s177 + $0x240] sm:$0xf] %v466
                %v468 = vld [vmem:[%s176 + $0x488] sm:$0xf]
                %469 = vst [vmem:[%s177 + $0x244] sm:$0xf] %v468
                %v470 = vld [vmem:[%s176 + $0x490] sm:$0xf]
                %471 = vst [vmem:[%s177 + $0x248] sm:$0xf] %v470
                %v472 = vld [vmem:[%s176 + $0x498] sm:$0xf]
                %473 = vst [vmem:[%s177 + $0x24c] sm:$0xf] %v472
                %v474 = vld [vmem:[%s176 + $0x4a0] sm:$0xf]
                %475 = vst [vmem:[%s177 + $0x250] sm:$0xf] %v474
                %v476 = vld [vmem:[%s176 + $0x4a8] sm:$0xf]
                %477 = vst [vmem:[%s177 + $0x254] sm:$0xf] %v476
                %v478 = vld [vmem:[%s176 + $0x4b0] sm:$0xf]
                %479 = vst [vmem:[%s177 + $0x258] sm:$0xf] %v478
                %v480 = vld [vmem:[%s176 + $0x4b8] sm:$0xf]
                %481 = vst [vmem:[%s177 + $0x25c] sm:$0xf] %v480
                %v482 = vld [vmem:[%s176 + $0x4c0] sm:$0xf]
                %483 = vst [vmem:[%s177 + $0x260] sm:$0xf] %v482
                %v484 = vld [vmem:[%s176 + $0x4c8] sm:$0xf]
                %485 = vst [vmem:[%s177 + $0x264] sm:$0xf] %v484
                %v486 = vld [vmem:[%s176 + $0x4d0] sm:$0xf]
                %487 = vst [vmem:[%s177 + $0x268] sm:$0xf] %v486
                %v488 = vld [vmem:[%s176 + $0x4d8] sm:$0xf]
                %489 = vst [vmem:[%s177 + $0x26c] sm:$0xf] %v488
                %v490 = vld [vmem:[%s176 + $0x4e0] sm:$0xf]
                %491 = vst [vmem:[%s177 + $0x270] sm:$0xf] %v490
                %v492 = vld [vmem:[%s176 + $0x4e8] sm:$0xf]
                %493 = vst [vmem:[%s177 + $0x274] sm:$0xf] %v492
                %v494 = vld [vmem:[%s176 + $0x4f0] sm:$0xf]
                %495 = vst [vmem:[%s177 + $0x278] sm:$0xf] %v494
                %v496 = vld [vmem:[%s176 + $0x4f8] sm:$0xf]
                %497 = vst [vmem:[%s177 + $0x27c] sm:$0xf] %v496
                %v498 = vld [vmem:[%s176 + $0x500] sm:$0xf]
                %499 = vst [vmem:[%s177 + $0x280] sm:$0xf] %v498
                %v500 = vld [vmem:[%s176 + $0x508] sm:$0xf]
                %501 = vst [vmem:[%s177 + $0x284] sm:$0xf] %v500
                %v502 = vld [vmem:[%s176 + $0x510] sm:$0xf]
                %503 = vst [vmem:[%s177 + $0x288] sm:$0xf] %v502
                %v504 = vld [vmem:[%s176 + $0x518] sm:$0xf]
                %505 = vst [vmem:[%s177 + $0x28c] sm:$0xf] %v504
                %v506 = vld [vmem:[%s176 + $0x520] sm:$0xf]
                %507 = vst [vmem:[%s177 + $0x290] sm:$0xf] %v506
                %v508 = vld [vmem:[%s176 + $0x528] sm:$0xf]
                %509 = vst [vmem:[%s177 + $0x294] sm:$0xf] %v508
                %v510 = vld [vmem:[%s176 + $0x530] sm:$0xf]
                %511 = vst [vmem:[%s177 + $0x298] sm:$0xf] %v510
                %v512 = vld [vmem:[%s176 + $0x538] sm:$0xf]
                %513 = vst [vmem:[%s177 + $0x29c] sm:$0xf] %v512
                %v514 = vld [vmem:[%s176 + $0x540] sm:$0xf]
                %515 = vst [vmem:[%s177 + $0x2a0] sm:$0xf] %v514
                %v516 = vld [vmem:[%s176 + $0x548] sm:$0xf]
                %517 = vst [vmem:[%s177 + $0x2a4] sm:$0xf] %v516
                %v518 = vld [vmem:[%s176 + $0x550] sm:$0xf]
                %519 = vst [vmem:[%s177 + $0x2a8] sm:$0xf] %v518
                %v520 = vld [vmem:[%s176 + $0x558] sm:$0xf]
                %521 = vst [vmem:[%s177 + $0x2ac] sm:$0xf] %v520
                %v522 = vld [vmem:[%s176 + $0x560] sm:$0xf]
                %523 = vst [vmem:[%s177 + $0x2b0] sm:$0xf] %v522
                %v524 = vld [vmem:[%s176 + $0x568] sm:$0xf]
                %525 = vst [vmem:[%s177 + $0x2b4] sm:$0xf] %v524
                %v526 = vld [vmem:[%s176 + $0x570] sm:$0xf]
                %527 = vst [vmem:[%s177 + $0x2b8] sm:$0xf] %v526
                %v528 = vld [vmem:[%s176 + $0x578] sm:$0xf]
                %529 = vst [vmem:[%s177 + $0x2bc] sm:$0xf] %v528
                %v530 = vld [vmem:[%s176 + $0x580] sm:$0xf]
                %531 = vst [vmem:[%s177 + $0x2c0] sm:$0xf] %v530
                %v532 = vld [vmem:[%s176 + $0x588] sm:$0xf]
                %533 = vst [vmem:[%s177 + $0x2c4] sm:$0xf] %v532
                %v534 = vld [vmem:[%s176 + $0x590] sm:$0xf]
                %535 = vst [vmem:[%s177 + $0x2c8] sm:$0xf] %v534
                %v536 = vld [vmem:[%s176 + $0x598] sm:$0xf]
                %537 = vst [vmem:[%s177 + $0x2cc] sm:$0xf] %v536
                %v538 = vld [vmem:[%s176 + $0x5a0] sm:$0xf]
                %539 = vst [vmem:[%s177 + $0x2d0] sm:$0xf] %v538
                %v540 = vld [vmem:[%s176 + $0x5a8] sm:$0xf]
                %541 = vst [vmem:[%s177 + $0x2d4] sm:$0xf] %v540
                %v542 = vld [vmem:[%s176 + $0x5b0] sm:$0xf]
                %543 = vst [vmem:[%s177 + $0x2d8] sm:$0xf] %v542
                %v544 = vld [vmem:[%s176 + $0x5b8] sm:$0xf]
                %545 = vst [vmem:[%s177 + $0x2dc] sm:$0xf] %v544
                %v546 = vld [vmem:[%s176 + $0x5c0] sm:$0xf]
                %547 = vst [vmem:[%s177 + $0x2e0] sm:$0xf] %v546
                %v548 = vld [vmem:[%s176 + $0x5c8] sm:$0xf]
                %549 = vst [vmem:[%s177 + $0x2e4] sm:$0xf] %v548
                %v550 = vld [vmem:[%s176 + $0x5d0] sm:$0xf]
                %551 = vst [vmem:[%s177 + $0x2e8] sm:$0xf] %v550
                %v552 = vld [vmem:[%s176 + $0x5d8] sm:$0xf]
                %553 = vst [vmem:[%s177 + $0x2ec] sm:$0xf] %v552
                %v554 = vld [vmem:[%s176 + $0x5e0] sm:$0xf]
                %555 = vst [vmem:[%s177 + $0x2f0] sm:$0xf] %v554
                %v556 = vld [vmem:[%s176 + $0x5e8] sm:$0xf]
                %557 = vst [vmem:[%s177 + $0x2f4] sm:$0xf] %v556
                %v558 = vld [vmem:[%s176 + $0x5f0] sm:$0xf]
                %559 = vst [vmem:[%s177 + $0x2f8] sm:$0xf] %v558
                %v560 = vld [vmem:[%s176 + $0x5f8] sm:$0xf]
                %561 = vst [vmem:[%s177 + $0x2fc] sm:$0xf] %v560
                %v562 = vld [vmem:[%s176 + $0x600] sm:$0xf]
                %563 = vst [vmem:[%s177 + $0x300] sm:$0xf] %v562
                %v564 = vld [vmem:[%s176 + $0x608] sm:$0xf]
                %565 = vst [vmem:[%s177 + $0x304] sm:$0xf] %v564
                %v566 = vld [vmem:[%s176 + $0x610] sm:$0xf]
                %567 = vst [vmem:[%s177 + $0x308] sm:$0xf] %v566
                %v568 = vld [vmem:[%s176 + $0x618] sm:$0xf]
                %569 = vst [vmem:[%s177 + $0x30c] sm:$0xf] %v568
                %v570 = vld [vmem:[%s176 + $0x620] sm:$0xf]
                %571 = vst [vmem:[%s177 + $0x310] sm:$0xf] %v570
                %v572 = vld [vmem:[%s176 + $0x628] sm:$0xf]
                %573 = vst [vmem:[%s177 + $0x314] sm:$0xf] %v572
                %v574 = vld [vmem:[%s176 + $0x630] sm:$0xf]
                %575 = vst [vmem:[%s177 + $0x318] sm:$0xf] %v574
                %v576 = vld [vmem:[%s176 + $0x638] sm:$0xf]
                %577 = vst [vmem:[%s177 + $0x31c] sm:$0xf] %v576
                %v578 = vld [vmem:[%s176 + $0x640] sm:$0xf]
                %579 = vst [vmem:[%s177 + $0x320] sm:$0xf] %v578
                %v580 = vld [vmem:[%s176 + $0x648] sm:$0xf]
                %581 = vst [vmem:[%s177 + $0x324] sm:$0xf] %v580
                %v582 = vld [vmem:[%s176 + $0x650] sm:$0xf]
                %583 = vst [vmem:[%s177 + $0x328] sm:$0xf] %v582
                %v584 = vld [vmem:[%s176 + $0x658] sm:$0xf]
                %585 = vst [vmem:[%s177 + $0x32c] sm:$0xf] %v584
                %v586 = vld [vmem:[%s176 + $0x660] sm:$0xf]
                %587 = vst [vmem:[%s177 + $0x330] sm:$0xf] %v586
                %v588 = vld [vmem:[%s176 + $0x668] sm:$0xf]
                %589 = vst [vmem:[%s177 + $0x334] sm:$0xf] %v588
                %v590 = vld [vmem:[%s176 + $0x670] sm:$0xf]
                %591 = vst [vmem:[%s177 + $0x338] sm:$0xf] %v590
                %v592 = vld [vmem:[%s176 + $0x678] sm:$0xf]
                %593 = vst [vmem:[%s177 + $0x33c] sm:$0xf] %v592
                %v594 = vld [vmem:[%s176 + $0x680] sm:$0xf]
                %595 = vst [vmem:[%s177 + $0x340] sm:$0xf] %v594
                %v596 = vld [vmem:[%s176 + $0x688] sm:$0xf]
                %597 = vst [vmem:[%s177 + $0x344] sm:$0xf] %v596
                %v598 = vld [vmem:[%s176 + $0x690] sm:$0xf]
                %599 = vst [vmem:[%s177 + $0x348] sm:$0xf] %v598
                %v600 = vld [vmem:[%s176 + $0x698] sm:$0xf]
                %601 = vst [vmem:[%s177 + $0x34c] sm:$0xf] %v600
                %v602 = vld [vmem:[%s176 + $0x6a0] sm:$0xf]
                %603 = vst [vmem:[%s177 + $0x350] sm:$0xf] %v602
                %v604 = vld [vmem:[%s176 + $0x6a8] sm:$0xf]
                %605 = vst [vmem:[%s177 + $0x354] sm:$0xf] %v604
                %v606 = vld [vmem:[%s176 + $0x6b0] sm:$0xf]
                %607 = vst [vmem:[%s177 + $0x358] sm:$0xf] %v606
                %v608 = vld [vmem:[%s176 + $0x6b8] sm:$0xf]
                %609 = vst [vmem:[%s177 + $0x35c] sm:$0xf] %v608
                %v610 = vld [vmem:[%s176 + $0x6c0] sm:$0xf]
                %611 = vst [vmem:[%s177 + $0x360] sm:$0xf] %v610
                %v612 = vld [vmem:[%s176 + $0x6c8] sm:$0xf]
                %613 = vst [vmem:[%s177 + $0x364] sm:$0xf] %v612
                %v614 = vld [vmem:[%s176 + $0x6d0] sm:$0xf]
                %615 = vst [vmem:[%s177 + $0x368] sm:$0xf] %v614
                %v616 = vld [vmem:[%s176 + $0x6d8] sm:$0xf]
                %617 = vst [vmem:[%s177 + $0x36c] sm:$0xf] %v616
                %v618 = vld [vmem:[%s176 + $0x6e0] sm:$0xf]
                %619 = vst [vmem:[%s177 + $0x370] sm:$0xf] %v618
                %v620 = vld [vmem:[%s176 + $0x6e8] sm:$0xf]
                %621 = vst [vmem:[%s177 + $0x374] sm:$0xf] %v620
                %v622 = vld [vmem:[%s176 + $0x6f0] sm:$0xf]
                %623 = vst [vmem:[%s177 + $0x378] sm:$0xf] %v622
                %v624 = vld [vmem:[%s176 + $0x6f8] sm:$0xf]
                %625 = vst [vmem:[%s177 + $0x37c] sm:$0xf] %v624
                %v626 = vld [vmem:[%s176 + $0x700] sm:$0xf]
                %627 = vst [vmem:[%s177 + $0x380] sm:$0xf] %v626
                %v628 = vld [vmem:[%s176 + $0x708] sm:$0xf]
                %629 = vst [vmem:[%s177 + $0x384] sm:$0xf] %v628
                %v630 = vld [vmem:[%s176 + $0x710] sm:$0xf]
                %631 = vst [vmem:[%s177 + $0x388] sm:$0xf] %v630
                %v632 = vld [vmem:[%s176 + $0x718] sm:$0xf]
                %633 = vst [vmem:[%s177 + $0x38c] sm:$0xf] %v632
                %v634 = vld [vmem:[%s176 + $0x720] sm:$0xf]
                %635 = vst [vmem:[%s177 + $0x390] sm:$0xf] %v634
                %v636 = vld [vmem:[%s176 + $0x728] sm:$0xf]
                %637 = vst [vmem:[%s177 + $0x394] sm:$0xf] %v636
                %v638 = vld [vmem:[%s176 + $0x730] sm:$0xf]
                %639 = vst [vmem:[%s177 + $0x398] sm:$0xf] %v638
                %v640 = vld [vmem:[%s176 + $0x738] sm:$0xf]
                %641 = vst [vmem:[%s177 + $0x39c] sm:$0xf] %v640
                %v642 = vld [vmem:[%s176 + $0x740] sm:$0xf]
                %643 = vst [vmem:[%s177 + $0x3a0] sm:$0xf] %v642
                %v644 = vld [vmem:[%s176 + $0x748] sm:$0xf]
                %645 = vst [vmem:[%s177 + $0x3a4] sm:$0xf] %v644
                %v646 = vld [vmem:[%s176 + $0x750] sm:$0xf]
                %647 = vst [vmem:[%s177 + $0x3a8] sm:$0xf] %v646
                %v648 = vld [vmem:[%s176 + $0x758] sm:$0xf]
                %649 = vst [vmem:[%s177 + $0x3ac] sm:$0xf] %v648
                %v650 = vld [vmem:[%s176 + $0x760] sm:$0xf]
                %651 = vst [vmem:[%s177 + $0x3b0] sm:$0xf] %v650
                %v652 = vld [vmem:[%s176 + $0x768] sm:$0xf]
                %653 = vst [vmem:[%s177 + $0x3b4] sm:$0xf] %v652
                %v654 = vld [vmem:[%s176 + $0x770] sm:$0xf]
                %655 = vst [vmem:[%s177 + $0x3b8] sm:$0xf] %v654
                %v656 = vld [vmem:[%s176 + $0x778] sm:$0xf]
                %657 = vst [vmem:[%s177 + $0x3bc] sm:$0xf] %v656
                %v658 = vld [vmem:[%s176 + $0x780] sm:$0xf]
                %659 = vst [vmem:[%s177 + $0x3c0] sm:$0xf] %v658
                %v660 = vld [vmem:[%s176 + $0x788] sm:$0xf]
                %661 = vst [vmem:[%s177 + $0x3c4] sm:$0xf] %v660
                %v662 = vld [vmem:[%s176 + $0x790] sm:$0xf]
                %663 = vst [vmem:[%s177 + $0x3c8] sm:$0xf] %v662
                %v664 = vld [vmem:[%s176 + $0x798] sm:$0xf]
                %665 = vst [vmem:[%s177 + $0x3cc] sm:$0xf] %v664
                %v666 = vld [vmem:[%s176 + $0x7a0] sm:$0xf]
                %667 = vst [vmem:[%s177 + $0x3d0] sm:$0xf] %v666
                %v668 = vld [vmem:[%s176 + $0x7a8] sm:$0xf]
                %669 = vst [vmem:[%s177 + $0x3d4] sm:$0xf] %v668
                %v670 = vld [vmem:[%s176 + $0x7b0] sm:$0xf]
                %671 = vst [vmem:[%s177 + $0x3d8] sm:$0xf] %v670
                %v672 = vld [vmem:[%s176 + $0x7b8] sm:$0xf]
                %673 = vst [vmem:[%s177 + $0x3dc] sm:$0xf] %v672
                %v674 = vld [vmem:[%s176 + $0x7c0] sm:$0xf]
                %675 = vst [vmem:[%s177 + $0x3e0] sm:$0xf] %v674
                %v676 = vld [vmem:[%s176 + $0x7c8] sm:$0xf]
                %677 = vst [vmem:[%s177 + $0x3e4] sm:$0xf] %v676
                %v678 = vld [vmem:[%s176 + $0x7d0] sm:$0xf]
                %679 = vst [vmem:[%s177 + $0x3e8] sm:$0xf] %v678
                %v680 = vld [vmem:[%s176 + $0x7d8] sm:$0xf]
                %681 = vst [vmem:[%s177 + $0x3ec] sm:$0xf] %v680
                %v682 = vld [vmem:[%s176 + $0x7e0] sm:$0xf]
                %683 = vst [vmem:[%s177 + $0x3f0] sm:$0xf] %v682
                %v684 = vld [vmem:[%s176 + $0x7e8] sm:$0xf]
                %685 = vst [vmem:[%s177 + $0x3f4] sm:$0xf] %v684
                %v686 = vld [vmem:[%s176 + $0x7f0] sm:$0xf]
                %687 = vst [vmem:[%s177 + $0x3f8] sm:$0xf] %v686
                %v688 = vld [vmem:[%s176 + $0x7f8] sm:$0xf]
                %689 = vst [vmem:[%s177 + $0x3fc] sm:$0xf] %v688
              $region41: #{generator_forward.8} parent=35 // loop_footer
                %s175 = sadd.s32 1, %s171
              $region42: #{generator_forward.8} parent=35 // loop_footer_branch
                %170 = sbr.rel target = $region38
              $region43: #{generator_forward.8} parent=35 // loop_exit
                _
            $region36: #{generator_forward.8} parent=27 // pred_fallthru
              _
          $region28: #{generator_forward.8} parent=23 // pred_fallthru
            _
          %1221 = vnop
        $region24: #{generator_forward.8} parent=19 // pred_fallthru
          _
        // Predicated region
        $region62: #{generator_forward.8} parent=19 // pred_check
          %p1222 = pneg %p93
        $region63: #{generator_forward.8} parent=19 // pred_check_branch
          %1224 = sbr.rel (%p1222) target = $region65
        $region64: #{generator_forward.8} parent=19 // pred_region
          %p1225 = scmp.lt.s32.totalorder %s17, 1
          %s1226 = scalar_select %p1225, %s17, 1
          %s1227 = scalar_lea.vmem %s2, %s1226
        $region65: #{generator_forward.8} parent=19 // pred_fallthru
          _
      $region20: #{generator_forward.8} parent=5 // pred_fallthru
        _
      %p1228 = scmp.le.s32.totalorder 1, %s9
      %p1229 = scmp.lt.s32.totalorder %s9, 3
      %p1230 = pnand %p1228, %p1229
      %p1231 = pneg %p1230
      // Predicated region
      $region66: #{generator_forward.8} parent=5 // pred_check
        _
      $region67: #{generator_forward.8} parent=5 // pred_check_branch
        %1233 = sbr.rel (%p1230) target = $region69
      $region68: #{generator_forward.8} parent=5 // pred_region
        %s1234 = ssub.s32 %s9, 1
        %s1235 = sand.u32 %s60, 1
        %s1236 = sand.u32 %s60, 1
        %s1237 = smul.addr %s1236, 1024
        %s1238 = scalar_lea.vmem [#allocation2], %s1237
        // Predicated region
        $region70: #{generator_forward.8} parent=68 // pred_check
          %p1239 = pneg %p73
        $region71: #{generator_forward.8} parent=68 // pred_check_branch
          %1241 = sbr.rel (%p1239) target = $region73
        $region72: #{generator_forward.8} parent=68 // pred_region
          _
        $region73: #{generator_forward.8} parent=68 // pred_fallthru
          _
        %p1242 = scmp.lt.s32.totalorder %s18, 0
        %s1243 = scalar_select %p1242, %s18, 0
        %s1244 = smul.addr %s1243, 16
        %s1245 = smul.addr %s1244, 4
        %s1246 = scalar_lea.vmem %s0, %s1245
        %p1247 = pneg %p47
        %p1248 = pneg %p44
        %s1249 = sand.u32 %s60, 1
        %s1250 = sand.u32 %s60, 1
        %s1251 = smul.addr %s1250, 1024
        %s1252 = scalar_lea.vmem [#allocation2], %s1251
        %p1253 = pneg %p73
        %p1254 = pneg %p70
        %p1255 = scmp.lt.s32.totalorder %s19, 1
        %s1256 = scalar_select %p1255, %s19, 1
        %s1257 = scalar_lea.vmem %s2, %s1256
        %p1258 = pneg %p99
        %p1259 = pneg %p96
        %p1260 = pneg %p127
        %p1261 = pneg %p124
        %p1262 = scmp.lt.s32.totalorder %s18, 0
        %s1263 = scalar_select %p1262, %s18, 0
        %p1264 = scmp.lt.s32.totalorder %s19, 1
        %s1265 = scalar_select %p1264, %s19, 1
        %s1266 = smul.addr %s1263, 2
        %s1267 = sadd.s32 %s1265, %s1266
        %s1268 = smul.addr %s1267, 4
        %s1269 = scalar_lea.vmem %s3, %s1268
        %p1270 = scmp.lt.s32.totalorder %s18, 0
        %s1271 = scalar_select %p1270, %s18, 0
        %s1272 = smul.addr %s1271, 16
        %s1273 = smul.addr %s1272, 4
        %s1274 = scalar_lea.vmem %s0, %s1273
        %p1275 = scmp.lt.s32.totalorder %s19, 1
        %s1276 = scalar_select %p1275, %s19, 1
        %s1277 = scalar_lea.vmem %s2, %s1276
        %p1278 = scmp.lt.s32.totalorder %s18, 0
        %s1279 = scalar_select %p1278, %s18, 0
        %p1280 = scmp.lt.s32.totalorder %s19, 1
        %s1281 = scalar_select %p1280, %s19, 1
        %s1282 = smul.addr %s1279, 2
        %s1283 = sadd.s32 %s1281, %s1282
        %s1284 = smul.addr %s1283, 4
        %s1285 = scalar_lea.vmem %s3, %s1284
        %v1287 = vld [vmem:[%s1274] sm:$0xff]
        %v1288 = vld [vmem:[%s1274 + $0x8] sm:$0xff]
        %v1289 = vld [vmem:[%s1274 + $0x10] sm:$0xff]
        %v1290 = vld [vmem:[%s1274 + $0x18] sm:$0xff]
        %v1291 = vld [vmem:[%s1274 + $0x20] sm:$0xff]
        %v1292 = vld [vmem:[%s1274 + $0x28] sm:$0xff]
        %v1293 = vld [vmem:[%s1274 + $0x30] sm:$0xff]
        %v1294 = vld [vmem:[%s1274 + $0x38] sm:$0xff]
        %v1295 = vld [vmem:[%s1238] sm:$0xf]
        %v1296 = vld [vmem:[%s1238 + $0x4] sm:$0xf]
        %v1297 = vld [vmem:[%s1238 + $0x8] sm:$0xf]
        %v1298 = vld [vmem:[%s1238 + $0xc] sm:$0xf]
        %v1299 = vld [vmem:[%s1238 + $0x10] sm:$0xf]
        %v1300 = vld [vmem:[%s1238 + $0x14] sm:$0xf]
        %v1301 = vld [vmem:[%s1238 + $0x18] sm:$0xf]
        %v1302 = vld [vmem:[%s1238 + $0x1c] sm:$0xf]
        %v1303 = vld [vmem:[%s1238 + $0x20] sm:$0xf]
        %v1304 = vld [vmem:[%s1238 + $0x24] sm:$0xf]
        %v1305 = vld [vmem:[%s1238 + $0x28] sm:$0xf]
        %v1306 = vld [vmem:[%s1238 + $0x2c] sm:$0xf]
        %v1307 = vld [vmem:[%s1238 + $0x30] sm:$0xf]
        %v1308 = vld [vmem:[%s1238 + $0x34] sm:$0xf]
        %v1309 = vld [vmem:[%s1238 + $0x38] sm:$0xf]
        %v1310 = vld [vmem:[%s1238 + $0x3c] sm:$0xf]
        %v1311 = vld [vmem:[%s1238 + $0x40] sm:$0xf]
        %v1312 = vld [vmem:[%s1238 + $0x44] sm:$0xf]
        %v1313 = vld [vmem:[%s1238 + $0x48] sm:$0xf]
        %v1314 = vld [vmem:[%s1238 + $0x4c] sm:$0xf]
        %v1315 = vld [vmem:[%s1238 + $0x50] sm:$0xf]
        %v1316 = vld [vmem:[%s1238 + $0x54] sm:$0xf]
        %v1317 = vld [vmem:[%s1238 + $0x58] sm:$0xf]
        %v1318 = vld [vmem:[%s1238 + $0x5c] sm:$0xf]
        %v1319 = vld [vmem:[%s1238 + $0x60] sm:$0xf]
        %v1320 = vld [vmem:[%s1238 + $0x64] sm:$0xf]
        %v1321 = vld [vmem:[%s1238 + $0x68] sm:$0xf]
        %v1322 = vld [vmem:[%s1238 + $0x6c] sm:$0xf]
        %v1323 = vld [vmem:[%s1238 + $0x70] sm:$0xf]
        %v1324 = vld [vmem:[%s1238 + $0x74] sm:$0xf]
        %v1325 = vld [vmem:[%s1238 + $0x78] sm:$0xf]
        %v1326 = vld [vmem:[%s1238 + $0x7c] sm:$0xf]
        %v1327 = vld [vmem:[%s1238 + $0x80] sm:$0xf]
        %v1328 = vld [vmem:[%s1238 + $0x84] sm:$0xf]
        %v1329 = vld [vmem:[%s1238 + $0x88] sm:$0xf]
        %v1330 = vld [vmem:[%s1238 + $0x8c] sm:$0xf]
        %v1331 = vld [vmem:[%s1238 + $0x90] sm:$0xf]
        %v1332 = vld [vmem:[%s1238 + $0x94] sm:$0xf]
        %v1333 = vld [vmem:[%s1238 + $0x98] sm:$0xf]
        %v1334 = vld [vmem:[%s1238 + $0x9c] sm:$0xf]
        %v1335 = vld [vmem:[%s1238 + $0xa0] sm:$0xf]
        %v1336 = vld [vmem:[%s1238 + $0xa4] sm:$0xf]
        %v1337 = vld [vmem:[%s1238 + $0xa8] sm:$0xf]
        %v1338 = vld [vmem:[%s1238 + $0xac] sm:$0xf]
        %v1339 = vld [vmem:[%s1238 + $0xb0] sm:$0xf]
        %v1340 = vld [vmem:[%s1238 + $0xb4] sm:$0xf]
        %v1341 = vld [vmem:[%s1238 + $0xb8] sm:$0xf]
        %v1342 = vld [vmem:[%s1238 + $0xbc] sm:$0xf]
        %v1343 = vld [vmem:[%s1238 + $0xc0] sm:$0xf]
        %v1344 = vld [vmem:[%s1238 + $0xc4] sm:$0xf]
        %v1345 = vld [vmem:[%s1238 + $0xc8] sm:$0xf]
        %v1346 = vld [vmem:[%s1238 + $0xcc] sm:$0xf]
        %v1347 = vld [vmem:[%s1238 + $0xd0] sm:$0xf]
        %v1348 = vld [vmem:[%s1238 + $0xd4] sm:$0xf]
        %v1349 = vld [vmem:[%s1238 + $0xd8] sm:$0xf]
        %v1350 = vld [vmem:[%s1238 + $0xdc] sm:$0xf]
        %v1351 = vld [vmem:[%s1238 + $0xe0] sm:$0xf]
        %v1352 = vld [vmem:[%s1238 + $0xe4] sm:$0xf]
        %v1353 = vld [vmem:[%s1238 + $0xe8] sm:$0xf]
        %v1354 = vld [vmem:[%s1238 + $0xec] sm:$0xf]
        %v1355 = vld [vmem:[%s1238 + $0xf0] sm:$0xf]
        %v1356 = vld [vmem:[%s1238 + $0xf4] sm:$0xf]
        %v1357 = vld [vmem:[%s1238 + $0xf8] sm:$0xf]
        %v1358 = vld [vmem:[%s1238 + $0xfc] sm:$0xf]
        %v1359 = vld [vmem:[%s1238 + $0x100] sm:$0xf]
        %v1360 = vld [vmem:[%s1238 + $0x104] sm:$0xf]
        %v1361 = vld [vmem:[%s1238 + $0x108] sm:$0xf]
        %v1362 = vld [vmem:[%s1238 + $0x10c] sm:$0xf]
        %v1363 = vld [vmem:[%s1238 + $0x110] sm:$0xf]
        %v1364 = vld [vmem:[%s1238 + $0x114] sm:$0xf]
        %v1365 = vld [vmem:[%s1238 + $0x118] sm:$0xf]
        %v1366 = vld [vmem:[%s1238 + $0x11c] sm:$0xf]
        %v1367 = vld [vmem:[%s1238 + $0x120] sm:$0xf]
        %v1368 = vld [vmem:[%s1238 + $0x124] sm:$0xf]
        %v1369 = vld [vmem:[%s1238 + $0x128] sm:$0xf]
        %v1370 = vld [vmem:[%s1238 + $0x12c] sm:$0xf]
        %v1371 = vld [vmem:[%s1238 + $0x130] sm:$0xf]
        %v1372 = vld [vmem:[%s1238 + $0x134] sm:$0xf]
        %v1373 = vld [vmem:[%s1238 + $0x138] sm:$0xf]
        %v1374 = vld [vmem:[%s1238 + $0x13c] sm:$0xf]
        %v1375 = vld [vmem:[%s1238 + $0x140] sm:$0xf]
        %v1376 = vld [vmem:[%s1238 + $0x144] sm:$0xf]
        %v1377 = vld [vmem:[%s1238 + $0x148] sm:$0xf]
        %v1378 = vld [vmem:[%s1238 + $0x14c] sm:$0xf]
        %v1379 = vld [vmem:[%s1238 + $0x150] sm:$0xf]
        %v1380 = vld [vmem:[%s1238 + $0x154] sm:$0xf]
        %v1381 = vld [vmem:[%s1238 + $0x158] sm:$0xf]
        %v1382 = vld [vmem:[%s1238 + $0x15c] sm:$0xf]
        %v1383 = vld [vmem:[%s1238 + $0x160] sm:$0xf]
        %v1384 = vld [vmem:[%s1238 + $0x164] sm:$0xf]
        %v1385 = vld [vmem:[%s1238 + $0x168] sm:$0xf]
        %v1386 = vld [vmem:[%s1238 + $0x16c] sm:$0xf]
        %v1387 = vld [vmem:[%s1238 + $0x170] sm:$0xf]
        %v1388 = vld [vmem:[%s1238 + $0x174] sm:$0xf]
        %v1389 = vld [vmem:[%s1238 + $0x178] sm:$0xf]
        %v1390 = vld [vmem:[%s1238 + $0x17c] sm:$0xf]
        %v1391 = vld [vmem:[%s1238 + $0x180] sm:$0xf]
        %v1392 = vld [vmem:[%s1238 + $0x184] sm:$0xf]
        %v1393 = vld [vmem:[%s1238 + $0x188] sm:$0xf]
        %v1394 = vld [vmem:[%s1238 + $0x18c] sm:$0xf]
        %v1395 = vld [vmem:[%s1238 + $0x190] sm:$0xf]
        %v1396 = vld [vmem:[%s1238 + $0x194] sm:$0xf]
        %v1397 = vld [vmem:[%s1238 + $0x198] sm:$0xf]
        %v1398 = vld [vmem:[%s1238 + $0x19c] sm:$0xf]
        %v1399 = vld [vmem:[%s1238 + $0x1a0] sm:$0xf]
        %v1400 = vld [vmem:[%s1238 + $0x1a4] sm:$0xf]
        %v1401 = vld [vmem:[%s1238 + $0x1a8] sm:$0xf]
        %v1402 = vld [vmem:[%s1238 + $0x1ac] sm:$0xf]
        %v1403 = vld [vmem:[%s1238 + $0x1b0] sm:$0xf]
        %v1404 = vld [vmem:[%s1238 + $0x1b4] sm:$0xf]
        %v1405 = vld [vmem:[%s1238 + $0x1b8] sm:$0xf]
        %v1406 = vld [vmem:[%s1238 + $0x1bc] sm:$0xf]
        %v1407 = vld [vmem:[%s1238 + $0x1c0] sm:$0xf]
        %v1408 = vld [vmem:[%s1238 + $0x1c4] sm:$0xf]
        %v1409 = vld [vmem:[%s1238 + $0x1c8] sm:$0xf]
        %v1410 = vld [vmem:[%s1238 + $0x1cc] sm:$0xf]
        %v1411 = vld [vmem:[%s1238 + $0x1d0] sm:$0xf]
        %v1412 = vld [vmem:[%s1238 + $0x1d4] sm:$0xf]
        %v1413 = vld [vmem:[%s1238 + $0x1d8] sm:$0xf]
        %v1414 = vld [vmem:[%s1238 + $0x1dc] sm:$0xf]
        %v1415 = vld [vmem:[%s1238 + $0x1e0] sm:$0xf]
        %v1416 = vld [vmem:[%s1238 + $0x1e4] sm:$0xf]
        %v1417 = vld [vmem:[%s1238 + $0x1e8] sm:$0xf]
        %v1418 = vld [vmem:[%s1238 + $0x1ec] sm:$0xf]
        %v1419 = vld [vmem:[%s1238 + $0x1f0] sm:$0xf]
        %v1420 = vld [vmem:[%s1238 + $0x1f4] sm:$0xf]
        %v1421 = vld [vmem:[%s1238 + $0x1f8] sm:$0xf]
        %v1422 = vld [vmem:[%s1238 + $0x1fc] sm:$0xf]
        %v1423 = vld [vmem:[%s1238 + $0x200] sm:$0xf]
        %v1424 = vld [vmem:[%s1238 + $0x204] sm:$0xf]
        %v1425 = vld [vmem:[%s1238 + $0x208] sm:$0xf]
        %v1426 = vld [vmem:[%s1238 + $0x20c] sm:$0xf]
        %v1427 = vld [vmem:[%s1238 + $0x210] sm:$0xf]
        %v1428 = vld [vmem:[%s1238 + $0x214] sm:$0xf]
        %v1429 = vld [vmem:[%s1238 + $0x218] sm:$0xf]
        %v1430 = vld [vmem:[%s1238 + $0x21c] sm:$0xf]
        %v1431 = vld [vmem:[%s1238 + $0x220] sm:$0xf]
        %v1432 = vld [vmem:[%s1238 + $0x224] sm:$0xf]
        %v1433 = vld [vmem:[%s1238 + $0x228] sm:$0xf]
        %v1434 = vld [vmem:[%s1238 + $0x22c] sm:$0xf]
        %v1435 = vld [vmem:[%s1238 + $0x230] sm:$0xf]
        %v1436 = vld [vmem:[%s1238 + $0x234] sm:$0xf]
        %v1437 = vld [vmem:[%s1238 + $0x238] sm:$0xf]
        %v1438 = vld [vmem:[%s1238 + $0x23c] sm:$0xf]
        %v1439 = vld [vmem:[%s1238 + $0x240] sm:$0xf]
        %v1440 = vld [vmem:[%s1238 + $0x244] sm:$0xf]
        %v1441 = vld [vmem:[%s1238 + $0x248] sm:$0xf]
        %v1442 = vld [vmem:[%s1238 + $0x24c] sm:$0xf]
        %v1443 = vld [vmem:[%s1238 + $0x250] sm:$0xf]
        %v1444 = vld [vmem:[%s1238 + $0x254] sm:$0xf]
        %v1445 = vld [vmem:[%s1238 + $0x258] sm:$0xf]
        %v1446 = vld [vmem:[%s1238 + $0x25c] sm:$0xf]
        %v1447 = vld [vmem:[%s1238 + $0x260] sm:$0xf]
        %v1448 = vld [vmem:[%s1238 + $0x264] sm:$0xf]
        %v1449 = vld [vmem:[%s1238 + $0x268] sm:$0xf]
        %v1450 = vld [vmem:[%s1238 + $0x26c] sm:$0xf]
        %v1451 = vld [vmem:[%s1238 + $0x270] sm:$0xf]
        %v1452 = vld [vmem:[%s1238 + $0x274] sm:$0xf]
        %v1453 = vld [vmem:[%s1238 + $0x278] sm:$0xf]
        %v1454 = vld [vmem:[%s1238 + $0x27c] sm:$0xf]
        %v1455 = vld [vmem:[%s1238 + $0x280] sm:$0xf]
        %v1456 = vld [vmem:[%s1238 + $0x284] sm:$0xf]
        %v1457 = vld [vmem:[%s1238 + $0x288] sm:$0xf]
        %v1458 = vld [vmem:[%s1238 + $0x28c] sm:$0xf]
        %v1459 = vld [vmem:[%s1238 + $0x290] sm:$0xf]
        %v1460 = vld [vmem:[%s1238 + $0x294] sm:$0xf]
        %v1461 = vld [vmem:[%s1238 + $0x298] sm:$0xf]
        %v1462 = vld [vmem:[%s1238 + $0x29c] sm:$0xf]
        %v1463 = vld [vmem:[%s1238 + $0x2a0] sm:$0xf]
        %v1464 = vld [vmem:[%s1238 + $0x2a4] sm:$0xf]
        %v1465 = vld [vmem:[%s1238 + $0x2a8] sm:$0xf]
        %v1466 = vld [vmem:[%s1238 + $0x2ac] sm:$0xf]
        %v1467 = vld [vmem:[%s1238 + $0x2b0] sm:$0xf]
        %v1468 = vld [vmem:[%s1238 + $0x2b4] sm:$0xf]
        %v1469 = vld [vmem:[%s1238 + $0x2b8] sm:$0xf]
        %v1470 = vld [vmem:[%s1238 + $0x2bc] sm:$0xf]
        %v1471 = vld [vmem:[%s1238 + $0x2c0] sm:$0xf]
        %v1472 = vld [vmem:[%s1238 + $0x2c4] sm:$0xf]
        %v1473 = vld [vmem:[%s1238 + $0x2c8] sm:$0xf]
        %v1474 = vld [vmem:[%s1238 + $0x2cc] sm:$0xf]
        %v1475 = vld [vmem:[%s1238 + $0x2d0] sm:$0xf]
        %v1476 = vld [vmem:[%s1238 + $0x2d4] sm:$0xf]
        %v1477 = vld [vmem:[%s1238 + $0x2d8] sm:$0xf]
        %v1478 = vld [vmem:[%s1238 + $0x2dc] sm:$0xf]
        %v1479 = vld [vmem:[%s1238 + $0x2e0] sm:$0xf]
        %v1480 = vld [vmem:[%s1238 + $0x2e4] sm:$0xf]
        %v1481 = vld [vmem:[%s1238 + $0x2e8] sm:$0xf]
        %v1482 = vld [vmem:[%s1238 + $0x2ec] sm:$0xf]
        %v1483 = vld [vmem:[%s1238 + $0x2f0] sm:$0xf]
        %v1484 = vld [vmem:[%s1238 + $0x2f4] sm:$0xf]
        %v1485 = vld [vmem:[%s1238 + $0x2f8] sm:$0xf]
        %v1486 = vld [vmem:[%s1238 + $0x2fc] sm:$0xf]
        %v1487 = vld [vmem:[%s1238 + $0x300] sm:$0xf]
        %v1488 = vld [vmem:[%s1238 + $0x304] sm:$0xf]
        %v1489 = vld [vmem:[%s1238 + $0x308] sm:$0xf]
        %v1490 = vld [vmem:[%s1238 + $0x30c] sm:$0xf]
        %v1491 = vld [vmem:[%s1238 + $0x310] sm:$0xf]
        %v1492 = vld [vmem:[%s1238 + $0x314] sm:$0xf]
        %v1493 = vld [vmem:[%s1238 + $0x318] sm:$0xf]
        %v1494 = vld [vmem:[%s1238 + $0x31c] sm:$0xf]
        %v1495 = vld [vmem:[%s1238 + $0x320] sm:$0xf]
        %v1496 = vld [vmem:[%s1238 + $0x324] sm:$0xf]
        %v1497 = vld [vmem:[%s1238 + $0x328] sm:$0xf]
        %v1498 = vld [vmem:[%s1238 + $0x32c] sm:$0xf]
        %v1499 = vld [vmem:[%s1238 + $0x330] sm:$0xf]
        %v1500 = vld [vmem:[%s1238 + $0x334] sm:$0xf]
        %v1501 = vld [vmem:[%s1238 + $0x338] sm:$0xf]
        %v1502 = vld [vmem:[%s1238 + $0x33c] sm:$0xf]
        %v1503 = vld [vmem:[%s1238 + $0x340] sm:$0xf]
        %v1504 = vld [vmem:[%s1238 + $0x344] sm:$0xf]
        %v1505 = vld [vmem:[%s1238 + $0x348] sm:$0xf]
        %v1506 = vld [vmem:[%s1238 + $0x34c] sm:$0xf]
        %v1507 = vld [vmem:[%s1238 + $0x350] sm:$0xf]
        %v1508 = vld [vmem:[%s1238 + $0x354] sm:$0xf]
        %v1509 = vld [vmem:[%s1238 + $0x358] sm:$0xf]
        %v1510 = vld [vmem:[%s1238 + $0x35c] sm:$0xf]
        %v1511 = vld [vmem:[%s1238 + $0x360] sm:$0xf]
        %v1512 = vld [vmem:[%s1238 + $0x364] sm:$0xf]
        %v1513 = vld [vmem:[%s1238 + $0x368] sm:$0xf]
        %v1514 = vld [vmem:[%s1238 + $0x36c] sm:$0xf]
        %v1515 = vld [vmem:[%s1238 + $0x370] sm:$0xf]
        %v1516 = vld [vmem:[%s1238 + $0x374] sm:$0xf]
        %v1517 = vld [vmem:[%s1238 + $0x378] sm:$0xf]
        %v1518 = vld [vmem:[%s1238 + $0x37c] sm:$0xf]
        %v1519 = vld [vmem:[%s1238 + $0x380] sm:$0xf]
        %v1520 = vld [vmem:[%s1238 + $0x384] sm:$0xf]
        %v1521 = vld [vmem:[%s1238 + $0x388] sm:$0xf]
        %v1522 = vld [vmem:[%s1238 + $0x38c] sm:$0xf]
        %v1523 = vld [vmem:[%s1238 + $0x390] sm:$0xf]
        %v1524 = vld [vmem:[%s1238 + $0x394] sm:$0xf]
        %v1525 = vld [vmem:[%s1238 + $0x398] sm:$0xf]
        %v1526 = vld [vmem:[%s1238 + $0x39c] sm:$0xf]
        %v1527 = vld [vmem:[%s1238 + $0x3a0] sm:$0xf]
        %v1528 = vld [vmem:[%s1238 + $0x3a4] sm:$0xf]
        %v1529 = vld [vmem:[%s1238 + $0x3a8] sm:$0xf]
        %v1530 = vld [vmem:[%s1238 + $0x3ac] sm:$0xf]
        %v1531 = vld [vmem:[%s1238 + $0x3b0] sm:$0xf]
        %v1532 = vld [vmem:[%s1238 + $0x3b4] sm:$0xf]
        %v1533 = vld [vmem:[%s1238 + $0x3b8] sm:$0xf]
        %v1534 = vld [vmem:[%s1238 + $0x3bc] sm:$0xf]
        %v1535 = vld [vmem:[%s1238 + $0x3c0] sm:$0xf]
        %v1536 = vld [vmem:[%s1238 + $0x3c4] sm:$0xf]
        %v1537 = vld [vmem:[%s1238 + $0x3c8] sm:$0xf]
        %v1538 = vld [vmem:[%s1238 + $0x3cc] sm:$0xf]
        %v1539 = vld [vmem:[%s1238 + $0x3d0] sm:$0xf]
        %v1540 = vld [vmem:[%s1238 + $0x3d4] sm:$0xf]
        %v1541 = vld [vmem:[%s1238 + $0x3d8] sm:$0xf]
        %v1542 = vld [vmem:[%s1238 + $0x3dc] sm:$0xf]
        %v1543 = vld [vmem:[%s1238 + $0x3e0] sm:$0xf]
        %v1544 = vld [vmem:[%s1238 + $0x3e4] sm:$0xf]
        %v1545 = vld [vmem:[%s1238 + $0x3e8] sm:$0xf]
        %v1546 = vld [vmem:[%s1238 + $0x3ec] sm:$0xf]
        %v1547 = vld [vmem:[%s1238 + $0x3f0] sm:$0xf]
        %v1548 = vld [vmem:[%s1238 + $0x3f4] sm:$0xf]
        %v1549 = vld [vmem:[%s1238 + $0x3f8] sm:$0xf]
        %v1550 = vld [vmem:[%s1238 + $0x3fc] sm:$0xf]
        %v1551 = vld [vmem:[%s1277] sm:$0x1]
        %v1553 = vlaneseq
        %v1554 = vshrl.u32 %v1553, 7
        %v1555 = vsub.s32 0, %v1554
        %v1556 = vrot.slane %v1551, %v1555
        %v1566 = vunpack.c.l.b16 %v1287
        %v1567 = vunpack.c.h.b16 %v1287
        %v1568 = vunpack.c.l.b16 %v1288
        %v1569 = vunpack.c.h.b16 %v1288
        %v1570 = vunpack.c.l.b16 %v1289
        %v1571 = vunpack.c.h.b16 %v1289
        %v1572 = vunpack.c.l.b16 %v1290
        %v1573 = vunpack.c.h.b16 %v1290
        %v1574 = vunpack.c.l.b16 %v1291
        %v1575 = vunpack.c.h.b16 %v1291
        %v1576 = vunpack.c.l.b16 %v1292
        %v1577 = vunpack.c.h.b16 %v1292
        %v1578 = vunpack.c.l.b16 %v1293
        %v1579 = vunpack.c.h.b16 %v1293
        %v1580 = vunpack.c.l.b16 %v1294
        %v1581 = vunpack.c.h.b16 %v1294
        %v1582 = vpack.c.b16 %v1566, %v1566
        %v1583 = vpack.c.b16 %v1567, %v1567
        %v1584 = vpack.c.b16 %v1568, %v1568
        %v1585 = vpack.c.b16 %v1569, %v1569
        %v1586 = vpack.c.b16 %v1570, %v1570
        %v1587 = vpack.c.b16 %v1571, %v1571
        %v1588 = vpack.c.b16 %v1572, %v1572
        %v1589 = vpack.c.b16 %v1573, %v1573
        %v1590 = vpack.c.b16 %v1574, %v1574
        %v1591 = vpack.c.b16 %v1575, %v1575
        %v1592 = vpack.c.b16 %v1576, %v1576
        %v1593 = vpack.c.b16 %v1577, %v1577
        %v1594 = vpack.c.b16 %v1578, %v1578
        %v1595 = vpack.c.b16 %v1579, %v1579
        %v1596 = vpack.c.b16 %v1580, %v1580
        %v1597 = vpack.c.b16 %v1581, %v1581
        %v1870 = vunpack.c.l.b16 %v1295
        %v1871 = vunpack.c.l.b16 %v1296
        %v1872 = vunpack.c.l.b16 %v1297
        %v1873 = vunpack.c.l.b16 %v1298
        %v1874 = vunpack.c.l.b16 %v1299
        %v1875 = vunpack.c.l.b16 %v1300
        %v1876 = vunpack.c.l.b16 %v1301
        %v1877 = vunpack.c.l.b16 %v1302
        %v1878 = vunpack.c.l.b16 %v1303
        %v1879 = vunpack.c.l.b16 %v1304
        %v1880 = vunpack.c.l.b16 %v1305
        %v1881 = vunpack.c.l.b16 %v1306
        %v1882 = vunpack.c.l.b16 %v1307
        %v1883 = vunpack.c.l.b16 %v1308
        %v1884 = vunpack.c.l.b16 %v1309
        %v1885 = vunpack.c.l.b16 %v1310
        %v1886 = vunpack.c.l.b16 %v1311
        %v1887 = vunpack.c.l.b16 %v1312
        %v1888 = vunpack.c.l.b16 %v1313
        %v1889 = vunpack.c.l.b16 %v1314
        %v1890 = vunpack.c.l.b16 %v1315
        %v1891 = vunpack.c.l.b16 %v1316
        %v1892 = vunpack.c.l.b16 %v1317
        %v1893 = vunpack.c.l.b16 %v1318
        %v1894 = vunpack.c.l.b16 %v1319
        %v1895 = vunpack.c.l.b16 %v1320
        %v1896 = vunpack.c.l.b16 %v1321
        %v1897 = vunpack.c.l.b16 %v1322
        %v1898 = vunpack.c.l.b16 %v1323
        %v1899 = vunpack.c.l.b16 %v1324
        %v1900 = vunpack.c.l.b16 %v1325
        %v1901 = vunpack.c.l.b16 %v1326
        %v1902 = vunpack.c.l.b16 %v1327
        %v1903 = vunpack.c.l.b16 %v1328
        %v1904 = vunpack.c.l.b16 %v1329
        %v1905 = vunpack.c.l.b16 %v1330
        %v1906 = vunpack.c.l.b16 %v1331
        %v1907 = vunpack.c.l.b16 %v1332
        %v1908 = vunpack.c.l.b16 %v1333
        %v1909 = vunpack.c.l.b16 %v1334
        %v1910 = vunpack.c.l.b16 %v1335
        %v1911 = vunpack.c.l.b16 %v1336
        %v1912 = vunpack.c.l.b16 %v1337
        %v1913 = vunpack.c.l.b16 %v1338
        %v1914 = vunpack.c.l.b16 %v1339
        %v1915 = vunpack.c.l.b16 %v1340
        %v1916 = vunpack.c.l.b16 %v1341
        %v1917 = vunpack.c.l.b16 %v1342
        %v1918 = vunpack.c.l.b16 %v1343
        %v1919 = vunpack.c.l.b16 %v1344
        %v1920 = vunpack.c.l.b16 %v1345
        %v1921 = vunpack.c.l.b16 %v1346
        %v1922 = vunpack.c.l.b16 %v1347
        %v1923 = vunpack.c.l.b16 %v1348
        %v1924 = vunpack.c.l.b16 %v1349
        %v1925 = vunpack.c.l.b16 %v1350
        %v1926 = vunpack.c.l.b16 %v1351
        %v1927 = vunpack.c.l.b16 %v1352
        %v1928 = vunpack.c.l.b16 %v1353
        %v1929 = vunpack.c.l.b16 %v1354
        %v1930 = vunpack.c.l.b16 %v1355
        %v1931 = vunpack.c.l.b16 %v1356
        %v1932 = vunpack.c.l.b16 %v1357
        %v1933 = vunpack.c.l.b16 %v1358
        %v1934 = vunpack.c.l.b16 %v1359
        %v1935 = vunpack.c.l.b16 %v1360
        %v1936 = vunpack.c.l.b16 %v1361
        %v1937 = vunpack.c.l.b16 %v1362
        %v1938 = vunpack.c.l.b16 %v1363
        %v1939 = vunpack.c.l.b16 %v1364
        %v1940 = vunpack.c.l.b16 %v1365
        %v1941 = vunpack.c.l.b16 %v1366
        %v1942 = vunpack.c.l.b16 %v1367
        %v1943 = vunpack.c.l.b16 %v1368
        %v1944 = vunpack.c.l.b16 %v1369
        %v1945 = vunpack.c.l.b16 %v1370
        %v1946 = vunpack.c.l.b16 %v1371
        %v1947 = vunpack.c.l.b16 %v1372
        %v1948 = vunpack.c.l.b16 %v1373
        %v1949 = vunpack.c.l.b16 %v1374
        %v1950 = vunpack.c.l.b16 %v1375
        %v1951 = vunpack.c.l.b16 %v1376
        %v1952 = vunpack.c.l.b16 %v1377
        %v1953 = vunpack.c.l.b16 %v1378
        %v1954 = vunpack.c.l.b16 %v1379
        %v1955 = vunpack.c.l.b16 %v1380
        %v1956 = vunpack.c.l.b16 %v1381
        %v1957 = vunpack.c.l.b16 %v1382
        %v1958 = vunpack.c.l.b16 %v1383
        %v1959 = vunpack.c.l.b16 %v1384
        %v1960 = vunpack.c.l.b16 %v1385
        %v1961 = vunpack.c.l.b16 %v1386
        %v1962 = vunpack.c.l.b16 %v1387
        %v1963 = vunpack.c.l.b16 %v1388
        %v1964 = vunpack.c.l.b16 %v1389
        %v1965 = vunpack.c.l.b16 %v1390
        %v1966 = vunpack.c.l.b16 %v1391
        %v1967 = vunpack.c.l.b16 %v1392
        %v1968 = vunpack.c.l.b16 %v1393
        %v1969 = vunpack.c.l.b16 %v1394
        %v1970 = vunpack.c.l.b16 %v1395
        %v1971 = vunpack.c.l.b16 %v1396
        %v1972 = vunpack.c.l.b16 %v1397
        %v1973 = vunpack.c.l.b16 %v1398
        %v1974 = vunpack.c.l.b16 %v1399
        %v1975 = vunpack.c.l.b16 %v1400
        %v1976 = vunpack.c.l.b16 %v1401
        %v1977 = vunpack.c.l.b16 %v1402
        %v1978 = vunpack.c.l.b16 %v1403
        %v1979 = vunpack.c.l.b16 %v1404
        %v1980 = vunpack.c.l.b16 %v1405
        %v1981 = vunpack.c.l.b16 %v1406
        %v1982 = vunpack.c.l.b16 %v1407
        %v1983 = vunpack.c.l.b16 %v1408
        %v1984 = vunpack.c.l.b16 %v1409
        %v1985 = vunpack.c.l.b16 %v1410
        %v1986 = vunpack.c.l.b16 %v1411
        %v1987 = vunpack.c.l.b16 %v1412
        %v1988 = vunpack.c.l.b16 %v1413
        %v1989 = vunpack.c.l.b16 %v1414
        %v1990 = vunpack.c.l.b16 %v1415
        %v1991 = vunpack.c.l.b16 %v1416
        %v1992 = vunpack.c.l.b16 %v1417
        %v1993 = vunpack.c.l.b16 %v1418
        %v1994 = vunpack.c.l.b16 %v1419
        %v1995 = vunpack.c.l.b16 %v1420
        %v1996 = vunpack.c.l.b16 %v1421
        %v1997 = vunpack.c.l.b16 %v1422
        %v1998 = vunpack.c.l.b16 %v1423
        %v1999 = vunpack.c.l.b16 %v1424
        %v2000 = vunpack.c.l.b16 %v1425
        %v2001 = vunpack.c.l.b16 %v1426
        %v2002 = vunpack.c.l.b16 %v1427
        %v2003 = vunpack.c.l.b16 %v1428
        %v2004 = vunpack.c.l.b16 %v1429
        %v2005 = vunpack.c.l.b16 %v1430
        %v2006 = vunpack.c.l.b16 %v1431
        %v2007 = vunpack.c.l.b16 %v1432
        %v2008 = vunpack.c.l.b16 %v1433
        %v2009 = vunpack.c.l.b16 %v1434
        %v2010 = vunpack.c.l.b16 %v1435
        %v2011 = vunpack.c.l.b16 %v1436
        %v2012 = vunpack.c.l.b16 %v1437
        %v2013 = vunpack.c.l.b16 %v1438
        %v2014 = vunpack.c.l.b16 %v1439
        %v2015 = vunpack.c.l.b16 %v1440
        %v2016 = vunpack.c.l.b16 %v1441
        %v2017 = vunpack.c.l.b16 %v1442
        %v2018 = vunpack.c.l.b16 %v1443
        %v2019 = vunpack.c.l.b16 %v1444
        %v2020 = vunpack.c.l.b16 %v1445
        %v2021 = vunpack.c.l.b16 %v1446
        %v2022 = vunpack.c.l.b16 %v1447
        %v2023 = vunpack.c.l.b16 %v1448
        %v2024 = vunpack.c.l.b16 %v1449
        %v2025 = vunpack.c.l.b16 %v1450
        %v2026 = vunpack.c.l.b16 %v1451
        %v2027 = vunpack.c.l.b16 %v1452
        %v2028 = vunpack.c.l.b16 %v1453
        %v2029 = vunpack.c.l.b16 %v1454
        %v2030 = vunpack.c.l.b16 %v1455
        %v2031 = vunpack.c.l.b16 %v1456
        %v2032 = vunpack.c.l.b16 %v1457
        %v2033 = vunpack.c.l.b16 %v1458
        %v2034 = vunpack.c.l.b16 %v1459
        %v2035 = vunpack.c.l.b16 %v1460
        %v2036 = vunpack.c.l.b16 %v1461
        %v2037 = vunpack.c.l.b16 %v1462
        %v2038 = vunpack.c.l.b16 %v1463
        %v2039 = vunpack.c.l.b16 %v1464
        %v2040 = vunpack.c.l.b16 %v1465
        %v2041 = vunpack.c.l.b16 %v1466
        %v2042 = vunpack.c.l.b16 %v1467
        %v2043 = vunpack.c.l.b16 %v1468
        %v2044 = vunpack.c.l.b16 %v1469
        %v2045 = vunpack.c.l.b16 %v1470
        %v2046 = vunpack.c.l.b16 %v1471
        %v2047 = vunpack.c.l.b16 %v1472
        %v2048 = vunpack.c.l.b16 %v1473
        %v2049 = vunpack.c.l.b16 %v1474
        %v2050 = vunpack.c.l.b16 %v1475
        %v2051 = vunpack.c.l.b16 %v1476
        %v2052 = vunpack.c.l.b16 %v1477
        %v2053 = vunpack.c.l.b16 %v1478
        %v2054 = vunpack.c.l.b16 %v1479
        %v2055 = vunpack.c.l.b16 %v1480
        %v2056 = vunpack.c.l.b16 %v1481
        %v2057 = vunpack.c.l.b16 %v1482
        %v2058 = vunpack.c.l.b16 %v1483
        %v2059 = vunpack.c.l.b16 %v1484
        %v2060 = vunpack.c.l.b16 %v1485
        %v2061 = vunpack.c.l.b16 %v1486
        %v2062 = vunpack.c.l.b16 %v1487
        %v2063 = vunpack.c.l.b16 %v1488
        %v2064 = vunpack.c.l.b16 %v1489
        %v2065 = vunpack.c.l.b16 %v1490
        %v2066 = vunpack.c.l.b16 %v1491
        %v2067 = vunpack.c.l.b16 %v1492
        %v2068 = vunpack.c.l.b16 %v1493
        %v2069 = vunpack.c.l.b16 %v1494
        %v2070 = vunpack.c.l.b16 %v1495
        %v2071 = vunpack.c.l.b16 %v1496
        %v2072 = vunpack.c.l.b16 %v1497
        %v2073 = vunpack.c.l.b16 %v1498
        %v2074 = vunpack.c.l.b16 %v1499
        %v2075 = vunpack.c.l.b16 %v1500
        %v2076 = vunpack.c.l.b16 %v1501
        %v2077 = vunpack.c.l.b16 %v1502
        %v2078 = vunpack.c.l.b16 %v1503
        %v2079 = vunpack.c.l.b16 %v1504
        %v2080 = vunpack.c.l.b16 %v1505
        %v2081 = vunpack.c.l.b16 %v1506
        %v2082 = vunpack.c.l.b16 %v1507
        %v2083 = vunpack.c.l.b16 %v1508
        %v2084 = vunpack.c.l.b16 %v1509
        %v2085 = vunpack.c.l.b16 %v1510
        %v2086 = vunpack.c.l.b16 %v1511
        %v2087 = vunpack.c.l.b16 %v1512
        %v2088 = vunpack.c.l.b16 %v1513
        %v2089 = vunpack.c.l.b16 %v1514
        %v2090 = vunpack.c.l.b16 %v1515
        %v2091 = vunpack.c.l.b16 %v1516
        %v2092 = vunpack.c.l.b16 %v1517
        %v2093 = vunpack.c.l.b16 %v1518
        %v2094 = vunpack.c.l.b16 %v1519
        %v2095 = vunpack.c.l.b16 %v1520
        %v2096 = vunpack.c.l.b16 %v1521
        %v2097 = vunpack.c.l.b16 %v1522
        %v2098 = vunpack.c.l.b16 %v1523
        %v2099 = vunpack.c.l.b16 %v1524
        %v2100 = vunpack.c.l.b16 %v1525
        %v2101 = vunpack.c.l.b16 %v1526
        %v2102 = vunpack.c.l.b16 %v1527
        %v2103 = vunpack.c.l.b16 %v1528
        %v2104 = vunpack.c.l.b16 %v1529
        %v2105 = vunpack.c.l.b16 %v1530
        %v2106 = vunpack.c.l.b16 %v1531
        %v2107 = vunpack.c.l.b16 %v1532
        %v2108 = vunpack.c.l.b16 %v1533
        %v2109 = vunpack.c.l.b16 %v1534
        %v2110 = vunpack.c.l.b16 %v1535
        %v2111 = vunpack.c.l.b16 %v1536
        %v2112 = vunpack.c.l.b16 %v1537
        %v2113 = vunpack.c.l.b16 %v1538
        %v2114 = vunpack.c.l.b16 %v1539
        %v2115 = vunpack.c.l.b16 %v1540
        %v2116 = vunpack.c.l.b16 %v1541
        %v2117 = vunpack.c.l.b16 %v1542
        %v2118 = vunpack.c.l.b16 %v1543
        %v2119 = vunpack.c.l.b16 %v1544
        %v2120 = vunpack.c.l.b16 %v1545
        %v2121 = vunpack.c.l.b16 %v1546
        %v2122 = vunpack.c.l.b16 %v1547
        %v2123 = vunpack.c.l.b16 %v1548
        %v2124 = vunpack.c.l.b16 %v1549
        %v2125 = vunpack.c.l.b16 %v1550
        %v2126 = vpack.c.b16 %v1871, %v1870
        %v2127 = vpack.c.b16 %v1873, %v1872
        %v2128 = vpack.c.b16 %v1875, %v1874
        %v2129 = vpack.c.b16 %v1877, %v1876
        %v2130 = vpack.c.b16 %v1879, %v1878
        %v2131 = vpack.c.b16 %v1881, %v1880
        %v2132 = vpack.c.b16 %v1883, %v1882
        %v2133 = vpack.c.b16 %v1885, %v1884
        %v2134 = vpack.c.b16 %v1887, %v1886
        %v2135 = vpack.c.b16 %v1889, %v1888
        %v2136 = vpack.c.b16 %v1891, %v1890
        %v2137 = vpack.c.b16 %v1893, %v1892
        %v2138 = vpack.c.b16 %v1895, %v1894
        %v2139 = vpack.c.b16 %v1897, %v1896
        %v2140 = vpack.c.b16 %v1899, %v1898
        %v2141 = vpack.c.b16 %v1901, %v1900
        %v2142 = vpack.c.b16 %v1903, %v1902
        %v2143 = vpack.c.b16 %v1905, %v1904
        %v2144 = vpack.c.b16 %v1907, %v1906
        %v2145 = vpack.c.b16 %v1909, %v1908
        %v2146 = vpack.c.b16 %v1911, %v1910
        %v2147 = vpack.c.b16 %v1913, %v1912
        %v2148 = vpack.c.b16 %v1915, %v1914
        %v2149 = vpack.c.b16 %v1917, %v1916
        %v2150 = vpack.c.b16 %v1919, %v1918
        %v2151 = vpack.c.b16 %v1921, %v1920
        %v2152 = vpack.c.b16 %v1923, %v1922
        %v2153 = vpack.c.b16 %v1925, %v1924
        %v2154 = vpack.c.b16 %v1927, %v1926
        %v2155 = vpack.c.b16 %v1929, %v1928
        %v2156 = vpack.c.b16 %v1931, %v1930
        %v2157 = vpack.c.b16 %v1933, %v1932
        %v2158 = vpack.c.b16 %v1935, %v1934
        %v2159 = vpack.c.b16 %v1937, %v1936
        %v2160 = vpack.c.b16 %v1939, %v1938
        %v2161 = vpack.c.b16 %v1941, %v1940
        %v2162 = vpack.c.b16 %v1943, %v1942
        %v2163 = vpack.c.b16 %v1945, %v1944
        %v2164 = vpack.c.b16 %v1947, %v1946
        %v2165 = vpack.c.b16 %v1949, %v1948
        %v2166 = vpack.c.b16 %v1951, %v1950
        %v2167 = vpack.c.b16 %v1953, %v1952
        %v2168 = vpack.c.b16 %v1955, %v1954
        %v2169 = vpack.c.b16 %v1957, %v1956
        %v2170 = vpack.c.b16 %v1959, %v1958
        %v2171 = vpack.c.b16 %v1961, %v1960
        %v2172 = vpack.c.b16 %v1963, %v1962
        %v2173 = vpack.c.b16 %v1965, %v1964
        %v2174 = vpack.c.b16 %v1967, %v1966
        %v2175 = vpack.c.b16 %v1969, %v1968
        %v2176 = vpack.c.b16 %v1971, %v1970
        %v2177 = vpack.c.b16 %v1973, %v1972
        %v2178 = vpack.c.b16 %v1975, %v1974
        %v2179 = vpack.c.b16 %v1977, %v1976
        %v2180 = vpack.c.b16 %v1979, %v1978
        %v2181 = vpack.c.b16 %v1981, %v1980
        %v2182 = vpack.c.b16 %v1983, %v1982
        %v2183 = vpack.c.b16 %v1985, %v1984
        %v2184 = vpack.c.b16 %v1987, %v1986
        %v2185 = vpack.c.b16 %v1989, %v1988
        %v2186 = vpack.c.b16 %v1991, %v1990
        %v2187 = vpack.c.b16 %v1993, %v1992
        %v2188 = vpack.c.b16 %v1995, %v1994
        %v2189 = vpack.c.b16 %v1997, %v1996
        %v2190 = vpack.c.b16 %v1999, %v1998
        %v2191 = vpack.c.b16 %v2001, %v2000
        %v2192 = vpack.c.b16 %v2003, %v2002
        %v2193 = vpack.c.b16 %v2005, %v2004
        %v2194 = vpack.c.b16 %v2007, %v2006
        %v2195 = vpack.c.b16 %v2009, %v2008
        %v2196 = vpack.c.b16 %v2011, %v2010
        %v2197 = vpack.c.b16 %v2013, %v2012
        %v2198 = vpack.c.b16 %v2015, %v2014
        %v2199 = vpack.c.b16 %v2017, %v2016
        %v2200 = vpack.c.b16 %v2019, %v2018
        %v2201 = vpack.c.b16 %v2021, %v2020
        %v2202 = vpack.c.b16 %v2023, %v2022
        %v2203 = vpack.c.b16 %v2025, %v2024
        %v2204 = vpack.c.b16 %v2027, %v2026
        %v2205 = vpack.c.b16 %v2029, %v2028
        %v2206 = vpack.c.b16 %v2031, %v2030
        %v2207 = vpack.c.b16 %v2033, %v2032
        %v2208 = vpack.c.b16 %v2035, %v2034
        %v2209 = vpack.c.b16 %v2037, %v2036
        %v2210 = vpack.c.b16 %v2039, %v2038
        %v2211 = vpack.c.b16 %v2041, %v2040
        %v2212 = vpack.c.b16 %v2043, %v2042
        %v2213 = vpack.c.b16 %v2045, %v2044
        %v2214 = vpack.c.b16 %v2047, %v2046
        %v2215 = vpack.c.b16 %v2049, %v2048
        %v2216 = vpack.c.b16 %v2051, %v2050
        %v2217 = vpack.c.b16 %v2053, %v2052
        %v2218 = vpack.c.b16 %v2055, %v2054
        %v2219 = vpack.c.b16 %v2057, %v2056
        %v2220 = vpack.c.b16 %v2059, %v2058
        %v2221 = vpack.c.b16 %v2061, %v2060
        %v2222 = vpack.c.b16 %v2063, %v2062
        %v2223 = vpack.c.b16 %v2065, %v2064
        %v2224 = vpack.c.b16 %v2067, %v2066
        %v2225 = vpack.c.b16 %v2069, %v2068
        %v2226 = vpack.c.b16 %v2071, %v2070
        %v2227 = vpack.c.b16 %v2073, %v2072
        %v2228 = vpack.c.b16 %v2075, %v2074
        %v2229 = vpack.c.b16 %v2077, %v2076
        %v2230 = vpack.c.b16 %v2079, %v2078
        %v2231 = vpack.c.b16 %v2081, %v2080
        %v2232 = vpack.c.b16 %v2083, %v2082
        %v2233 = vpack.c.b16 %v2085, %v2084
        %v2234 = vpack.c.b16 %v2087, %v2086
        %v2235 = vpack.c.b16 %v2089, %v2088
        %v2236 = vpack.c.b16 %v2091, %v2090
        %v2237 = vpack.c.b16 %v2093, %v2092
        %v2238 = vpack.c.b16 %v2095, %v2094
        %v2239 = vpack.c.b16 %v2097, %v2096
        %v2240 = vpack.c.b16 %v2099, %v2098
        %v2241 = vpack.c.b16 %v2101, %v2100
        %v2242 = vpack.c.b16 %v2103, %v2102
        %v2243 = vpack.c.b16 %v2105, %v2104
        %v2244 = vpack.c.b16 %v2107, %v2106
        %v2245 = vpack.c.b16 %v2109, %v2108
        %v2246 = vpack.c.b16 %v2111, %v2110
        %v2247 = vpack.c.b16 %v2113, %v2112
        %v2248 = vpack.c.b16 %v2115, %v2114
        %v2249 = vpack.c.b16 %v2117, %v2116
        %v2250 = vpack.c.b16 %v2119, %v2118
        %v2251 = vpack.c.b16 %v2121, %v2120
        %v2252 = vpack.c.b16 %v2123, %v2122
        %v2253 = vpack.c.b16 %v2125, %v2124
        %2382 = vmatprep.subr.bf16.mxu0 0
        %2383 = vmatpush1.bf16.msra.mxu0 %v2126
        %2384 = vmatprep.subr.bf16.mxu0 0
        %2385 = vmatpush1.bf16.msra.mxu0 %v2127
        %2386 = vmatprep.subr.bf16.mxu0 0
        %2387 = vmatpush1.bf16.msra.mxu0 %v2128
        %2388 = vmatprep.subr.bf16.mxu0 0
        %2389 = vmatpush1.bf16.msra.mxu0 %v2129
        %2390 = vmatprep.subr.bf16.mxu0 0
        %2391 = vmatpush1.bf16.msra.mxu0 %v2130
        %2392 = vmatprep.subr.bf16.mxu0 0
        %2393 = vmatpush1.bf16.msra.mxu0 %v2131
        %2394 = vmatprep.subr.bf16.mxu0 0
        %2395 = vmatpush1.bf16.msra.mxu0 %v2132
        %2396 = vmatprep.subr.bf16.mxu0 0
        %2397 = vmatpush1.bf16.msra.mxu0 %v2133
        %2398 = vmatprep.subr.bf16.mxu0 0
        %2399 = vmatpush1.bf16.msra.mxu0 %v2134
        %2400 = vmatprep.subr.bf16.mxu0 0
        %2401 = vmatpush1.bf16.msra.mxu0 %v2135
        %2402 = vmatprep.subr.bf16.mxu0 0
        %2403 = vmatpush1.bf16.msra.mxu0 %v2136
        %2404 = vmatprep.subr.bf16.mxu0 0
        %2405 = vmatpush1.bf16.msra.mxu0 %v2137
        %2406 = vmatprep.subr.bf16.mxu0 0
        %2407 = vmatpush1.bf16.msra.mxu0 %v2138
        %2408 = vmatprep.subr.bf16.mxu0 0
        %2409 = vmatpush1.bf16.msra.mxu0 %v2139
        %2410 = vmatprep.subr.bf16.mxu0 0
        %2411 = vmatpush1.bf16.msra.mxu0 %v2140
        %2412 = vmatprep.subr.bf16.mxu0 0
        %2413 = vmatpush1.bf16.msra.mxu0 %v2141
        %2414 = vmatprep.mubr.bf16.mxu0 %v1583
        %2415 = vmatmul.mubr.bf16.gmra.mrb[0].mxu0 %v1582
        %v2416 = vpop.f32.mrb[0].mxu0
        %v2417 = vadd.f32 %v1556, %v2416
        %v2418 = vpop.f32.mrb[0].mxu0
        %v2419 = vpop.f32.mrb[0].mxu0
        %v2420 = vpop.f32.mrb[0].mxu0
        %2421 = vdwg.mxu0
        %2422 = vmatprep.subr.bf16.mxu0 0
        %2423 = vmatpush1.bf16.msra.mxu0 %v2142
        %2424 = vmatprep.subr.bf16.mxu0 0
        %2425 = vmatpush1.bf16.msra.mxu0 %v2143
        %2426 = vmatprep.subr.bf16.mxu0 0
        %2427 = vmatpush1.bf16.msra.mxu0 %v2144
        %2428 = vmatprep.subr.bf16.mxu0 0
        %2429 = vmatpush1.bf16.msra.mxu0 %v2145
        %2430 = vmatprep.subr.bf16.mxu0 0
        %2431 = vmatpush1.bf16.msra.mxu0 %v2146
        %2432 = vmatprep.subr.bf16.mxu0 0
        %2433 = vmatpush1.bf16.msra.mxu0 %v2147
        %2434 = vmatprep.subr.bf16.mxu0 0
        %2435 = vmatpush1.bf16.msra.mxu0 %v2148
        %2436 = vmatprep.subr.bf16.mxu0 0
        %2437 = vmatpush1.bf16.msra.mxu0 %v2149
        %2438 = vmatprep.subr.bf16.mxu0 0
        %2439 = vmatpush1.bf16.msra.mxu0 %v2150
        %2440 = vmatprep.subr.bf16.mxu0 0
        %2441 = vmatpush1.bf16.msra.mxu0 %v2151
        %2442 = vmatprep.subr.bf16.mxu0 0
        %2443 = vmatpush1.bf16.msra.mxu0 %v2152
        %2444 = vmatprep.subr.bf16.mxu0 0
        %2445 = vmatpush1.bf16.msra.mxu0 %v2153
        %2446 = vmatprep.subr.bf16.mxu0 0
        %2447 = vmatpush1.bf16.msra.mxu0 %v2154
        %2448 = vmatprep.subr.bf16.mxu0 0
        %2449 = vmatpush1.bf16.msra.mxu0 %v2155
        %2450 = vmatprep.subr.bf16.mxu0 0
        %2451 = vmatpush1.bf16.msra.mxu0 %v2156
        %2452 = vmatprep.subr.bf16.mxu0 0
        %2453 = vmatpush1.bf16.msra.mxu0 %v2157
        %2454 = vmatprep.mubr.bf16.mxu0 %v1585
        %2455 = vmatmul.mubr.bf16.gmra.mrb[0].mxu0 %v1584
        %v2456 = vpop.f32.mrb[0].mxu0
        %v2457 = vadd.f32 %v2417, %v2456
        %v2458 = vpop.f32.mrb[0].mxu0
        %v2459 = vpop.f32.mrb[0].mxu0
        %v2460 = vpop.f32.mrb[0].mxu0
        %2461 = vdwg.mxu0
        %2462 = vmatprep.subr.bf16.mxu0 0
        %2463 = vmatpush1.bf16.msra.mxu0 %v2158
        %2464 = vmatprep.subr.bf16.mxu0 0
        %2465 = vmatpush1.bf16.msra.mxu0 %v2159
        %2466 = vmatprep.subr.bf16.mxu0 0
        %2467 = vmatpush1.bf16.msra.mxu0 %v2160
        %2468 = vmatprep.subr.bf16.mxu0 0
        %2469 = vmatpush1.bf16.msra.mxu0 %v2161
        %2470 = vmatprep.subr.bf16.mxu0 0
        %2471 = vmatpush1.bf16.msra.mxu0 %v2162
        %2472 = vmatprep.subr.bf16.mxu0 0
        %2473 = vmatpush1.bf16.msra.mxu0 %v2163
        %2474 = vmatprep.subr.bf16.mxu0 0
        %2475 = vmatpush1.bf16.msra.mxu0 %v2164
        %2476 = vmatprep.subr.bf16.mxu0 0
        %2477 = vmatpush1.bf16.msra.mxu0 %v2165
        %2478 = vmatprep.subr.bf16.mxu0 0
        %2479 = vmatpush1.bf16.msra.mxu0 %v2166
        %2480 = vmatprep.subr.bf16.mxu0 0
        %2481 = vmatpush1.bf16.msra.mxu0 %v2167
        %2482 = vmatprep.subr.bf16.mxu0 0
        %2483 = vmatpush1.bf16.msra.mxu0 %v2168
        %2484 = vmatprep.subr.bf16.mxu0 0
        %2485 = vmatpush1.bf16.msra.mxu0 %v2169
        %2486 = vmatprep.subr.bf16.mxu0 0
        %2487 = vmatpush1.bf16.msra.mxu0 %v2170
        %2488 = vmatprep.subr.bf16.mxu0 0
        %2489 = vmatpush1.bf16.msra.mxu0 %v2171
        %2490 = vmatprep.subr.bf16.mxu0 0
        %2491 = vmatpush1.bf16.msra.mxu0 %v2172
        %2492 = vmatprep.subr.bf16.mxu0 0
        %2493 = vmatpush1.bf16.msra.mxu0 %v2173
        %2494 = vmatprep.mubr.bf16.mxu0 %v1587
        %2495 = vmatmul.mubr.bf16.gmra.mrb[0].mxu0 %v1586
        %v2496 = vpop.f32.mrb[0].mxu0
        %v2497 = vadd.f32 %v2457, %v2496
        %v2498 = vpop.f32.mrb[0].mxu0
        %v2499 = vpop.f32.mrb[0].mxu0
        %v2500 = vpop.f32.mrb[0].mxu0
        %2501 = vdwg.mxu0
        %2502 = vmatprep.subr.bf16.mxu0 0
        %2503 = vmatpush1.bf16.msra.mxu0 %v2174
        %2504 = vmatprep.subr.bf16.mxu0 0
        %2505 = vmatpush1.bf16.msra.mxu0 %v2175
        %2506 = vmatprep.subr.bf16.mxu0 0
        %2507 = vmatpush1.bf16.msra.mxu0 %v2176
        %2508 = vmatprep.subr.bf16.mxu0 0
        %2509 = vmatpush1.bf16.msra.mxu0 %v2177
        %2510 = vmatprep.subr.bf16.mxu0 0
        %2511 = vmatpush1.bf16.msra.mxu0 %v2178
        %2512 = vmatprep.subr.bf16.mxu0 0
        %2513 = vmatpush1.bf16.msra.mxu0 %v2179
        %2514 = vmatprep.subr.bf16.mxu0 0
        %2515 = vmatpush1.bf16.msra.mxu0 %v2180
        %2516 = vmatprep.subr.bf16.mxu0 0
        %2517 = vmatpush1.bf16.msra.mxu0 %v2181
        %2518 = vmatprep.subr.bf16.mxu0 0
        %2519 = vmatpush1.bf16.msra.mxu0 %v2182
        %2520 = vmatprep.subr.bf16.mxu0 0
        %2521 = vmatpush1.bf16.msra.mxu0 %v2183
        %2522 = vmatprep.subr.bf16.mxu0 0
        %2523 = vmatpush1.bf16.msra.mxu0 %v2184
        %2524 = vmatprep.subr.bf16.mxu0 0
        %2525 = vmatpush1.bf16.msra.mxu0 %v2185
        %2526 = vmatprep.subr.bf16.mxu0 0
        %2527 = vmatpush1.bf16.msra.mxu0 %v2186
        %2528 = vmatprep.subr.bf16.mxu0 0
        %2529 = vmatpush1.bf16.msra.mxu0 %v2187
        %2530 = vmatprep.subr.bf16.mxu0 0
        %2531 = vmatpush1.bf16.msra.mxu0 %v2188
        %2532 = vmatprep.subr.bf16.mxu0 0
        %2533 = vmatpush1.bf16.msra.mxu0 %v2189
        %2534 = vmatprep.mubr.bf16.mxu0 %v1589
        %2535 = vmatmul.mubr.bf16.gmra.mrb[0].mxu0 %v1588
        %v2536 = vpop.f32.mrb[0].mxu0
        %v2537 = vadd.f32 %v2497, %v2536
        %v2538 = vpop.f32.mrb[0].mxu0
        %v2539 = vpop.f32.mrb[0].mxu0
        %v2540 = vpop.f32.mrb[0].mxu0
        %2541 = vdwg.mxu0
        %2542 = vmatprep.subr.bf16.mxu0 0
        %2543 = vmatpush1.bf16.msra.mxu0 %v2190
        %2544 = vmatprep.subr.bf16.mxu0 0
        %2545 = vmatpush1.bf16.msra.mxu0 %v2191
        %2546 = vmatprep.subr.bf16.mxu0 0
        %2547 = vmatpush1.bf16.msra.mxu0 %v2192
        %2548 = vmatprep.subr.bf16.mxu0 0
        %2549 = vmatpush1.bf16.msra.mxu0 %v2193
        %2550 = vmatprep.subr.bf16.mxu0 0
        %2551 = vmatpush1.bf16.msra.mxu0 %v2194
        %2552 = vmatprep.subr.bf16.mxu0 0
        %2553 = vmatpush1.bf16.msra.mxu0 %v2195
        %2554 = vmatprep.subr.bf16.mxu0 0
        %2555 = vmatpush1.bf16.msra.mxu0 %v2196
        %2556 = vmatprep.subr.bf16.mxu0 0
        %2557 = vmatpush1.bf16.msra.mxu0 %v2197
        %2558 = vmatprep.subr.bf16.mxu0 0
        %2559 = vmatpush1.bf16.msra.mxu0 %v2198
        %2560 = vmatprep.subr.bf16.mxu0 0
        %2561 = vmatpush1.bf16.msra.mxu0 %v2199
        %2562 = vmatprep.subr.bf16.mxu0 0
        %2563 = vmatpush1.bf16.msra.mxu0 %v2200
        %2564 = vmatprep.subr.bf16.mxu0 0
        %2565 = vmatpush1.bf16.msra.mxu0 %v2201
        %2566 = vmatprep.subr.bf16.mxu0 0
        %2567 = vmatpush1.bf16.msra.mxu0 %v2202
        %2568 = vmatprep.subr.bf16.mxu0 0
        %2569 = vmatpush1.bf16.msra.mxu0 %v2203
        %2570 = vmatprep.subr.bf16.mxu0 0
        %2571 = vmatpush1.bf16.msra.mxu0 %v2204
        %2572 = vmatprep.subr.bf16.mxu0 0
        %2573 = vmatpush1.bf16.msra.mxu0 %v2205
        %2574 = vmatprep.mubr.bf16.mxu0 %v1591
        %2575 = vmatmul.mubr.bf16.gmra.mrb[0].mxu0 %v1590
        %v2576 = vpop.f32.mrb[0].mxu0
        %v2577 = vadd.f32 %v2537, %v2576
        %v2578 = vpop.f32.mrb[0].mxu0
        %v2579 = vpop.f32.mrb[0].mxu0
        %v2580 = vpop.f32.mrb[0].mxu0
        %2581 = vdwg.mxu0
        %2582 = vmatprep.subr.bf16.mxu0 0
        %2583 = vmatpush1.bf16.msra.mxu0 %v2206
        %2584 = vmatprep.subr.bf16.mxu0 0
        %2585 = vmatpush1.bf16.msra.mxu0 %v2207
        %2586 = vmatprep.subr.bf16.mxu0 0
        %2587 = vmatpush1.bf16.msra.mxu0 %v2208
        %2588 = vmatprep.subr.bf16.mxu0 0
        %2589 = vmatpush1.bf16.msra.mxu0 %v2209
        %2590 = vmatprep.subr.bf16.mxu0 0
        %2591 = vmatpush1.bf16.msra.mxu0 %v2210
        %2592 = vmatprep.subr.bf16.mxu0 0
        %2593 = vmatpush1.bf16.msra.mxu0 %v2211
        %2594 = vmatprep.subr.bf16.mxu0 0
        %2595 = vmatpush1.bf16.msra.mxu0 %v2212
        %2596 = vmatprep.subr.bf16.mxu0 0
        %2597 = vmatpush1.bf16.msra.mxu0 %v2213
        %2598 = vmatprep.subr.bf16.mxu0 0
        %2599 = vmatpush1.bf16.msra.mxu0 %v2214
        %2600 = vmatprep.subr.bf16.mxu0 0
        %2601 = vmatpush1.bf16.msra.mxu0 %v2215
        %2602 = vmatprep.subr.bf16.mxu0 0
        %2603 = vmatpush1.bf16.msra.mxu0 %v2216
        %2604 = vmatprep.subr.bf16.mxu0 0
        %2605 = vmatpush1.bf16.msra.mxu0 %v2217
        %2606 = vmatprep.subr.bf16.mxu0 0
        %2607 = vmatpush1.bf16.msra.mxu0 %v2218
        %2608 = vmatprep.subr.bf16.mxu0 0
        %2609 = vmatpush1.bf16.msra.mxu0 %v2219
        %2610 = vmatprep.subr.bf16.mxu0 0
        %2611 = vmatpush1.bf16.msra.mxu0 %v2220
        %2612 = vmatprep.subr.bf16.mxu0 0
        %2613 = vmatpush1.bf16.msra.mxu0 %v2221
        %2614 = vmatprep.mubr.bf16.mxu0 %v1593
        %2615 = vmatmul.mubr.bf16.gmra.mrb[0].mxu0 %v1592
        %v2616 = vpop.f32.mrb[0].mxu0
        %v2617 = vadd.f32 %v2577, %v2616
        %v2618 = vpop.f32.mrb[0].mxu0
        %v2619 = vpop.f32.mrb[0].mxu0
        %v2620 = vpop.f32.mrb[0].mxu0
        %2621 = vdwg.mxu0
        %2622 = vmatprep.subr.bf16.mxu0 0
        %2623 = vmatpush1.bf16.msra.mxu0 %v2222
        %2624 = vmatprep.subr.bf16.mxu0 0
        %2625 = vmatpush1.bf16.msra.mxu0 %v2223
        %2626 = vmatprep.subr.bf16.mxu0 0
        %2627 = vmatpush1.bf16.msra.mxu0 %v2224
        %2628 = vmatprep.subr.bf16.mxu0 0
        %2629 = vmatpush1.bf16.msra.mxu0 %v2225
        %2630 = vmatprep.subr.bf16.mxu0 0
        %2631 = vmatpush1.bf16.msra.mxu0 %v2226
        %2632 = vmatprep.subr.bf16.mxu0 0
        %2633 = vmatpush1.bf16.msra.mxu0 %v2227
        %2634 = vmatprep.subr.bf16.mxu0 0
        %2635 = vmatpush1.bf16.msra.mxu0 %v2228
        %2636 = vmatprep.subr.bf16.mxu0 0
        %2637 = vmatpush1.bf16.msra.mxu0 %v2229
        %2638 = vmatprep.subr.bf16.mxu0 0
        %2639 = vmatpush1.bf16.msra.mxu0 %v2230
        %2640 = vmatprep.subr.bf16.mxu0 0
        %2641 = vmatpush1.bf16.msra.mxu0 %v2231
        %2642 = vmatprep.subr.bf16.mxu0 0
        %2643 = vmatpush1.bf16.msra.mxu0 %v2232
        %2644 = vmatprep.subr.bf16.mxu0 0
        %2645 = vmatpush1.bf16.msra.mxu0 %v2233
        %2646 = vmatprep.subr.bf16.mxu0 0
        %2647 = vmatpush1.bf16.msra.mxu0 %v2234
        %2648 = vmatprep.subr.bf16.mxu0 0
        %2649 = vmatpush1.bf16.msra.mxu0 %v2235
        %2650 = vmatprep.subr.bf16.mxu0 0
        %2651 = vmatpush1.bf16.msra.mxu0 %v2236
        %2652 = vmatprep.subr.bf16.mxu0 0
        %2653 = vmatpush1.bf16.msra.mxu0 %v2237
        %2654 = vmatprep.mubr.bf16.mxu0 %v1595
        %2655 = vmatmul.mubr.bf16.gmra.mrb[0].mxu0 %v1594
        %v2656 = vpop.f32.mrb[0].mxu0
        %v2657 = vadd.f32 %v2617, %v2656
        %v2658 = vpop.f32.mrb[0].mxu0
        %v2659 = vpop.f32.mrb[0].mxu0
        %v2660 = vpop.f32.mrb[0].mxu0
        %2661 = vdwg.mxu0
        %2662 = vmatprep.subr.bf16.mxu0 0
        %2663 = vmatpush1.bf16.msra.mxu0 %v2238
        %2664 = vmatprep.subr.bf16.mxu0 0
        %2665 = vmatpush1.bf16.msra.mxu0 %v2239
        %2666 = vmatprep.subr.bf16.mxu0 0
        %2667 = vmatpush1.bf16.msra.mxu0 %v2240
        %2668 = vmatprep.subr.bf16.mxu0 0
        %2669 = vmatpush1.bf16.msra.mxu0 %v2241
        %2670 = vmatprep.subr.bf16.mxu0 0
        %2671 = vmatpush1.bf16.msra.mxu0 %v2242
        %2672 = vmatprep.subr.bf16.mxu0 0
        %2673 = vmatpush1.bf16.msra.mxu0 %v2243
        %2674 = vmatprep.subr.bf16.mxu0 0
        %2675 = vmatpush1.bf16.msra.mxu0 %v2244
        %2676 = vmatprep.subr.bf16.mxu0 0
        %2677 = vmatpush1.bf16.msra.mxu0 %v2245
        %2678 = vmatprep.subr.bf16.mxu0 0
        %2679 = vmatpush1.bf16.msra.mxu0 %v2246
        %2680 = vmatprep.subr.bf16.mxu0 0
        %2681 = vmatpush1.bf16.msra.mxu0 %v2247
        %2682 = vmatprep.subr.bf16.mxu0 0
        %2683 = vmatpush1.bf16.msra.mxu0 %v2248
        %2684 = vmatprep.subr.bf16.mxu0 0
        %2685 = vmatpush1.bf16.msra.mxu0 %v2249
        %2686 = vmatprep.subr.bf16.mxu0 0
        %2687 = vmatpush1.bf16.msra.mxu0 %v2250
        %2688 = vmatprep.subr.bf16.mxu0 0
        %2689 = vmatpush1.bf16.msra.mxu0 %v2251
        %2690 = vmatprep.subr.bf16.mxu0 0
        %2691 = vmatpush1.bf16.msra.mxu0 %v2252
        %2692 = vmatprep.subr.bf16.mxu0 0
        %2693 = vmatpush1.bf16.msra.mxu0 %v2253
        %2694 = vmatprep.mubr.bf16.mxu0 %v1597
        %2695 = vmatmul.mubr.bf16.gmra.mrb[0].mxu0 %v1596
        %v2696 = vpop.f32.mrb[0].mxu0
        %v2697 = vadd.f32 %v2657, %v2696
        %v2698 = vpop.f32.mrb[0].mxu0
        %v2699 = vpop.f32.mrb[0].mxu0
        %v2700 = vpop.f32.mrb[0].mxu0
        %2701 = vdwg.mxu0
        %v2702 = vmax.f32 %v2697, 0.0
        %v2703 = vpack.c.bf16 %v2702, %v2702
        %2704 = vst [vmem:[%s1285] sm:$0xf] %v2703
        %p2705 = scmp.lt.s32.totalorder %s18, 0
        %s2706 = scalar_select %p2705, %s18, 0
        %p2707 = scmp.lt.s32.totalorder %s19, 1
        %s2708 = scalar_select %p2707, %s19, 1
        %s2709 = smul.addr %s2706, 2
        %s2710 = sadd.s32 %s2708, %s2709
        %s2711 = smul.addr %s2710, 4
        %s2712 = scalar_lea.vmem %s3, %s2711
        // Predicated region
        $region74: #{generator_forward.8} parent=68 // pred_check
          %p2713 = pneg %p124
        $region75: #{generator_forward.8} parent=68 // pred_check_branch
          %2715 = sbr.rel (%p2713) target = $region77
        $region76: #{generator_forward.8} parent=68 // pred_region
          _
        $region77: #{generator_forward.8} parent=68 // pred_fallthru
          _
      $region69: #{generator_forward.8} parent=5 // pred_fallthru
        _
      %p2716 = scmp.le.s32.totalorder 2, %s9
      // Predicated region
      $region78: #{generator_forward.8} parent=5 // pred_check
        %p2717 = pneg %p2716
      $region79: #{generator_forward.8} parent=5 // pred_check_branch
        %2719 = sbr.rel (%p2717) target = $region81
      $region80: #{generator_forward.8} parent=5 // pred_region
        %s2720 = ssub.s32 %s9, 2
        // Predicated region
        $region82: #{generator_forward.8} parent=80 // pred_check
          %p2721 = pneg %p130
        $region83: #{generator_forward.8} parent=80 // pred_check_branch
          %2723 = sbr.rel (%p2721) target = $region85
        $region84: #{generator_forward.8} parent=80 // pred_region
          %p2724 = scmp.lt.s32.totalorder %s20, 0
          %s2725 = scalar_select %p2724, %s20, 0
          %p2726 = scmp.lt.s32.totalorder %s21, 1
          %s2727 = scalar_select %p2726, %s21, 1
          %s2728 = smul.addr %s2725, 2
          %s2729 = sadd.s32 %s2727, %s2728
          %s2730 = smul.addr %s2729, 4
          %s2731 = scalar_lea.vmem %s3, %s2730
        $region85: #{generator_forward.8} parent=80 // pred_fallthru
          _
      $region81: #{generator_forward.8} parent=5 // pred_fallthru
        _
    $region6: #{generator_forward.8} parent=1 // loop_footer
      %s13 = sadd.s32 1, %s9
    $region7: #{generator_forward.8} parent=1 // loop_footer_branch
      %8 = sbr.rel target = $region3
    $region8: #{generator_forward.8} parent=1 // loop_exit
      _

// kernel: tile.28
$region0: #{tile.28}
  #allocation0 [shape = 's32[1]{0}', space=sflag, size = 0x4, scoped, tag = 'scoped memory for tile.28']
  %s0 = inlined_call_operand.vmem [shape: f32[128], index: 0, kind: input, shape index: {}]
  %s1 = inlined_call_operand.vmem [shape: f32[4,128], index: 1, kind: output, shape index: {}]
  // Predicated region
  $region2: #{tile.28} parent=0 // pred_check
    _
  $region3: #{tile.28} parent=0 // pred_check_branch
    %3 = sbr.rel (0) target = $region5
  $region4: #{tile.28} parent=0 // pred_region
    _
  $region5: #{tile.28} parent=0 // pred_fallthru
    _
  %v4 = vld [vmem:[%s0] ss:$0 sm:$0xff]
  %5 = vst [vmem:[%s1] sm:$0xf] %v4

// kernel: generator_forward.9
$region0: #{generator_forward.9}
  #allocation0 [shape = 'u32[]', space=smem, size = 0x4, offset = 0x4, fixed_abs, tag = 'smem constant byte address 0x4 - core index']
  #allocation1 [shape = 'u32[144,128]{1,0:T(1,128)}', space=vmem, size = 0x12000, scoped, tag = 'internal scratch']
  %s0 = inlined_call_operand.vmem [shape: bf16[8,2304], index: 0, kind: input, shape index: {}]
  %s1 = inlined_call_operand.vmem [shape: bf16[2304,512], index: 1, kind: input, shape index: {}]
  %s2 = inlined_call_operand.vmem [shape: f32[1,512], index: 2, kind: input, shape index: {}]
  %s3 = inlined_call_operand.vmem [shape: bf16[8,512], index: 3, kind: output, shape index: {}]
  %s4 = sld [smem:[#allocation0]]
  $region86: #{generator_forward.9} parent=0
    _
  %s6 = ssub.s32 1, %s4
  %s7 = scalar_select 0, %s6, %s4
  $region1: #{generator_forward.9} parent=0
    #allocation2 [shape = 'u8[1179648]{0}', space=vmem, size = 0x120000, scoped, tag = 'input window, operand 1']
    loop: start=0, step=1, limit=6
    $region2: #{generator_forward.9} parent=1 // loop_pre_header
      _
    $region3: #{generator_forward.9} parent=1 // loop_header
      %s9 = sphi 0, %s13
      %p10 = scmp.ge.s32.totalorder %s9, 6
      %s16 = sphi 0, %s28
      %s17 = sphi 0, %s24
      %s18 = sphi 0, %s16
      %s19 = sphi 0, %s17
      %s20 = sphi 0, %s18
      %s21 = sphi 0, %s19
      %s31 = sphi 0, %s33
      %s34 = sphi 0, %s31
      %s35 = sphi 0, %s34
      %s51 = sphi 0, %s35
      %s57 = sphi 0, %s59
      %s60 = sphi 0, %s57
      %s61 = sphi 0, %s60
      %s77 = sphi 0, %s61
      %s83 = sphi 0, %s85
      %s86 = sphi 0, %s83
      %s87 = sphi 0, %s86
      %s103 = sphi 0, %s87
      %s111 = sphi 0, %s113
      %s114 = sphi 0, %s111
      %s115 = sphi 0, %s114
      %s131 = sphi 0, %s115
    $region4: #{generator_forward.9} parent=1 // loop_header_branch
      %12 = sbr.rel (%p10) target = $region8
    $region5: #{generator_forward.9} parent=1 // loop_body
      %s14 = ssub.s32 %s9, 1
      %s15 = ssub.s32 %s9, 2
      %s22 = sadd.s32 1, %s17
      %p23 = scmp.ge.s32.totalorder %s22, 4
      %s24 = scalar_select %p23, 0, %s22
      %s25 = sadd.s32 1, %s16
      %s26 = scalar_select %p23, %s25, %s16
      %p27 = scmp.ge.s32.totalorder %s26, 1
      %s28 = scalar_select %p27, 0, %s26
      %s29 = ssub.s32 %s16, %s28
      %p30 = scmp.eq.s32.totalorder %s29, 0
      %s32 = sadd.s32 %s31, 1
      %s33 = scalar_select %p30, %s31, %s32
      %p36 = pneg %p30
      %p37 = scmp.eq.s32.totalorder %s9, 3
      %p38 = por %p36, %p37
      %p39 = scmp.ne.s32.totalorder %s31, %s34
      %p40 = scmp.eq.s32.totalorder %s9, 0
      %p41 = por %p39, %p40
      %p42 = scmp.ne.s32.totalorder %s31, %s34
      %p43 = scmp.eq.s32.totalorder %s14, 3
      %p44 = por %p42, %p43
      %p45 = scmp.ne.s32.totalorder %s34, %s35
      %p46 = scmp.eq.s32.totalorder %s14, 0
      %p47 = por %p45, %p46
      %p48 = scmp.ne.s32.totalorder %s34, %s35
      %p49 = scmp.eq.s32.totalorder %s15, 3
      %p50 = por %p48, %p49
      %p52 = scmp.ne.s32.totalorder %s35, %s51
      %p53 = scmp.eq.s32.totalorder %s15, 0
      %p54 = por %p52, %p53
      %s55 = ssub.s32 %s17, %s24
      %p56 = scmp.eq.s32.totalorder %s55, 0
      %s58 = sadd.s32 %s57, 1
      %s59 = scalar_select %p56, %s57, %s58
      %p62 = pneg %p56
      %p63 = scmp.eq.s32.totalorder %s9, 3
      %p64 = por %p62, %p63
      %p65 = scmp.ne.s32.totalorder %s57, %s60
      %p66 = scmp.eq.s32.totalorder %s9, 0
      %p67 = por %p65, %p66
      %p68 = scmp.ne.s32.totalorder %s57, %s60
      %p69 = scmp.eq.s32.totalorder %s14, 3
      %p70 = por %p68, %p69
      %p71 = scmp.ne.s32.totalorder %s60, %s61
      %p72 = scmp.eq.s32.totalorder %s14, 0
      %p73 = por %p71, %p72
      %p74 = scmp.ne.s32.totalorder %s60, %s61
      %p75 = scmp.eq.s32.totalorder %s15, 3
      %p76 = por %p74, %p75
      %p78 = scmp.ne.s32.totalorder %s61, %s77
      %p79 = scmp.eq.s32.totalorder %s15, 0
      %p80 = por %p78, %p79
      %s81 = ssub.s32 %s17, %s24
      %p82 = scmp.eq.s32.totalorder %s81, 0
      %s84 = sadd.s32 %s83, 1
      %s85 = scalar_select %p82, %s83, %s84
      %p88 = pneg %p82
      %p89 = scmp.eq.s32.totalorder %s9, 3
      %p90 = por %p88, %p89
      %p91 = scmp.ne.s32.totalorder %s83, %s86
      %p92 = scmp.eq.s32.totalorder %s9, 0
      %p93 = por %p91, %p92
      %p94 = scmp.ne.s32.totalorder %s83, %s86
      %p95 = scmp.eq.s32.totalorder %s14, 3
      %p96 = por %p94, %p95
      %p97 = scmp.ne.s32.totalorder %s86, %s87
      %p98 = scmp.eq.s32.totalorder %s14, 0
      %p99 = por %p97, %p98
      %p100 = scmp.ne.s32.totalorder %s86, %s87
      %p101 = scmp.eq.s32.totalorder %s15, 3
      %p102 = por %p100, %p101
      %p104 = scmp.ne.s32.totalorder %s87, %s103
      %p105 = scmp.eq.s32.totalorder %s15, 0
      %p106 = por %p104, %p105
      %s107 = ssub.s32 %s16, %s28
      %s108 = ssub.s32 %s17, %s24
      %s109 = sor.u32 %s107, %s108
      %p110 = scmp.eq.s32.totalorder %s109, 0
      %s112 = sadd.s32 %s111, 1
      %s113 = scalar_select %p110, %s111, %s112
      %p116 = pneg %p110
      %p117 = scmp.eq.s32.totalorder %s9, 3
      %p118 = por %p116, %p117
      %p119 = scmp.ne.s32.totalorder %s111, %s114
      %p120 = scmp.eq.s32.totalorder %s9, 0
      %p121 = por %p119, %p120
      %p122 = scmp.ne.s32.totalorder %s111, %s114
      %p123 = scmp.eq.s32.totalorder %s14, 3
      %p124 = por %p122, %p123
      %p125 = scmp.ne.s32.totalorder %s114, %s115
      %p126 = scmp.eq.s32.totalorder %s14, 0
      %p127 = por %p125, %p126
      %p128 = scmp.ne.s32.totalorder %s114, %s115
      %p129 = scmp.eq.s32.totalorder %s15, 3
      %p130 = por %p128, %p129
      %p132 = scmp.ne.s32.totalorder %s115, %s131
      %p133 = scmp.eq.s32.totalorder %s15, 0
      %p134 = por %p132, %p133
      %p135 = scmp.le.s32.totalorder 1, %s9
      %p136 = scmp.lt.s32.totalorder %s9, 5
      %p137 = pnand %p135, %p136
      %p138 = pneg %p137
      // Predicated region
      $region9: #{generator_forward.9} parent=5 // pred_check
        _
      $region10: #{generator_forward.9} parent=5 // pred_check_branch
        %140 = sbr.rel (%p137) target = $region12
      $region11: #{generator_forward.9} parent=5 // pred_region
        %s141 = ssub.s32 %s9, 1
        // Predicated region
        $region13: #{generator_forward.9} parent=11 // pred_check
          %p142 = pneg %p47
        $region14: #{generator_forward.9} parent=11 // pred_check_branch
          %144 = sbr.rel (%p142) target = $region16
        $region15: #{generator_forward.9} parent=11 // pred_region
          %p145 = scmp.lt.s32.totalorder %s18, 0
          %s146 = scalar_select %p145, %s18, 0
          %s147 = smul.addr %s146, 18
          %s148 = smul.addr %s147, 4
          %s149 = scalar_lea.vmem %s0, %s148
        $region16: #{generator_forward.9} parent=11 // pred_fallthru
          _
      $region12: #{generator_forward.9} parent=5 // pred_fallthru
        _
      %p150 = scmp.lt.s32.totalorder %s9, 4
      // Predicated region
      $region17: #{generator_forward.9} parent=5 // pred_check
        %p151 = pneg %p150
      $region18: #{generator_forward.9} parent=5 // pred_check_branch
        %153 = sbr.rel (%p151) target = $region20
      $region19: #{generator_forward.9} parent=5 // pred_region
        // Predicated region
        $region21: #{generator_forward.9} parent=19 // pred_check
          %p154 = pneg %p67
        $region22: #{generator_forward.9} parent=19 // pred_check_branch
          %156 = sbr.rel (%p154) target = $region24
        $region23: #{generator_forward.9} parent=19 // pred_region
          %s157 = sand.u32 %s57, 1
          %s158 = sand.u32 %s57, 1
          %s159 = smul.addr %s158, 1152
          %s160 = scalar_lea.vmem [#allocation2], %s159
          %s161 = smul.addr %s17, 4
          %s162 = scalar_lea.vmem %s1, %s161
          // Predicated region
          $region25: #{generator_forward.9} parent=23 // pred_check
            _
          $region26: #{generator_forward.9} parent=23 // pred_check_branch
            %164 = sbr.rel (0) target = $region28
          $region27: #{generator_forward.9} parent=23 // pred_region
            // Predicated region
            $region29: #{generator_forward.9} parent=27 // pred_check
              _
            $region30: #{generator_forward.9} parent=27 // pred_check_branch
              %166 = sbr.rel target = $region32
            $region31: #{generator_forward.9} parent=27 // pred_region
              // Predicated region
              $region44: #{generator_forward.9} parent=31 // pred_check
                _
              $region45: #{generator_forward.9} parent=31 // pred_check_branch
                %755 = sbr.rel (0) target = $region47
              $region46: #{generator_forward.9} parent=31 // pred_region
                loop: start=0, step=1, limit=1
                $region48: #{generator_forward.9} parent=46 // loop_pre_header
                  _
                $region49: #{generator_forward.9} parent=46 // loop_header
                  %s757 = sphi 0, %s761
                  %p758 = scmp.ge.s32.totalorder %s757, 1
                  %s762 = sphi %s162, %s162
                  %s763 = sphi %s160, %s160
                $region50: #{generator_forward.9} parent=46 // loop_header_branch
                  %760 = sbr.rel (%p758) target = $region54
                $region51: #{generator_forward.9} parent=46 // loop_body
                  _
                $region52: #{generator_forward.9} parent=46 // loop_footer
                  %s761 = sadd.s32 1, %s757
                $region53: #{generator_forward.9} parent=46 // loop_footer_branch
                  %756 = sbr.rel target = $region49
                $region54: #{generator_forward.9} parent=46 // loop_exit
                  _
                loop: start=0, step=1, limit=1
                $region55: #{generator_forward.9} parent=46 // loop_pre_header
                  _
                $region56: #{generator_forward.9} parent=46 // loop_header
                  %s766 = sphi 0, %s770
                  %p767 = scmp.ge.s32.totalorder %s766, 1
                  %s771 = sphi %s162, %s162
                  %s772 = sphi %s160, %s160
                $region57: #{generator_forward.9} parent=46 // loop_header_branch
                  %769 = sbr.rel (%p767) target = $region61
                $region58: #{generator_forward.9} parent=46 // loop_body
                  %v773 = vld [vmem:[%s771] sm:$0xf]
                  %774 = vst [vmem:[%s772] sm:$0xf] %v773
                  %v775 = vld [vmem:[%s771 + $0x10] sm:$0xf]
                  %776 = vst [vmem:[%s772 + $0x4] sm:$0xf] %v775
                  %v777 = vld [vmem:[%s771 + $0x20] sm:$0xf]
                  %778 = vst [vmem:[%s772 + $0x8] sm:$0xf] %v777
                  %v779 = vld [vmem:[%s771 + $0x30] sm:$0xf]
                  %780 = vst [vmem:[%s772 + $0xc] sm:$0xf] %v779
                  %v781 = vld [vmem:[%s771 + $0x40] sm:$0xf]
                  %782 = vst [vmem:[%s772 + $0x10] sm:$0xf] %v781
                  %v783 = vld [vmem:[%s771 + $0x50] sm:$0xf]
                  %784 = vst [vmem:[%s772 + $0x14] sm:$0xf] %v783
                  %v785 = vld [vmem:[%s771 + $0x60] sm:$0xf]
                  %786 = vst [vmem:[%s772 + $0x18] sm:$0xf] %v785
                  %v787 = vld [vmem:[%s771 + $0x70] sm:$0xf]
                  %788 = vst [vmem:[%s772 + $0x1c] sm:$0xf] %v787
                  %v789 = vld [vmem:[%s771 + $0x80] sm:$0xf]
                  %790 = vst [vmem:[%s772 + $0x20] sm:$0xf] %v789
                  %v791 = vld [vmem:[%s771 + $0x90] sm:$0xf]
                  %792 = vst [vmem:[%s772 + $0x24] sm:$0xf] %v791
                  %v793 = vld [vmem:[%s771 + $0xa0] sm:$0xf]
                  %794 = vst [vmem:[%s772 + $0x28] sm:$0xf] %v793
                  %v795 = vld [vmem:[%s771 + $0xb0] sm:$0xf]
                  %796 = vst [vmem:[%s772 + $0x2c] sm:$0xf] %v795
                  %v797 = vld [vmem:[%s771 + $0xc0] sm:$0xf]
                  %798 = vst [vmem:[%s772 + $0x30] sm:$0xf] %v797
                  %v799 = vld [vmem:[%s771 + $0xd0] sm:$0xf]
                  %800 = vst [vmem:[%s772 + $0x34] sm:$0xf] %v799
                  %v801 = vld [vmem:[%s771 + $0xe0] sm:$0xf]
                  %802 = vst [vmem:[%s772 + $0x38] sm:$0xf] %v801
                  %v803 = vld [vmem:[%s771 + $0xf0] sm:$0xf]
                  %804 = vst [vmem:[%s772 + $0x3c] sm:$0xf] %v803
                  %v805 = vld [vmem:[%s771 + $0x100] sm:$0xf]
                  %806 = vst [vmem:[%s772 + $0x40] sm:$0xf] %v805
                  %v807 = vld [vmem:[%s771 + $0x110] sm:$0xf]
                  %808 = vst [vmem:[%s772 + $0x44] sm:$0xf] %v807
                  %v809 = vld [vmem:[%s771 + $0x120] sm:$0xf]
                  %810 = vst [vmem:[%s772 + $0x48] sm:$0xf] %v809
                  %v811 = vld [vmem:[%s771 + $0x130] sm:$0xf]
                  %812 = vst [vmem:[%s772 + $0x4c] sm:$0xf] %v811
                  %v813 = vld [vmem:[%s771 + $0x140] sm:$0xf]
                  %814 = vst [vmem:[%s772 + $0x50] sm:$0xf] %v813
                  %v815 = vld [vmem:[%s771 + $0x150] sm:$0xf]
                  %816 = vst [vmem:[%s772 + $0x54] sm:$0xf] %v815
                  %v817 = vld [vmem:[%s771 + $0x160] sm:$0xf]
                  %818 = vst [vmem:[%s772 + $0x58] sm:$0xf] %v817
                  %v819 = vld [vmem:[%s771 + $0x170] sm:$0xf]
                  %820 = vst [vmem:[%s772 + $0x5c] sm:$0xf] %v819
                  %v821 = vld [vmem:[%s771 + $0x180] sm:$0xf]
                  %822 = vst [vmem:[%s772 + $0x60] sm:$0xf] %v821
                  %v823 = vld [vmem:[%s771 + $0x190] sm:$0xf]
                  %824 = vst [vmem:[%s772 + $0x64] sm:$0xf] %v823
                  %v825 = vld [vmem:[%s771 + $0x1a0] sm:$0xf]
                  %826 = vst [vmem:[%s772 + $0x68] sm:$0xf] %v825
                  %v827 = vld [vmem:[%s771 + $0x1b0] sm:$0xf]
                  %828 = vst [vmem:[%s772 + $0x6c] sm:$0xf] %v827
                  %v829 = vld [vmem:[%s771 + $0x1c0] sm:$0xf]
                  %830 = vst [vmem:[%s772 + $0x70] sm:$0xf] %v829
                  %v831 = vld [vmem:[%s771 + $0x1d0] sm:$0xf]
                  %832 = vst [vmem:[%s772 + $0x74] sm:$0xf] %v831
                  %v833 = vld [vmem:[%s771 + $0x1e0] sm:$0xf]
                  %834 = vst [vmem:[%s772 + $0x78] sm:$0xf] %v833
                  %v835 = vld [vmem:[%s771 + $0x1f0] sm:$0xf]
                  %836 = vst [vmem:[%s772 + $0x7c] sm:$0xf] %v835
                  %v837 = vld [vmem:[%s771 + $0x200] sm:$0xf]
                  %838 = vst [vmem:[%s772 + $0x80] sm:$0xf] %v837
                  %v839 = vld [vmem:[%s771 + $0x210] sm:$0xf]
                  %840 = vst [vmem:[%s772 + $0x84] sm:$0xf] %v839
                  %v841 = vld [vmem:[%s771 + $0x220] sm:$0xf]
                  %842 = vst [vmem:[%s772 + $0x88] sm:$0xf] %v841
                  %v843 = vld [vmem:[%s771 + $0x230] sm:$0xf]
                  %844 = vst [vmem:[%s772 + $0x8c] sm:$0xf] %v843
                  %v845 = vld [vmem:[%s771 + $0x240] sm:$0xf]
                  %846 = vst [vmem:[%s772 + $0x90] sm:$0xf] %v845
                  %v847 = vld [vmem:[%s771 + $0x250] sm:$0xf]
                  %848 = vst [vmem:[%s772 + $0x94] sm:$0xf] %v847
                  %v849 = vld [vmem:[%s771 + $0x260] sm:$0xf]
                  %850 = vst [vmem:[%s772 + $0x98] sm:$0xf] %v849
                  %v851 = vld [vmem:[%s771 + $0x270] sm:$0xf]
                  %852 = vst [vmem:[%s772 + $0x9c] sm:$0xf] %v851
                  %v853 = vld [vmem:[%s771 + $0x280] sm:$0xf]
                  %854 = vst [vmem:[%s772 + $0xa0] sm:$0xf] %v853
                  %v855 = vld [vmem:[%s771 + $0x290] sm:$0xf]
                  %856 = vst [vmem:[%s772 + $0xa4] sm:$0xf] %v855
                  %v857 = vld [vmem:[%s771 + $0x2a0] sm:$0xf]
                  %858 = vst [vmem:[%s772 + $0xa8] sm:$0xf] %v857
                  %v859 = vld [vmem:[%s771 + $0x2b0] sm:$0xf]
                  %860 = vst [vmem:[%s772 + $0xac] sm:$0xf] %v859
                  %v861 = vld [vmem:[%s771 + $0x2c0] sm:$0xf]
                  %862 = vst [vmem:[%s772 + $0xb0] sm:$0xf] %v861
                  %v863 = vld [vmem:[%s771 + $0x2d0] sm:$0xf]
                  %864 = vst [vmem:[%s772 + $0xb4] sm:$0xf] %v863
                  %v865 = vld [vmem:[%s771 + $0x2e0] sm:$0xf]
                  %866 = vst [vmem:[%s772 + $0xb8] sm:$0xf] %v865
                  %v867 = vld [vmem:[%s771 + $0x2f0] sm:$0xf]
                  %868 = vst [vmem:[%s772 + $0xbc] sm:$0xf] %v867
                  %v869 = vld [vmem:[%s771 + $0x300] sm:$0xf]
                  %870 = vst [vmem:[%s772 + $0xc0] sm:$0xf] %v869
                  %v871 = vld [vmem:[%s771 + $0x310] sm:$0xf]
                  %872 = vst [vmem:[%s772 + $0xc4] sm:$0xf] %v871
                  %v873 = vld [vmem:[%s771 + $0x320] sm:$0xf]
                  %874 = vst [vmem:[%s772 + $0xc8] sm:$0xf] %v873
                  %v875 = vld [vmem:[%s771 + $0x330] sm:$0xf]
                  %876 = vst [vmem:[%s772 + $0xcc] sm:$0xf] %v875
                  %v877 = vld [vmem:[%s771 + $0x340] sm:$0xf]
                  %878 = vst [vmem:[%s772 + $0xd0] sm:$0xf] %v877
                  %v879 = vld [vmem:[%s771 + $0x350] sm:$0xf]
                  %880 = vst [vmem:[%s772 + $0xd4] sm:$0xf] %v879
                  %v881 = vld [vmem:[%s771 + $0x360] sm:$0xf]
                  %882 = vst [vmem:[%s772 + $0xd8] sm:$0xf] %v881
                  %v883 = vld [vmem:[%s771 + $0x370] sm:$0xf]
                  %884 = vst [vmem:[%s772 + $0xdc] sm:$0xf] %v883
                  %v885 = vld [vmem:[%s771 + $0x380] sm:$0xf]
                  %886 = vst [vmem:[%s772 + $0xe0] sm:$0xf] %v885
                  %v887 = vld [vmem:[%s771 + $0x390] sm:$0xf]
                  %888 = vst [vmem:[%s772 + $0xe4] sm:$0xf] %v887
                  %v889 = vld [vmem:[%s771 + $0x3a0] sm:$0xf]
                  %890 = vst [vmem:[%s772 + $0xe8] sm:$0xf] %v889
                  %v891 = vld [vmem:[%s771 + $0x3b0] sm:$0xf]
                  %892 = vst [vmem:[%s772 + $0xec] sm:$0xf] %v891
                  %v893 = vld [vmem:[%s771 + $0x3c0] sm:$0xf]
                  %894 = vst [vmem:[%s772 + $0xf0] sm:$0xf] %v893
                  %v895 = vld [vmem:[%s771 + $0x3d0] sm:$0xf]
                  %896 = vst [vmem:[%s772 + $0xf4] sm:$0xf] %v895
                  %v897 = vld [vmem:[%s771 + $0x3e0] sm:$0xf]
                  %898 = vst [vmem:[%s772 + $0xf8] sm:$0xf] %v897
                  %v899 = vld [vmem:[%s771 + $0x3f0] sm:$0xf]
                  %900 = vst [vmem:[%s772 + $0xfc] sm:$0xf] %v899
                  %v901 = vld [vmem:[%s771 + $0x400] sm:$0xf]
                  %902 = vst [vmem:[%s772 + $0x100] sm:$0xf] %v901
                  %v903 = vld [vmem:[%s771 + $0x410] sm:$0xf]
                  %904 = vst [vmem:[%s772 + $0x104] sm:$0xf] %v903
                  %v905 = vld [vmem:[%s771 + $0x420] sm:$0xf]
                  %906 = vst [vmem:[%s772 + $0x108] sm:$0xf] %v905
                  %v907 = vld [vmem:[%s771 + $0x430] sm:$0xf]
                  %908 = vst [vmem:[%s772 + $0x10c] sm:$0xf] %v907
                  %v909 = vld [vmem:[%s771 + $0x440] sm:$0xf]
                  %910 = vst [vmem:[%s772 + $0x110] sm:$0xf] %v909
                  %v911 = vld [vmem:[%s771 + $0x450] sm:$0xf]
                  %912 = vst [vmem:[%s772 + $0x114] sm:$0xf] %v911
                  %v913 = vld [vmem:[%s771 + $0x460] sm:$0xf]
                  %914 = vst [vmem:[%s772 + $0x118] sm:$0xf] %v913
                  %v915 = vld [vmem:[%s771 + $0x470] sm:$0xf]
                  %916 = vst [vmem:[%s772 + $0x11c] sm:$0xf] %v915
                  %v917 = vld [vmem:[%s771 + $0x480] sm:$0xf]
                  %918 = vst [vmem:[%s772 + $0x120] sm:$0xf] %v917
                  %v919 = vld [vmem:[%s771 + $0x490] sm:$0xf]
                  %920 = vst [vmem:[%s772 + $0x124] sm:$0xf] %v919
                  %v921 = vld [vmem:[%s771 + $0x4a0] sm:$0xf]
                  %922 = vst [vmem:[%s772 + $0x128] sm:$0xf] %v921
                  %v923 = vld [vmem:[%s771 + $0x4b0] sm:$0xf]
                  %924 = vst [vmem:[%s772 + $0x12c] sm:$0xf] %v923
                  %v925 = vld [vmem:[%s771 + $0x4c0] sm:$0xf]
                  %926 = vst [vmem:[%s772 + $0x130] sm:$0xf] %v925
                  %v927 = vld [vmem:[%s771 + $0x4d0] sm:$0xf]
                  %928 = vst [vmem:[%s772 + $0x134] sm:$0xf] %v927
                  %v929 = vld [vmem:[%s771 + $0x4e0] sm:$0xf]
                  %930 = vst [vmem:[%s772 + $0x138] sm:$0xf] %v929
                  %v931 = vld [vmem:[%s771 + $0x4f0] sm:$0xf]
                  %932 = vst [vmem:[%s772 + $0x13c] sm:$0xf] %v931
                  %v933 = vld [vmem:[%s771 + $0x500] sm:$0xf]
                  %934 = vst [vmem:[%s772 + $0x140] sm:$0xf] %v933
                  %v935 = vld [vmem:[%s771 + $0x510] sm:$0xf]
                  %936 = vst [vmem:[%s772 + $0x144] sm:$0xf] %v935
                  %v937 = vld [vmem:[%s771 + $0x520] sm:$0xf]
                  %938 = vst [vmem:[%s772 + $0x148] sm:$0xf] %v937
                  %v939 = vld [vmem:[%s771 + $0x530] sm:$0xf]
                  %940 = vst [vmem:[%s772 + $0x14c] sm:$0xf] %v939
                  %v941 = vld [vmem:[%s771 + $0x540] sm:$0xf]
                  %942 = vst [vmem:[%s772 + $0x150] sm:$0xf] %v941
                  %v943 = vld [vmem:[%s771 + $0x550] sm:$0xf]
                  %944 = vst [vmem:[%s772 + $0x154] sm:$0xf] %v943
                  %v945 = vld [vmem:[%s771 + $0x560] sm:$0xf]
                  %946 = vst [vmem:[%s772 + $0x158] sm:$0xf] %v945
                  %v947 = vld [vmem:[%s771 + $0x570] sm:$0xf]
                  %948 = vst [vmem:[%s772 + $0x15c] sm:$0xf] %v947
                  %v949 = vld [vmem:[%s771 + $0x580] sm:$0xf]
                  %950 = vst [vmem:[%s772 + $0x160] sm:$0xf] %v949
                  %v951 = vld [vmem:[%s771 + $0x590] sm:$0xf]
                  %952 = vst [vmem:[%s772 + $0x164] sm:$0xf] %v951
                  %v953 = vld [vmem:[%s771 + $0x5a0] sm:$0xf]
                  %954 = vst [vmem:[%s772 + $0x168] sm:$0xf] %v953
                  %v955 = vld [vmem:[%s771 + $0x5b0] sm:$0xf]
                  %956 = vst [vmem:[%s772 + $0x16c] sm:$0xf] %v955
                  %v957 = vld [vmem:[%s771 + $0x5c0] sm:$0xf]
                  %958 = vst [vmem:[%s772 + $0x170] sm:$0xf] %v957
                  %v959 = vld [vmem:[%s771 + $0x5d0] sm:$0xf]
                  %960 = vst [vmem:[%s772 + $0x174] sm:$0xf] %v959
                  %v961 = vld [vmem:[%s771 + $0x5e0] sm:$0xf]
                  %962 = vst [vmem:[%s772 + $0x178] sm:$0xf] %v961
                  %v963 = vld [vmem:[%s771 + $0x5f0] sm:$0xf]
                  %964 = vst [vmem:[%s772 + $0x17c] sm:$0xf] %v963
                  %v965 = vld [vmem:[%s771 + $0x600] sm:$0xf]
                  %966 = vst [vmem:[%s772 + $0x180] sm:$0xf] %v965
                  %v967 = vld [vmem:[%s771 + $0x610] sm:$0xf]
                  %968 = vst [vmem:[%s772 + $0x184] sm:$0xf] %v967
                  %v969 = vld [vmem:[%s771 + $0x620] sm:$0xf]
                  %970 = vst [vmem:[%s772 + $0x188] sm:$0xf] %v969
                  %v971 = vld [vmem:[%s771 + $0x630] sm:$0xf]
                  %972 = vst [vmem:[%s772 + $0x18c] sm:$0xf] %v971
                  %v973 = vld [vmem:[%s771 + $0x640] sm:$0xf]
                  %974 = vst [vmem:[%s772 + $0x190] sm:$0xf] %v973
                  %v975 = vld [vmem:[%s771 + $0x650] sm:$0xf]
                  %976 = vst [vmem:[%s772 + $0x194] sm:$0xf] %v975
                  %v977 = vld [vmem:[%s771 + $0x660] sm:$0xf]
                  %978 = vst [vmem:[%s772 + $0x198] sm:$0xf] %v977
                  %v979 = vld [vmem:[%s771 + $0x670] sm:$0xf]
                  %980 = vst [vmem:[%s772 + $0x19c] sm:$0xf] %v979
                  %v981 = vld [vmem:[%s771 + $0x680] sm:$0xf]
                  %982 = vst [vmem:[%s772 + $0x1a0] sm:$0xf] %v981
                  %v983 = vld [vmem:[%s771 + $0x690] sm:$0xf]
                  %984 = vst [vmem:[%s772 + $0x1a4] sm:$0xf] %v983
                  %v985 = vld [vmem:[%s771 + $0x6a0] sm:$0xf]
                  %986 = vst [vmem:[%s772 + $0x1a8] sm:$0xf] %v985
                  %v987 = vld [vmem:[%s771 + $0x6b0] sm:$0xf]
                  %988 = vst [vmem:[%s772 + $0x1ac] sm:$0xf] %v987
                  %v989 = vld [vmem:[%s771 + $0x6c0] sm:$0xf]
                  %990 = vst [vmem:[%s772 + $0x1b0] sm:$0xf] %v989
                  %v991 = vld [vmem:[%s771 + $0x6d0] sm:$0xf]
                  %992 = vst [vmem:[%s772 + $0x1b4] sm:$0xf] %v991
                  %v993 = vld [vmem:[%s771 + $0x6e0] sm:$0xf]
                  %994 = vst [vmem:[%s772 + $0x1b8] sm:$0xf] %v993
                  %v995 = vld [vmem:[%s771 + $0x6f0] sm:$0xf]
                  %996 = vst [vmem:[%s772 + $0x1bc] sm:$0xf] %v995
                  %v997 = vld [vmem:[%s771 + $0x700] sm:$0xf]
                  %998 = vst [vmem:[%s772 + $0x1c0] sm:$0xf] %v997
                  %v999 = vld [vmem:[%s771 + $0x710] sm:$0xf]
                  %1000 = vst [vmem:[%s772 + $0x1c4] sm:$0xf] %v999
                  %v1001 = vld [vmem:[%s771 + $0x720] sm:$0xf]
                  %1002 = vst [vmem:[%s772 + $0x1c8] sm:$0xf] %v1001
                  %v1003 = vld [vmem:[%s771 + $0x730] sm:$0xf]
                  %1004 = vst [vmem:[%s772 + $0x1cc] sm:$0xf] %v1003
                  %v1005 = vld [vmem:[%s771 + $0x740] sm:$0xf]
                  %1006 = vst [vmem:[%s772 + $0x1d0] sm:$0xf] %v1005
                  %v1007 = vld [vmem:[%s771 + $0x750] sm:$0xf]
                  %1008 = vst [vmem:[%s772 + $0x1d4] sm:$0xf] %v1007
                  %v1009 = vld [vmem:[%s771 + $0x760] sm:$0xf]
                  %1010 = vst [vmem:[%s772 + $0x1d8] sm:$0xf] %v1009
                  %v1011 = vld [vmem:[%s771 + $0x770] sm:$0xf]
                  %1012 = vst [vmem:[%s772 + $0x1dc] sm:$0xf] %v1011
                  %v1013 = vld [vmem:[%s771 + $0x780] sm:$0xf]
                  %1014 = vst [vmem:[%s772 + $0x1e0] sm:$0xf] %v1013
                  %v1015 = vld [vmem:[%s771 + $0x790] sm:$0xf]
                  %1016 = vst [vmem:[%s772 + $0x1e4] sm:$0xf] %v1015
                  %v1017 = vld [vmem:[%s771 + $0x7a0] sm:$0xf]
                  %1018 = vst [vmem:[%s772 + $0x1e8] sm:$0xf] %v1017
                  %v1019 = vld [vmem:[%s771 + $0x7b0] sm:$0xf]
                  %1020 = vst [vmem:[%s772 + $0x1ec] sm:$0xf] %v1019
                  %v1021 = vld [vmem:[%s771 + $0x7c0] sm:$0xf]
                  %1022 = vst [vmem:[%s772 + $0x1f0] sm:$0xf] %v1021
                  %v1023 = vld [vmem:[%s771 + $0x7d0] sm:$0xf]
                  %1024 = vst [vmem:[%s772 + $0x1f4] sm:$0xf] %v1023
                  %v1025 = vld [vmem:[%s771 + $0x7e0] sm:$0xf]
                  %1026 = vst [vmem:[%s772 + $0x1f8] sm:$0xf] %v1025
                  %v1027 = vld [vmem:[%s771 + $0x7f0] sm:$0xf]
                  %1028 = vst [vmem:[%s772 + $0x1fc] sm:$0xf] %v1027
                  %v1029 = vld [vmem:[%s771 + $0x800] sm:$0xf]
                  %1030 = vst [vmem:[%s772 + $0x200] sm:$0xf] %v1029
                  %v1031 = vld [vmem:[%s771 + $0x810] sm:$0xf]
                  %1032 = vst [vmem:[%s772 + $0x204] sm:$0xf] %v1031
                  %v1033 = vld [vmem:[%s771 + $0x820] sm:$0xf]
                  %1034 = vst [vmem:[%s772 + $0x208] sm:$0xf] %v1033
                  %v1035 = vld [vmem:[%s771 + $0x830] sm:$0xf]
                  %1036 = vst [vmem:[%s772 + $0x20c] sm:$0xf] %v1035
                  %v1037 = vld [vmem:[%s771 + $0x840] sm:$0xf]
                  %1038 = vst [vmem:[%s772 + $0x210] sm:$0xf] %v1037
                  %v1039 = vld [vmem:[%s771 + $0x850] sm:$0xf]
                  %1040 = vst [vmem:[%s772 + $0x214] sm:$0xf] %v1039
                  %v1041 = vld [vmem:[%s771 + $0x860] sm:$0xf]
                  %1042 = vst [vmem:[%s772 + $0x218] sm:$0xf] %v1041
                  %v1043 = vld [vmem:[%s771 + $0x870] sm:$0xf]
                  %1044 = vst [vmem:[%s772 + $0x21c] sm:$0xf] %v1043
                  %v1045 = vld [vmem:[%s771 + $0x880] sm:$0xf]
                  %1046 = vst [vmem:[%s772 + $0x220] sm:$0xf] %v1045
                  %v1047 = vld [vmem:[%s771 + $0x890] sm:$0xf]
                  %1048 = vst [vmem:[%s772 + $0x224] sm:$0xf] %v1047
                  %v1049 = vld [vmem:[%s771 + $0x8a0] sm:$0xf]
                  %1050 = vst [vmem:[%s772 + $0x228] sm:$0xf] %v1049
                  %v1051 = vld [vmem:[%s771 + $0x8b0] sm:$0xf]
                  %1052 = vst [vmem:[%s772 + $0x22c] sm:$0xf] %v1051
                  %v1053 = vld [vmem:[%s771 + $0x8c0] sm:$0xf]
                  %1054 = vst [vmem:[%s772 + $0x230] sm:$0xf] %v1053
                  %v1055 = vld [vmem:[%s771 + $0x8d0] sm:$0xf]
                  %1056 = vst [vmem:[%s772 + $0x234] sm:$0xf] %v1055
                  %v1057 = vld [vmem:[%s771 + $0x8e0] sm:$0xf]
                  %1058 = vst [vmem:[%s772 + $0x238] sm:$0xf] %v1057
                  %v1059 = vld [vmem:[%s771 + $0x8f0] sm:$0xf]
                  %1060 = vst [vmem:[%s772 + $0x23c] sm:$0xf] %v1059
                  %v1061 = vld [vmem:[%s771 + $0x900] sm:$0xf]
                  %1062 = vst [vmem:[%s772 + $0x240] sm:$0xf] %v1061
                  %v1063 = vld [vmem:[%s771 + $0x910] sm:$0xf]
                  %1064 = vst [vmem:[%s772 + $0x244] sm:$0xf] %v1063
                  %v1065 = vld [vmem:[%s771 + $0x920] sm:$0xf]
                  %1066 = vst [vmem:[%s772 + $0x248] sm:$0xf] %v1065
                  %v1067 = vld [vmem:[%s771 + $0x930] sm:$0xf]
                  %1068 = vst [vmem:[%s772 + $0x24c] sm:$0xf] %v1067
                  %v1069 = vld [vmem:[%s771 + $0x940] sm:$0xf]
                  %1070 = vst [vmem:[%s772 + $0x250] sm:$0xf] %v1069
                  %v1071 = vld [vmem:[%s771 + $0x950] sm:$0xf]
                  %1072 = vst [vmem:[%s772 + $0x254] sm:$0xf] %v1071
                  %v1073 = vld [vmem:[%s771 + $0x960] sm:$0xf]
                  %1074 = vst [vmem:[%s772 + $0x258] sm:$0xf] %v1073
                  %v1075 = vld [vmem:[%s771 + $0x970] sm:$0xf]
                  %1076 = vst [vmem:[%s772 + $0x25c] sm:$0xf] %v1075
                  %v1077 = vld [vmem:[%s771 + $0x980] sm:$0xf]
                  %1078 = vst [vmem:[%s772 + $0x260] sm:$0xf] %v1077
                  %v1079 = vld [vmem:[%s771 + $0x990] sm:$0xf]
                  %1080 = vst [vmem:[%s772 + $0x264] sm:$0xf] %v1079
                  %v1081 = vld [vmem:[%s771 + $0x9a0] sm:$0xf]
                  %1082 = vst [vmem:[%s772 + $0x268] sm:$0xf] %v1081
                  %v1083 = vld [vmem:[%s771 + $0x9b0] sm:$0xf]
                  %1084 = vst [vmem:[%s772 + $0x26c] sm:$0xf] %v1083
                  %v1085 = vld [vmem:[%s771 + $0x9c0] sm:$0xf]
                  %1086 = vst [vmem:[%s772 + $0x270] sm:$0xf] %v1085
                  %v1087 = vld [vmem:[%s771 + $0x9d0] sm:$0xf]
                  %1088 = vst [vmem:[%s772 + $0x274] sm:$0xf] %v1087
                  %v1089 = vld [vmem:[%s771 + $0x9e0] sm:$0xf]
                  %1090 = vst [vmem:[%s772 + $0x278] sm:$0xf] %v1089
                  %v1091 = vld [vmem:[%s771 + $0x9f0] sm:$0xf]
                  %1092 = vst [vmem:[%s772 + $0x27c] sm:$0xf] %v1091
                  %v1093 = vld [vmem:[%s771 + $0xa00] sm:$0xf]
                  %1094 = vst [vmem:[%s772 + $0x280] sm:$0xf] %v1093
                  %v1095 = vld [vmem:[%s771 + $0xa10] sm:$0xf]
                  %1096 = vst [vmem:[%s772 + $0x284] sm:$0xf] %v1095
                  %v1097 = vld [vmem:[%s771 + $0xa20] sm:$0xf]
                  %1098 = vst [vmem:[%s772 + $0x288] sm:$0xf] %v1097
                  %v1099 = vld [vmem:[%s771 + $0xa30] sm:$0xf]
                  %1100 = vst [vmem:[%s772 + $0x28c] sm:$0xf] %v1099
                  %v1101 = vld [vmem:[%s771 + $0xa40] sm:$0xf]
                  %1102 = vst [vmem:[%s772 + $0x290] sm:$0xf] %v1101
                  %v1103 = vld [vmem:[%s771 + $0xa50] sm:$0xf]
                  %1104 = vst [vmem:[%s772 + $0x294] sm:$0xf] %v1103
                  %v1105 = vld [vmem:[%s771 + $0xa60] sm:$0xf]
                  %1106 = vst [vmem:[%s772 + $0x298] sm:$0xf] %v1105
                  %v1107 = vld [vmem:[%s771 + $0xa70] sm:$0xf]
                  %1108 = vst [vmem:[%s772 + $0x29c] sm:$0xf] %v1107
                  %v1109 = vld [vmem:[%s771 + $0xa80] sm:$0xf]
                  %1110 = vst [vmem:[%s772 + $0x2a0] sm:$0xf] %v1109
                  %v1111 = vld [vmem:[%s771 + $0xa90] sm:$0xf]
                  %1112 = vst [vmem:[%s772 + $0x2a4] sm:$0xf] %v1111
                  %v1113 = vld [vmem:[%s771 + $0xaa0] sm:$0xf]
                  %1114 = vst [vmem:[%s772 + $0x2a8] sm:$0xf] %v1113
                  %v1115 = vld [vmem:[%s771 + $0xab0] sm:$0xf]
                  %1116 = vst [vmem:[%s772 + $0x2ac] sm:$0xf] %v1115
                  %v1117 = vld [vmem:[%s771 + $0xac0] sm:$0xf]
                  %1118 = vst [vmem:[%s772 + $0x2b0] sm:$0xf] %v1117
                  %v1119 = vld [vmem:[%s771 + $0xad0] sm:$0xf]
                  %1120 = vst [vmem:[%s772 + $0x2b4] sm:$0xf] %v1119
                  %v1121 = vld [vmem:[%s771 + $0xae0] sm:$0xf]
                  %1122 = vst [vmem:[%s772 + $0x2b8] sm:$0xf] %v1121
                  %v1123 = vld [vmem:[%s771 + $0xaf0] sm:$0xf]
                  %1124 = vst [vmem:[%s772 + $0x2bc] sm:$0xf] %v1123
                  %v1125 = vld [vmem:[%s771 + $0xb00] sm:$0xf]
                  %1126 = vst [vmem:[%s772 + $0x2c0] sm:$0xf] %v1125
                  %v1127 = vld [vmem:[%s771 + $0xb10] sm:$0xf]
                  %1128 = vst [vmem:[%s772 + $0x2c4] sm:$0xf] %v1127
                  %v1129 = vld [vmem:[%s771 + $0xb20] sm:$0xf]
                  %1130 = vst [vmem:[%s772 + $0x2c8] sm:$0xf] %v1129
                  %v1131 = vld [vmem:[%s771 + $0xb30] sm:$0xf]
                  %1132 = vst [vmem:[%s772 + $0x2cc] sm:$0xf] %v1131
                  %v1133 = vld [vmem:[%s771 + $0xb40] sm:$0xf]
                  %1134 = vst [vmem:[%s772 + $0x2d0] sm:$0xf] %v1133
                  %v1135 = vld [vmem:[%s771 + $0xb50] sm:$0xf]
                  %1136 = vst [vmem:[%s772 + $0x2d4] sm:$0xf] %v1135
                  %v1137 = vld [vmem:[%s771 + $0xb60] sm:$0xf]
                  %1138 = vst [vmem:[%s772 + $0x2d8] sm:$0xf] %v1137
                  %v1139 = vld [vmem:[%s771 + $0xb70] sm:$0xf]
                  %1140 = vst [vmem:[%s772 + $0x2dc] sm:$0xf] %v1139
                  %v1141 = vld [vmem:[%s771 + $0xb80] sm:$0xf]
                  %1142 = vst [vmem:[%s772 + $0x2e0] sm:$0xf] %v1141
                  %v1143 = vld [vmem:[%s771 + $0xb90] sm:$0xf]
                  %1144 = vst [vmem:[%s772 + $0x2e4] sm:$0xf] %v1143
                  %v1145 = vld [vmem:[%s771 + $0xba0] sm:$0xf]
                  %1146 = vst [vmem:[%s772 + $0x2e8] sm:$0xf] %v1145
                  %v1147 = vld [vmem:[%s771 + $0xbb0] sm:$0xf]
                  %1148 = vst [vmem:[%s772 + $0x2ec] sm:$0xf] %v1147
                  %v1149 = vld [vmem:[%s771 + $0xbc0] sm:$0xf]
                  %1150 = vst [vmem:[%s772 + $0x2f0] sm:$0xf] %v1149
                  %v1151 = vld [vmem:[%s771 + $0xbd0] sm:$0xf]
                  %1152 = vst [vmem:[%s772 + $0x2f4] sm:$0xf] %v1151
                  %v1153 = vld [vmem:[%s771 + $0xbe0] sm:$0xf]
                  %1154 = vst [vmem:[%s772 + $0x2f8] sm:$0xf] %v1153
                  %v1155 = vld [vmem:[%s771 + $0xbf0] sm:$0xf]
                  %1156 = vst [vmem:[%s772 + $0x2fc] sm:$0xf] %v1155
                  %v1157 = vld [vmem:[%s771 + $0xc00] sm:$0xf]
                  %1158 = vst [vmem:[%s772 + $0x300] sm:$0xf] %v1157
                  %v1159 = vld [vmem:[%s771 + $0xc10] sm:$0xf]
                  %1160 = vst [vmem:[%s772 + $0x304] sm:$0xf] %v1159
                  %v1161 = vld [vmem:[%s771 + $0xc20] sm:$0xf]
                  %1162 = vst [vmem:[%s772 + $0x308] sm:$0xf] %v1161
                  %v1163 = vld [vmem:[%s771 + $0xc30] sm:$0xf]
                  %1164 = vst [vmem:[%s772 + $0x30c] sm:$0xf] %v1163
                  %v1165 = vld [vmem:[%s771 + $0xc40] sm:$0xf]
                  %1166 = vst [vmem:[%s772 + $0x310] sm:$0xf] %v1165
                  %v1167 = vld [vmem:[%s771 + $0xc50] sm:$0xf]
                  %1168 = vst [vmem:[%s772 + $0x314] sm:$0xf] %v1167
                  %v1169 = vld [vmem:[%s771 + $0xc60] sm:$0xf]
                  %1170 = vst [vmem:[%s772 + $0x318] sm:$0xf] %v1169
                  %v1171 = vld [vmem:[%s771 + $0xc70] sm:$0xf]
                  %1172 = vst [vmem:[%s772 + $0x31c] sm:$0xf] %v1171
                  %v1173 = vld [vmem:[%s771 + $0xc80] sm:$0xf]
                  %1174 = vst [vmem:[%s772 + $0x320] sm:$0xf] %v1173
                  %v1175 = vld [vmem:[%s771 + $0xc90] sm:$0xf]
                  %1176 = vst [vmem:[%s772 + $0x324] sm:$0xf] %v1175
                  %v1177 = vld [vmem:[%s771 + $0xca0] sm:$0xf]
                  %1178 = vst [vmem:[%s772 + $0x328] sm:$0xf] %v1177
                  %v1179 = vld [vmem:[%s771 + $0xcb0] sm:$0xf]
                  %1180 = vst [vmem:[%s772 + $0x32c] sm:$0xf] %v1179
                  %v1181 = vld [vmem:[%s771 + $0xcc0] sm:$0xf]
                  %1182 = vst [vmem:[%s772 + $0x330] sm:$0xf] %v1181
                  %v1183 = vld [vmem:[%s771 + $0xcd0] sm:$0xf]
                  %1184 = vst [vmem:[%s772 + $0x334] sm:$0xf] %v1183
                  %v1185 = vld [vmem:[%s771 + $0xce0] sm:$0xf]
                  %1186 = vst [vmem:[%s772 + $0x338] sm:$0xf] %v1185
                  %v1187 = vld [vmem:[%s771 + $0xcf0] sm:$0xf]
                  %1188 = vst [vmem:[%s772 + $0x33c] sm:$0xf] %v1187
                  %v1189 = vld [vmem:[%s771 + $0xd00] sm:$0xf]
                  %1190 = vst [vmem:[%s772 + $0x340] sm:$0xf] %v1189
                  %v1191 = vld [vmem:[%s771 + $0xd10] sm:$0xf]
                  %1192 = vst [vmem:[%s772 + $0x344] sm:$0xf] %v1191
                  %v1193 = vld [vmem:[%s771 + $0xd20] sm:$0xf]
                  %1194 = vst [vmem:[%s772 + $0x348] sm:$0xf] %v1193
                  %v1195 = vld [vmem:[%s771 + $0xd30] sm:$0xf]
                  %1196 = vst [vmem:[%s772 + $0x34c] sm:$0xf] %v1195
                  %v1197 = vld [vmem:[%s771 + $0xd40] sm:$0xf]
                  %1198 = vst [vmem:[%s772 + $0x350] sm:$0xf] %v1197
                  %v1199 = vld [vmem:[%s771 + $0xd50] sm:$0xf]
                  %1200 = vst [vmem:[%s772 + $0x354] sm:$0xf] %v1199
                  %v1201 = vld [vmem:[%s771 + $0xd60] sm:$0xf]
                  %1202 = vst [vmem:[%s772 + $0x358] sm:$0xf] %v1201
                  %v1203 = vld [vmem:[%s771 + $0xd70] sm:$0xf]
                  %1204 = vst [vmem:[%s772 + $0x35c] sm:$0xf] %v1203
                  %v1205 = vld [vmem:[%s771 + $0xd80] sm:$0xf]
                  %1206 = vst [vmem:[%s772 + $0x360] sm:$0xf] %v1205
                  %v1207 = vld [vmem:[%s771 + $0xd90] sm:$0xf]
                  %1208 = vst [vmem:[%s772 + $0x364] sm:$0xf] %v1207
                  %v1209 = vld [vmem:[%s771 + $0xda0] sm:$0xf]
                  %1210 = vst [vmem:[%s772 + $0x368] sm:$0xf] %v1209
                  %v1211 = vld [vmem:[%s771 + $0xdb0] sm:$0xf]
                  %1212 = vst [vmem:[%s772 + $0x36c] sm:$0xf] %v1211
                  %v1213 = vld [vmem:[%s771 + $0xdc0] sm:$0xf]
                  %1214 = vst [vmem:[%s772 + $0x370] sm:$0xf] %v1213
                  %v1215 = vld [vmem:[%s771 + $0xdd0] sm:$0xf]
                  %1216 = vst [vmem:[%s772 + $0x374] sm:$0xf] %v1215
                  %v1217 = vld [vmem:[%s771 + $0xde0] sm:$0xf]
                  %1218 = vst [vmem:[%s772 + $0x378] sm:$0xf] %v1217
                  %v1219 = vld [vmem:[%s771 + $0xdf0] sm:$0xf]
                  %1220 = vst [vmem:[%s772 + $0x37c] sm:$0xf] %v1219
                  %v1221 = vld [vmem:[%s771 + $0xe00] sm:$0xf]
                  %1222 = vst [vmem:[%s772 + $0x380] sm:$0xf] %v1221
                  %v1223 = vld [vmem:[%s771 + $0xe10] sm:$0xf]
                  %1224 = vst [vmem:[%s772 + $0x384] sm:$0xf] %v1223
                  %v1225 = vld [vmem:[%s771 + $0xe20] sm:$0xf]
                  %1226 = vst [vmem:[%s772 + $0x388] sm:$0xf] %v1225
                  %v1227 = vld [vmem:[%s771 + $0xe30] sm:$0xf]
                  %1228 = vst [vmem:[%s772 + $0x38c] sm:$0xf] %v1227
                  %v1229 = vld [vmem:[%s771 + $0xe40] sm:$0xf]
                  %1230 = vst [vmem:[%s772 + $0x390] sm:$0xf] %v1229
                  %v1231 = vld [vmem:[%s771 + $0xe50] sm:$0xf]
                  %1232 = vst [vmem:[%s772 + $0x394] sm:$0xf] %v1231
                  %v1233 = vld [vmem:[%s771 + $0xe60] sm:$0xf]
                  %1234 = vst [vmem:[%s772 + $0x398] sm:$0xf] %v1233
                  %v1235 = vld [vmem:[%s771 + $0xe70] sm:$0xf]
                  %1236 = vst [vmem:[%s772 + $0x39c] sm:$0xf] %v1235
                  %v1237 = vld [vmem:[%s771 + $0xe80] sm:$0xf]
                  %1238 = vst [vmem:[%s772 + $0x3a0] sm:$0xf] %v1237
                  %v1239 = vld [vmem:[%s771 + $0xe90] sm:$0xf]
                  %1240 = vst [vmem:[%s772 + $0x3a4] sm:$0xf] %v1239
                  %v1241 = vld [vmem:[%s771 + $0xea0] sm:$0xf]
                  %1242 = vst [vmem:[%s772 + $0x3a8] sm:$0xf] %v1241
                  %v1243 = vld [vmem:[%s771 + $0xeb0] sm:$0xf]
                  %1244 = vst [vmem:[%s772 + $0x3ac] sm:$0xf] %v1243
                  %v1245 = vld [vmem:[%s771 + $0xec0] sm:$0xf]
                  %1246 = vst [vmem:[%s772 + $0x3b0] sm:$0xf] %v1245
                  %v1247 = vld [vmem:[%s771 + $0xed0] sm:$0xf]
                  %1248 = vst [vmem:[%s772 + $0x3b4] sm:$0xf] %v1247
                  %v1249 = vld [vmem:[%s771 + $0xee0] sm:$0xf]
                  %1250 = vst [vmem:[%s772 + $0x3b8] sm:$0xf] %v1249
                  %v1251 = vld [vmem:[%s771 + $0xef0] sm:$0xf]
                  %1252 = vst [vmem:[%s772 + $0x3bc] sm:$0xf] %v1251
                  %v1253 = vld [vmem:[%s771 + $0xf00] sm:$0xf]
                  %1254 = vst [vmem:[%s772 + $0x3c0] sm:$0xf] %v1253
                  %v1255 = vld [vmem:[%s771 + $0xf10] sm:$0xf]
                  %1256 = vst [vmem:[%s772 + $0x3c4] sm:$0xf] %v1255
                  %v1257 = vld [vmem:[%s771 + $0xf20] sm:$0xf]
                  %1258 = vst [vmem:[%s772 + $0x3c8] sm:$0xf] %v1257
                  %v1259 = vld [vmem:[%s771 + $0xf30] sm:$0xf]
                  %1260 = vst [vmem:[%s772 + $0x3cc] sm:$0xf] %v1259
                  %v1261 = vld [vmem:[%s771 + $0xf40] sm:$0xf]
                  %1262 = vst [vmem:[%s772 + $0x3d0] sm:$0xf] %v1261
                  %v1263 = vld [vmem:[%s771 + $0xf50] sm:$0xf]
                  %1264 = vst [vmem:[%s772 + $0x3d4] sm:$0xf] %v1263
                  %v1265 = vld [vmem:[%s771 + $0xf60] sm:$0xf]
                  %1266 = vst [vmem:[%s772 + $0x3d8] sm:$0xf] %v1265
                  %v1267 = vld [vmem:[%s771 + $0xf70] sm:$0xf]
                  %1268 = vst [vmem:[%s772 + $0x3dc] sm:$0xf] %v1267
                  %v1269 = vld [vmem:[%s771 + $0xf80] sm:$0xf]
                  %1270 = vst [vmem:[%s772 + $0x3e0] sm:$0xf] %v1269
                  %v1271 = vld [vmem:[%s771 + $0xf90] sm:$0xf]
                  %1272 = vst [vmem:[%s772 + $0x3e4] sm:$0xf] %v1271
                  %v1273 = vld [vmem:[%s771 + $0xfa0] sm:$0xf]
                  %1274 = vst [vmem:[%s772 + $0x3e8] sm:$0xf] %v1273
                  %v1275 = vld [vmem:[%s771 + $0xfb0] sm:$0xf]
                  %1276 = vst [vmem:[%s772 + $0x3ec] sm:$0xf] %v1275
                  %v1277 = vld [vmem:[%s771 + $0xfc0] sm:$0xf]
                  %1278 = vst [vmem:[%s772 + $0x3f0] sm:$0xf] %v1277
                  %v1279 = vld [vmem:[%s771 + $0xfd0] sm:$0xf]
                  %1280 = vst [vmem:[%s772 + $0x3f4] sm:$0xf] %v1279
                  %v1281 = vld [vmem:[%s771 + $0xfe0] sm:$0xf]
                  %1282 = vst [vmem:[%s772 + $0x3f8] sm:$0xf] %v1281
                  %v1283 = vld [vmem:[%s771 + $0xff0] sm:$0xf]
                  %1284 = vst [vmem:[%s772 + $0x3fc] sm:$0xf] %v1283
                  %v1285 = vld [vmem:[%s771 + $0x1000] sm:$0xf]
                  %1286 = vst [vmem:[%s772 + $0x400] sm:$0xf] %v1285
                  %v1287 = vld [vmem:[%s771 + $0x1010] sm:$0xf]
                  %1288 = vst [vmem:[%s772 + $0x404] sm:$0xf] %v1287
                  %v1289 = vld [vmem:[%s771 + $0x1020] sm:$0xf]
                  %1290 = vst [vmem:[%s772 + $0x408] sm:$0xf] %v1289
                  %v1291 = vld [vmem:[%s771 + $0x1030] sm:$0xf]
                  %1292 = vst [vmem:[%s772 + $0x40c] sm:$0xf] %v1291
                  %v1293 = vld [vmem:[%s771 + $0x1040] sm:$0xf]
                  %1294 = vst [vmem:[%s772 + $0x410] sm:$0xf] %v1293
                  %v1295 = vld [vmem:[%s771 + $0x1050] sm:$0xf]
                  %1296 = vst [vmem:[%s772 + $0x414] sm:$0xf] %v1295
                  %v1297 = vld [vmem:[%s771 + $0x1060] sm:$0xf]
                  %1298 = vst [vmem:[%s772 + $0x418] sm:$0xf] %v1297
                  %v1299 = vld [vmem:[%s771 + $0x1070] sm:$0xf]
                  %1300 = vst [vmem:[%s772 + $0x41c] sm:$0xf] %v1299
                  %v1301 = vld [vmem:[%s771 + $0x1080] sm:$0xf]
                  %1302 = vst [vmem:[%s772 + $0x420] sm:$0xf] %v1301
                  %v1303 = vld [vmem:[%s771 + $0x1090] sm:$0xf]
                  %1304 = vst [vmem:[%s772 + $0x424] sm:$0xf] %v1303
                  %v1305 = vld [vmem:[%s771 + $0x10a0] sm:$0xf]
                  %1306 = vst [vmem:[%s772 + $0x428] sm:$0xf] %v1305
                  %v1307 = vld [vmem:[%s771 + $0x10b0] sm:$0xf]
                  %1308 = vst [vmem:[%s772 + $0x42c] sm:$0xf] %v1307
                  %v1309 = vld [vmem:[%s771 + $0x10c0] sm:$0xf]
                  %1310 = vst [vmem:[%s772 + $0x430] sm:$0xf] %v1309
                  %v1311 = vld [vmem:[%s771 + $0x10d0] sm:$0xf]
                  %1312 = vst [vmem:[%s772 + $0x434] sm:$0xf] %v1311
                  %v1313 = vld [vmem:[%s771 + $0x10e0] sm:$0xf]
                  %1314 = vst [vmem:[%s772 + $0x438] sm:$0xf] %v1313
                  %v1315 = vld [vmem:[%s771 + $0x10f0] sm:$0xf]
                  %1316 = vst [vmem:[%s772 + $0x43c] sm:$0xf] %v1315
                  %v1317 = vld [vmem:[%s771 + $0x1100] sm:$0xf]
                  %1318 = vst [vmem:[%s772 + $0x440] sm:$0xf] %v1317
                  %v1319 = vld [vmem:[%s771 + $0x1110] sm:$0xf]
                  %1320 = vst [vmem:[%s772 + $0x444] sm:$0xf] %v1319
                  %v1321 = vld [vmem:[%s771 + $0x1120] sm:$0xf]
                  %1322 = vst [vmem:[%s772 + $0x448] sm:$0xf] %v1321
                  %v1323 = vld [vmem:[%s771 + $0x1130] sm:$0xf]
                  %1324 = vst [vmem:[%s772 + $0x44c] sm:$0xf] %v1323
                  %v1325 = vld [vmem:[%s771 + $0x1140] sm:$0xf]
                  %1326 = vst [vmem:[%s772 + $0x450] sm:$0xf] %v1325
                  %v1327 = vld [vmem:[%s771 + $0x1150] sm:$0xf]
                  %1328 = vst [vmem:[%s772 + $0x454] sm:$0xf] %v1327
                  %v1329 = vld [vmem:[%s771 + $0x1160] sm:$0xf]
                  %1330 = vst [vmem:[%s772 + $0x458] sm:$0xf] %v1329
                  %v1331 = vld [vmem:[%s771 + $0x1170] sm:$0xf]
                  %1332 = vst [vmem:[%s772 + $0x45c] sm:$0xf] %v1331
                  %v1333 = vld [vmem:[%s771 + $0x1180] sm:$0xf]
                  %1334 = vst [vmem:[%s772 + $0x460] sm:$0xf] %v1333
                  %v1335 = vld [vmem:[%s771 + $0x1190] sm:$0xf]
                  %1336 = vst [vmem:[%s772 + $0x464] sm:$0xf] %v1335
                  %v1337 = vld [vmem:[%s771 + $0x11a0] sm:$0xf]
                  %1338 = vst [vmem:[%s772 + $0x468] sm:$0xf] %v1337
                  %v1339 = vld [vmem:[%s771 + $0x11b0] sm:$0xf]
                  %1340 = vst [vmem:[%s772 + $0x46c] sm:$0xf] %v1339
                  %v1341 = vld [vmem:[%s771 + $0x11c0] sm:$0xf]
                  %1342 = vst [vmem:[%s772 + $0x470] sm:$0xf] %v1341
                  %v1343 = vld [vmem:[%s771 + $0x11d0] sm:$0xf]
                  %1344 = vst [vmem:[%s772 + $0x474] sm:$0xf] %v1343
                  %v1345 = vld [vmem:[%s771 + $0x11e0] sm:$0xf]
                  %1346 = vst [vmem:[%s772 + $0x478] sm:$0xf] %v1345
                  %v1347 = vld [vmem:[%s771 + $0x11f0] sm:$0xf]
                  %1348 = vst [vmem:[%s772 + $0x47c] sm:$0xf] %v1347
                $region59: #{generator_forward.9} parent=46 // loop_footer
                  %s770 = sadd.s32 1, %s766
                $region60: #{generator_forward.9} parent=46 // loop_footer_branch
                  %765 = sbr.rel target = $region56
                $region61: #{generator_forward.9} parent=46 // loop_exit
                  _
              $region47: #{generator_forward.9} parent=31 // pred_fallthru
                _
            $region32: #{generator_forward.9} parent=27 // pred_fallthru
              _
            // Predicated region
            $region33: #{generator_forward.9} parent=27 // pred_check
              _
            $region34: #{generator_forward.9} parent=27 // pred_check_branch
              %168 = sbr.rel (0) target = $region36
            $region35: #{generator_forward.9} parent=27 // pred_region
              loop: start=0, step=1, limit=1
              $region37: #{generator_forward.9} parent=35 // loop_pre_header
                _
              $region38: #{generator_forward.9} parent=35 // loop_header
                %s171 = sphi 0, %s175
                %p172 = scmp.ge.s32.totalorder %s171, 1
                %s176 = sphi %s162, %s162
                %s177 = sphi %s160, %s160
              $region39: #{generator_forward.9} parent=35 // loop_header_branch
                %174 = sbr.rel (%p172) target = $region43
              $region40: #{generator_forward.9} parent=35 // loop_body
                %v178 = vld [vmem:[%s176] sm:$0xf]
                %179 = vst [vmem:[%s177] sm:$0xf] %v178
                %v180 = vld [vmem:[%s176 + $0x10] sm:$0xf]
                %181 = vst [vmem:[%s177 + $0x4] sm:$0xf] %v180
                %v182 = vld [vmem:[%s176 + $0x20] sm:$0xf]
                %183 = vst [vmem:[%s177 + $0x8] sm:$0xf] %v182
                %v184 = vld [vmem:[%s176 + $0x30] sm:$0xf]
                %185 = vst [vmem:[%s177 + $0xc] sm:$0xf] %v184
                %v186 = vld [vmem:[%s176 + $0x40] sm:$0xf]
                %187 = vst [vmem:[%s177 + $0x10] sm:$0xf] %v186
                %v188 = vld [vmem:[%s176 + $0x50] sm:$0xf]
                %189 = vst [vmem:[%s177 + $0x14] sm:$0xf] %v188
                %v190 = vld [vmem:[%s176 + $0x60] sm:$0xf]
                %191 = vst [vmem:[%s177 + $0x18] sm:$0xf] %v190
                %v192 = vld [vmem:[%s176 + $0x70] sm:$0xf]
                %193 = vst [vmem:[%s177 + $0x1c] sm:$0xf] %v192
                %v194 = vld [vmem:[%s176 + $0x80] sm:$0xf]
                %195 = vst [vmem:[%s177 + $0x20] sm:$0xf] %v194
                %v196 = vld [vmem:[%s176 + $0x90] sm:$0xf]
                %197 = vst [vmem:[%s177 + $0x24] sm:$0xf] %v196
                %v198 = vld [vmem:[%s176 + $0xa0] sm:$0xf]
                %199 = vst [vmem:[%s177 + $0x28] sm:$0xf] %v198
                %v200 = vld [vmem:[%s176 + $0xb0] sm:$0xf]
                %201 = vst [vmem:[%s177 + $0x2c] sm:$0xf] %v200
                %v202 = vld [vmem:[%s176 + $0xc0] sm:$0xf]
                %203 = vst [vmem:[%s177 + $0x30] sm:$0xf] %v202
                %v204 = vld [vmem:[%s176 + $0xd0] sm:$0xf]
                %205 = vst [vmem:[%s177 + $0x34] sm:$0xf] %v204
                %v206 = vld [vmem:[%s176 + $0xe0] sm:$0xf]
                %207 = vst [vmem:[%s177 + $0x38] sm:$0xf] %v206
                %v208 = vld [vmem:[%s176 + $0xf0] sm:$0xf]
                %209 = vst [vmem:[%s177 + $0x3c] sm:$0xf] %v208
                %v210 = vld [vmem:[%s176 + $0x100] sm:$0xf]
                %211 = vst [vmem:[%s177 + $0x40] sm:$0xf] %v210
                %v212 = vld [vmem:[%s176 + $0x110] sm:$0xf]
                %213 = vst [vmem:[%s177 + $0x44] sm:$0xf] %v212
                %v214 = vld [vmem:[%s176 + $0x120] sm:$0xf]
                %215 = vst [vmem:[%s177 + $0x48] sm:$0xf] %v214
                %v216 = vld [vmem:[%s176 + $0x130] sm:$0xf]
                %217 = vst [vmem:[%s177 + $0x4c] sm:$0xf] %v216
                %v218 = vld [vmem:[%s176 + $0x140] sm:$0xf]
                %219 = vst [vmem:[%s177 + $0x50] sm:$0xf] %v218
                %v220 = vld [vmem:[%s176 + $0x150] sm:$0xf]
                %221 = vst [vmem:[%s177 + $0x54] sm:$0xf] %v220
                %v222 = vld [vmem:[%s176 + $0x160] sm:$0xf]
                %223 = vst [vmem:[%s177 + $0x58] sm:$0xf] %v222
                %v224 = vld [vmem:[%s176 + $0x170] sm:$0xf]
                %225 = vst [vmem:[%s177 + $0x5c] sm:$0xf] %v224
                %v226 = vld [vmem:[%s176 + $0x180] sm:$0xf]
                %227 = vst [vmem:[%s177 + $0x60] sm:$0xf] %v226
                %v228 = vld [vmem:[%s176 + $0x190] sm:$0xf]
                %229 = vst [vmem:[%s177 + $0x64] sm:$0xf] %v228
                %v230 = vld [vmem:[%s176 + $0x1a0] sm:$0xf]
                %231 = vst [vmem:[%s177 + $0x68] sm:$0xf] %v230
                %v232 = vld [vmem:[%s176 + $0x1b0] sm:$0xf]
                %233 = vst [vmem:[%s177 + $0x6c] sm:$0xf] %v232
                %v234 = vld [vmem:[%s176 + $0x1c0] sm:$0xf]
                %235 = vst [vmem:[%s177 + $0x70] sm:$0xf] %v234
                %v236 = vld [vmem:[%s176 + $0x1d0] sm:$0xf]
                %237 = vst [vmem:[%s177 + $0x74] sm:$0xf] %v236
                %v238 = vld [vmem:[%s176 + $0x1e0] sm:$0xf]
                %239 = vst [vmem:[%s177 + $0x78] sm:$0xf] %v238
                %v240 = vld [vmem:[%s176 + $0x1f0] sm:$0xf]
                %241 = vst [vmem:[%s177 + $0x7c] sm:$0xf] %v240
                %v242 = vld [vmem:[%s176 + $0x200] sm:$0xf]
                %243 = vst [vmem:[%s177 + $0x80] sm:$0xf] %v242
                %v244 = vld [vmem:[%s176 + $0x210] sm:$0xf]
                %245 = vst [vmem:[%s177 + $0x84] sm:$0xf] %v244
                %v246 = vld [vmem:[%s176 + $0x220] sm:$0xf]
                %247 = vst [vmem:[%s177 + $0x88] sm:$0xf] %v246
                %v248 = vld [vmem:[%s176 + $0x230] sm:$0xf]
                %249 = vst [vmem:[%s177 + $0x8c] sm:$0xf] %v248
                %v250 = vld [vmem:[%s176 + $0x240] sm:$0xf]
                %251 = vst [vmem:[%s177 + $0x90] sm:$0xf] %v250
                %v252 = vld [vmem:[%s176 + $0x250] sm:$0xf]
                %253 = vst [vmem:[%s177 + $0x94] sm:$0xf] %v252
                %v254 = vld [vmem:[%s176 + $0x260] sm:$0xf]
                %255 = vst [vmem:[%s177 + $0x98] sm:$0xf] %v254
                %v256 = vld [vmem:[%s176 + $0x270] sm:$0xf]
                %257 = vst [vmem:[%s177 + $0x9c] sm:$0xf] %v256
                %v258 = vld [vmem:[%s176 + $0x280] sm:$0xf]
                %259 = vst [vmem:[%s177 + $0xa0] sm:$0xf] %v258
                %v260 = vld [vmem:[%s176 + $0x290] sm:$0xf]
                %261 = vst [vmem:[%s177 + $0xa4] sm:$0xf] %v260
                %v262 = vld [vmem:[%s176 + $0x2a0] sm:$0xf]
                %263 = vst [vmem:[%s177 + $0xa8] sm:$0xf] %v262
                %v264 = vld [vmem:[%s176 + $0x2b0] sm:$0xf]
                %265 = vst [vmem:[%s177 + $0xac] sm:$0xf] %v264
                %v266 = vld [vmem:[%s176 + $0x2c0] sm:$0xf]
                %267 = vst [vmem:[%s177 + $0xb0] sm:$0xf] %v266
                %v268 = vld [vmem:[%s176 + $0x2d0] sm:$0xf]
                %269 = vst [vmem:[%s177 + $0xb4] sm:$0xf] %v268
                %v270 = vld [vmem:[%s176 + $0x2e0] sm:$0xf]
                %271 = vst [vmem:[%s177 + $0xb8] sm:$0xf] %v270
                %v272 = vld [vmem:[%s176 + $0x2f0] sm:$0xf]
                %273 = vst [vmem:[%s177 + $0xbc] sm:$0xf] %v272
                %v274 = vld [vmem:[%s176 + $0x300] sm:$0xf]
                %275 = vst [vmem:[%s177 + $0xc0] sm:$0xf] %v274
                %v276 = vld [vmem:[%s176 + $0x310] sm:$0xf]
                %277 = vst [vmem:[%s177 + $0xc4] sm:$0xf] %v276
                %v278 = vld [vmem:[%s176 + $0x320] sm:$0xf]
                %279 = vst [vmem:[%s177 + $0xc8] sm:$0xf] %v278
                %v280 = vld [vmem:[%s176 + $0x330] sm:$0xf]
                %281 = vst [vmem:[%s177 + $0xcc] sm:$0xf] %v280
                %v282 = vld [vmem:[%s176 + $0x340] sm:$0xf]
                %283 = vst [vmem:[%s177 + $0xd0] sm:$0xf] %v282
                %v284 = vld [vmem:[%s176 + $0x350] sm:$0xf]
                %285 = vst [vmem:[%s177 + $0xd4] sm:$0xf] %v284
                %v286 = vld [vmem:[%s176 + $0x360] sm:$0xf]
                %287 = vst [vmem:[%s177 + $0xd8] sm:$0xf] %v286
                %v288 = vld [vmem:[%s176 + $0x370] sm:$0xf]
                %289 = vst [vmem:[%s177 + $0xdc] sm:$0xf] %v288
                %v290 = vld [vmem:[%s176 + $0x380] sm:$0xf]
                %291 = vst [vmem:[%s177 + $0xe0] sm:$0xf] %v290
                %v292 = vld [vmem:[%s176 + $0x390] sm:$0xf]
                %293 = vst [vmem:[%s177 + $0xe4] sm:$0xf] %v292
                %v294 = vld [vmem:[%s176 + $0x3a0] sm:$0xf]
                %295 = vst [vmem:[%s177 + $0xe8] sm:$0xf] %v294
                %v296 = vld [vmem:[%s176 + $0x3b0] sm:$0xf]
                %297 = vst [vmem:[%s177 + $0xec] sm:$0xf] %v296
                %v298 = vld [vmem:[%s176 + $0x3c0] sm:$0xf]
                %299 = vst [vmem:[%s177 + $0xf0] sm:$0xf] %v298
                %v300 = vld [vmem:[%s176 + $0x3d0] sm:$0xf]
                %301 = vst [vmem:[%s177 + $0xf4] sm:$0xf] %v300
                %v302 = vld [vmem:[%s176 + $0x3e0] sm:$0xf]
                %303 = vst [vmem:[%s177 + $0xf8] sm:$0xf] %v302
                %v304 = vld [vmem:[%s176 + $0x3f0] sm:$0xf]
                %305 = vst [vmem:[%s177 + $0xfc] sm:$0xf] %v304
                %v306 = vld [vmem:[%s176 + $0x400] sm:$0xf]
                %307 = vst [vmem:[%s177 + $0x100] sm:$0xf] %v306
                %v308 = vld [vmem:[%s176 + $0x410] sm:$0xf]
                %309 = vst [vmem:[%s177 + $0x104] sm:$0xf] %v308
                %v310 = vld [vmem:[%s176 + $0x420] sm:$0xf]
                %311 = vst [vmem:[%s177 + $0x108] sm:$0xf] %v310
                %v312 = vld [vmem:[%s176 + $0x430] sm:$0xf]
                %313 = vst [vmem:[%s177 + $0x10c] sm:$0xf] %v312
                %v314 = vld [vmem:[%s176 + $0x440] sm:$0xf]
                %315 = vst [vmem:[%s177 + $0x110] sm:$0xf] %v314
                %v316 = vld [vmem:[%s176 + $0x450] sm:$0xf]
                %317 = vst [vmem:[%s177 + $0x114] sm:$0xf] %v316
                %v318 = vld [vmem:[%s176 + $0x460] sm:$0xf]
                %319 = vst [vmem:[%s177 + $0x118] sm:$0xf] %v318
                %v320 = vld [vmem:[%s176 + $0x470] sm:$0xf]
                %321 = vst [vmem:[%s177 + $0x11c] sm:$0xf] %v320
                %v322 = vld [vmem:[%s176 + $0x480] sm:$0xf]
                %323 = vst [vmem:[%s177 + $0x120] sm:$0xf] %v322
                %v324 = vld [vmem:[%s176 + $0x490] sm:$0xf]
                %325 = vst [vmem:[%s177 + $0x124] sm:$0xf] %v324
                %v326 = vld [vmem:[%s176 + $0x4a0] sm:$0xf]
                %327 = vst [vmem:[%s177 + $0x128] sm:$0xf] %v326
                %v328 = vld [vmem:[%s176 + $0x4b0] sm:$0xf]
                %329 = vst [vmem:[%s177 + $0x12c] sm:$0xf] %v328
                %v330 = vld [vmem:[%s176 + $0x4c0] sm:$0xf]
                %331 = vst [vmem:[%s177 + $0x130] sm:$0xf] %v330
                %v332 = vld [vmem:[%s176 + $0x4d0] sm:$0xf]
                %333 = vst [vmem:[%s177 + $0x134] sm:$0xf] %v332
                %v334 = vld [vmem:[%s176 + $0x4e0] sm:$0xf]
                %335 = vst [vmem:[%s177 + $0x138] sm:$0xf] %v334
                %v336 = vld [vmem:[%s176 + $0x4f0] sm:$0xf]
                %337 = vst [vmem:[%s177 + $0x13c] sm:$0xf] %v336
                %v338 = vld [vmem:[%s176 + $0x500] sm:$0xf]
                %339 = vst [vmem:[%s177 + $0x140] sm:$0xf] %v338
                %v340 = vld [vmem:[%s176 + $0x510] sm:$0xf]
                %341 = vst [vmem:[%s177 + $0x144] sm:$0xf] %v340
                %v342 = vld [vmem:[%s176 + $0x520] sm:$0xf]
                %343 = vst [vmem:[%s177 + $0x148] sm:$0xf] %v342
                %v344 = vld [vmem:[%s176 + $0x530] sm:$0xf]
                %345 = vst [vmem:[%s177 + $0x14c] sm:$0xf] %v344
                %v346 = vld [vmem:[%s176 + $0x540] sm:$0xf]
                %347 = vst [vmem:[%s177 + $0x150] sm:$0xf] %v346
                %v348 = vld [vmem:[%s176 + $0x550] sm:$0xf]
                %349 = vst [vmem:[%s177 + $0x154] sm:$0xf] %v348
                %v350 = vld [vmem:[%s176 + $0x560] sm:$0xf]
                %351 = vst [vmem:[%s177 + $0x158] sm:$0xf] %v350
                %v352 = vld [vmem:[%s176 + $0x570] sm:$0xf]
                %353 = vst [vmem:[%s177 + $0x15c] sm:$0xf] %v352
                %v354 = vld [vmem:[%s176 + $0x580] sm:$0xf]
                %355 = vst [vmem:[%s177 + $0x160] sm:$0xf] %v354
                %v356 = vld [vmem:[%s176 + $0x590] sm:$0xf]
                %357 = vst [vmem:[%s177 + $0x164] sm:$0xf] %v356
                %v358 = vld [vmem:[%s176 + $0x5a0] sm:$0xf]
                %359 = vst [vmem:[%s177 + $0x168] sm:$0xf] %v358
                %v360 = vld [vmem:[%s176 + $0x5b0] sm:$0xf]
                %361 = vst [vmem:[%s177 + $0x16c] sm:$0xf] %v360
                %v362 = vld [vmem:[%s176 + $0x5c0] sm:$0xf]
                %363 = vst [vmem:[%s177 + $0x170] sm:$0xf] %v362
                %v364 = vld [vmem:[%s176 + $0x5d0] sm:$0xf]
                %365 = vst [vmem:[%s177 + $0x174] sm:$0xf] %v364
                %v366 = vld [vmem:[%s176 + $0x5e0] sm:$0xf]
                %367 = vst [vmem:[%s177 + $0x178] sm:$0xf] %v366
                %v368 = vld [vmem:[%s176 + $0x5f0] sm:$0xf]
                %369 = vst [vmem:[%s177 + $0x17c] sm:$0xf] %v368
                %v370 = vld [vmem:[%s176 + $0x600] sm:$0xf]
                %371 = vst [vmem:[%s177 + $0x180] sm:$0xf] %v370
                %v372 = vld [vmem:[%s176 + $0x610] sm:$0xf]
                %373 = vst [vmem:[%s177 + $0x184] sm:$0xf] %v372
                %v374 = vld [vmem:[%s176 + $0x620] sm:$0xf]
                %375 = vst [vmem:[%s177 + $0x188] sm:$0xf] %v374
                %v376 = vld [vmem:[%s176 + $0x630] sm:$0xf]
                %377 = vst [vmem:[%s177 + $0x18c] sm:$0xf] %v376
                %v378 = vld [vmem:[%s176 + $0x640] sm:$0xf]
                %379 = vst [vmem:[%s177 + $0x190] sm:$0xf] %v378
                %v380 = vld [vmem:[%s176 + $0x650] sm:$0xf]
                %381 = vst [vmem:[%s177 + $0x194] sm:$0xf] %v380
                %v382 = vld [vmem:[%s176 + $0x660] sm:$0xf]
                %383 = vst [vmem:[%s177 + $0x198] sm:$0xf] %v382
                %v384 = vld [vmem:[%s176 + $0x670] sm:$0xf]
                %385 = vst [vmem:[%s177 + $0x19c] sm:$0xf] %v384
                %v386 = vld [vmem:[%s176 + $0x680] sm:$0xf]
                %387 = vst [vmem:[%s177 + $0x1a0] sm:$0xf] %v386
                %v388 = vld [vmem:[%s176 + $0x690] sm:$0xf]
                %389 = vst [vmem:[%s177 + $0x1a4] sm:$0xf] %v388
                %v390 = vld [vmem:[%s176 + $0x6a0] sm:$0xf]
                %391 = vst [vmem:[%s177 + $0x1a8] sm:$0xf] %v390
                %v392 = vld [vmem:[%s176 + $0x6b0] sm:$0xf]
                %393 = vst [vmem:[%s177 + $0x1ac] sm:$0xf] %v392
                %v394 = vld [vmem:[%s176 + $0x6c0] sm:$0xf]
                %395 = vst [vmem:[%s177 + $0x1b0] sm:$0xf] %v394
                %v396 = vld [vmem:[%s176 + $0x6d0] sm:$0xf]
                %397 = vst [vmem:[%s177 + $0x1b4] sm:$0xf] %v396
                %v398 = vld [vmem:[%s176 + $0x6e0] sm:$0xf]
                %399 = vst [vmem:[%s177 + $0x1b8] sm:$0xf] %v398
                %v400 = vld [vmem:[%s176 + $0x6f0] sm:$0xf]
                %401 = vst [vmem:[%s177 + $0x1bc] sm:$0xf] %v400
                %v402 = vld [vmem:[%s176 + $0x700] sm:$0xf]
                %403 = vst [vmem:[%s177 + $0x1c0] sm:$0xf] %v402
                %v404 = vld [vmem:[%s176 + $0x710] sm:$0xf]
                %405 = vst [vmem:[%s177 + $0x1c4] sm:$0xf] %v404
                %v406 = vld [vmem:[%s176 + $0x720] sm:$0xf]
                %407 = vst [vmem:[%s177 + $0x1c8] sm:$0xf] %v406
                %v408 = vld [vmem:[%s176 + $0x730] sm:$0xf]
                %409 = vst [vmem:[%s177 + $0x1cc] sm:$0xf] %v408
                %v410 = vld [vmem:[%s176 + $0x740] sm:$0xf]
                %411 = vst [vmem:[%s177 + $0x1d0] sm:$0xf] %v410
                %v412 = vld [vmem:[%s176 + $0x750] sm:$0xf]
                %413 = vst [vmem:[%s177 + $0x1d4] sm:$0xf] %v412
                %v414 = vld [vmem:[%s176 + $0x760] sm:$0xf]
                %415 = vst [vmem:[%s177 + $0x1d8] sm:$0xf] %v414
                %v416 = vld [vmem:[%s176 + $0x770] sm:$0xf]
                %417 = vst [vmem:[%s177 + $0x1dc] sm:$0xf] %v416
                %v418 = vld [vmem:[%s176 + $0x780] sm:$0xf]
                %419 = vst [vmem:[%s177 + $0x1e0] sm:$0xf] %v418
                %v420 = vld [vmem:[%s176 + $0x790] sm:$0xf]
                %421 = vst [vmem:[%s177 + $0x1e4] sm:$0xf] %v420
                %v422 = vld [vmem:[%s176 + $0x7a0] sm:$0xf]
                %423 = vst [vmem:[%s177 + $0x1e8] sm:$0xf] %v422
                %v424 = vld [vmem:[%s176 + $0x7b0] sm:$0xf]
                %425 = vst [vmem:[%s177 + $0x1ec] sm:$0xf] %v424
                %v426 = vld [vmem:[%s176 + $0x7c0] sm:$0xf]
                %427 = vst [vmem:[%s177 + $0x1f0] sm:$0xf] %v426
                %v428 = vld [vmem:[%s176 + $0x7d0] sm:$0xf]
                %429 = vst [vmem:[%s177 + $0x1f4] sm:$0xf] %v428
                %v430 = vld [vmem:[%s176 + $0x7e0] sm:$0xf]
                %431 = vst [vmem:[%s177 + $0x1f8] sm:$0xf] %v430
                %v432 = vld [vmem:[%s176 + $0x7f0] sm:$0xf]
                %433 = vst [vmem:[%s177 + $0x1fc] sm:$0xf] %v432
                %v434 = vld [vmem:[%s176 + $0x800] sm:$0xf]
                %435 = vst [vmem:[%s177 + $0x200] sm:$0xf] %v434
                %v436 = vld [vmem:[%s176 + $0x810] sm:$0xf]
                %437 = vst [vmem:[%s177 + $0x204] sm:$0xf] %v436
                %v438 = vld [vmem:[%s176 + $0x820] sm:$0xf]
                %439 = vst [vmem:[%s177 + $0x208] sm:$0xf] %v438
                %v440 = vld [vmem:[%s176 + $0x830] sm:$0xf]
                %441 = vst [vmem:[%s177 + $0x20c] sm:$0xf] %v440
                %v442 = vld [vmem:[%s176 + $0x840] sm:$0xf]
                %443 = vst [vmem:[%s177 + $0x210] sm:$0xf] %v442
                %v444 = vld [vmem:[%s176 + $0x850] sm:$0xf]
                %445 = vst [vmem:[%s177 + $0x214] sm:$0xf] %v444
                %v446 = vld [vmem:[%s176 + $0x860] sm:$0xf]
                %447 = vst [vmem:[%s177 + $0x218] sm:$0xf] %v446
                %v448 = vld [vmem:[%s176 + $0x870] sm:$0xf]
                %449 = vst [vmem:[%s177 + $0x21c] sm:$0xf] %v448
                %v450 = vld [vmem:[%s176 + $0x880] sm:$0xf]
                %451 = vst [vmem:[%s177 + $0x220] sm:$0xf] %v450
                %v452 = vld [vmem:[%s176 + $0x890] sm:$0xf]
                %453 = vst [vmem:[%s177 + $0x224] sm:$0xf] %v452
                %v454 = vld [vmem:[%s176 + $0x8a0] sm:$0xf]
                %455 = vst [vmem:[%s177 + $0x228] sm:$0xf] %v454
                %v456 = vld [vmem:[%s176 + $0x8b0] sm:$0xf]
                %457 = vst [vmem:[%s177 + $0x22c] sm:$0xf] %v456
                %v458 = vld [vmem:[%s176 + $0x8c0] sm:$0xf]
                %459 = vst [vmem:[%s177 + $0x230] sm:$0xf] %v458
                %v460 = vld [vmem:[%s176 + $0x8d0] sm:$0xf]
                %461 = vst [vmem:[%s177 + $0x234] sm:$0xf] %v460
                %v462 = vld [vmem:[%s176 + $0x8e0] sm:$0xf]
                %463 = vst [vmem:[%s177 + $0x238] sm:$0xf] %v462
                %v464 = vld [vmem:[%s176 + $0x8f0] sm:$0xf]
                %465 = vst [vmem:[%s177 + $0x23c] sm:$0xf] %v464
                %v466 = vld [vmem:[%s176 + $0x900] sm:$0xf]
                %467 = vst [vmem:[%s177 + $0x240] sm:$0xf] %v466
                %v468 = vld [vmem:[%s176 + $0x910] sm:$0xf]
                %469 = vst [vmem:[%s177 + $0x244] sm:$0xf] %v468
                %v470 = vld [vmem:[%s176 + $0x920] sm:$0xf]
                %471 = vst [vmem:[%s177 + $0x248] sm:$0xf] %v470
                %v472 = vld [vmem:[%s176 + $0x930] sm:$0xf]
                %473 = vst [vmem:[%s177 + $0x24c] sm:$0xf] %v472
                %v474 = vld [vmem:[%s176 + $0x940] sm:$0xf]
                %475 = vst [vmem:[%s177 + $0x250] sm:$0xf] %v474
                %v476 = vld [vmem:[%s176 + $0x950] sm:$0xf]
                %477 = vst [vmem:[%s177 + $0x254] sm:$0xf] %v476
                %v478 = vld [vmem:[%s176 + $0x960] sm:$0xf]
                %479 = vst [vmem:[%s177 + $0x258] sm:$0xf] %v478
                %v480 = vld [vmem:[%s176 + $0x970] sm:$0xf]
                %481 = vst [vmem:[%s177 + $0x25c] sm:$0xf] %v480
                %v482 = vld [vmem:[%s176 + $0x980] sm:$0xf]
                %483 = vst [vmem:[%s177 + $0x260] sm:$0xf] %v482
                %v484 = vld [vmem:[%s176 + $0x990] sm:$0xf]
                %485 = vst [vmem:[%s177 + $0x264] sm:$0xf] %v484
                %v486 = vld [vmem:[%s176 + $0x9a0] sm:$0xf]
                %487 = vst [vmem:[%s177 + $0x268] sm:$0xf] %v486
                %v488 = vld [vmem:[%s176 + $0x9b0] sm:$0xf]
                %489 = vst [vmem:[%s177 + $0x26c] sm:$0xf] %v488
                %v490 = vld [vmem:[%s176 + $0x9c0] sm:$0xf]
                %491 = vst [vmem:[%s177 + $0x270] sm:$0xf] %v490
                %v492 = vld [vmem:[%s176 + $0x9d0] sm:$0xf]
                %493 = vst [vmem:[%s177 + $0x274] sm:$0xf] %v492
                %v494 = vld [vmem:[%s176 + $0x9e0] sm:$0xf]
                %495 = vst [vmem:[%s177 + $0x278] sm:$0xf] %v494
                %v496 = vld [vmem:[%s176 + $0x9f0] sm:$0xf]
                %497 = vst [vmem:[%s177 + $0x27c] sm:$0xf] %v496
                %v498 = vld [vmem:[%s176 + $0xa00] sm:$0xf]
                %499 = vst [vmem:[%s177 + $0x280] sm:$0xf] %v498
                %v500 = vld [vmem:[%s176 + $0xa10] sm:$0xf]
                %501 = vst [vmem:[%s177 + $0x284] sm:$0xf] %v500
                %v502 = vld [vmem:[%s176 + $0xa20] sm:$0xf]
                %503 = vst [vmem:[%s177 + $0x288] sm:$0xf] %v502
                %v504 = vld [vmem:[%s176 + $0xa30] sm:$0xf]
                %505 = vst [vmem:[%s177 + $0x28c] sm:$0xf] %v504
                %v506 = vld [vmem:[%s176 + $0xa40] sm:$0xf]
                %507 = vst [vmem:[%s177 + $0x290] sm:$0xf] %v506
                %v508 = vld [vmem:[%s176 + $0xa50] sm:$0xf]
                %509 = vst [vmem:[%s177 + $0x294] sm:$0xf] %v508
                %v510 = vld [vmem:[%s176 + $0xa60] sm:$0xf]
                %511 = vst [vmem:[%s177 + $0x298] sm:$0xf] %v510
                %v512 = vld [vmem:[%s176 + $0xa70] sm:$0xf]
                %513 = vst [vmem:[%s177 + $0x29c] sm:$0xf] %v512
                %v514 = vld [vmem:[%s176 + $0xa80] sm:$0xf]
                %515 = vst [vmem:[%s177 + $0x2a0] sm:$0xf] %v514
                %v516 = vld [vmem:[%s176 + $0xa90] sm:$0xf]
                %517 = vst [vmem:[%s177 + $0x2a4] sm:$0xf] %v516
                %v518 = vld [vmem:[%s176 + $0xaa0] sm:$0xf]
                %519 = vst [vmem:[%s177 + $0x2a8] sm:$0xf] %v518
                %v520 = vld [vmem:[%s176 + $0xab0] sm:$0xf]
                %521 = vst [vmem:[%s177 + $0x2ac] sm:$0xf] %v520
                %v522 = vld [vmem:[%s176 + $0xac0] sm:$0xf]
                %523 = vst [vmem:[%s177 + $0x2b0] sm:$0xf] %v522
                %v524 = vld [vmem:[%s176 + $0xad0] sm:$0xf]
                %525 = vst [vmem:[%s177 + $0x2b4] sm:$0xf] %v524
                %v526 = vld [vmem:[%s176 + $0xae0] sm:$0xf]
                %527 = vst [vmem:[%s177 + $0x2b8] sm:$0xf] %v526
                %v528 = vld [vmem:[%s176 + $0xaf0] sm:$0xf]
                %529 = vst [vmem:[%s177 + $0x2bc] sm:$0xf] %v528
                %v530 = vld [vmem:[%s176 + $0xb00] sm:$0xf]
                %531 = vst [vmem:[%s177 + $0x2c0] sm:$0xf] %v530
                %v532 = vld [vmem:[%s176 + $0xb10] sm:$0xf]
                %533 = vst [vmem:[%s177 + $0x2c4] sm:$0xf] %v532
                %v534 = vld [vmem:[%s176 + $0xb20] sm:$0xf]
                %535 = vst [vmem:[%s177 + $0x2c8] sm:$0xf] %v534
                %v536 = vld [vmem:[%s176 + $0xb30] sm:$0xf]
                %537 = vst [vmem:[%s177 + $0x2cc] sm:$0xf] %v536
                %v538 = vld [vmem:[%s176 + $0xb40] sm:$0xf]
                %539 = vst [vmem:[%s177 + $0x2d0] sm:$0xf] %v538
                %v540 = vld [vmem:[%s176 + $0xb50] sm:$0xf]
                %541 = vst [vmem:[%s177 + $0x2d4] sm:$0xf] %v540
                %v542 = vld [vmem:[%s176 + $0xb60] sm:$0xf]
                %543 = vst [vmem:[%s177 + $0x2d8] sm:$0xf] %v542
                %v544 = vld [vmem:[%s176 + $0xb70] sm:$0xf]
                %545 = vst [vmem:[%s177 + $0x2dc] sm:$0xf] %v544
                %v546 = vld [vmem:[%s176 + $0xb80] sm:$0xf]
                %547 = vst [vmem:[%s177 + $0x2e0] sm:$0xf] %v546
                %v548 = vld [vmem:[%s176 + $0xb90] sm:$0xf]
                %549 = vst [vmem:[%s177 + $0x2e4] sm:$0xf] %v548
                %v550 = vld [vmem:[%s176 + $0xba0] sm:$0xf]
                %551 = vst [vmem:[%s177 + $0x2e8] sm:$0xf] %v550
                %v552 = vld [vmem:[%s176 + $0xbb0] sm:$0xf]
                %553 = vst [vmem:[%s177 + $0x2ec] sm:$0xf] %v552
                %v554 = vld [vmem:[%s176 + $0xbc0] sm:$0xf]
                %555 = vst [vmem:[%s177 + $0x2f0] sm:$0xf] %v554
                %v556 = vld [vmem:[%s176 + $0xbd0] sm:$0xf]
                %557 = vst [vmem:[%s177 + $0x2f4] sm:$0xf] %v556
                %v558 = vld [vmem:[%s176 + $0xbe0] sm:$0xf]
                %559 = vst [vmem:[%s177 + $0x2f8] sm:$0xf] %v558
                %v560 = vld [vmem:[%s176 + $0xbf0] sm:$0xf]
                %561 = vst [vmem:[%s177 + $0x2fc] sm:$0xf] %v560
                %v562 = vld [vmem:[%s176 + $0xc00] sm:$0xf]
                %563 = vst [vmem:[%s177 + $0x300] sm:$0xf] %v562
                %v564 = vld [vmem:[%s176 + $0xc10] sm:$0xf]
                %565 = vst [vmem:[%s177 + $0x304] sm:$0xf] %v564
                %v566 = vld [vmem:[%s176 + $0xc20] sm:$0xf]
                %567 = vst [vmem:[%s177 + $0x308] sm:$0xf] %v566
                %v568 = vld [vmem:[%s176 + $0xc30] sm:$0xf]
                %569 = vst [vmem:[%s177 + $0x30c] sm:$0xf] %v568
                %v570 = vld [vmem:[%s176 + $0xc40] sm:$0xf]
                %571 = vst [vmem:[%s177 + $0x310] sm:$0xf] %v570
                %v572 = vld [vmem:[%s176 + $0xc50] sm:$0xf]
                %573 = vst [vmem:[%s177 + $0x314] sm:$0xf] %v572
                %v574 = vld [vmem:[%s176 + $0xc60] sm:$0xf]
                %575 = vst [vmem:[%s177 + $0x318] sm:$0xf] %v574
                %v576 = vld [vmem:[%s176 + $0xc70] sm:$0xf]
                %577 = vst [vmem:[%s177 + $0x31c] sm:$0xf] %v576
                %v578 = vld [vmem:[%s176 + $0xc80] sm:$0xf]
                %579 = vst [vmem:[%s177 + $0x320] sm:$0xf] %v578
                %v580 = vld [vmem:[%s176 + $0xc90] sm:$0xf]
                %581 = vst [vmem:[%s177 + $0x324] sm:$0xf] %v580
                %v582 = vld [vmem:[%s176 + $0xca0] sm:$0xf]
                %583 = vst [vmem:[%s177 + $0x328] sm:$0xf] %v582
                %v584 = vld [vmem:[%s176 + $0xcb0] sm:$0xf]
                %585 = vst [vmem:[%s177 + $0x32c] sm:$0xf] %v584
                %v586 = vld [vmem:[%s176 + $0xcc0] sm:$0xf]
                %587 = vst [vmem:[%s177 + $0x330] sm:$0xf] %v586
                %v588 = vld [vmem:[%s176 + $0xcd0] sm:$0xf]
                %589 = vst [vmem:[%s177 + $0x334] sm:$0xf] %v588
                %v590 = vld [vmem:[%s176 + $0xce0] sm:$0xf]
                %591 = vst [vmem:[%s177 + $0x338] sm:$0xf] %v590
                %v592 = vld [vmem:[%s176 + $0xcf0] sm:$0xf]
                %593 = vst [vmem:[%s177 + $0x33c] sm:$0xf] %v592
                %v594 = vld [vmem:[%s176 + $0xd00] sm:$0xf]
                %595 = vst [vmem:[%s177 + $0x340] sm:$0xf] %v594
                %v596 = vld [vmem:[%s176 + $0xd10] sm:$0xf]
                %597 = vst [vmem:[%s177 + $0x344] sm:$0xf] %v596
                %v598 = vld [vmem:[%s176 + $0xd20] sm:$0xf]
                %599 = vst [vmem:[%s177 + $0x348] sm:$0xf] %v598
                %v600 = vld [vmem:[%s176 + $0xd30] sm:$0xf]
                %601 = vst [vmem:[%s177 + $0x34c] sm:$0xf] %v600
                %v602 = vld [vmem:[%s176 + $0xd40] sm:$0xf]
                %603 = vst [vmem:[%s177 + $0x350] sm:$0xf] %v602
                %v604 = vld [vmem:[%s176 + $0xd50] sm:$0xf]
                %605 = vst [vmem:[%s177 + $0x354] sm:$0xf] %v604
                %v606 = vld [vmem:[%s176 + $0xd60] sm:$0xf]
                %607 = vst [vmem:[%s177 + $0x358] sm:$0xf] %v606
                %v608 = vld [vmem:[%s176 + $0xd70] sm:$0xf]
                %609 = vst [vmem:[%s177 + $0x35c] sm:$0xf] %v608
                %v610 = vld [vmem:[%s176 + $0xd80] sm:$0xf]
                %611 = vst [vmem:[%s177 + $0x360] sm:$0xf] %v610
                %v612 = vld [vmem:[%s176 + $0xd90] sm:$0xf]
                %613 = vst [vmem:[%s177 + $0x364] sm:$0xf] %v612
                %v614 = vld [vmem:[%s176 + $0xda0] sm:$0xf]
                %615 = vst [vmem:[%s177 + $0x368] sm:$0xf] %v614
                %v616 = vld [vmem:[%s176 + $0xdb0] sm:$0xf]
                %617 = vst [vmem:[%s177 + $0x36c] sm:$0xf] %v616
                %v618 = vld [vmem:[%s176 + $0xdc0] sm:$0xf]
                %619 = vst [vmem:[%s177 + $0x370] sm:$0xf] %v618
                %v620 = vld [vmem:[%s176 + $0xdd0] sm:$0xf]
                %621 = vst [vmem:[%s177 + $0x374] sm:$0xf] %v620
                %v622 = vld [vmem:[%s176 + $0xde0] sm:$0xf]
                %623 = vst [vmem:[%s177 + $0x378] sm:$0xf] %v622
                %v624 = vld [vmem:[%s176 + $0xdf0] sm:$0xf]
                %625 = vst [vmem:[%s177 + $0x37c] sm:$0xf] %v624
                %v626 = vld [vmem:[%s176 + $0xe00] sm:$0xf]
                %627 = vst [vmem:[%s177 + $0x380] sm:$0xf] %v626
                %v628 = vld [vmem:[%s176 + $0xe10] sm:$0xf]
                %629 = vst [vmem:[%s177 + $0x384] sm:$0xf] %v628
                %v630 = vld [vmem:[%s176 + $0xe20] sm:$0xf]
                %631 = vst [vmem:[%s177 + $0x388] sm:$0xf] %v630
                %v632 = vld [vmem:[%s176 + $0xe30] sm:$0xf]
                %633 = vst [vmem:[%s177 + $0x38c] sm:$0xf] %v632
                %v634 = vld [vmem:[%s176 + $0xe40] sm:$0xf]
                %635 = vst [vmem:[%s177 + $0x390] sm:$0xf] %v634
                %v636 = vld [vmem:[%s176 + $0xe50] sm:$0xf]
                %637 = vst [vmem:[%s177 + $0x394] sm:$0xf] %v636
                %v638 = vld [vmem:[%s176 + $0xe60] sm:$0xf]
                %639 = vst [vmem:[%s177 + $0x398] sm:$0xf] %v638
                %v640 = vld [vmem:[%s176 + $0xe70] sm:$0xf]
                %641 = vst [vmem:[%s177 + $0x39c] sm:$0xf] %v640
                %v642 = vld [vmem:[%s176 + $0xe80] sm:$0xf]
                %643 = vst [vmem:[%s177 + $0x3a0] sm:$0xf] %v642
                %v644 = vld [vmem:[%s176 + $0xe90] sm:$0xf]
                %645 = vst [vmem:[%s177 + $0x3a4] sm:$0xf] %v644
                %v646 = vld [vmem:[%s176 + $0xea0] sm:$0xf]
                %647 = vst [vmem:[%s177 + $0x3a8] sm:$0xf] %v646
                %v648 = vld [vmem:[%s176 + $0xeb0] sm:$0xf]
                %649 = vst [vmem:[%s177 + $0x3ac] sm:$0xf] %v648
                %v650 = vld [vmem:[%s176 + $0xec0] sm:$0xf]
                %651 = vst [vmem:[%s177 + $0x3b0] sm:$0xf] %v650
                %v652 = vld [vmem:[%s176 + $0xed0] sm:$0xf]
                %653 = vst [vmem:[%s177 + $0x3b4] sm:$0xf] %v652
                %v654 = vld [vmem:[%s176 + $0xee0] sm:$0xf]
                %655 = vst [vmem:[%s177 + $0x3b8] sm:$0xf] %v654
                %v656 = vld [vmem:[%s176 + $0xef0] sm:$0xf]
                %657 = vst [vmem:[%s177 + $0x3bc] sm:$0xf] %v656
                %v658 = vld [vmem:[%s176 + $0xf00] sm:$0xf]
                %659 = vst [vmem:[%s177 + $0x3c0] sm:$0xf] %v658
                %v660 = vld [vmem:[%s176 + $0xf10] sm:$0xf]
                %661 = vst [vmem:[%s177 + $0x3c4] sm:$0xf] %v660
                %v662 = vld [vmem:[%s176 + $0xf20] sm:$0xf]
                %663 = vst [vmem:[%s177 + $0x3c8] sm:$0xf] %v662
                %v664 = vld [vmem:[%s176 + $0xf30] sm:$0xf]
                %665 = vst [vmem:[%s177 + $0x3cc] sm:$0xf] %v664
                %v666 = vld [vmem:[%s176 + $0xf40] sm:$0xf]
                %667 = vst [vmem:[%s177 + $0x3d0] sm:$0xf] %v666
                %v668 = vld [vmem:[%s176 + $0xf50] sm:$0xf]
                %669 = vst [vmem:[%s177 + $0x3d4] sm:$0xf] %v668
                %v670 = vld [vmem:[%s176 + $0xf60] sm:$0xf]
                %671 = vst [vmem:[%s177 + $0x3d8] sm:$0xf] %v670
                %v672 = vld [vmem:[%s176 + $0xf70] sm:$0xf]
                %673 = vst [vmem:[%s177 + $0x3dc] sm:$0xf] %v672
                %v674 = vld [vmem:[%s176 + $0xf80] sm:$0xf]
                %675 = vst [vmem:[%s177 + $0x3e0] sm:$0xf] %v674
                %v676 = vld [vmem:[%s176 + $0xf90] sm:$0xf]
                %677 = vst [vmem:[%s177 + $0x3e4] sm:$0xf] %v676
                %v678 = vld [vmem:[%s176 + $0xfa0] sm:$0xf]
                %679 = vst [vmem:[%s177 + $0x3e8] sm:$0xf] %v678
                %v680 = vld [vmem:[%s176 + $0xfb0] sm:$0xf]
                %681 = vst [vmem:[%s177 + $0x3ec] sm:$0xf] %v680
                %v682 = vld [vmem:[%s176 + $0xfc0] sm:$0xf]
                %683 = vst [vmem:[%s177 + $0x3f0] sm:$0xf] %v682
                %v684 = vld [vmem:[%s176 + $0xfd0] sm:$0xf]
                %685 = vst [vmem:[%s177 + $0x3f4] sm:$0xf] %v684
                %v686 = vld [vmem:[%s176 + $0xfe0] sm:$0xf]
                %687 = vst [vmem:[%s177 + $0x3f8] sm:$0xf] %v686
                %v688 = vld [vmem:[%s176 + $0xff0] sm:$0xf]
                %689 = vst [vmem:[%s177 + $0x3fc] sm:$0xf] %v688
                %v690 = vld [vmem:[%s176 + $0x1000] sm:$0xf]
                %691 = vst [vmem:[%s177 + $0x400] sm:$0xf] %v690
                %v692 = vld [vmem:[%s176 + $0x1010] sm:$0xf]
                %693 = vst [vmem:[%s177 + $0x404] sm:$0xf] %v692
                %v694 = vld [vmem:[%s176 + $0x1020] sm:$0xf]
                %695 = vst [vmem:[%s177 + $0x408] sm:$0xf] %v694
                %v696 = vld [vmem:[%s176 + $0x1030] sm:$0xf]
                %697 = vst [vmem:[%s177 + $0x40c] sm:$0xf] %v696
                %v698 = vld [vmem:[%s176 + $0x1040] sm:$0xf]
                %699 = vst [vmem:[%s177 + $0x410] sm:$0xf] %v698
                %v700 = vld [vmem:[%s176 + $0x1050] sm:$0xf]
                %701 = vst [vmem:[%s177 + $0x414] sm:$0xf] %v700
                %v702 = vld [vmem:[%s176 + $0x1060] sm:$0xf]
                %703 = vst [vmem:[%s177 + $0x418] sm:$0xf] %v702
                %v704 = vld [vmem:[%s176 + $0x1070] sm:$0xf]
                %705 = vst [vmem:[%s177 + $0x41c] sm:$0xf] %v704
                %v706 = vld [vmem:[%s176 + $0x1080] sm:$0xf]
                %707 = vst [vmem:[%s177 + $0x420] sm:$0xf] %v706
                %v708 = vld [vmem:[%s176 + $0x1090] sm:$0xf]
                %709 = vst [vmem:[%s177 + $0x424] sm:$0xf] %v708
                %v710 = vld [vmem:[%s176 + $0x10a0] sm:$0xf]
                %711 = vst [vmem:[%s177 + $0x428] sm:$0xf] %v710
                %v712 = vld [vmem:[%s176 + $0x10b0] sm:$0xf]
                %713 = vst [vmem:[%s177 + $0x42c] sm:$0xf] %v712
                %v714 = vld [vmem:[%s176 + $0x10c0] sm:$0xf]
                %715 = vst [vmem:[%s177 + $0x430] sm:$0xf] %v714
                %v716 = vld [vmem:[%s176 + $0x10d0] sm:$0xf]
                %717 = vst [vmem:[%s177 + $0x434] sm:$0xf] %v716
                %v718 = vld [vmem:[%s176 + $0x10e0] sm:$0xf]
                %719 = vst [vmem:[%s177 + $0x438] sm:$0xf] %v718
                %v720 = vld [vmem:[%s176 + $0x10f0] sm:$0xf]
                %721 = vst [vmem:[%s177 + $0x43c] sm:$0xf] %v720
                %v722 = vld [vmem:[%s176 + $0x1100] sm:$0xf]
                %723 = vst [vmem:[%s177 + $0x440] sm:$0xf] %v722
                %v724 = vld [vmem:[%s176 + $0x1110] sm:$0xf]
                %725 = vst [vmem:[%s177 + $0x444] sm:$0xf] %v724
                %v726 = vld [vmem:[%s176 + $0x1120] sm:$0xf]
                %727 = vst [vmem:[%s177 + $0x448] sm:$0xf] %v726
                %v728 = vld [vmem:[%s176 + $0x1130] sm:$0xf]
                %729 = vst [vmem:[%s177 + $0x44c] sm:$0xf] %v728
                %v730 = vld [vmem:[%s176 + $0x1140] sm:$0xf]
                %731 = vst [vmem:[%s177 + $0x450] sm:$0xf] %v730
                %v732 = vld [vmem:[%s176 + $0x1150] sm:$0xf]
                %733 = vst [vmem:[%s177 + $0x454] sm:$0xf] %v732
                %v734 = vld [vmem:[%s176 + $0x1160] sm:$0xf]
                %735 = vst [vmem:[%s177 + $0x458] sm:$0xf] %v734
                %v736 = vld [vmem:[%s176 + $0x1170] sm:$0xf]
                %737 = vst [vmem:[%s177 + $0x45c] sm:$0xf] %v736
                %v738 = vld [vmem:[%s176 + $0x1180] sm:$0xf]
                %739 = vst [vmem:[%s177 + $0x460] sm:$0xf] %v738
                %v740 = vld [vmem:[%s176 + $0x1190] sm:$0xf]
                %741 = vst [vmem:[%s177 + $0x464] sm:$0xf] %v740
                %v742 = vld [vmem:[%s176 + $0x11a0] sm:$0xf]
                %743 = vst [vmem:[%s177 + $0x468] sm:$0xf] %v742
                %v744 = vld [vmem:[%s176 + $0x11b0] sm:$0xf]
                %745 = vst [vmem:[%s177 + $0x46c] sm:$0xf] %v744
                %v746 = vld [vmem:[%s176 + $0x11c0] sm:$0xf]
                %747 = vst [vmem:[%s177 + $0x470] sm:$0xf] %v746
                %v748 = vld [vmem:[%s176 + $0x11d0] sm:$0xf]
                %749 = vst [vmem:[%s177 + $0x474] sm:$0xf] %v748
                %v750 = vld [vmem:[%s176 + $0x11e0] sm:$0xf]
                %751 = vst [vmem:[%s177 + $0x478] sm:$0xf] %v750
                %v752 = vld [vmem:[%s176 + $0x11f0] sm:$0xf]
                %753 = vst [vmem:[%s177 + $0x47c] sm:$0xf] %v752
              $region41: #{generator_forward.9} parent=35 // loop_footer
                %s175 = sadd.s32 1, %s171
              $region42: #{generator_forward.9} parent=35 // loop_footer_branch
                %170 = sbr.rel target = $region38
              $region43: #{generator_forward.9} parent=35 // loop_exit
                _
            $region36: #{generator_forward.9} parent=27 // pred_fallthru
              _
          $region28: #{generator_forward.9} parent=23 // pred_fallthru
            _
          %1349 = vnop
        $region24: #{generator_forward.9} parent=19 // pred_fallthru
          _
        // Predicated region
        $region62: #{generator_forward.9} parent=19 // pred_check
          %p1350 = pneg %p93
        $region63: #{generator_forward.9} parent=19 // pred_check_branch
          %1352 = sbr.rel (%p1350) target = $region65
        $region64: #{generator_forward.9} parent=19 // pred_region
          %p1353 = scmp.lt.s32.totalorder %s17, 3
          %s1354 = scalar_select %p1353, %s17, 3
          %s1355 = scalar_lea.vmem %s2, %s1354
        $region65: #{generator_forward.9} parent=19 // pred_fallthru
          _
      $region20: #{generator_forward.9} parent=5 // pred_fallthru
        _
      %p1356 = scmp.le.s32.totalorder 1, %s9
      %p1357 = scmp.lt.s32.totalorder %s9, 5
      %p1358 = pnand %p1356, %p1357
      %p1359 = pneg %p1358
      // Predicated region
      $region66: #{generator_forward.9} parent=5 // pred_check
        _
      $region67: #{generator_forward.9} parent=5 // pred_check_branch
        %1361 = sbr.rel (%p1358) target = $region69
      $region68: #{generator_forward.9} parent=5 // pred_region
        %s1362 = ssub.s32 %s9, 1
        %s1363 = sand.u32 %s60, 1
        %s1364 = sand.u32 %s60, 1
        %s1365 = smul.addr %s1364, 1152
        %s1366 = scalar_lea.vmem [#allocation2], %s1365
        // Predicated region
        $region70: #{generator_forward.9} parent=68 // pred_check
          %p1367 = pneg %p73
        $region71: #{generator_forward.9} parent=68 // pred_check_branch
          %1369 = sbr.rel (%p1367) target = $region73
        $region72: #{generator_forward.9} parent=68 // pred_region
          _
        $region73: #{generator_forward.9} parent=68 // pred_fallthru
          _
        %p1370 = scmp.lt.s32.totalorder %s18, 0
        %s1371 = scalar_select %p1370, %s18, 0
        %s1372 = smul.addr %s1371, 18
        %s1373 = smul.addr %s1372, 4
        %s1374 = scalar_lea.vmem %s0, %s1373
        %p1375 = pneg %p47
        %p1376 = pneg %p44
        %s1377 = sand.u32 %s60, 1
        %s1378 = sand.u32 %s60, 1
        %s1379 = smul.addr %s1378, 1152
        %s1380 = scalar_lea.vmem [#allocation2], %s1379
        %p1381 = pneg %p73
        %p1382 = pneg %p70
        %p1383 = scmp.lt.s32.totalorder %s19, 3
        %s1384 = scalar_select %p1383, %s19, 3
        %s1385 = scalar_lea.vmem %s2, %s1384
        %p1386 = pneg %p99
        %p1387 = pneg %p96
        %p1388 = pneg %p127
        %p1389 = pneg %p124
        %p1390 = scmp.lt.s32.totalorder %s18, 0
        %s1391 = scalar_select %p1390, %s18, 0
        %p1392 = scmp.lt.s32.totalorder %s19, 3
        %s1393 = scalar_select %p1392, %s19, 3
        %s1394 = smul.addr %s1391, 4
        %s1395 = sadd.s32 %s1393, %s1394
        %s1396 = smul.addr %s1395, 4
        %s1397 = scalar_lea.vmem %s3, %s1396
        %p1398 = scmp.lt.s32.totalorder %s18, 0
        %s1399 = scalar_select %p1398, %s18, 0
        %s1400 = smul.addr %s1399, 18
        %s1401 = smul.addr %s1400, 4
        %s1402 = scalar_lea.vmem %s0, %s1401
        %p1403 = scmp.lt.s32.totalorder %s19, 3
        %s1404 = scalar_select %p1403, %s19, 3
        %s1405 = scalar_lea.vmem %s2, %s1404
        %p1406 = scmp.lt.s32.totalorder %s18, 0
        %s1407 = scalar_select %p1406, %s18, 0
        %p1408 = scmp.lt.s32.totalorder %s19, 3
        %s1409 = scalar_select %p1408, %s19, 3
        %s1410 = smul.addr %s1407, 4
        %s1411 = sadd.s32 %s1409, %s1410
        %s1412 = smul.addr %s1411, 4
        %s1413 = scalar_lea.vmem %s3, %s1412
        %v1415 = vld [vmem:[%s1402] sm:$0xff]
        %v1416 = vld [vmem:[%s1402 + $0x8] sm:$0xff]
        %v1417 = vld [vmem:[%s1402 + $0x10] sm:$0xff]
        %v1418 = vld [vmem:[%s1402 + $0x18] sm:$0xff]
        %v1419 = vld [vmem:[%s1402 + $0x20] sm:$0xff]
        %v1420 = vld [vmem:[%s1402 + $0x28] sm:$0xff]
        %v1421 = vld [vmem:[%s1402 + $0x30] sm:$0xff]
        %v1422 = vld [vmem:[%s1402 + $0x38] sm:$0xff]
        %v1423 = vld [vmem:[%s1402 + $0x40] sm:$0xff]
        %v1424 = vld [vmem:[%s1366] sm:$0xf]
        %v1425 = vld [vmem:[%s1366 + $0x4] sm:$0xf]
        %v1426 = vld [vmem:[%s1366 + $0x8] sm:$0xf]
        %v1427 = vld [vmem:[%s1366 + $0xc] sm:$0xf]
        %v1428 = vld [vmem:[%s1366 + $0x10] sm:$0xf]
        %v1429 = vld [vmem:[%s1366 + $0x14] sm:$0xf]
        %v1430 = vld [vmem:[%s1366 + $0x18] sm:$0xf]
        %v1431 = vld [vmem:[%s1366 + $0x1c] sm:$0xf]
        %v1432 = vld [vmem:[%s1366 + $0x20] sm:$0xf]
        %v1433 = vld [vmem:[%s1366 + $0x24] sm:$0xf]
        %v1434 = vld [vmem:[%s1366 + $0x28] sm:$0xf]
        %v1435 = vld [vmem:[%s1366 + $0x2c] sm:$0xf]
        %v1436 = vld [vmem:[%s1366 + $0x30] sm:$0xf]
        %v1437 = vld [vmem:[%s1366 + $0x34] sm:$0xf]
        %v1438 = vld [vmem:[%s1366 + $0x38] sm:$0xf]
        %v1439 = vld [vmem:[%s1366 + $0x3c] sm:$0xf]
        %v1440 = vld [vmem:[%s1366 + $0x40] sm:$0xf]
        %v1441 = vld [vmem:[%s1366 + $0x44] sm:$0xf]
        %v1442 = vld [vmem:[%s1366 + $0x48] sm:$0xf]
        %v1443 = vld [vmem:[%s1366 + $0x4c] sm:$0xf]
        %v1444 = vld [vmem:[%s1366 + $0x50] sm:$0xf]
        %v1445 = vld [vmem:[%s1366 + $0x54] sm:$0xf]
        %v1446 = vld [vmem:[%s1366 + $0x58] sm:$0xf]
        %v1447 = vld [vmem:[%s1366 + $0x5c] sm:$0xf]
        %v1448 = vld [vmem:[%s1366 + $0x60] sm:$0xf]
        %v1449 = vld [vmem:[%s1366 + $0x64] sm:$0xf]
        %v1450 = vld [vmem:[%s1366 + $0x68] sm:$0xf]
        %v1451 = vld [vmem:[%s1366 + $0x6c] sm:$0xf]
        %v1452 = vld [vmem:[%s1366 + $0x70] sm:$0xf]
        %v1453 = vld [vmem:[%s1366 + $0x74] sm:$0xf]
        %v1454 = vld [vmem:[%s1366 + $0x78] sm:$0xf]
        %v1455 = vld [vmem:[%s1366 + $0x7c] sm:$0xf]
        %v1456 = vld [vmem:[%s1366 + $0x80] sm:$0xf]
        %v1457 = vld [vmem:[%s1366 + $0x84] sm:$0xf]
        %v1458 = vld [vmem:[%s1366 + $0x88] sm:$0xf]
        %v1459 = vld [vmem:[%s1366 + $0x8c] sm:$0xf]
        %v1460 = vld [vmem:[%s1366 + $0x90] sm:$0xf]
        %v1461 = vld [vmem:[%s1366 + $0x94] sm:$0xf]
        %v1462 = vld [vmem:[%s1366 + $0x98] sm:$0xf]
        %v1463 = vld [vmem:[%s1366 + $0x9c] sm:$0xf]
        %v1464 = vld [vmem:[%s1366 + $0xa0] sm:$0xf]
        %v1465 = vld [vmem:[%s1366 + $0xa4] sm:$0xf]
        %v1466 = vld [vmem:[%s1366 + $0xa8] sm:$0xf]
        %v1467 = vld [vmem:[%s1366 + $0xac] sm:$0xf]
        %v1468 = vld [vmem:[%s1366 + $0xb0] sm:$0xf]
        %v1469 = vld [vmem:[%s1366 + $0xb4] sm:$0xf]
        %v1470 = vld [vmem:[%s1366 + $0xb8] sm:$0xf]
        %v1471 = vld [vmem:[%s1366 + $0xbc] sm:$0xf]
        %v1472 = vld [vmem:[%s1366 + $0xc0] sm:$0xf]
        %v1473 = vld [vmem:[%s1366 + $0xc4] sm:$0xf]
        %v1474 = vld [vmem:[%s1366 + $0xc8] sm:$0xf]
        %v1475 = vld [vmem:[%s1366 + $0xcc] sm:$0xf]
        %v1476 = vld [vmem:[%s1366 + $0xd0] sm:$0xf]
        %v1477 = vld [vmem:[%s1366 + $0xd4] sm:$0xf]
        %v1478 = vld [vmem:[%s1366 + $0xd8] sm:$0xf]
        %v1479 = vld [vmem:[%s1366 + $0xdc] sm:$0xf]
        %v1480 = vld [vmem:[%s1366 + $0xe0] sm:$0xf]
        %v1481 = vld [vmem:[%s1366 + $0xe4] sm:$0xf]
        %v1482 = vld [vmem:[%s1366 + $0xe8] sm:$0xf]
        %v1483 = vld [vmem:[%s1366 + $0xec] sm:$0xf]
        %v1484 = vld [vmem:[%s1366 + $0xf0] sm:$0xf]
        %v1485 = vld [vmem:[%s1366 + $0xf4] sm:$0xf]
        %v1486 = vld [vmem:[%s1366 + $0xf8] sm:$0xf]
        %v1487 = vld [vmem:[%s1366 + $0xfc] sm:$0xf]
        %v1488 = vld [vmem:[%s1366 + $0x100] sm:$0xf]
        %v1489 = vld [vmem:[%s1366 + $0x104] sm:$0xf]
        %v1490 = vld [vmem:[%s1366 + $0x108] sm:$0xf]
        %v1491 = vld [vmem:[%s1366 + $0x10c] sm:$0xf]
        %v1492 = vld [vmem:[%s1366 + $0x110] sm:$0xf]
        %v1493 = vld [vmem:[%s1366 + $0x114] sm:$0xf]
        %v1494 = vld [vmem:[%s1366 + $0x118] sm:$0xf]
        %v1495 = vld [vmem:[%s1366 + $0x11c] sm:$0xf]
        %v1496 = vld [vmem:[%s1366 + $0x120] sm:$0xf]
        %v1497 = vld [vmem:[%s1366 + $0x124] sm:$0xf]
        %v1498 = vld [vmem:[%s1366 + $0x128] sm:$0xf]
        %v1499 = vld [vmem:[%s1366 + $0x12c] sm:$0xf]
        %v1500 = vld [vmem:[%s1366 + $0x130] sm:$0xf]
        %v1501 = vld [vmem:[%s1366 + $0x134] sm:$0xf]
        %v1502 = vld [vmem:[%s1366 + $0x138] sm:$0xf]
        %v1503 = vld [vmem:[%s1366 + $0x13c] sm:$0xf]
        %v1504 = vld [vmem:[%s1366 + $0x140] sm:$0xf]
        %v1505 = vld [vmem:[%s1366 + $0x144] sm:$0xf]
        %v1506 = vld [vmem:[%s1366 + $0x148] sm:$0xf]
        %v1507 = vld [vmem:[%s1366 + $0x14c] sm:$0xf]
        %v1508 = vld [vmem:[%s1366 + $0x150] sm:$0xf]
        %v1509 = vld [vmem:[%s1366 + $0x154] sm:$0xf]
        %v1510 = vld [vmem:[%s1366 + $0x158] sm:$0xf]
        %v1511 = vld [vmem:[%s1366 + $0x15c] sm:$0xf]
        %v1512 = vld [vmem:[%s1366 + $0x160] sm:$0xf]
        %v1513 = vld [vmem:[%s1366 + $0x164] sm:$0xf]
        %v1514 = vld [vmem:[%s1366 + $0x168] sm:$0xf]
        %v1515 = vld [vmem:[%s1366 + $0x16c] sm:$0xf]
        %v1516 = vld [vmem:[%s1366 + $0x170] sm:$0xf]
        %v1517 = vld [vmem:[%s1366 + $0x174] sm:$0xf]
        %v1518 = vld [vmem:[%s1366 + $0x178] sm:$0xf]
        %v1519 = vld [vmem:[%s1366 + $0x17c] sm:$0xf]
        %v1520 = vld [vmem:[%s1366 + $0x180] sm:$0xf]
        %v1521 = vld [vmem:[%s1366 + $0x184] sm:$0xf]
        %v1522 = vld [vmem:[%s1366 + $0x188] sm:$0xf]
        %v1523 = vld [vmem:[%s1366 + $0x18c] sm:$0xf]
        %v1524 = vld [vmem:[%s1366 + $0x190] sm:$0xf]
        %v1525 = vld [vmem:[%s1366 + $0x194] sm:$0xf]
        %v1526 = vld [vmem:[%s1366 + $0x198] sm:$0xf]
        %v1527 = vld [vmem:[%s1366 + $0x19c] sm:$0xf]
        %v1528 = vld [vmem:[%s1366 + $0x1a0] sm:$0xf]
        %v1529 = vld [vmem:[%s1366 + $0x1a4] sm:$0xf]
        %v1530 = vld [vmem:[%s1366 + $0x1a8] sm:$0xf]
        %v1531 = vld [vmem:[%s1366 + $0x1ac] sm:$0xf]
        %v1532 = vld [vmem:[%s1366 + $0x1b0] sm:$0xf]
        %v1533 = vld [vmem:[%s1366 + $0x1b4] sm:$0xf]
        %v1534 = vld [vmem:[%s1366 + $0x1b8] sm:$0xf]
        %v1535 = vld [vmem:[%s1366 + $0x1bc] sm:$0xf]
        %v1536 = vld [vmem:[%s1366 + $0x1c0] sm:$0xf]
        %v1537 = vld [vmem:[%s1366 + $0x1c4] sm:$0xf]
        %v1538 = vld [vmem:[%s1366 + $0x1c8] sm:$0xf]
        %v1539 = vld [vmem:[%s1366 + $0x1cc] sm:$0xf]
        %v1540 = vld [vmem:[%s1366 + $0x1d0] sm:$0xf]
        %v1541 = vld [vmem:[%s1366 + $0x1d4] sm:$0xf]
        %v1542 = vld [vmem:[%s1366 + $0x1d8] sm:$0xf]
        %v1543 = vld [vmem:[%s1366 + $0x1dc] sm:$0xf]
        %v1544 = vld [vmem:[%s1366 + $0x1e0] sm:$0xf]
        %v1545 = vld [vmem:[%s1366 + $0x1e4] sm:$0xf]
        %v1546 = vld [vmem:[%s1366 + $0x1e8] sm:$0xf]
        %v1547 = vld [vmem:[%s1366 + $0x1ec] sm:$0xf]
        %v1548 = vld [vmem:[%s1366 + $0x1f0] sm:$0xf]
        %v1549 = vld [vmem:[%s1366 + $0x1f4] sm:$0xf]
        %v1550 = vld [vmem:[%s1366 + $0x1f8] sm:$0xf]
        %v1551 = vld [vmem:[%s1366 + $0x1fc] sm:$0xf]
        %v1552 = vld [vmem:[%s1366 + $0x200] sm:$0xf]
        %v1553 = vld [vmem:[%s1366 + $0x204] sm:$0xf]
        %v1554 = vld [vmem:[%s1366 + $0x208] sm:$0xf]
        %v1555 = vld [vmem:[%s1366 + $0x20c] sm:$0xf]
        %v1556 = vld [vmem:[%s1366 + $0x210] sm:$0xf]
        %v1557 = vld [vmem:[%s1366 + $0x214] sm:$0xf]
        %v1558 = vld [vmem:[%s1366 + $0x218] sm:$0xf]
        %v1559 = vld [vmem:[%s1366 + $0x21c] sm:$0xf]
        %v1560 = vld [vmem:[%s1366 + $0x220] sm:$0xf]
        %v1561 = vld [vmem:[%s1366 + $0x224] sm:$0xf]
        %v1562 = vld [vmem:[%s1366 + $0x228] sm:$0xf]
        %v1563 = vld [vmem:[%s1366 + $0x22c] sm:$0xf]
        %v1564 = vld [vmem:[%s1366 + $0x230] sm:$0xf]
        %v1565 = vld [vmem:[%s1366 + $0x234] sm:$0xf]
        %v1566 = vld [vmem:[%s1366 + $0x238] sm:$0xf]
        %v1567 = vld [vmem:[%s1366 + $0x23c] sm:$0xf]
        %v1568 = vld [vmem:[%s1366 + $0x240] sm:$0xf]
        %v1569 = vld [vmem:[%s1366 + $0x244] sm:$0xf]
        %v1570 = vld [vmem:[%s1366 + $0x248] sm:$0xf]
        %v1571 = vld [vmem:[%s1366 + $0x24c] sm:$0xf]
        %v1572 = vld [vmem:[%s1366 + $0x250] sm:$0xf]
        %v1573 = vld [vmem:[%s1366 + $0x254] sm:$0xf]
        %v1574 = vld [vmem:[%s1366 + $0x258] sm:$0xf]
        %v1575 = vld [vmem:[%s1366 + $0x25c] sm:$0xf]
        %v1576 = vld [vmem:[%s1366 + $0x260] sm:$0xf]
        %v1577 = vld [vmem:[%s1366 + $0x264] sm:$0xf]
        %v1578 = vld [vmem:[%s1366 + $0x268] sm:$0xf]
        %v1579 = vld [vmem:[%s1366 + $0x26c] sm:$0xf]
        %v1580 = vld [vmem:[%s1366 + $0x270] sm:$0xf]
        %v1581 = vld [vmem:[%s1366 + $0x274] sm:$0xf]
        %v1582 = vld [vmem:[%s1366 + $0x278] sm:$0xf]
        %v1583 = vld [vmem:[%s1366 + $0x27c] sm:$0xf]
        %v1584 = vld [vmem:[%s1366 + $0x280] sm:$0xf]
        %v1585 = vld [vmem:[%s1366 + $0x284] sm:$0xf]
        %v1586 = vld [vmem:[%s1366 + $0x288] sm:$0xf]
        %v1587 = vld [vmem:[%s1366 + $0x28c] sm:$0xf]
        %v1588 = vld [vmem:[%s1366 + $0x290] sm:$0xf]
        %v1589 = vld [vmem:[%s1366 + $0x294] sm:$0xf]
        %v1590 = vld [vmem:[%s1366 + $0x298] sm:$0xf]
        %v1591 = vld [vmem:[%s1366 + $0x29c] sm:$0xf]
        %v1592 = vld [vmem:[%s1366 + $0x2a0] sm:$0xf]
        %v1593 = vld [vmem:[%s1366 + $0x2a4] sm:$0xf]
        %v1594 = vld [vmem:[%s1366 + $0x2a8] sm:$0xf]
        %v1595 = vld [vmem:[%s1366 + $0x2ac] sm:$0xf]
        %v1596 = vld [vmem:[%s1366 + $0x2b0] sm:$0xf]
        %v1597 = vld [vmem:[%s1366 + $0x2b4] sm:$0xf]
        %v1598 = vld [vmem:[%s1366 + $0x2b8] sm:$0xf]
        %v1599 = vld [vmem:[%s1366 + $0x2bc] sm:$0xf]
        %v1600 = vld [vmem:[%s1366 + $0x2c0] sm:$0xf]
        %v1601 = vld [vmem:[%s1366 + $0x2c4] sm:$0xf]
        %v1602 = vld [vmem:[%s1366 + $0x2c8] sm:$0xf]
        %v1603 = vld [vmem:[%s1366 + $0x2cc] sm:$0xf]
        %v1604 = vld [vmem:[%s1366 + $0x2d0] sm:$0xf]
        %v1605 = vld [vmem:[%s1366 + $0x2d4] sm:$0xf]
        %v1606 = vld [vmem:[%s1366 + $0x2d8] sm:$0xf]
        %v1607 = vld [vmem:[%s1366 + $0x2dc] sm:$0xf]
        %v1608 = vld [vmem:[%s1366 + $0x2e0] sm:$0xf]
        %v1609 = vld [vmem:[%s1366 + $0x2e4] sm:$0xf]
        %v1610 = vld [vmem:[%s1366 + $0x2e8] sm:$0xf]
        %v1611 = vld [vmem:[%s1366 + $0x2ec] sm:$0xf]
        %v1612 = vld [vmem:[%s1366 + $0x2f0] sm:$0xf]
        %v1613 = vld [vmem:[%s1366 + $0x2f4] sm:$0xf]
        %v1614 = vld [vmem:[%s1366 + $0x2f8] sm:$0xf]
        %v1615 = vld [vmem:[%s1366 + $0x2fc] sm:$0xf]
        %v1616 = vld [vmem:[%s1366 + $0x300] sm:$0xf]
        %v1617 = vld [vmem:[%s1366 + $0x304] sm:$0xf]
        %v1618 = vld [vmem:[%s1366 + $0x308] sm:$0xf]
        %v1619 = vld [vmem:[%s1366 + $0x30c] sm:$0xf]
        %v1620 = vld [vmem:[%s1366 + $0x310] sm:$0xf]
        %v1621 = vld [vmem:[%s1366 + $0x314] sm:$0xf]
        %v1622 = vld [vmem:[%s1366 + $0x318] sm:$0xf]
        %v1623 = vld [vmem:[%s1366 + $0x31c] sm:$0xf]
        %v1624 = vld [vmem:[%s1366 + $0x320] sm:$0xf]
        %v1625 = vld [vmem:[%s1366 + $0x324] sm:$0xf]
        %v1626 = vld [vmem:[%s1366 + $0x328] sm:$0xf]
        %v1627 = vld [vmem:[%s1366 + $0x32c] sm:$0xf]
        %v1628 = vld [vmem:[%s1366 + $0x330] sm:$0xf]
        %v1629 = vld [vmem:[%s1366 + $0x334] sm:$0xf]
        %v1630 = vld [vmem:[%s1366 + $0x338] sm:$0xf]
        %v1631 = vld [vmem:[%s1366 + $0x33c] sm:$0xf]
        %v1632 = vld [vmem:[%s1366 + $0x340] sm:$0xf]
        %v1633 = vld [vmem:[%s1366 + $0x344] sm:$0xf]
        %v1634 = vld [vmem:[%s1366 + $0x348] sm:$0xf]
        %v1635 = vld [vmem:[%s1366 + $0x34c] sm:$0xf]
        %v1636 = vld [vmem:[%s1366 + $0x350] sm:$0xf]
        %v1637 = vld [vmem:[%s1366 + $0x354] sm:$0xf]
        %v1638 = vld [vmem:[%s1366 + $0x358] sm:$0xf]
        %v1639 = vld [vmem:[%s1366 + $0x35c] sm:$0xf]
        %v1640 = vld [vmem:[%s1366 + $0x360] sm:$0xf]
        %v1641 = vld [vmem:[%s1366 + $0x364] sm:$0xf]
        %v1642 = vld [vmem:[%s1366 + $0x368] sm:$0xf]
        %v1643 = vld [vmem:[%s1366 + $0x36c] sm:$0xf]
        %v1644 = vld [vmem:[%s1366 + $0x370] sm:$0xf]
        %v1645 = vld [vmem:[%s1366 + $0x374] sm:$0xf]
        %v1646 = vld [vmem:[%s1366 + $0x378] sm:$0xf]
        %v1647 = vld [vmem:[%s1366 + $0x37c] sm:$0xf]
        %v1648 = vld [vmem:[%s1366 + $0x380] sm:$0xf]
        %v1649 = vld [vmem:[%s1366 + $0x384] sm:$0xf]
        %v1650 = vld [vmem:[%s1366 + $0x388] sm:$0xf]
        %v1651 = vld [vmem:[%s1366 + $0x38c] sm:$0xf]
        %v1652 = vld [vmem:[%s1366 + $0x390] sm:$0xf]
        %v1653 = vld [vmem:[%s1366 + $0x394] sm:$0xf]
        %v1654 = vld [vmem:[%s1366 + $0x398] sm:$0xf]
        %v1655 = vld [vmem:[%s1366 + $0x39c] sm:$0xf]
        %v1656 = vld [vmem:[%s1366 + $0x3a0] sm:$0xf]
        %v1657 = vld [vmem:[%s1366 + $0x3a4] sm:$0xf]
        %v1658 = vld [vmem:[%s1366 + $0x3a8] sm:$0xf]
        %v1659 = vld [vmem:[%s1366 + $0x3ac] sm:$0xf]
        %v1660 = vld [vmem:[%s1366 + $0x3b0] sm:$0xf]
        %v1661 = vld [vmem:[%s1366 + $0x3b4] sm:$0xf]
        %v1662 = vld [vmem:[%s1366 + $0x3b8] sm:$0xf]
        %v1663 = vld [vmem:[%s1366 + $0x3bc] sm:$0xf]
        %v1664 = vld [vmem:[%s1366 + $0x3c0] sm:$0xf]
        %v1665 = vld [vmem:[%s1366 + $0x3c4] sm:$0xf]
        %v1666 = vld [vmem:[%s1366 + $0x3c8] sm:$0xf]
        %v1667 = vld [vmem:[%s1366 + $0x3cc] sm:$0xf]
        %v1668 = vld [vmem:[%s1366 + $0x3d0] sm:$0xf]
        %v1669 = vld [vmem:[%s1366 + $0x3d4] sm:$0xf]
        %v1670 = vld [vmem:[%s1366 + $0x3d8] sm:$0xf]
        %v1671 = vld [vmem:[%s1366 + $0x3dc] sm:$0xf]
        %v1672 = vld [vmem:[%s1366 + $0x3e0] sm:$0xf]
        %v1673 = vld [vmem:[%s1366 + $0x3e4] sm:$0xf]
        %v1674 = vld [vmem:[%s1366 + $0x3e8] sm:$0xf]
        %v1675 = vld [vmem:[%s1366 + $0x3ec] sm:$0xf]
        %v1676 = vld [vmem:[%s1366 + $0x3f0] sm:$0xf]
        %v1677 = vld [vmem:[%s1366 + $0x3f4] sm:$0xf]
        %v1678 = vld [vmem:[%s1366 + $0x3f8] sm:$0xf]
        %v1679 = vld [vmem:[%s1366 + $0x3fc] sm:$0xf]
        %v1680 = vld [vmem:[%s1366 + $0x400] sm:$0xf]
        %v1681 = vld [vmem:[%s1366 + $0x404] sm:$0xf]
        %v1682 = vld [vmem:[%s1366 + $0x408] sm:$0xf]
        %v1683 = vld [vmem:[%s1366 + $0x40c] sm:$0xf]
        %v1684 = vld [vmem:[%s1366 + $0x410] sm:$0xf]
        %v1685 = vld [vmem:[%s1366 + $0x414] sm:$0xf]
        %v1686 = vld [vmem:[%s1366 + $0x418] sm:$0xf]
        %v1687 = vld [vmem:[%s1366 + $0x41c] sm:$0xf]
        %v1688 = vld [vmem:[%s1366 + $0x420] sm:$0xf]
        %v1689 = vld [vmem:[%s1366 + $0x424] sm:$0xf]
        %v1690 = vld [vmem:[%s1366 + $0x428] sm:$0xf]
        %v1691 = vld [vmem:[%s1366 + $0x42c] sm:$0xf]
        %v1692 = vld [vmem:[%s1366 + $0x430] sm:$0xf]
        %v1693 = vld [vmem:[%s1366 + $0x434] sm:$0xf]
        %v1694 = vld [vmem:[%s1366 + $0x438] sm:$0xf]
        %v1695 = vld [vmem:[%s1366 + $0x43c] sm:$0xf]
        %v1696 = vld [vmem:[%s1366 + $0x440] sm:$0xf]
        %v1697 = vld [vmem:[%s1366 + $0x444] sm:$0xf]
        %v1698 = vld [vmem:[%s1366 + $0x448] sm:$0xf]
        %v1699 = vld [vmem:[%s1366 + $0x44c] sm:$0xf]
        %v1700 = vld [vmem:[%s1366 + $0x450] sm:$0xf]
        %v1701 = vld [vmem:[%s1366 + $0x454] sm:$0xf]
        %v1702 = vld [vmem:[%s1366 + $0x458] sm:$0xf]
        %v1703 = vld [vmem:[%s1366 + $0x45c] sm:$0xf]
        %v1704 = vld [vmem:[%s1366 + $0x460] sm:$0xf]
        %v1705 = vld [vmem:[%s1366 + $0x464] sm:$0xf]
        %v1706 = vld [vmem:[%s1366 + $0x468] sm:$0xf]
        %v1707 = vld [vmem:[%s1366 + $0x46c] sm:$0xf]
        %v1708 = vld [vmem:[%s1366 + $0x470] sm:$0xf]
        %v1709 = vld [vmem:[%s1366 + $0x474] sm:$0xf]
        %v1710 = vld [vmem:[%s1366 + $0x478] sm:$0xf]
        %v1711 = vld [vmem:[%s1366 + $0x47c] sm:$0xf]
        %v1712 = vld [vmem:[%s1405] sm:$0x1]
        %v1714 = vlaneseq
        %v1715 = vshrl.u32 %v1714, 7
        %v1716 = vsub.s32 0, %v1715
        %v1717 = vrot.slane %v1712, %v1716
        %v1728 = vunpack.c.l.b16 %v1415
        %v1729 = vunpack.c.h.b16 %v1415
        %v1730 = vunpack.c.l.b16 %v1416
        %v1731 = vunpack.c.h.b16 %v1416
        %v1732 = vunpack.c.l.b16 %v1417
        %v1733 = vunpack.c.h.b16 %v1417
        %v1734 = vunpack.c.l.b16 %v1418
        %v1735 = vunpack.c.h.b16 %v1418
        %v1736 = vunpack.c.l.b16 %v1419
        %v1737 = vunpack.c.h.b16 %v1419
        %v1738 = vunpack.c.l.b16 %v1420
        %v1739 = vunpack.c.h.b16 %v1420
        %v1740 = vunpack.c.l.b16 %v1421
        %v1741 = vunpack.c.h.b16 %v1421
        %v1742 = vunpack.c.l.b16 %v1422
        %v1743 = vunpack.c.h.b16 %v1422
        %v1744 = vunpack.c.l.b16 %v1423
        %v1745 = vunpack.c.h.b16 %v1423
        %v1746 = vpack.c.b16 %v1728, %v1728
        %v1747 = vpack.c.b16 %v1729, %v1729
        %v1748 = vpack.c.b16 %v1730, %v1730
        %v1749 = vpack.c.b16 %v1731, %v1731
        %v1750 = vpack.c.b16 %v1732, %v1732
        %v1751 = vpack.c.b16 %v1733, %v1733
        %v1752 = vpack.c.b16 %v1734, %v1734
        %v1753 = vpack.c.b16 %v1735, %v1735
        %v1754 = vpack.c.b16 %v1736, %v1736
        %v1755 = vpack.c.b16 %v1737, %v1737
        %v1756 = vpack.c.b16 %v1738, %v1738
        %v1757 = vpack.c.b16 %v1739, %v1739
        %v1758 = vpack.c.b16 %v1740, %v1740
        %v1759 = vpack.c.b16 %v1741, %v1741
        %v1760 = vpack.c.b16 %v1742, %v1742
        %v1761 = vpack.c.b16 %v1743, %v1743
        %v1762 = vpack.c.b16 %v1744, %v1744
        %v1763 = vpack.c.b16 %v1745, %v1745
        %v2070 = vunpack.c.l.b16 %v1424
        %v2071 = vunpack.c.l.b16 %v1425
        %v2072 = vunpack.c.l.b16 %v1426
        %v2073 = vunpack.c.l.b16 %v1427
        %v2074 = vunpack.c.l.b16 %v1428
        %v2075 = vunpack.c.l.b16 %v1429
        %v2076 = vunpack.c.l.b16 %v1430
        %v2077 = vunpack.c.l.b16 %v1431
        %v2078 = vunpack.c.l.b16 %v1432
        %v2079 = vunpack.c.l.b16 %v1433
        %v2080 = vunpack.c.l.b16 %v1434
        %v2081 = vunpack.c.l.b16 %v1435
        %v2082 = vunpack.c.l.b16 %v1436
        %v2083 = vunpack.c.l.b16 %v1437
        %v2084 = vunpack.c.l.b16 %v1438
        %v2085 = vunpack.c.l.b16 %v1439
        %v2086 = vunpack.c.l.b16 %v1440
        %v2087 = vunpack.c.l.b16 %v1441
        %v2088 = vunpack.c.l.b16 %v1442
        %v2089 = vunpack.c.l.b16 %v1443
        %v2090 = vunpack.c.l.b16 %v1444
        %v2091 = vunpack.c.l.b16 %v1445
        %v2092 = vunpack.c.l.b16 %v1446
        %v2093 = vunpack.c.l.b16 %v1447
        %v2094 = vunpack.c.l.b16 %v1448
        %v2095 = vunpack.c.l.b16 %v1449
        %v2096 = vunpack.c.l.b16 %v1450
        %v2097 = vunpack.c.l.b16 %v1451
        %v2098 = vunpack.c.l.b16 %v1452
        %v2099 = vunpack.c.l.b16 %v1453
        %v2100 = vunpack.c.l.b16 %v1454
        %v2101 = vunpack.c.l.b16 %v1455
        %v2102 = vunpack.c.l.b16 %v1456
        %v2103 = vunpack.c.l.b16 %v1457
        %v2104 = vunpack.c.l.b16 %v1458
        %v2105 = vunpack.c.l.b16 %v1459
        %v2106 = vunpack.c.l.b16 %v1460
        %v2107 = vunpack.c.l.b16 %v1461
        %v2108 = vunpack.c.l.b16 %v1462
        %v2109 = vunpack.c.l.b16 %v1463
        %v2110 = vunpack.c.l.b16 %v1464
        %v2111 = vunpack.c.l.b16 %v1465
        %v2112 = vunpack.c.l.b16 %v1466
        %v2113 = vunpack.c.l.b16 %v1467
        %v2114 = vunpack.c.l.b16 %v1468
        %v2115 = vunpack.c.l.b16 %v1469
        %v2116 = vunpack.c.l.b16 %v1470
        %v2117 = vunpack.c.l.b16 %v1471
        %v2118 = vunpack.c.l.b16 %v1472
        %v2119 = vunpack.c.l.b16 %v1473
        %v2120 = vunpack.c.l.b16 %v1474
        %v2121 = vunpack.c.l.b16 %v1475
        %v2122 = vunpack.c.l.b16 %v1476
        %v2123 = vunpack.c.l.b16 %v1477
        %v2124 = vunpack.c.l.b16 %v1478
        %v2125 = vunpack.c.l.b16 %v1479
        %v2126 = vunpack.c.l.b16 %v1480
        %v2127 = vunpack.c.l.b16 %v1481
        %v2128 = vunpack.c.l.b16 %v1482
        %v2129 = vunpack.c.l.b16 %v1483
        %v2130 = vunpack.c.l.b16 %v1484
        %v2131 = vunpack.c.l.b16 %v1485
        %v2132 = vunpack.c.l.b16 %v1486
        %v2133 = vunpack.c.l.b16 %v1487
        %v2134 = vunpack.c.l.b16 %v1488
        %v2135 = vunpack.c.l.b16 %v1489
        %v2136 = vunpack.c.l.b16 %v1490
        %v2137 = vunpack.c.l.b16 %v1491
        %v2138 = vunpack.c.l.b16 %v1492
        %v2139 = vunpack.c.l.b16 %v1493
        %v2140 = vunpack.c.l.b16 %v1494
        %v2141 = vunpack.c.l.b16 %v1495
        %v2142 = vunpack.c.l.b16 %v1496
        %v2143 = vunpack.c.l.b16 %v1497
        %v2144 = vunpack.c.l.b16 %v1498
        %v2145 = vunpack.c.l.b16 %v1499
        %v2146 = vunpack.c.l.b16 %v1500
        %v2147 = vunpack.c.l.b16 %v1501
        %v2148 = vunpack.c.l.b16 %v1502
        %v2149 = vunpack.c.l.b16 %v1503
        %v2150 = vunpack.c.l.b16 %v1504
        %v2151 = vunpack.c.l.b16 %v1505
        %v2152 = vunpack.c.l.b16 %v1506
        %v2153 = vunpack.c.l.b16 %v1507
        %v2154 = vunpack.c.l.b16 %v1508
        %v2155 = vunpack.c.l.b16 %v1509
        %v2156 = vunpack.c.l.b16 %v1510
        %v2157 = vunpack.c.l.b16 %v1511
        %v2158 = vunpack.c.l.b16 %v1512
        %v2159 = vunpack.c.l.b16 %v1513
        %v2160 = vunpack.c.l.b16 %v1514
        %v2161 = vunpack.c.l.b16 %v1515
        %v2162 = vunpack.c.l.b16 %v1516
        %v2163 = vunpack.c.l.b16 %v1517
        %v2164 = vunpack.c.l.b16 %v1518
        %v2165 = vunpack.c.l.b16 %v1519
        %v2166 = vunpack.c.l.b16 %v1520
        %v2167 = vunpack.c.l.b16 %v1521
        %v2168 = vunpack.c.l.b16 %v1522
        %v2169 = vunpack.c.l.b16 %v1523
        %v2170 = vunpack.c.l.b16 %v1524
        %v2171 = vunpack.c.l.b16 %v1525
        %v2172 = vunpack.c.l.b16 %v1526
        %v2173 = vunpack.c.l.b16 %v1527
        %v2174 = vunpack.c.l.b16 %v1528
        %v2175 = vunpack.c.l.b16 %v1529
        %v2176 = vunpack.c.l.b16 %v1530
        %v2177 = vunpack.c.l.b16 %v1531
        %v2178 = vunpack.c.l.b16 %v1532
        %v2179 = vunpack.c.l.b16 %v1533
        %v2180 = vunpack.c.l.b16 %v1534
        %v2181 = vunpack.c.l.b16 %v1535
        %v2182 = vunpack.c.l.b16 %v1536
        %v2183 = vunpack.c.l.b16 %v1537
        %v2184 = vunpack.c.l.b16 %v1538
        %v2185 = vunpack.c.l.b16 %v1539
        %v2186 = vunpack.c.l.b16 %v1540
        %v2187 = vunpack.c.l.b16 %v1541
        %v2188 = vunpack.c.l.b16 %v1542
        %v2189 = vunpack.c.l.b16 %v1543
        %v2190 = vunpack.c.l.b16 %v1544
        %v2191 = vunpack.c.l.b16 %v1545
        %v2192 = vunpack.c.l.b16 %v1546
        %v2193 = vunpack.c.l.b16 %v1547
        %v2194 = vunpack.c.l.b16 %v1548
        %v2195 = vunpack.c.l.b16 %v1549
        %v2196 = vunpack.c.l.b16 %v1550
        %v2197 = vunpack.c.l.b16 %v1551
        %v2198 = vunpack.c.l.b16 %v1552
        %v2199 = vunpack.c.l.b16 %v1553
        %v2200 = vunpack.c.l.b16 %v1554
        %v2201 = vunpack.c.l.b16 %v1555
        %v2202 = vunpack.c.l.b16 %v1556
        %v2203 = vunpack.c.l.b16 %v1557
        %v2204 = vunpack.c.l.b16 %v1558
        %v2205 = vunpack.c.l.b16 %v1559
        %v2206 = vunpack.c.l.b16 %v1560
        %v2207 = vunpack.c.l.b16 %v1561
        %v2208 = vunpack.c.l.b16 %v1562
        %v2209 = vunpack.c.l.b16 %v1563
        %v2210 = vunpack.c.l.b16 %v1564
        %v2211 = vunpack.c.l.b16 %v1565
        %v2212 = vunpack.c.l.b16 %v1566
        %v2213 = vunpack.c.l.b16 %v1567
        %v2214 = vunpack.c.l.b16 %v1568
        %v2215 = vunpack.c.l.b16 %v1569
        %v2216 = vunpack.c.l.b16 %v1570
        %v2217 = vunpack.c.l.b16 %v1571
        %v2218 = vunpack.c.l.b16 %v1572
        %v2219 = vunpack.c.l.b16 %v1573
        %v2220 = vunpack.c.l.b16 %v1574
        %v2221 = vunpack.c.l.b16 %v1575
        %v2222 = vunpack.c.l.b16 %v1576
        %v2223 = vunpack.c.l.b16 %v1577
        %v2224 = vunpack.c.l.b16 %v1578
        %v2225 = vunpack.c.l.b16 %v1579
        %v2226 = vunpack.c.l.b16 %v1580
        %v2227 = vunpack.c.l.b16 %v1581
        %v2228 = vunpack.c.l.b16 %v1582
        %v2229 = vunpack.c.l.b16 %v1583
        %v2230 = vunpack.c.l.b16 %v1584
        %v2231 = vunpack.c.l.b16 %v1585
        %v2232 = vunpack.c.l.b16 %v1586
        %v2233 = vunpack.c.l.b16 %v1587
        %v2234 = vunpack.c.l.b16 %v1588
        %v2235 = vunpack.c.l.b16 %v1589
        %v2236 = vunpack.c.l.b16 %v1590
        %v2237 = vunpack.c.l.b16 %v1591
        %v2238 = vunpack.c.l.b16 %v1592
        %v2239 = vunpack.c.l.b16 %v1593
        %v2240 = vunpack.c.l.b16 %v1594
        %v2241 = vunpack.c.l.b16 %v1595
        %v2242 = vunpack.c.l.b16 %v1596
        %v2243 = vunpack.c.l.b16 %v1597
        %v2244 = vunpack.c.l.b16 %v1598
        %v2245 = vunpack.c.l.b16 %v1599
        %v2246 = vunpack.c.l.b16 %v1600
        %v2247 = vunpack.c.l.b16 %v1601
        %v2248 = vunpack.c.l.b16 %v1602
        %v2249 = vunpack.c.l.b16 %v1603
        %v2250 = vunpack.c.l.b16 %v1604
        %v2251 = vunpack.c.l.b16 %v1605
        %v2252 = vunpack.c.l.b16 %v1606
        %v2253 = vunpack.c.l.b16 %v1607
        %v2254 = vunpack.c.l.b16 %v1608
        %v2255 = vunpack.c.l.b16 %v1609
        %v2256 = vunpack.c.l.b16 %v1610
        %v2257 = vunpack.c.l.b16 %v1611
        %v2258 = vunpack.c.l.b16 %v1612
        %v2259 = vunpack.c.l.b16 %v1613
        %v2260 = vunpack.c.l.b16 %v1614
        %v2261 = vunpack.c.l.b16 %v1615
        %v2262 = vunpack.c.l.b16 %v1616
        %v2263 = vunpack.c.l.b16 %v1617
        %v2264 = vunpack.c.l.b16 %v1618
        %v2265 = vunpack.c.l.b16 %v1619
        %v2266 = vunpack.c.l.b16 %v1620
        %v2267 = vunpack.c.l.b16 %v1621
        %v2268 = vunpack.c.l.b16 %v1622
        %v2269 = vunpack.c.l.b16 %v1623
        %v2270 = vunpack.c.l.b16 %v1624
        %v2271 = vunpack.c.l.b16 %v1625
        %v2272 = vunpack.c.l.b16 %v1626
        %v2273 = vunpack.c.l.b16 %v1627
        %v2274 = vunpack.c.l.b16 %v1628
        %v2275 = vunpack.c.l.b16 %v1629
        %v2276 = vunpack.c.l.b16 %v1630
        %v2277 = vunpack.c.l.b16 %v1631
        %v2278 = vunpack.c.l.b16 %v1632
        %v2279 = vunpack.c.l.b16 %v1633
        %v2280 = vunpack.c.l.b16 %v1634
        %v2281 = vunpack.c.l.b16 %v1635
        %v2282 = vunpack.c.l.b16 %v1636
        %v2283 = vunpack.c.l.b16 %v1637
        %v2284 = vunpack.c.l.b16 %v1638
        %v2285 = vunpack.c.l.b16 %v1639
        %v2286 = vunpack.c.l.b16 %v1640
        %v2287 = vunpack.c.l.b16 %v1641
        %v2288 = vunpack.c.l.b16 %v1642
        %v2289 = vunpack.c.l.b16 %v1643
        %v2290 = vunpack.c.l.b16 %v1644
        %v2291 = vunpack.c.l.b16 %v1645
        %v2292 = vunpack.c.l.b16 %v1646
        %v2293 = vunpack.c.l.b16 %v1647
        %v2294 = vunpack.c.l.b16 %v1648
        %v2295 = vunpack.c.l.b16 %v1649
        %v2296 = vunpack.c.l.b16 %v1650
        %v2297 = vunpack.c.l.b16 %v1651
        %v2298 = vunpack.c.l.b16 %v1652
        %v2299 = vunpack.c.l.b16 %v1653
        %v2300 = vunpack.c.l.b16 %v1654
        %v2301 = vunpack.c.l.b16 %v1655
        %v2302 = vunpack.c.l.b16 %v1656
        %v2303 = vunpack.c.l.b16 %v1657
        %v2304 = vunpack.c.l.b16 %v1658
        %v2305 = vunpack.c.l.b16 %v1659
        %v2306 = vunpack.c.l.b16 %v1660
        %v2307 = vunpack.c.l.b16 %v1661
        %v2308 = vunpack.c.l.b16 %v1662
        %v2309 = vunpack.c.l.b16 %v1663
        %v2310 = vunpack.c.l.b16 %v1664
        %v2311 = vunpack.c.l.b16 %v1665
        %v2312 = vunpack.c.l.b16 %v1666
        %v2313 = vunpack.c.l.b16 %v1667
        %v2314 = vunpack.c.l.b16 %v1668
        %v2315 = vunpack.c.l.b16 %v1669
        %v2316 = vunpack.c.l.b16 %v1670
        %v2317 = vunpack.c.l.b16 %v1671
        %v2318 = vunpack.c.l.b16 %v1672
        %v2319 = vunpack.c.l.b16 %v1673
        %v2320 = vunpack.c.l.b16 %v1674
        %v2321 = vunpack.c.l.b16 %v1675
        %v2322 = vunpack.c.l.b16 %v1676
        %v2323 = vunpack.c.l.b16 %v1677
        %v2324 = vunpack.c.l.b16 %v1678
        %v2325 = vunpack.c.l.b16 %v1679
        %v2326 = vunpack.c.l.b16 %v1680
        %v2327 = vunpack.c.l.b16 %v1681
        %v2328 = vunpack.c.l.b16 %v1682
        %v2329 = vunpack.c.l.b16 %v1683
        %v2330 = vunpack.c.l.b16 %v1684
        %v2331 = vunpack.c.l.b16 %v1685
        %v2332 = vunpack.c.l.b16 %v1686
        %v2333 = vunpack.c.l.b16 %v1687
        %v2334 = vunpack.c.l.b16 %v1688
        %v2335 = vunpack.c.l.b16 %v1689
        %v2336 = vunpack.c.l.b16 %v1690
        %v2337 = vunpack.c.l.b16 %v1691
        %v2338 = vunpack.c.l.b16 %v1692
        %v2339 = vunpack.c.l.b16 %v1693
        %v2340 = vunpack.c.l.b16 %v1694
        %v2341 = vunpack.c.l.b16 %v1695
        %v2342 = vunpack.c.l.b16 %v1696
        %v2343 = vunpack.c.l.b16 %v1697
        %v2344 = vunpack.c.l.b16 %v1698
        %v2345 = vunpack.c.l.b16 %v1699
        %v2346 = vunpack.c.l.b16 %v1700
        %v2347 = vunpack.c.l.b16 %v1701
        %v2348 = vunpack.c.l.b16 %v1702
        %v2349 = vunpack.c.l.b16 %v1703
        %v2350 = vunpack.c.l.b16 %v1704
        %v2351 = vunpack.c.l.b16 %v1705
        %v2352 = vunpack.c.l.b16 %v1706
        %v2353 = vunpack.c.l.b16 %v1707
        %v2354 = vunpack.c.l.b16 %v1708
        %v2355 = vunpack.c.l.b16 %v1709
        %v2356 = vunpack.c.l.b16 %v1710
        %v2357 = vunpack.c.l.b16 %v1711
        %v2358 = vpack.c.b16 %v2071, %v2070
        %v2359 = vpack.c.b16 %v2073, %v2072
        %v2360 = vpack.c.b16 %v2075, %v2074
        %v2361 = vpack.c.b16 %v2077, %v2076
        %v2362 = vpack.c.b16 %v2079, %v2078
        %v2363 = vpack.c.b16 %v2081, %v2080
        %v2364 = vpack.c.b16 %v2083, %v2082
        %v2365 = vpack.c.b16 %v2085, %v2084
        %v2366 = vpack.c.b16 %v2087, %v2086
        %v2367 = vpack.c.b16 %v2089, %v2088
        %v2368 = vpack.c.b16 %v2091, %v2090
        %v2369 = vpack.c.b16 %v2093, %v2092
        %v2370 = vpack.c.b16 %v2095, %v2094
        %v2371 = vpack.c.b16 %v2097, %v2096
        %v2372 = vpack.c.b16 %v2099, %v2098
        %v2373 = vpack.c.b16 %v2101, %v2100
        %v2374 = vpack.c.b16 %v2103, %v2102
        %v2375 = vpack.c.b16 %v2105, %v2104
        %v2376 = vpack.c.b16 %v2107, %v2106
        %v2377 = vpack.c.b16 %v2109, %v2108
        %v2378 = vpack.c.b16 %v2111, %v2110
        %v2379 = vpack.c.b16 %v2113, %v2112
        %v2380 = vpack.c.b16 %v2115, %v2114
        %v2381 = vpack.c.b16 %v2117, %v2116
        %v2382 = vpack.c.b16 %v2119, %v2118
        %v2383 = vpack.c.b16 %v2121, %v2120
        %v2384 = vpack.c.b16 %v2123, %v2122
        %v2385 = vpack.c.b16 %v2125, %v2124
        %v2386 = vpack.c.b16 %v2127, %v2126
        %v2387 = vpack.c.b16 %v2129, %v2128
        %v2388 = vpack.c.b16 %v2131, %v2130
        %v2389 = vpack.c.b16 %v2133, %v2132
        %v2390 = vpack.c.b16 %v2135, %v2134
        %v2391 = vpack.c.b16 %v2137, %v2136
        %v2392 = vpack.c.b16 %v2139, %v2138
        %v2393 = vpack.c.b16 %v2141, %v2140
        %v2394 = vpack.c.b16 %v2143, %v2142
        %v2395 = vpack.c.b16 %v2145, %v2144
        %v2396 = vpack.c.b16 %v2147, %v2146
        %v2397 = vpack.c.b16 %v2149, %v2148
        %v2398 = vpack.c.b16 %v2151, %v2150
        %v2399 = vpack.c.b16 %v2153, %v2152
        %v2400 = vpack.c.b16 %v2155, %v2154
        %v2401 = vpack.c.b16 %v2157, %v2156
        %v2402 = vpack.c.b16 %v2159, %v2158
        %v2403 = vpack.c.b16 %v2161, %v2160
        %v2404 = vpack.c.b16 %v2163, %v2162
        %v2405 = vpack.c.b16 %v2165, %v2164
        %v2406 = vpack.c.b16 %v2167, %v2166
        %v2407 = vpack.c.b16 %v2169, %v2168
        %v2408 = vpack.c.b16 %v2171, %v2170
        %v2409 = vpack.c.b16 %v2173, %v2172
        %v2410 = vpack.c.b16 %v2175, %v2174
        %v2411 = vpack.c.b16 %v2177, %v2176
        %v2412 = vpack.c.b16 %v2179, %v2178
        %v2413 = vpack.c.b16 %v2181, %v2180
        %v2414 = vpack.c.b16 %v2183, %v2182
        %v2415 = vpack.c.b16 %v2185, %v2184
        %v2416 = vpack.c.b16 %v2187, %v2186
        %v2417 = vpack.c.b16 %v2189, %v2188
        %v2418 = vpack.c.b16 %v2191, %v2190
        %v2419 = vpack.c.b16 %v2193, %v2192
        %v2420 = vpack.c.b16 %v2195, %v2194
        %v2421 = vpack.c.b16 %v2197, %v2196
        %v2422 = vpack.c.b16 %v2199, %v2198
        %v2423 = vpack.c.b16 %v2201, %v2200
        %v2424 = vpack.c.b16 %v2203, %v2202
        %v2425 = vpack.c.b16 %v2205, %v2204
        %v2426 = vpack.c.b16 %v2207, %v2206
        %v2427 = vpack.c.b16 %v2209, %v2208
        %v2428 = vpack.c.b16 %v2211, %v2210
        %v2429 = vpack.c.b16 %v2213, %v2212
        %v2430 = vpack.c.b16 %v2215, %v2214
        %v2431 = vpack.c.b16 %v2217, %v2216
        %v2432 = vpack.c.b16 %v2219, %v2218
        %v2433 = vpack.c.b16 %v2221, %v2220
        %v2434 = vpack.c.b16 %v2223, %v2222
        %v2435 = vpack.c.b16 %v2225, %v2224
        %v2436 = vpack.c.b16 %v2227, %v2226
        %v2437 = vpack.c.b16 %v2229, %v2228
        %v2438 = vpack.c.b16 %v2231, %v2230
        %v2439 = vpack.c.b16 %v2233, %v2232
        %v2440 = vpack.c.b16 %v2235, %v2234
        %v2441 = vpack.c.b16 %v2237, %v2236
        %v2442 = vpack.c.b16 %v2239, %v2238
        %v2443 = vpack.c.b16 %v2241, %v2240
        %v2444 = vpack.c.b16 %v2243, %v2242
        %v2445 = vpack.c.b16 %v2245, %v2244
        %v2446 = vpack.c.b16 %v2247, %v2246
        %v2447 = vpack.c.b16 %v2249, %v2248
        %v2448 = vpack.c.b16 %v2251, %v2250
        %v2449 = vpack.c.b16 %v2253, %v2252
        %v2450 = vpack.c.b16 %v2255, %v2254
        %v2451 = vpack.c.b16 %v2257, %v2256
        %v2452 = vpack.c.b16 %v2259, %v2258
        %v2453 = vpack.c.b16 %v2261, %v2260
        %v2454 = vpack.c.b16 %v2263, %v2262
        %v2455 = vpack.c.b16 %v2265, %v2264
        %v2456 = vpack.c.b16 %v2267, %v2266
        %v2457 = vpack.c.b16 %v2269, %v2268
        %v2458 = vpack.c.b16 %v2271, %v2270
        %v2459 = vpack.c.b16 %v2273, %v2272
        %v2460 = vpack.c.b16 %v2275, %v2274
        %v2461 = vpack.c.b16 %v2277, %v2276
        %v2462 = vpack.c.b16 %v2279, %v2278
        %v2463 = vpack.c.b16 %v2281, %v2280
        %v2464 = vpack.c.b16 %v2283, %v2282
        %v2465 = vpack.c.b16 %v2285, %v2284
        %v2466 = vpack.c.b16 %v2287, %v2286
        %v2467 = vpack.c.b16 %v2289, %v2288
        %v2468 = vpack.c.b16 %v2291, %v2290
        %v2469 = vpack.c.b16 %v2293, %v2292
        %v2470 = vpack.c.b16 %v2295, %v2294
        %v2471 = vpack.c.b16 %v2297, %v2296
        %v2472 = vpack.c.b16 %v2299, %v2298
        %v2473 = vpack.c.b16 %v2301, %v2300
        %v2474 = vpack.c.b16 %v2303, %v2302
        %v2475 = vpack.c.b16 %v2305, %v2304
        %v2476 = vpack.c.b16 %v2307, %v2306
        %v2477 = vpack.c.b16 %v2309, %v2308
        %v2478 = vpack.c.b16 %v2311, %v2310
        %v2479 = vpack.c.b16 %v2313, %v2312
        %v2480 = vpack.c.b16 %v2315, %v2314
        %v2481 = vpack.c.b16 %v2317, %v2316
        %v2482 = vpack.c.b16 %v2319, %v2318
        %v2483 = vpack.c.b16 %v2321, %v2320
        %v2484 = vpack.c.b16 %v2323, %v2322
        %v2485 = vpack.c.b16 %v2325, %v2324
        %v2486 = vpack.c.b16 %v2327, %v2326
        %v2487 = vpack.c.b16 %v2329, %v2328
        %v2488 = vpack.c.b16 %v2331, %v2330
        %v2489 = vpack.c.b16 %v2333, %v2332
        %v2490 = vpack.c.b16 %v2335, %v2334
        %v2491 = vpack.c.b16 %v2337, %v2336
        %v2492 = vpack.c.b16 %v2339, %v2338
        %v2493 = vpack.c.b16 %v2341, %v2340
        %v2494 = vpack.c.b16 %v2343, %v2342
        %v2495 = vpack.c.b16 %v2345, %v2344
        %v2496 = vpack.c.b16 %v2347, %v2346
        %v2497 = vpack.c.b16 %v2349, %v2348
        %v2498 = vpack.c.b16 %v2351, %v2350
        %v2499 = vpack.c.b16 %v2353, %v2352
        %v2500 = vpack.c.b16 %v2355, %v2354
        %v2501 = vpack.c.b16 %v2357, %v2356
        %2646 = vmatprep.subr.bf16.mxu0 0
        %2647 = vmatpush1.bf16.msra.mxu0 %v2358
        %2648 = vmatprep.subr.bf16.mxu0 0
        %2649 = vmatpush1.bf16.msra.mxu0 %v2359
        %2650 = vmatprep.subr.bf16.mxu0 0
        %2651 = vmatpush1.bf16.msra.mxu0 %v2360
        %2652 = vmatprep.subr.bf16.mxu0 0
        %2653 = vmatpush1.bf16.msra.mxu0 %v2361
        %2654 = vmatprep.subr.bf16.mxu0 0
        %2655 = vmatpush1.bf16.msra.mxu0 %v2362
        %2656 = vmatprep.subr.bf16.mxu0 0
        %2657 = vmatpush1.bf16.msra.mxu0 %v2363
        %2658 = vmatprep.subr.bf16.mxu0 0
        %2659 = vmatpush1.bf16.msra.mxu0 %v2364
        %2660 = vmatprep.subr.bf16.mxu0 0
        %2661 = vmatpush1.bf16.msra.mxu0 %v2365
        %2662 = vmatprep.subr.bf16.mxu0 0
        %2663 = vmatpush1.bf16.msra.mxu0 %v2366
        %2664 = vmatprep.subr.bf16.mxu0 0
        %2665 = vmatpush1.bf16.msra.mxu0 %v2367
        %2666 = vmatprep.subr.bf16.mxu0 0
        %2667 = vmatpush1.bf16.msra.mxu0 %v2368
        %2668 = vmatprep.subr.bf16.mxu0 0
        %2669 = vmatpush1.bf16.msra.mxu0 %v2369
        %2670 = vmatprep.subr.bf16.mxu0 0
        %2671 = vmatpush1.bf16.msra.mxu0 %v2370
        %2672 = vmatprep.subr.bf16.mxu0 0
        %2673 = vmatpush1.bf16.msra.mxu0 %v2371
        %2674 = vmatprep.subr.bf16.mxu0 0
        %2675 = vmatpush1.bf16.msra.mxu0 %v2372
        %2676 = vmatprep.subr.bf16.mxu0 0
        %2677 = vmatpush1.bf16.msra.mxu0 %v2373
        %2678 = vmatprep.mubr.bf16.mxu0 %v1747
        %2679 = vmatmul.mubr.bf16.gmra.mrb[0].mxu0 %v1746
        %v2680 = vpop.f32.mrb[0].mxu0
        %v2681 = vadd.f32 %v1717, %v2680
        %v2682 = vpop.f32.mrb[0].mxu0
        %v2683 = vpop.f32.mrb[0].mxu0
        %v2684 = vpop.f32.mrb[0].mxu0
        %2685 = vdwg.mxu0
        %2686 = vmatprep.subr.bf16.mxu0 0
        %2687 = vmatpush1.bf16.msra.mxu0 %v2374
        %2688 = vmatprep.subr.bf16.mxu0 0
        %2689 = vmatpush1.bf16.msra.mxu0 %v2375
        %2690 = vmatprep.subr.bf16.mxu0 0
        %2691 = vmatpush1.bf16.msra.mxu0 %v2376
        %2692 = vmatprep.subr.bf16.mxu0 0
        %2693 = vmatpush1.bf16.msra.mxu0 %v2377
        %2694 = vmatprep.subr.bf16.mxu0 0
        %2695 = vmatpush1.bf16.msra.mxu0 %v2378
        %2696 = vmatprep.subr.bf16.mxu0 0
        %2697 = vmatpush1.bf16.msra.mxu0 %v2379
        %2698 = vmatprep.subr.bf16.mxu0 0
        %2699 = vmatpush1.bf16.msra.mxu0 %v2380
        %2700 = vmatprep.subr.bf16.mxu0 0
        %2701 = vmatpush1.bf16.msra.mxu0 %v2381
        %2702 = vmatprep.subr.bf16.mxu0 0
        %2703 = vmatpush1.bf16.msra.mxu0 %v2382
        %2704 = vmatprep.subr.bf16.mxu0 0
        %2705 = vmatpush1.bf16.msra.mxu0 %v2383
        %2706 = vmatprep.subr.bf16.mxu0 0
        %2707 = vmatpush1.bf16.msra.mxu0 %v2384
        %2708 = vmatprep.subr.bf16.mxu0 0
        %2709 = vmatpush1.bf16.msra.mxu0 %v2385
        %2710 = vmatprep.subr.bf16.mxu0 0
        %2711 = vmatpush1.bf16.msra.mxu0 %v2386
        %2712 = vmatprep.subr.bf16.mxu0 0
        %2713 = vmatpush1.bf16.msra.mxu0 %v2387
        %2714 = vmatprep.subr.bf16.mxu0 0
        %2715 = vmatpush1.bf16.msra.mxu0 %v2388
        %2716 = vmatprep.subr.bf16.mxu0 0
        %2717 = vmatpush1.bf16.msra.mxu0 %v2389
        %2718 = vmatprep.mubr.bf16.mxu0 %v1749
        %2719 = vmatmul.mubr.bf16.gmra.mrb[0].mxu0 %v1748
        %v2720 = vpop.f32.mrb[0].mxu0
        %v2721 = vadd.f32 %v2681, %v2720
        %v2722 = vpop.f32.mrb[0].mxu0
        %v2723 = vpop.f32.mrb[0].mxu0
        %v2724 = vpop.f32.mrb[0].mxu0
        %2725 = vdwg.mxu0
        %2726 = vmatprep.subr.bf16.mxu0 0
        %2727 = vmatpush1.bf16.msra.mxu0 %v2390
        %2728 = vmatprep.subr.bf16.mxu0 0
        %2729 = vmatpush1.bf16.msra.mxu0 %v2391
        %2730 = vmatprep.subr.bf16.mxu0 0
        %2731 = vmatpush1.bf16.msra.mxu0 %v2392
        %2732 = vmatprep.subr.bf16.mxu0 0
        %2733 = vmatpush1.bf16.msra.mxu0 %v2393
        %2734 = vmatprep.subr.bf16.mxu0 0
        %2735 = vmatpush1.bf16.msra.mxu0 %v2394
        %2736 = vmatprep.subr.bf16.mxu0 0
        %2737 = vmatpush1.bf16.msra.mxu0 %v2395
        %2738 = vmatprep.subr.bf16.mxu0 0
        %2739 = vmatpush1.bf16.msra.mxu0 %v2396
        %2740 = vmatprep.subr.bf16.mxu0 0
        %2741 = vmatpush1.bf16.msra.mxu0 %v2397
        %2742 = vmatprep.subr.bf16.mxu0 0
        %2743 = vmatpush1.bf16.msra.mxu0 %v2398
        %2744 = vmatprep.subr.bf16.mxu0 0
        %2745 = vmatpush1.bf16.msra.mxu0 %v2399
        %2746 = vmatprep.subr.bf16.mxu0 0
        %2747 = vmatpush1.bf16.msra.mxu0 %v2400
        %2748 = vmatprep.subr.bf16.mxu0 0
        %2749 = vmatpush1.bf16.msra.mxu0 %v2401
        %2750 = vmatprep.subr.bf16.mxu0 0
        %2751 = vmatpush1.bf16.msra.mxu0 %v2402
        %2752 = vmatprep.subr.bf16.mxu0 0
        %2753 = vmatpush1.bf16.msra.mxu0 %v2403
        %2754 = vmatprep.subr.bf16.mxu0 0
        %2755 = vmatpush1.bf16.msra.mxu0 %v2404
        %2756 = vmatprep.subr.bf16.mxu0 0
        %2757 = vmatpush1.bf16.msra.mxu0 %v2405
        %2758 = vmatprep.mubr.bf16.mxu0 %v1751
        %2759 = vmatmul.mubr.bf16.gmra.mrb[0].mxu0 %v1750
        %v2760 = vpop.f32.mrb[0].mxu0
        %v2761 = vadd.f32 %v2721, %v2760
        %v2762 = vpop.f32.mrb[0].mxu0
        %v2763 = vpop.f32.mrb[0].mxu0
        %v2764 = vpop.f32.mrb[0].mxu0
        %2765 = vdwg.mxu0
        %2766 = vmatprep.subr.bf16.mxu0 0
        %2767 = vmatpush1.bf16.msra.mxu0 %v2406
        %2768 = vmatprep.subr.bf16.mxu0 0
        %2769 = vmatpush1.bf16.msra.mxu0 %v2407
        %2770 = vmatprep.subr.bf16.mxu0 0
        %2771 = vmatpush1.bf16.msra.mxu0 %v2408
        %2772 = vmatprep.subr.bf16.mxu0 0
        %2773 = vmatpush1.bf16.msra.mxu0 %v2409
        %2774 = vmatprep.subr.bf16.mxu0 0
        %2775 = vmatpush1.bf16.msra.mxu0 %v2410
        %2776 = vmatprep.subr.bf16.mxu0 0
        %2777 = vmatpush1.bf16.msra.mxu0 %v2411
        %2778 = vmatprep.subr.bf16.mxu0 0
        %2779 = vmatpush1.bf16.msra.mxu0 %v2412
        %2780 = vmatprep.subr.bf16.mxu0 0
        %2781 = vmatpush1.bf16.msra.mxu0 %v2413
        %2782 = vmatprep.subr.bf16.mxu0 0
        %2783 = vmatpush1.bf16.msra.mxu0 %v2414
        %2784 = vmatprep.subr.bf16.mxu0 0
        %2785 = vmatpush1.bf16.msra.mxu0 %v2415
        %2786 = vmatprep.subr.bf16.mxu0 0
        %2787 = vmatpush1.bf16.msra.mxu0 %v2416
        %2788 = vmatprep.subr.bf16.mxu0 0
        %2789 = vmatpush1.bf16.msra.mxu0 %v2417
        %2790 = vmatprep.subr.bf16.mxu0 0
        %2791 = vmatpush1.bf16.msra.mxu0 %v2418
        %2792 = vmatprep.subr.bf16.mxu0 0
        %2793 = vmatpush1.bf16.msra.mxu0 %v2419
        %2794 = vmatprep.subr.bf16.mxu0 0
        %2795 = vmatpush1.bf16.msra.mxu0 %v2420
        %2796 = vmatprep.subr.bf16.mxu0 0
        %2797 = vmatpush1.bf16.msra.mxu0 %v2421
        %2798 = vmatprep.mubr.bf16.mxu0 %v1753
        %2799 = vmatmul.mubr.bf16.gmra.mrb[0].mxu0 %v1752
        %v2800 = vpop.f32.mrb[0].mxu0
        %v2801 = vadd.f32 %v2761, %v2800
        %v2802 = vpop.f32.mrb[0].mxu0
        %v2803 = vpop.f32.mrb[0].mxu0
        %v2804 = vpop.f32.mrb[0].mxu0
        %2805 = vdwg.mxu0
        %2806 = vmatprep.subr.bf16.mxu0 0
        %2807 = vmatpush1.bf16.msra.mxu0 %v2422
        %2808 = vmatprep.subr.bf16.mxu0 0
        %2809 = vmatpush1.bf16.msra.mxu0 %v2423
        %2810 = vmatprep.subr.bf16.mxu0 0
        %2811 = vmatpush1.bf16.msra.mxu0 %v2424
        %2812 = vmatprep.subr.bf16.mxu0 0
        %2813 = vmatpush1.bf16.msra.mxu0 %v2425
        %2814 = vmatprep.subr.bf16.mxu0 0
        %2815 = vmatpush1.bf16.msra.mxu0 %v2426
        %2816 = vmatprep.subr.bf16.mxu0 0
        %2817 = vmatpush1.bf16.msra.mxu0 %v2427
        %2818 = vmatprep.subr.bf16.mxu0 0
        %2819 = vmatpush1.bf16.msra.mxu0 %v2428
        %2820 = vmatprep.subr.bf16.mxu0 0
        %2821 = vmatpush1.bf16.msra.mxu0 %v2429
        %2822 = vmatprep.subr.bf16.mxu0 0
        %2823 = vmatpush1.bf16.msra.mxu0 %v2430
        %2824 = vmatprep.subr.bf16.mxu0 0
        %2825 = vmatpush1.bf16.msra.mxu0 %v2431
        %2826 = vmatprep.subr.bf16.mxu0 0
        %2827 = vmatpush1.bf16.msra.mxu0 %v2432
        %2828 = vmatprep.subr.bf16.mxu0 0
        %2829 = vmatpush1.bf16.msra.mxu0 %v2433
        %2830 = vmatprep.subr.bf16.mxu0 0
        %2831 = vmatpush1.bf16.msra.mxu0 %v2434
        %2832 = vmatprep.subr.bf16.mxu0 0
        %2833 = vmatpush1.bf16.msra.mxu0 %v2435
        %2834 = vmatprep.subr.bf16.mxu0 0
        %2835 = vmatpush1.bf16.msra.mxu0 %v2436
        %2836 = vmatprep.subr.bf16.mxu0 0
        %2837 = vmatpush1.bf16.msra.mxu0 %v2437
        %2838 = vmatprep.mubr.bf16.mxu0 %v1755
        %2839 = vmatmul.mubr.bf16.gmra.mrb[0].mxu0 %v1754
        %v2840 = vpop.f32.mrb[0].mxu0
        %v2841 = vadd.f32 %v2801, %v2840
        %v2842 = vpop.f32.mrb[0].mxu0
        %v2843 = vpop.f32.mrb[0].mxu0
        %v2844 = vpop.f32.mrb[0].mxu0
        %2845 = vdwg.mxu0
        %2846 = vmatprep.subr.bf16.mxu0 0
        %2847 = vmatpush1.bf16.msra.mxu0 %v2438
        %2848 = vmatprep.subr.bf16.mxu0 0
        %2849 = vmatpush1.bf16.msra.mxu0 %v2439
        %2850 = vmatprep.subr.bf16.mxu0 0
        %2851 = vmatpush1.bf16.msra.mxu0 %v2440
        %2852 = vmatprep.subr.bf16.mxu0 0
        %2853 = vmatpush1.bf16.msra.mxu0 %v2441
        %2854 = vmatprep.subr.bf16.mxu0 0
        %2855 = vmatpush1.bf16.msra.mxu0 %v2442
        %2856 = vmatprep.subr.bf16.mxu0 0
        %2857 = vmatpush1.bf16.msra.mxu0 %v2443
        %2858 = vmatprep.subr.bf16.mxu0 0
        %2859 = vmatpush1.bf16.msra.mxu0 %v2444
        %2860 = vmatprep.subr.bf16.mxu0 0
        %2861 = vmatpush1.bf16.msra.mxu0 %v2445
        %2862 = vmatprep.subr.bf16.mxu0 0
        %2863 = vmatpush1.bf16.msra.mxu0 %v2446
        %2864 = vmatprep.subr.bf16.mxu0 0
        %2865 = vmatpush1.bf16.msra.mxu0 %v2447
        %2866 = vmatprep.subr.bf16.mxu0 0
        %2867 = vmatpush1.bf16.msra.mxu0 %v2448
        %2868 = vmatprep.subr.bf16.mxu0 0
        %2869 = vmatpush1.bf16.msra.mxu0 %v2449
        %2870 = vmatprep.subr.bf16.mxu0 0
        %2871 = vmatpush1.bf16.msra.mxu0 %v2450
        %2872 = vmatprep.subr.bf16.mxu0 0
        %2873 = vmatpush1.bf16.msra.mxu0 %v2451
        %2874 = vmatprep.subr.bf16.mxu0 0
        %2875 = vmatpush1.bf16.msra.mxu0 %v2452
        %2876 = vmatprep.subr.bf16.mxu0 0
        %2877 = vmatpush1.bf16.msra.mxu0 %v2453
        %2878 = vmatprep.mubr.bf16.mxu0 %v1757
        %2879 = vmatmul.mubr.bf16.gmra.mrb[0].mxu0 %v1756
        %v2880 = vpop.f32.mrb[0].mxu0
        %v2881 = vadd.f32 %v2841, %v2880
        %v2882 = vpop.f32.mrb[0].mxu0
        %v2883 = vpop.f32.mrb[0].mxu0
        %v2884 = vpop.f32.mrb[0].mxu0
        %2885 = vdwg.mxu0
        %2886 = vmatprep.subr.bf16.mxu0 0
        %2887 = vmatpush1.bf16.msra.mxu0 %v2454
        %2888 = vmatprep.subr.bf16.mxu0 0
        %2889 = vmatpush1.bf16.msra.mxu0 %v2455
        %2890 = vmatprep.subr.bf16.mxu0 0
        %2891 = vmatpush1.bf16.msra.mxu0 %v2456
        %2892 = vmatprep.subr.bf16.mxu0 0
        %2893 = vmatpush1.bf16.msra.mxu0 %v2457
        %2894 = vmatprep.subr.bf16.mxu0 0
        %2895 = vmatpush1.bf16.msra.mxu0 %v2458
        %2896 = vmatprep.subr.bf16.mxu0 0
        %2897 = vmatpush1.bf16.msra.mxu0 %v2459
        %2898 = vmatprep.subr.bf16.mxu0 0
        %2899 = vmatpush1.bf16.msra.mxu0 %v2460
        %2900 = vmatprep.subr.bf16.mxu0 0
        %2901 = vmatpush1.bf16.msra.mxu0 %v2461
        %2902 = vmatprep.subr.bf16.mxu0 0
        %2903 = vmatpush1.bf16.msra.mxu0 %v2462
        %2904 = vmatprep.subr.bf16.mxu0 0
        %2905 = vmatpush1.bf16.msra.mxu0 %v2463
        %2906 = vmatprep.subr.bf16.mxu0 0
        %2907 = vmatpush1.bf16.msra.mxu0 %v2464
        %2908 = vmatprep.subr.bf16.mxu0 0
        %2909 = vmatpush1.bf16.msra.mxu0 %v2465
        %2910 = vmatprep.subr.bf16.mxu0 0
        %2911 = vmatpush1.bf16.msra.mxu0 %v2466
        %2912 = vmatprep.subr.bf16.mxu0 0
        %2913 = vmatpush1.bf16.msra.mxu0 %v2467
        %2914 = vmatprep.subr.bf16.mxu0 0
        %2915 = vmatpush1.bf16.msra.mxu0 %v2468
        %2916 = vmatprep.subr.bf16.mxu0 0
        %2917 = vmatpush1.bf16.msra.mxu0 %v2469
        %2918 = vmatprep.mubr.bf16.mxu0 %v1759
        %2919 = vmatmul.mubr.bf16.gmra.mrb[0].mxu0 %v1758
        %v2920 = vpop.f32.mrb[0].mxu0
        %v2921 = vadd.f32 %v2881, %v2920
        %v2922 = vpop.f32.mrb[0].mxu0
        %v2923 = vpop.f32.mrb[0].mxu0
        %v2924 = vpop.f32.mrb[0].mxu0
        %2925 = vdwg.mxu0
        %2926 = vmatprep.subr.bf16.mxu0 0
        %2927 = vmatpush1.bf16.msra.mxu0 %v2470
        %2928 = vmatprep.subr.bf16.mxu0 0
        %2929 = vmatpush1.bf16.msra.mxu0 %v2471
        %2930 = vmatprep.subr.bf16.mxu0 0
        %2931 = vmatpush1.bf16.msra.mxu0 %v2472
        %2932 = vmatprep.subr.bf16.mxu0 0
        %2933 = vmatpush1.bf16.msra.mxu0 %v2473
        %2934 = vmatprep.subr.bf16.mxu0 0
        %2935 = vmatpush1.bf16.msra.mxu0 %v2474
        %2936 = vmatprep.subr.bf16.mxu0 0
        %2937 = vmatpush1.bf16.msra.mxu0 %v2475
        %2938 = vmatprep.subr.bf16.mxu0 0
        %2939 = vmatpush1.bf16.msra.mxu0 %v2476
        %2940 = vmatprep.subr.bf16.mxu0 0
        %2941 = vmatpush1.bf16.msra.mxu0 %v2477
        %2942 = vmatprep.subr.bf16.mxu0 0
        %2943 = vmatpush1.bf16.msra.mxu0 %v2478
        %2944 = vmatprep.subr.bf16.mxu0 0
        %2945 = vmatpush1.bf16.msra.mxu0 %v2479
        %2946 = vmatprep.subr.bf16.mxu0 0
        %2947 = vmatpush1.bf16.msra.mxu0 %v2480
        %2948 = vmatprep.subr.bf16.mxu0 0
        %2949 = vmatpush1.bf16.msra.mxu0 %v2481
        %2950 = vmatprep.subr.bf16.mxu0 0
        %2951 = vmatpush1.bf16.msra.mxu0 %v2482
        %2952 = vmatprep.subr.bf16.mxu0 0
        %2953 = vmatpush1.bf16.msra.mxu0 %v2483
        %2954 = vmatprep.subr.bf16.mxu0 0
        %2955 = vmatpush1.bf16.msra.mxu0 %v2484
        %2956 = vmatprep.subr.bf16.mxu0 0
        %2957 = vmatpush1.bf16.msra.mxu0 %v2485
        %2958 = vmatprep.mubr.bf16.mxu0 %v1761
        %2959 = vmatmul.mubr.bf16.gmra.mrb[0].mxu0 %v1760
        %v2960 = vpop.f32.mrb[0].mxu0
        %v2961 = vadd.f32 %v2921, %v2960
        %v2962 = vpop.f32.mrb[0].mxu0
        %v2963 = vpop.f32.mrb[0].mxu0
        %v2964 = vpop.f32.mrb[0].mxu0
        %2965 = vdwg.mxu0
        %2966 = vmatprep.subr.bf16.mxu0 0
        %2967 = vmatpush1.bf16.msra.mxu0 %v2486
        %2968 = vmatprep.subr.bf16.mxu0 0
        %2969 = vmatpush1.bf16.msra.mxu0 %v2487
        %2970 = vmatprep.subr.bf16.mxu0 0
        %2971 = vmatpush1.bf16.msra.mxu0 %v2488
        %2972 = vmatprep.subr.bf16.mxu0 0
        %2973 = vmatpush1.bf16.msra.mxu0 %v2489
        %2974 = vmatprep.subr.bf16.mxu0 0
        %2975 = vmatpush1.bf16.msra.mxu0 %v2490
        %2976 = vmatprep.subr.bf16.mxu0 0
        %2977 = vmatpush1.bf16.msra.mxu0 %v2491
        %2978 = vmatprep.subr.bf16.mxu0 0
        %2979 = vmatpush1.bf16.msra.mxu0 %v2492
        %2980 = vmatprep.subr.bf16.mxu0 0
        %2981 = vmatpush1.bf16.msra.mxu0 %v2493
        %2982 = vmatprep.subr.bf16.mxu0 0
        %2983 = vmatpush1.bf16.msra.mxu0 %v2494
        %2984 = vmatprep.subr.bf16.mxu0 0
        %2985 = vmatpush1.bf16.msra.mxu0 %v2495
        %2986 = vmatprep.subr.bf16.mxu0 0
        %2987 = vmatpush1.bf16.msra.mxu0 %v2496
        %2988 = vmatprep.subr.bf16.mxu0 0
        %2989 = vmatpush1.bf16.msra.mxu0 %v2497
        %2990 = vmatprep.subr.bf16.mxu0 0
        %2991 = vmatpush1.bf16.msra.mxu0 %v2498
        %2992 = vmatprep.subr.bf16.mxu0 0
        %2993 = vmatpush1.bf16.msra.mxu0 %v2499
        %2994 = vmatprep.subr.bf16.mxu0 0
        %2995 = vmatpush1.bf16.msra.mxu0 %v2500
        %2996 = vmatprep.subr.bf16.mxu0 0
        %2997 = vmatpush1.bf16.msra.mxu0 %v2501
        %2998 = vmatprep.mubr.bf16.mxu0 %v1763
        %2999 = vmatmul.mubr.bf16.gmra.mrb[0].mxu0 %v1762
        %v3000 = vpop.f32.mrb[0].mxu0
        %v3001 = vadd.f32 %v2961, %v3000
        %v3002 = vpop.f32.mrb[0].mxu0
        %v3003 = vpop.f32.mrb[0].mxu0
        %v3004 = vpop.f32.mrb[0].mxu0
        %3005 = vdwg.mxu0
        %v3006 = vmax.f32 %v3001, 0.0
        %v3007 = vpack.c.bf16 %v3006, %v3006
        %3008 = vst [vmem:[%s1413] sm:$0xf] %v3007
        %p3009 = scmp.lt.s32.totalorder %s18, 0
        %s3010 = scalar_select %p3009, %s18, 0
        %p3011 = scmp.lt.s32.totalorder %s19, 3
        %s3012 = scalar_select %p3011, %s19, 3
        %s3013 = smul.addr %s3010, 4
        %s3014 = sadd.s32 %s3012, %s3013
        %s3015 = smul.addr %s3014, 4
        %s3016 = scalar_lea.vmem %s3, %s3015
        // Predicated region
        $region74: #{generator_forward.9} parent=68 // pred_check
          %p3017 = pneg %p124
        $region75: #{generator_forward.9} parent=68 // pred_check_branch
          %3019 = sbr.rel (%p3017) target = $region77
        $region76: #{generator_forward.9} parent=68 // pred_region
          _
        $region77: #{generator_forward.9} parent=68 // pred_fallthru
          _
      $region69: #{generator_forward.9} parent=5 // pred_fallthru
        _
      %p3020 = scmp.le.s32.totalorder 2, %s9
      // Predicated region
      $region78: #{generator_forward.9} parent=5 // pred_check
        %p3021 = pneg %p3020
      $region79: #{generator_forward.9} parent=5 // pred_check_branch
        %3023 = sbr.rel (%p3021) target = $region81
      $region80: #{generator_forward.9} parent=5 // pred_region
        %s3024 = ssub.s32 %s9, 2
        // Predicated region
        $region82: #{generator_forward.9} parent=80 // pred_check
          %p3025 = pneg %p130
        $region83: #{generator_forward.9} parent=80 // pred_check_branch
          %3027 = sbr.rel (%p3025) target = $region85
        $region84: #{generator_forward.9} parent=80 // pred_region
          %p3028 = scmp.lt.s32.totalorder %s20, 0
          %s3029 = scalar_select %p3028, %s20, 0
          %p3030 = scmp.lt.s32.totalorder %s21, 3
          %s3031 = scalar_select %p3030, %s21, 3
          %s3032 = smul.addr %s3029, 4
          %s3033 = sadd.s32 %s3031, %s3032
          %s3034 = smul.addr %s3033, 4
          %s3035 = scalar_lea.vmem %s3, %s3034
        $region85: #{generator_forward.9} parent=80 // pred_fallthru
          _
      $region81: #{generator_forward.9} parent=5 // pred_fallthru
        _
    $region6: #{generator_forward.9} parent=1 // loop_footer
      %s13 = sadd.s32 1, %s9
    $region7: #{generator_forward.9} parent=1 // loop_footer_branch
      %8 = sbr.rel target = $region3
    $region8: #{generator_forward.9} parent=1 // loop_exit
      _

// kernel: tile.33
$region0: #{tile.33}
  #allocation0 [shape = 's32[1]{0}', space=sflag, size = 0x4, scoped, tag = 'scoped memory for tile.33']
  %s0 = inlined_call_operand.vmem [shape: f32[64], index: 0, kind: input, shape index: {}]
  %s1 = inlined_call_operand.vmem [shape: f32[4,64], index: 1, kind: output, shape index: {}]
  // Predicated region
  $region2: #{tile.33} parent=0 // pred_check
    _
  $region3: #{tile.33} parent=0 // pred_check_branch
    %3 = sbr.rel (0) target = $region5
  $region4: #{tile.33} parent=0 // pred_region
    _
  $region5: #{tile.33} parent=0 // pred_fallthru
    _
  %v4 = vld [vmem:[%s0] ss:$0 sm:$0xff]
  %5 = vst [vmem:[%s1] sm:$0xf] %v4

// kernel: mul.47
$region0: #{mul.47}
  %s0 = inlined_call_operand.vmem [shape: f32[4,64], index: 0, kind: input, shape index: {}]
  %s1 = inlined_call_operand.vmem [shape: f32[256], index: 1, kind: output, shape index: {}]
  $region1: #{mul.47} parent=0
    #allocation0 [shape = 'u8[4096]{0}', space=vmem, size = 0x1000, scoped, tag = 'scoped mem for output reshape']
    #allocation1 [shape = 'u8[4096]{0}', space=vmem, size = 0x1000, scoped, tag = 'scoped mem for input reshape']
    %s3 = sshllo.u32 0, 4
    %v4 = vld [vmem:[%s0] sm:%s3]
    %5 = vst [vmem:[#allocation1] sm:%s3] %v4
    %s6 = smov 3
    %v7 = vld [vmem:[#allocation1] ss:$2 sm:%s6]
    %vm8 = vcmask 523264
    %9 = vst.msk [vmem:[#allocation0] sm:$0x3] %vm8, %v7
    %s10 = scalar_lea.vmem [#allocation1], 1
    %s11 = smov 3
    %v12 = vld [vmem:[%s10] ss:$2 sm:%s11]
    %13 = vrot.lane.b32.xlu0 %v12, 64
    %v14 = vpop.permute.xlu0 %13
    %vm15 = vcmask 1048064
    %16 = vst.msk [vmem:[#allocation0] sm:$0x3] %vm15, %v14
    %s18 = sshllo.u32 0, 2
    %v20 = vld [vmem:[#allocation0] sm:%s18]
    %s21 = sshllo.u32 0, 2
    %22 = vst [vmem:[%s1] sm:%s21] %v20

// kernel: tile.39
$region0: #{tile.39}
  %s0 = inlined_call_operand.vmem [shape: f32[4,64], index: 0, kind: input, shape index: {}]
  %s1 = inlined_call_operand.vmem [shape: f32[1,256], index: 1, kind: output, shape index: {}]
  $region1: #{tile.39} parent=0
    #allocation0 [shape = 'u8[8192]{0}', space=vmem, size = 0x2000, scoped, tag = 'scoped mem for output reshape']
    #allocation1 [shape = 'u8[4096]{0}', space=vmem, size = 0x1000, scoped, tag = 'scoped mem for input reshape']
    %s3 = sshllo.u32 0, 4
    %v4 = vld [vmem:[%s0] sm:%s3]
    %5 = vst [vmem:[#allocation1] sm:%s3] %v4
    %s6 = smov 3
    %v7 = vld [vmem:[#allocation1] ss:$2 sm:%s6]
    %vm8 = vcmask 523264
    %9 = vst.msk [vmem:[#allocation0] ss:$8 sm:$0x3] %vm8, %v7
    %s10 = scalar_lea.vmem [#allocation1], 1
    %s11 = smov 3
    %v12 = vld [vmem:[%s10] ss:$2 sm:%s11]
    %13 = vrot.lane.b32.xlu0 %v12, 64
    %v14 = vpop.permute.xlu0 %13
    %vm15 = vcmask 1048064
    %16 = vst.msk [vmem:[#allocation0] ss:$8 sm:$0x3] %vm15, %v14
    %s18 = sshllo.u32 0, 1
    %v20 = vld [vmem:[#allocation0] sm:%s18]
    %s21 = sshllo.u32 0, 1
    %22 = vst [vmem:[%s1] sm:%s21] %v20
    %s23 = scalar_lea.vmem [#allocation0], 8
    %v24 = vld [vmem:[%s23] sm:%s18]
    %s25 = sshllo.u32 0, 1
    %s26 = scalar_lea.vmem %s1, 1
    %27 = vst [vmem:[%s26] sm:%s25] %v24

// kernel: generator_forward.10
$region0: #{generator_forward.10}
  #allocation0 [shape = 'u32[]', space=smem, size = 0x4, offset = 0x4, fixed_abs, tag = 'smem constant byte address 0x4 - core index']
  #allocation1 [shape = 'u32[144,128]{1,0:T(1,128)}', space=vmem, size = 0x12000, scoped, tag = 'internal scratch']
  %s0 = inlined_call_operand.vmem [shape: bf16[32,1152], index: 0, kind: input, shape index: {}]
  %s1 = inlined_call_operand.vmem [shape: bf16[1152,256], index: 1, kind: input, shape index: {}]
  %s2 = inlined_call_operand.vmem [shape: f32[1,256], index: 2, kind: input, shape index: {}]
  %s3 = inlined_call_operand.vmem [shape: bf16[32,256], index: 3, kind: output, shape index: {}]
  %s4 = sld [smem:[#allocation0]]
  $region123: #{generator_forward.10} parent=0
    _
  %s6 = ssub.s32 1, %s4
  %s7 = scalar_select 0, %s6, %s4
  $region1: #{generator_forward.10} parent=0
    #allocation2 [shape = 'u8[589824]{0}', space=vmem, size = 0x90000, scoped, tag = 'input window, operand 1']
    #allocation3 [shape = 'u8[16384]{0}', space=vmem, size = 0x4000, scoped, tag = 'output window, operand 0']
    loop: start=0, step=1, limit=4
    $region2: #{generator_forward.10} parent=1 // loop_pre_header
      _
    $region3: #{generator_forward.10} parent=1 // loop_header
      %s9 = sphi 0, %s13
      %p10 = scmp.ge.s32.totalorder %s9, 4
      %s16 = sphi 0, %s28
      %s17 = sphi 0, %s24
      %s18 = sphi 0, %s16
      %s19 = sphi 0, %s17
      %s20 = sphi 0, %s18
      %s21 = sphi 0, %s19
      %s31 = sphi 0, %s33
      %s34 = sphi 0, %s31
      %s35 = sphi 0, %s34
      %s51 = sphi 0, %s35
      %s57 = sphi 0, %s59
      %s60 = sphi 0, %s57
      %s61 = sphi 0, %s60
      %s77 = sphi 0, %s61
      %s83 = sphi 0, %s85
      %s86 = sphi 0, %s83
      %s87 = sphi 0, %s86
      %s103 = sphi 0, %s87
      %s111 = sphi 0, %s113
      %s114 = sphi 0, %s111
      %s115 = sphi 0, %s114
      %s131 = sphi 0, %s115
    $region4: #{generator_forward.10} parent=1 // loop_header_branch
      %12 = sbr.rel (%p10) target = $region8
    $region5: #{generator_forward.10} parent=1 // loop_body
      %s14 = ssub.s32 %s9, 1
      %s15 = ssub.s32 %s9, 2
      %s22 = sadd.s32 1, %s17
      %p23 = scmp.ge.s32.totalorder %s22, 2
      %s24 = scalar_select %p23, 0, %s22
      %s25 = sadd.s32 1, %s16
      %s26 = scalar_select %p23, %s25, %s16
      %p27 = scmp.ge.s32.totalorder %s26, 1
      %s28 = scalar_select %p27, 0, %s26
      %s29 = ssub.s32 %s16, %s28
      %p30 = scmp.eq.s32.totalorder %s29, 0
      %s32 = sadd.s32 %s31, 1
      %s33 = scalar_select %p30, %s31, %s32
      %p36 = pneg %p30
      %p37 = scmp.eq.s32.totalorder %s9, 1
      %p38 = por %p36, %p37
      %p39 = scmp.ne.s32.totalorder %s31, %s34
      %p40 = scmp.eq.s32.totalorder %s9, 0
      %p41 = por %p39, %p40
      %p42 = scmp.ne.s32.totalorder %s31, %s34
      %p43 = scmp.eq.s32.totalorder %s14, 1
      %p44 = por %p42, %p43
      %p45 = scmp.ne.s32.totalorder %s34, %s35
      %p46 = scmp.eq.s32.totalorder %s14, 0
      %p47 = por %p45, %p46
      %p48 = scmp.ne.s32.totalorder %s34, %s35
      %p49 = scmp.eq.s32.totalorder %s15, 1
      %p50 = por %p48, %p49
      %p52 = scmp.ne.s32.totalorder %s35, %s51
      %p53 = scmp.eq.s32.totalorder %s15, 0
      %p54 = por %p52, %p53
      %s55 = ssub.s32 %s17, %s24
      %p56 = scmp.eq.s32.totalorder %s55, 0
      %s58 = sadd.s32 %s57, 1
      %s59 = scalar_select %p56, %s57, %s58
      %p62 = pneg %p56
      %p63 = scmp.eq.s32.totalorder %s9, 1
      %p64 = por %p62, %p63
      %p65 = scmp.ne.s32.totalorder %s57, %s60
      %p66 = scmp.eq.s32.totalorder %s9, 0
      %p67 = por %p65, %p66
      %p68 = scmp.ne.s32.totalorder %s57, %s60
      %p69 = scmp.eq.s32.totalorder %s14, 1
      %p70 = por %p68, %p69
      %p71 = scmp.ne.s32.totalorder %s60, %s61
      %p72 = scmp.eq.s32.totalorder %s14, 0
      %p73 = por %p71, %p72
      %p74 = scmp.ne.s32.totalorder %s60, %s61
      %p75 = scmp.eq.s32.totalorder %s15, 1
      %p76 = por %p74, %p75
      %p78 = scmp.ne.s32.totalorder %s61, %s77
      %p79 = scmp.eq.s32.totalorder %s15, 0
      %p80 = por %p78, %p79
      %s81 = ssub.s32 %s17, %s24
      %p82 = scmp.eq.s32.totalorder %s81, 0
      %s84 = sadd.s32 %s83, 1
      %s85 = scalar_select %p82, %s83, %s84
      %p88 = pneg %p82
      %p89 = scmp.eq.s32.totalorder %s9, 1
      %p90 = por %p88, %p89
      %p91 = scmp.ne.s32.totalorder %s83, %s86
      %p92 = scmp.eq.s32.totalorder %s9, 0
      %p93 = por %p91, %p92
      %p94 = scmp.ne.s32.totalorder %s83, %s86
      %p95 = scmp.eq.s32.totalorder %s14, 1
      %p96 = por %p94, %p95
      %p97 = scmp.ne.s32.totalorder %s86, %s87
      %p98 = scmp.eq.s32.totalorder %s14, 0
      %p99 = por %p97, %p98
      %p100 = scmp.ne.s32.totalorder %s86, %s87
      %p101 = scmp.eq.s32.totalorder %s15, 1
      %p102 = por %p100, %p101
      %p104 = scmp.ne.s32.totalorder %s87, %s103
      %p105 = scmp.eq.s32.totalorder %s15, 0
      %p106 = por %p104, %p105
      %s107 = ssub.s32 %s16, %s28
      %s108 = ssub.s32 %s17, %s24
      %s109 = sor.u32 %s107, %s108
      %p110 = scmp.eq.s32.totalorder %s109, 0
      %s112 = sadd.s32 %s111, 1
      %s113 = scalar_select %p110, %s111, %s112
      %p116 = pneg %p110
      %p117 = scmp.eq.s32.totalorder %s9, 1
      %p118 = por %p116, %p117
      %p119 = scmp.ne.s32.totalorder %s111, %s114
      %p120 = scmp.eq.s32.totalorder %s9, 0
      %p121 = por %p119, %p120
      %p122 = scmp.ne.s32.totalorder %s111, %s114
      %p123 = scmp.eq.s32.totalorder %s14, 1
      %p124 = por %p122, %p123
      %p125 = scmp.ne.s32.totalorder %s114, %s115
      %p126 = scmp.eq.s32.totalorder %s14, 0
      %p127 = por %p125, %p126
      %p128 = scmp.ne.s32.totalorder %s114, %s115
      %p129 = scmp.eq.s32.totalorder %s15, 1
      %p130 = por %p128, %p129
      %p132 = scmp.ne.s32.totalorder %s115, %s131
      %p133 = scmp.eq.s32.totalorder %s15, 0
      %p134 = por %p132, %p133
      %p135 = scmp.le.s32.totalorder 1, %s9
      %p136 = scmp.lt.s32.totalorder %s9, 3
      %p137 = pnand %p135, %p136
      %p138 = pneg %p137
      // Predicated region
      $region9: #{generator_forward.10} parent=5 // pred_check
        _
      $region10: #{generator_forward.10} parent=5 // pred_check_branch
        %140 = sbr.rel (%p137) target = $region12
      $region11: #{generator_forward.10} parent=5 // pred_region
        %s141 = ssub.s32 %s9, 1
        // Predicated region
        $region13: #{generator_forward.10} parent=11 // pred_check
          %p142 = pneg %p47
        $region14: #{generator_forward.10} parent=11 // pred_check_branch
          %144 = sbr.rel (%p142) target = $region16
        $region15: #{generator_forward.10} parent=11 // pred_region
          %s145 = smul.u32 4, %s18
          %p146 = scmp.lt.s32.totalorder %s145, 3
          %s147 = scalar_select %p146, %s145, 3
          %s148 = smul.addr %s147, 9
          %s149 = smul.addr %s148, 4
          %s150 = scalar_lea.vmem %s0, %s149
          %s151 = smul.u32 4, %s18
        $region16: #{generator_forward.10} parent=11 // pred_fallthru
          _
      $region12: #{generator_forward.10} parent=5 // pred_fallthru
        _
      %p152 = scmp.lt.s32.totalorder %s9, 2
      // Predicated region
      $region17: #{generator_forward.10} parent=5 // pred_check
        %p153 = pneg %p152
      $region18: #{generator_forward.10} parent=5 // pred_check_branch
        %155 = sbr.rel (%p153) target = $region20
      $region19: #{generator_forward.10} parent=5 // pred_region
        // Predicated region
        $region21: #{generator_forward.10} parent=19 // pred_check
          %p156 = pneg %p67
        $region22: #{generator_forward.10} parent=19 // pred_check_branch
          %158 = sbr.rel (%p156) target = $region24
        $region23: #{generator_forward.10} parent=19 // pred_region
          %s159 = sand.u32 %s57, 1
          %s160 = sand.u32 %s57, 1
          %s161 = smul.addr %s160, 576
          %s162 = scalar_lea.vmem [#allocation2], %s161
          %s163 = smul.addr %s17, 4
          %s164 = scalar_lea.vmem %s1, %s163
          // Predicated region
          $region25: #{generator_forward.10} parent=23 // pred_check
            _
          $region26: #{generator_forward.10} parent=23 // pred_check_branch
            %166 = sbr.rel (0) target = $region28
          $region27: #{generator_forward.10} parent=23 // pred_region
            // Predicated region
            $region29: #{generator_forward.10} parent=27 // pred_check
              _
            $region30: #{generator_forward.10} parent=27 // pred_check_branch
              %168 = sbr.rel target = $region32
            $region31: #{generator_forward.10} parent=27 // pred_region
              // Predicated region
              $region44: #{generator_forward.10} parent=31 // pred_check
                _
              $region45: #{generator_forward.10} parent=31 // pred_check_branch
                %469 = sbr.rel (0) target = $region47
              $region46: #{generator_forward.10} parent=31 // pred_region
                loop: start=0, step=1, limit=1
                $region48: #{generator_forward.10} parent=46 // loop_pre_header
                  _
                $region49: #{generator_forward.10} parent=46 // loop_header
                  %s471 = sphi 0, %s475
                  %p472 = scmp.ge.s32.totalorder %s471, 1
                  %s476 = sphi %s164, %s164
                  %s477 = sphi %s162, %s162
                $region50: #{generator_forward.10} parent=46 // loop_header_branch
                  %474 = sbr.rel (%p472) target = $region54
                $region51: #{generator_forward.10} parent=46 // loop_body
                  _
                $region52: #{generator_forward.10} parent=46 // loop_footer
                  %s475 = sadd.s32 1, %s471
                $region53: #{generator_forward.10} parent=46 // loop_footer_branch
                  %470 = sbr.rel target = $region49
                $region54: #{generator_forward.10} parent=46 // loop_exit
                  _
                loop: start=0, step=1, limit=1
                $region55: #{generator_forward.10} parent=46 // loop_pre_header
                  _
                $region56: #{generator_forward.10} parent=46 // loop_header
                  %s480 = sphi 0, %s484
                  %p481 = scmp.ge.s32.totalorder %s480, 1
                  %s485 = sphi %s164, %s164
                  %s486 = sphi %s162, %s162
                $region57: #{generator_forward.10} parent=46 // loop_header_branch
                  %483 = sbr.rel (%p481) target = $region61
                $region58: #{generator_forward.10} parent=46 // loop_body
                  %v487 = vld [vmem:[%s485] sm:$0xf]
                  %488 = vst [vmem:[%s486] sm:$0xf] %v487
                  %v489 = vld [vmem:[%s485 + $0x8] sm:$0xf]
                  %490 = vst [vmem:[%s486 + $0x4] sm:$0xf] %v489
                  %v491 = vld [vmem:[%s485 + $0x10] sm:$0xf]
                  %492 = vst [vmem:[%s486 + $0x8] sm:$0xf] %v491
                  %v493 = vld [vmem:[%s485 + $0x18] sm:$0xf]
                  %494 = vst [vmem:[%s486 + $0xc] sm:$0xf] %v493
                  %v495 = vld [vmem:[%s485 + $0x20] sm:$0xf]
                  %496 = vst [vmem:[%s486 + $0x10] sm:$0xf] %v495
                  %v497 = vld [vmem:[%s485 + $0x28] sm:$0xf]
                  %498 = vst [vmem:[%s486 + $0x14] sm:$0xf] %v497
                  %v499 = vld [vmem:[%s485 + $0x30] sm:$0xf]
                  %500 = vst [vmem:[%s486 + $0x18] sm:$0xf] %v499
                  %v501 = vld [vmem:[%s485 + $0x38] sm:$0xf]
                  %502 = vst [vmem:[%s486 + $0x1c] sm:$0xf] %v501
                  %v503 = vld [vmem:[%s485 + $0x40] sm:$0xf]
                  %504 = vst [vmem:[%s486 + $0x20] sm:$0xf] %v503
                  %v505 = vld [vmem:[%s485 + $0x48] sm:$0xf]
                  %506 = vst [vmem:[%s486 + $0x24] sm:$0xf] %v505
                  %v507 = vld [vmem:[%s485 + $0x50] sm:$0xf]
                  %508 = vst [vmem:[%s486 + $0x28] sm:$0xf] %v507
                  %v509 = vld [vmem:[%s485 + $0x58] sm:$0xf]
                  %510 = vst [vmem:[%s486 + $0x2c] sm:$0xf] %v509
                  %v511 = vld [vmem:[%s485 + $0x60] sm:$0xf]
                  %512 = vst [vmem:[%s486 + $0x30] sm:$0xf] %v511
                  %v513 = vld [vmem:[%s485 + $0x68] sm:$0xf]
                  %514 = vst [vmem:[%s486 + $0x34] sm:$0xf] %v513
                  %v515 = vld [vmem:[%s485 + $0x70] sm:$0xf]
                  %516 = vst [vmem:[%s486 + $0x38] sm:$0xf] %v515
                  %v517 = vld [vmem:[%s485 + $0x78] sm:$0xf]
                  %518 = vst [vmem:[%s486 + $0x3c] sm:$0xf] %v517
                  %v519 = vld [vmem:[%s485 + $0x80] sm:$0xf]
                  %520 = vst [vmem:[%s486 + $0x40] sm:$0xf] %v519
                  %v521 = vld [vmem:[%s485 + $0x88] sm:$0xf]
                  %522 = vst [vmem:[%s486 + $0x44] sm:$0xf] %v521
                  %v523 = vld [vmem:[%s485 + $0x90] sm:$0xf]
                  %524 = vst [vmem:[%s486 + $0x48] sm:$0xf] %v523
                  %v525 = vld [vmem:[%s485 + $0x98] sm:$0xf]
                  %526 = vst [vmem:[%s486 + $0x4c] sm:$0xf] %v525
                  %v527 = vld [vmem:[%s485 + $0xa0] sm:$0xf]
                  %528 = vst [vmem:[%s486 + $0x50] sm:$0xf] %v527
                  %v529 = vld [vmem:[%s485 + $0xa8] sm:$0xf]
                  %530 = vst [vmem:[%s486 + $0x54] sm:$0xf] %v529
                  %v531 = vld [vmem:[%s485 + $0xb0] sm:$0xf]
                  %532 = vst [vmem:[%s486 + $0x58] sm:$0xf] %v531
                  %v533 = vld [vmem:[%s485 + $0xb8] sm:$0xf]
                  %534 = vst [vmem:[%s486 + $0x5c] sm:$0xf] %v533
                  %v535 = vld [vmem:[%s485 + $0xc0] sm:$0xf]
                  %536 = vst [vmem:[%s486 + $0x60] sm:$0xf] %v535
                  %v537 = vld [vmem:[%s485 + $0xc8] sm:$0xf]
                  %538 = vst [vmem:[%s486 + $0x64] sm:$0xf] %v537
                  %v539 = vld [vmem:[%s485 + $0xd0] sm:$0xf]
                  %540 = vst [vmem:[%s486 + $0x68] sm:$0xf] %v539
                  %v541 = vld [vmem:[%s485 + $0xd8] sm:$0xf]
                  %542 = vst [vmem:[%s486 + $0x6c] sm:$0xf] %v541
                  %v543 = vld [vmem:[%s485 + $0xe0] sm:$0xf]
                  %544 = vst [vmem:[%s486 + $0x70] sm:$0xf] %v543
                  %v545 = vld [vmem:[%s485 + $0xe8] sm:$0xf]
                  %546 = vst [vmem:[%s486 + $0x74] sm:$0xf] %v545
                  %v547 = vld [vmem:[%s485 + $0xf0] sm:$0xf]
                  %548 = vst [vmem:[%s486 + $0x78] sm:$0xf] %v547
                  %v549 = vld [vmem:[%s485 + $0xf8] sm:$0xf]
                  %550 = vst [vmem:[%s486 + $0x7c] sm:$0xf] %v549
                  %v551 = vld [vmem:[%s485 + $0x100] sm:$0xf]
                  %552 = vst [vmem:[%s486 + $0x80] sm:$0xf] %v551
                  %v553 = vld [vmem:[%s485 + $0x108] sm:$0xf]
                  %554 = vst [vmem:[%s486 + $0x84] sm:$0xf] %v553
                  %v555 = vld [vmem:[%s485 + $0x110] sm:$0xf]
                  %556 = vst [vmem:[%s486 + $0x88] sm:$0xf] %v555
                  %v557 = vld [vmem:[%s485 + $0x118] sm:$0xf]
                  %558 = vst [vmem:[%s486 + $0x8c] sm:$0xf] %v557
                  %v559 = vld [vmem:[%s485 + $0x120] sm:$0xf]
                  %560 = vst [vmem:[%s486 + $0x90] sm:$0xf] %v559
                  %v561 = vld [vmem:[%s485 + $0x128] sm:$0xf]
                  %562 = vst [vmem:[%s486 + $0x94] sm:$0xf] %v561
                  %v563 = vld [vmem:[%s485 + $0x130] sm:$0xf]
                  %564 = vst [vmem:[%s486 + $0x98] sm:$0xf] %v563
                  %v565 = vld [vmem:[%s485 + $0x138] sm:$0xf]
                  %566 = vst [vmem:[%s486 + $0x9c] sm:$0xf] %v565
                  %v567 = vld [vmem:[%s485 + $0x140] sm:$0xf]
                  %568 = vst [vmem:[%s486 + $0xa0] sm:$0xf] %v567
                  %v569 = vld [vmem:[%s485 + $0x148] sm:$0xf]
                  %570 = vst [vmem:[%s486 + $0xa4] sm:$0xf] %v569
                  %v571 = vld [vmem:[%s485 + $0x150] sm:$0xf]
                  %572 = vst [vmem:[%s486 + $0xa8] sm:$0xf] %v571
                  %v573 = vld [vmem:[%s485 + $0x158] sm:$0xf]
                  %574 = vst [vmem:[%s486 + $0xac] sm:$0xf] %v573
                  %v575 = vld [vmem:[%s485 + $0x160] sm:$0xf]
                  %576 = vst [vmem:[%s486 + $0xb0] sm:$0xf] %v575
                  %v577 = vld [vmem:[%s485 + $0x168] sm:$0xf]
                  %578 = vst [vmem:[%s486 + $0xb4] sm:$0xf] %v577
                  %v579 = vld [vmem:[%s485 + $0x170] sm:$0xf]
                  %580 = vst [vmem:[%s486 + $0xb8] sm:$0xf] %v579
                  %v581 = vld [vmem:[%s485 + $0x178] sm:$0xf]
                  %582 = vst [vmem:[%s486 + $0xbc] sm:$0xf] %v581
                  %v583 = vld [vmem:[%s485 + $0x180] sm:$0xf]
                  %584 = vst [vmem:[%s486 + $0xc0] sm:$0xf] %v583
                  %v585 = vld [vmem:[%s485 + $0x188] sm:$0xf]
                  %586 = vst [vmem:[%s486 + $0xc4] sm:$0xf] %v585
                  %v587 = vld [vmem:[%s485 + $0x190] sm:$0xf]
                  %588 = vst [vmem:[%s486 + $0xc8] sm:$0xf] %v587
                  %v589 = vld [vmem:[%s485 + $0x198] sm:$0xf]
                  %590 = vst [vmem:[%s486 + $0xcc] sm:$0xf] %v589
                  %v591 = vld [vmem:[%s485 + $0x1a0] sm:$0xf]
                  %592 = vst [vmem:[%s486 + $0xd0] sm:$0xf] %v591
                  %v593 = vld [vmem:[%s485 + $0x1a8] sm:$0xf]
                  %594 = vst [vmem:[%s486 + $0xd4] sm:$0xf] %v593
                  %v595 = vld [vmem:[%s485 + $0x1b0] sm:$0xf]
                  %596 = vst [vmem:[%s486 + $0xd8] sm:$0xf] %v595
                  %v597 = vld [vmem:[%s485 + $0x1b8] sm:$0xf]
                  %598 = vst [vmem:[%s486 + $0xdc] sm:$0xf] %v597
                  %v599 = vld [vmem:[%s485 + $0x1c0] sm:$0xf]
                  %600 = vst [vmem:[%s486 + $0xe0] sm:$0xf] %v599
                  %v601 = vld [vmem:[%s485 + $0x1c8] sm:$0xf]
                  %602 = vst [vmem:[%s486 + $0xe4] sm:$0xf] %v601
                  %v603 = vld [vmem:[%s485 + $0x1d0] sm:$0xf]
                  %604 = vst [vmem:[%s486 + $0xe8] sm:$0xf] %v603
                  %v605 = vld [vmem:[%s485 + $0x1d8] sm:$0xf]
                  %606 = vst [vmem:[%s486 + $0xec] sm:$0xf] %v605
                  %v607 = vld [vmem:[%s485 + $0x1e0] sm:$0xf]
                  %608 = vst [vmem:[%s486 + $0xf0] sm:$0xf] %v607
                  %v609 = vld [vmem:[%s485 + $0x1e8] sm:$0xf]
                  %610 = vst [vmem:[%s486 + $0xf4] sm:$0xf] %v609
                  %v611 = vld [vmem:[%s485 + $0x1f0] sm:$0xf]
                  %612 = vst [vmem:[%s486 + $0xf8] sm:$0xf] %v611
                  %v613 = vld [vmem:[%s485 + $0x1f8] sm:$0xf]
                  %614 = vst [vmem:[%s486 + $0xfc] sm:$0xf] %v613
                  %v615 = vld [vmem:[%s485 + $0x200] sm:$0xf]
                  %616 = vst [vmem:[%s486 + $0x100] sm:$0xf] %v615
                  %v617 = vld [vmem:[%s485 + $0x208] sm:$0xf]
                  %618 = vst [vmem:[%s486 + $0x104] sm:$0xf] %v617
                  %v619 = vld [vmem:[%s485 + $0x210] sm:$0xf]
                  %620 = vst [vmem:[%s486 + $0x108] sm:$0xf] %v619
                  %v621 = vld [vmem:[%s485 + $0x218] sm:$0xf]
                  %622 = vst [vmem:[%s486 + $0x10c] sm:$0xf] %v621
                  %v623 = vld [vmem:[%s485 + $0x220] sm:$0xf]
                  %624 = vst [vmem:[%s486 + $0x110] sm:$0xf] %v623
                  %v625 = vld [vmem:[%s485 + $0x228] sm:$0xf]
                  %626 = vst [vmem:[%s486 + $0x114] sm:$0xf] %v625
                  %v627 = vld [vmem:[%s485 + $0x230] sm:$0xf]
                  %628 = vst [vmem:[%s486 + $0x118] sm:$0xf] %v627
                  %v629 = vld [vmem:[%s485 + $0x238] sm:$0xf]
                  %630 = vst [vmem:[%s486 + $0x11c] sm:$0xf] %v629
                  %v631 = vld [vmem:[%s485 + $0x240] sm:$0xf]
                  %632 = vst [vmem:[%s486 + $0x120] sm:$0xf] %v631
                  %v633 = vld [vmem:[%s485 + $0x248] sm:$0xf]
                  %634 = vst [vmem:[%s486 + $0x124] sm:$0xf] %v633
                  %v635 = vld [vmem:[%s485 + $0x250] sm:$0xf]
                  %636 = vst [vmem:[%s486 + $0x128] sm:$0xf] %v635
                  %v637 = vld [vmem:[%s485 + $0x258] sm:$0xf]
                  %638 = vst [vmem:[%s486 + $0x12c] sm:$0xf] %v637
                  %v639 = vld [vmem:[%s485 + $0x260] sm:$0xf]
                  %640 = vst [vmem:[%s486 + $0x130] sm:$0xf] %v639
                  %v641 = vld [vmem:[%s485 + $0x268] sm:$0xf]
                  %642 = vst [vmem:[%s486 + $0x134] sm:$0xf] %v641
                  %v643 = vld [vmem:[%s485 + $0x270] sm:$0xf]
                  %644 = vst [vmem:[%s486 + $0x138] sm:$0xf] %v643
                  %v645 = vld [vmem:[%s485 + $0x278] sm:$0xf]
                  %646 = vst [vmem:[%s486 + $0x13c] sm:$0xf] %v645
                  %v647 = vld [vmem:[%s485 + $0x280] sm:$0xf]
                  %648 = vst [vmem:[%s486 + $0x140] sm:$0xf] %v647
                  %v649 = vld [vmem:[%s485 + $0x288] sm:$0xf]
                  %650 = vst [vmem:[%s486 + $0x144] sm:$0xf] %v649
                  %v651 = vld [vmem:[%s485 + $0x290] sm:$0xf]
                  %652 = vst [vmem:[%s486 + $0x148] sm:$0xf] %v651
                  %v653 = vld [vmem:[%s485 + $0x298] sm:$0xf]
                  %654 = vst [vmem:[%s486 + $0x14c] sm:$0xf] %v653
                  %v655 = vld [vmem:[%s485 + $0x2a0] sm:$0xf]
                  %656 = vst [vmem:[%s486 + $0x150] sm:$0xf] %v655
                  %v657 = vld [vmem:[%s485 + $0x2a8] sm:$0xf]
                  %658 = vst [vmem:[%s486 + $0x154] sm:$0xf] %v657
                  %v659 = vld [vmem:[%s485 + $0x2b0] sm:$0xf]
                  %660 = vst [vmem:[%s486 + $0x158] sm:$0xf] %v659
                  %v661 = vld [vmem:[%s485 + $0x2b8] sm:$0xf]
                  %662 = vst [vmem:[%s486 + $0x15c] sm:$0xf] %v661
                  %v663 = vld [vmem:[%s485 + $0x2c0] sm:$0xf]
                  %664 = vst [vmem:[%s486 + $0x160] sm:$0xf] %v663
                  %v665 = vld [vmem:[%s485 + $0x2c8] sm:$0xf]
                  %666 = vst [vmem:[%s486 + $0x164] sm:$0xf] %v665
                  %v667 = vld [vmem:[%s485 + $0x2d0] sm:$0xf]
                  %668 = vst [vmem:[%s486 + $0x168] sm:$0xf] %v667
                  %v669 = vld [vmem:[%s485 + $0x2d8] sm:$0xf]
                  %670 = vst [vmem:[%s486 + $0x16c] sm:$0xf] %v669
                  %v671 = vld [vmem:[%s485 + $0x2e0] sm:$0xf]
                  %672 = vst [vmem:[%s486 + $0x170] sm:$0xf] %v671
                  %v673 = vld [vmem:[%s485 + $0x2e8] sm:$0xf]
                  %674 = vst [vmem:[%s486 + $0x174] sm:$0xf] %v673
                  %v675 = vld [vmem:[%s485 + $0x2f0] sm:$0xf]
                  %676 = vst [vmem:[%s486 + $0x178] sm:$0xf] %v675
                  %v677 = vld [vmem:[%s485 + $0x2f8] sm:$0xf]
                  %678 = vst [vmem:[%s486 + $0x17c] sm:$0xf] %v677
                  %v679 = vld [vmem:[%s485 + $0x300] sm:$0xf]
                  %680 = vst [vmem:[%s486 + $0x180] sm:$0xf] %v679
                  %v681 = vld [vmem:[%s485 + $0x308] sm:$0xf]
                  %682 = vst [vmem:[%s486 + $0x184] sm:$0xf] %v681
                  %v683 = vld [vmem:[%s485 + $0x310] sm:$0xf]
                  %684 = vst [vmem:[%s486 + $0x188] sm:$0xf] %v683
                  %v685 = vld [vmem:[%s485 + $0x318] sm:$0xf]
                  %686 = vst [vmem:[%s486 + $0x18c] sm:$0xf] %v685
                  %v687 = vld [vmem:[%s485 + $0x320] sm:$0xf]
                  %688 = vst [vmem:[%s486 + $0x190] sm:$0xf] %v687
                  %v689 = vld [vmem:[%s485 + $0x328] sm:$0xf]
                  %690 = vst [vmem:[%s486 + $0x194] sm:$0xf] %v689
                  %v691 = vld [vmem:[%s485 + $0x330] sm:$0xf]
                  %692 = vst [vmem:[%s486 + $0x198] sm:$0xf] %v691
                  %v693 = vld [vmem:[%s485 + $0x338] sm:$0xf]
                  %694 = vst [vmem:[%s486 + $0x19c] sm:$0xf] %v693
                  %v695 = vld [vmem:[%s485 + $0x340] sm:$0xf]
                  %696 = vst [vmem:[%s486 + $0x1a0] sm:$0xf] %v695
                  %v697 = vld [vmem:[%s485 + $0x348] sm:$0xf]
                  %698 = vst [vmem:[%s486 + $0x1a4] sm:$0xf] %v697
                  %v699 = vld [vmem:[%s485 + $0x350] sm:$0xf]
                  %700 = vst [vmem:[%s486 + $0x1a8] sm:$0xf] %v699
                  %v701 = vld [vmem:[%s485 + $0x358] sm:$0xf]
                  %702 = vst [vmem:[%s486 + $0x1ac] sm:$0xf] %v701
                  %v703 = vld [vmem:[%s485 + $0x360] sm:$0xf]
                  %704 = vst [vmem:[%s486 + $0x1b0] sm:$0xf] %v703
                  %v705 = vld [vmem:[%s485 + $0x368] sm:$0xf]
                  %706 = vst [vmem:[%s486 + $0x1b4] sm:$0xf] %v705
                  %v707 = vld [vmem:[%s485 + $0x370] sm:$0xf]
                  %708 = vst [vmem:[%s486 + $0x1b8] sm:$0xf] %v707
                  %v709 = vld [vmem:[%s485 + $0x378] sm:$0xf]
                  %710 = vst [vmem:[%s486 + $0x1bc] sm:$0xf] %v709
                  %v711 = vld [vmem:[%s485 + $0x380] sm:$0xf]
                  %712 = vst [vmem:[%s486 + $0x1c0] sm:$0xf] %v711
                  %v713 = vld [vmem:[%s485 + $0x388] sm:$0xf]
                  %714 = vst [vmem:[%s486 + $0x1c4] sm:$0xf] %v713
                  %v715 = vld [vmem:[%s485 + $0x390] sm:$0xf]
                  %716 = vst [vmem:[%s486 + $0x1c8] sm:$0xf] %v715
                  %v717 = vld [vmem:[%s485 + $0x398] sm:$0xf]
                  %718 = vst [vmem:[%s486 + $0x1cc] sm:$0xf] %v717
                  %v719 = vld [vmem:[%s485 + $0x3a0] sm:$0xf]
                  %720 = vst [vmem:[%s486 + $0x1d0] sm:$0xf] %v719
                  %v721 = vld [vmem:[%s485 + $0x3a8] sm:$0xf]
                  %722 = vst [vmem:[%s486 + $0x1d4] sm:$0xf] %v721
                  %v723 = vld [vmem:[%s485 + $0x3b0] sm:$0xf]
                  %724 = vst [vmem:[%s486 + $0x1d8] sm:$0xf] %v723
                  %v725 = vld [vmem:[%s485 + $0x3b8] sm:$0xf]
                  %726 = vst [vmem:[%s486 + $0x1dc] sm:$0xf] %v725
                  %v727 = vld [vmem:[%s485 + $0x3c0] sm:$0xf]
                  %728 = vst [vmem:[%s486 + $0x1e0] sm:$0xf] %v727
                  %v729 = vld [vmem:[%s485 + $0x3c8] sm:$0xf]
                  %730 = vst [vmem:[%s486 + $0x1e4] sm:$0xf] %v729
                  %v731 = vld [vmem:[%s485 + $0x3d0] sm:$0xf]
                  %732 = vst [vmem:[%s486 + $0x1e8] sm:$0xf] %v731
                  %v733 = vld [vmem:[%s485 + $0x3d8] sm:$0xf]
                  %734 = vst [vmem:[%s486 + $0x1ec] sm:$0xf] %v733
                  %v735 = vld [vmem:[%s485 + $0x3e0] sm:$0xf]
                  %736 = vst [vmem:[%s486 + $0x1f0] sm:$0xf] %v735
                  %v737 = vld [vmem:[%s485 + $0x3e8] sm:$0xf]
                  %738 = vst [vmem:[%s486 + $0x1f4] sm:$0xf] %v737
                  %v739 = vld [vmem:[%s485 + $0x3f0] sm:$0xf]
                  %740 = vst [vmem:[%s486 + $0x1f8] sm:$0xf] %v739
                  %v741 = vld [vmem:[%s485 + $0x3f8] sm:$0xf]
                  %742 = vst [vmem:[%s486 + $0x1fc] sm:$0xf] %v741
                  %v743 = vld [vmem:[%s485 + $0x400] sm:$0xf]
                  %744 = vst [vmem:[%s486 + $0x200] sm:$0xf] %v743
                  %v745 = vld [vmem:[%s485 + $0x408] sm:$0xf]
                  %746 = vst [vmem:[%s486 + $0x204] sm:$0xf] %v745
                  %v747 = vld [vmem:[%s485 + $0x410] sm:$0xf]
                  %748 = vst [vmem:[%s486 + $0x208] sm:$0xf] %v747
                  %v749 = vld [vmem:[%s485 + $0x418] sm:$0xf]
                  %750 = vst [vmem:[%s486 + $0x20c] sm:$0xf] %v749
                  %v751 = vld [vmem:[%s485 + $0x420] sm:$0xf]
                  %752 = vst [vmem:[%s486 + $0x210] sm:$0xf] %v751
                  %v753 = vld [vmem:[%s485 + $0x428] sm:$0xf]
                  %754 = vst [vmem:[%s486 + $0x214] sm:$0xf] %v753
                  %v755 = vld [vmem:[%s485 + $0x430] sm:$0xf]
                  %756 = vst [vmem:[%s486 + $0x218] sm:$0xf] %v755
                  %v757 = vld [vmem:[%s485 + $0x438] sm:$0xf]
                  %758 = vst [vmem:[%s486 + $0x21c] sm:$0xf] %v757
                  %v759 = vld [vmem:[%s485 + $0x440] sm:$0xf]
                  %760 = vst [vmem:[%s486 + $0x220] sm:$0xf] %v759
                  %v761 = vld [vmem:[%s485 + $0x448] sm:$0xf]
                  %762 = vst [vmem:[%s486 + $0x224] sm:$0xf] %v761
                  %v763 = vld [vmem:[%s485 + $0x450] sm:$0xf]
                  %764 = vst [vmem:[%s486 + $0x228] sm:$0xf] %v763
                  %v765 = vld [vmem:[%s485 + $0x458] sm:$0xf]
                  %766 = vst [vmem:[%s486 + $0x22c] sm:$0xf] %v765
                  %v767 = vld [vmem:[%s485 + $0x460] sm:$0xf]
                  %768 = vst [vmem:[%s486 + $0x230] sm:$0xf] %v767
                  %v769 = vld [vmem:[%s485 + $0x468] sm:$0xf]
                  %770 = vst [vmem:[%s486 + $0x234] sm:$0xf] %v769
                  %v771 = vld [vmem:[%s485 + $0x470] sm:$0xf]
                  %772 = vst [vmem:[%s486 + $0x238] sm:$0xf] %v771
                  %v773 = vld [vmem:[%s485 + $0x478] sm:$0xf]
                  %774 = vst [vmem:[%s486 + $0x23c] sm:$0xf] %v773
                $region59: #{generator_forward.10} parent=46 // loop_footer
                  %s484 = sadd.s32 1, %s480
                $region60: #{generator_forward.10} parent=46 // loop_footer_branch
                  %479 = sbr.rel target = $region56
                $region61: #{generator_forward.10} parent=46 // loop_exit
                  _
              $region47: #{generator_forward.10} parent=31 // pred_fallthru
                _
            $region32: #{generator_forward.10} parent=27 // pred_fallthru
              _
            // Predicated region
            $region33: #{generator_forward.10} parent=27 // pred_check
              _
            $region34: #{generator_forward.10} parent=27 // pred_check_branch
              %170 = sbr.rel (0) target = $region36
            $region35: #{generator_forward.10} parent=27 // pred_region
              loop: start=0, step=1, limit=1
              $region37: #{generator_forward.10} parent=35 // loop_pre_header
                _
              $region38: #{generator_forward.10} parent=35 // loop_header
                %s173 = sphi 0, %s177
                %p174 = scmp.ge.s32.totalorder %s173, 1
                %s178 = sphi %s164, %s164
                %s179 = sphi %s162, %s162
              $region39: #{generator_forward.10} parent=35 // loop_header_branch
                %176 = sbr.rel (%p174) target = $region43
              $region40: #{generator_forward.10} parent=35 // loop_body
                %v180 = vld [vmem:[%s178] sm:$0xf]
                %181 = vst [vmem:[%s179] sm:$0xf] %v180
                %v182 = vld [vmem:[%s178 + $0x8] sm:$0xf]
                %183 = vst [vmem:[%s179 + $0x4] sm:$0xf] %v182
                %v184 = vld [vmem:[%s178 + $0x10] sm:$0xf]
                %185 = vst [vmem:[%s179 + $0x8] sm:$0xf] %v184
                %v186 = vld [vmem:[%s178 + $0x18] sm:$0xf]
                %187 = vst [vmem:[%s179 + $0xc] sm:$0xf] %v186
                %v188 = vld [vmem:[%s178 + $0x20] sm:$0xf]
                %189 = vst [vmem:[%s179 + $0x10] sm:$0xf] %v188
                %v190 = vld [vmem:[%s178 + $0x28] sm:$0xf]
                %191 = vst [vmem:[%s179 + $0x14] sm:$0xf] %v190
                %v192 = vld [vmem:[%s178 + $0x30] sm:$0xf]
                %193 = vst [vmem:[%s179 + $0x18] sm:$0xf] %v192
                %v194 = vld [vmem:[%s178 + $0x38] sm:$0xf]
                %195 = vst [vmem:[%s179 + $0x1c] sm:$0xf] %v194
                %v196 = vld [vmem:[%s178 + $0x40] sm:$0xf]
                %197 = vst [vmem:[%s179 + $0x20] sm:$0xf] %v196
                %v198 = vld [vmem:[%s178 + $0x48] sm:$0xf]
                %199 = vst [vmem:[%s179 + $0x24] sm:$0xf] %v198
                %v200 = vld [vmem:[%s178 + $0x50] sm:$0xf]
                %201 = vst [vmem:[%s179 + $0x28] sm:$0xf] %v200
                %v202 = vld [vmem:[%s178 + $0x58] sm:$0xf]
                %203 = vst [vmem:[%s179 + $0x2c] sm:$0xf] %v202
                %v204 = vld [vmem:[%s178 + $0x60] sm:$0xf]
                %205 = vst [vmem:[%s179 + $0x30] sm:$0xf] %v204
                %v206 = vld [vmem:[%s178 + $0x68] sm:$0xf]
                %207 = vst [vmem:[%s179 + $0x34] sm:$0xf] %v206
                %v208 = vld [vmem:[%s178 + $0x70] sm:$0xf]
                %209 = vst [vmem:[%s179 + $0x38] sm:$0xf] %v208
                %v210 = vld [vmem:[%s178 + $0x78] sm:$0xf]
                %211 = vst [vmem:[%s179 + $0x3c] sm:$0xf] %v210
                %v212 = vld [vmem:[%s178 + $0x80] sm:$0xf]
                %213 = vst [vmem:[%s179 + $0x40] sm:$0xf] %v212
                %v214 = vld [vmem:[%s178 + $0x88] sm:$0xf]
                %215 = vst [vmem:[%s179 + $0x44] sm:$0xf] %v214
                %v216 = vld [vmem:[%s178 + $0x90] sm:$0xf]
                %217 = vst [vmem:[%s179 + $0x48] sm:$0xf] %v216
                %v218 = vld [vmem:[%s178 + $0x98] sm:$0xf]
                %219 = vst [vmem:[%s179 + $0x4c] sm:$0xf] %v218
                %v220 = vld [vmem:[%s178 + $0xa0] sm:$0xf]
                %221 = vst [vmem:[%s179 + $0x50] sm:$0xf] %v220
                %v222 = vld [vmem:[%s178 + $0xa8] sm:$0xf]
                %223 = vst [vmem:[%s179 + $0x54] sm:$0xf] %v222
                %v224 = vld [vmem:[%s178 + $0xb0] sm:$0xf]
                %225 = vst [vmem:[%s179 + $0x58] sm:$0xf] %v224
                %v226 = vld [vmem:[%s178 + $0xb8] sm:$0xf]
                %227 = vst [vmem:[%s179 + $0x5c] sm:$0xf] %v226
                %v228 = vld [vmem:[%s178 + $0xc0] sm:$0xf]
                %229 = vst [vmem:[%s179 + $0x60] sm:$0xf] %v228
                %v230 = vld [vmem:[%s178 + $0xc8] sm:$0xf]
                %231 = vst [vmem:[%s179 + $0x64] sm:$0xf] %v230
                %v232 = vld [vmem:[%s178 + $0xd0] sm:$0xf]
                %233 = vst [vmem:[%s179 + $0x68] sm:$0xf] %v232
                %v234 = vld [vmem:[%s178 + $0xd8] sm:$0xf]
                %235 = vst [vmem:[%s179 + $0x6c] sm:$0xf] %v234
                %v236 = vld [vmem:[%s178 + $0xe0] sm:$0xf]
                %237 = vst [vmem:[%s179 + $0x70] sm:$0xf] %v236
                %v238 = vld [vmem:[%s178 + $0xe8] sm:$0xf]
                %239 = vst [vmem:[%s179 + $0x74] sm:$0xf] %v238
                %v240 = vld [vmem:[%s178 + $0xf0] sm:$0xf]
                %241 = vst [vmem:[%s179 + $0x78] sm:$0xf] %v240
                %v242 = vld [vmem:[%s178 + $0xf8] sm:$0xf]
                %243 = vst [vmem:[%s179 + $0x7c] sm:$0xf] %v242
                %v244 = vld [vmem:[%s178 + $0x100] sm:$0xf]
                %245 = vst [vmem:[%s179 + $0x80] sm:$0xf] %v244
                %v246 = vld [vmem:[%s178 + $0x108] sm:$0xf]
                %247 = vst [vmem:[%s179 + $0x84] sm:$0xf] %v246
                %v248 = vld [vmem:[%s178 + $0x110] sm:$0xf]
                %249 = vst [vmem:[%s179 + $0x88] sm:$0xf] %v248
                %v250 = vld [vmem:[%s178 + $0x118] sm:$0xf]
                %251 = vst [vmem:[%s179 + $0x8c] sm:$0xf] %v250
                %v252 = vld [vmem:[%s178 + $0x120] sm:$0xf]
                %253 = vst [vmem:[%s179 + $0x90] sm:$0xf] %v252
                %v254 = vld [vmem:[%s178 + $0x128] sm:$0xf]
                %255 = vst [vmem:[%s179 + $0x94] sm:$0xf] %v254
                %v256 = vld [vmem:[%s178 + $0x130] sm:$0xf]
                %257 = vst [vmem:[%s179 + $0x98] sm:$0xf] %v256
                %v258 = vld [vmem:[%s178 + $0x138] sm:$0xf]
                %259 = vst [vmem:[%s179 + $0x9c] sm:$0xf] %v258
                %v260 = vld [vmem:[%s178 + $0x140] sm:$0xf]
                %261 = vst [vmem:[%s179 + $0xa0] sm:$0xf] %v260
                %v262 = vld [vmem:[%s178 + $0x148] sm:$0xf]
                %263 = vst [vmem:[%s179 + $0xa4] sm:$0xf] %v262
                %v264 = vld [vmem:[%s178 + $0x150] sm:$0xf]
                %265 = vst [vmem:[%s179 + $0xa8] sm:$0xf] %v264
                %v266 = vld [vmem:[%s178 + $0x158] sm:$0xf]
                %267 = vst [vmem:[%s179 + $0xac] sm:$0xf] %v266
                %v268 = vld [vmem:[%s178 + $0x160] sm:$0xf]
                %269 = vst [vmem:[%s179 + $0xb0] sm:$0xf] %v268
                %v270 = vld [vmem:[%s178 + $0x168] sm:$0xf]
                %271 = vst [vmem:[%s179 + $0xb4] sm:$0xf] %v270
                %v272 = vld [vmem:[%s178 + $0x170] sm:$0xf]
                %273 = vst [vmem:[%s179 + $0xb8] sm:$0xf] %v272
                %v274 = vld [vmem:[%s178 + $0x178] sm:$0xf]
                %275 = vst [vmem:[%s179 + $0xbc] sm:$0xf] %v274
                %v276 = vld [vmem:[%s178 + $0x180] sm:$0xf]
                %277 = vst [vmem:[%s179 + $0xc0] sm:$0xf] %v276
                %v278 = vld [vmem:[%s178 + $0x188] sm:$0xf]
                %279 = vst [vmem:[%s179 + $0xc4] sm:$0xf] %v278
                %v280 = vld [vmem:[%s178 + $0x190] sm:$0xf]
                %281 = vst [vmem:[%s179 + $0xc8] sm:$0xf] %v280
                %v282 = vld [vmem:[%s178 + $0x198] sm:$0xf]
                %283 = vst [vmem:[%s179 + $0xcc] sm:$0xf] %v282
                %v284 = vld [vmem:[%s178 + $0x1a0] sm:$0xf]
                %285 = vst [vmem:[%s179 + $0xd0] sm:$0xf] %v284
                %v286 = vld [vmem:[%s178 + $0x1a8] sm:$0xf]
                %287 = vst [vmem:[%s179 + $0xd4] sm:$0xf] %v286
                %v288 = vld [vmem:[%s178 + $0x1b0] sm:$0xf]
                %289 = vst [vmem:[%s179 + $0xd8] sm:$0xf] %v288
                %v290 = vld [vmem:[%s178 + $0x1b8] sm:$0xf]
                %291 = vst [vmem:[%s179 + $0xdc] sm:$0xf] %v290
                %v292 = vld [vmem:[%s178 + $0x1c0] sm:$0xf]
                %293 = vst [vmem:[%s179 + $0xe0] sm:$0xf] %v292
                %v294 = vld [vmem:[%s178 + $0x1c8] sm:$0xf]
                %295 = vst [vmem:[%s179 + $0xe4] sm:$0xf] %v294
                %v296 = vld [vmem:[%s178 + $0x1d0] sm:$0xf]
                %297 = vst [vmem:[%s179 + $0xe8] sm:$0xf] %v296
                %v298 = vld [vmem:[%s178 + $0x1d8] sm:$0xf]
                %299 = vst [vmem:[%s179 + $0xec] sm:$0xf] %v298
                %v300 = vld [vmem:[%s178 + $0x1e0] sm:$0xf]
                %301 = vst [vmem:[%s179 + $0xf0] sm:$0xf] %v300
                %v302 = vld [vmem:[%s178 + $0x1e8] sm:$0xf]
                %303 = vst [vmem:[%s179 + $0xf4] sm:$0xf] %v302
                %v304 = vld [vmem:[%s178 + $0x1f0] sm:$0xf]
                %305 = vst [vmem:[%s179 + $0xf8] sm:$0xf] %v304
                %v306 = vld [vmem:[%s178 + $0x1f8] sm:$0xf]
                %307 = vst [vmem:[%s179 + $0xfc] sm:$0xf] %v306
                %v308 = vld [vmem:[%s178 + $0x200] sm:$0xf]
                %309 = vst [vmem:[%s179 + $0x100] sm:$0xf] %v308
                %v310 = vld [vmem:[%s178 + $0x208] sm:$0xf]
                %311 = vst [vmem:[%s179 + $0x104] sm:$0xf] %v310
                %v312 = vld [vmem:[%s178 + $0x210] sm:$0xf]
                %313 = vst [vmem:[%s179 + $0x108] sm:$0xf] %v312
                %v314 = vld [vmem:[%s178 + $0x218] sm:$0xf]
                %315 = vst [vmem:[%s179 + $0x10c] sm:$0xf] %v314
                %v316 = vld [vmem:[%s178 + $0x220] sm:$0xf]
                %317 = vst [vmem:[%s179 + $0x110] sm:$0xf] %v316
                %v318 = vld [vmem:[%s178 + $0x228] sm:$0xf]
                %319 = vst [vmem:[%s179 + $0x114] sm:$0xf] %v318
                %v320 = vld [vmem:[%s178 + $0x230] sm:$0xf]
                %321 = vst [vmem:[%s179 + $0x118] sm:$0xf] %v320
                %v322 = vld [vmem:[%s178 + $0x238] sm:$0xf]
                %323 = vst [vmem:[%s179 + $0x11c] sm:$0xf] %v322
                %v324 = vld [vmem:[%s178 + $0x240] sm:$0xf]
                %325 = vst [vmem:[%s179 + $0x120] sm:$0xf] %v324
                %v326 = vld [vmem:[%s178 + $0x248] sm:$0xf]
                %327 = vst [vmem:[%s179 + $0x124] sm:$0xf] %v326
                %v328 = vld [vmem:[%s178 + $0x250] sm:$0xf]
                %329 = vst [vmem:[%s179 + $0x128] sm:$0xf] %v328
                %v330 = vld [vmem:[%s178 + $0x258] sm:$0xf]
                %331 = vst [vmem:[%s179 + $0x12c] sm:$0xf] %v330
                %v332 = vld [vmem:[%s178 + $0x260] sm:$0xf]
                %333 = vst [vmem:[%s179 + $0x130] sm:$0xf] %v332
                %v334 = vld [vmem:[%s178 + $0x268] sm:$0xf]
                %335 = vst [vmem:[%s179 + $0x134] sm:$0xf] %v334
                %v336 = vld [vmem:[%s178 + $0x270] sm:$0xf]
                %337 = vst [vmem:[%s179 + $0x138] sm:$0xf] %v336
                %v338 = vld [vmem:[%s178 + $0x278] sm:$0xf]
                %339 = vst [vmem:[%s179 + $0x13c] sm:$0xf] %v338
                %v340 = vld [vmem:[%s178 + $0x280] sm:$0xf]
                %341 = vst [vmem:[%s179 + $0x140] sm:$0xf] %v340
                %v342 = vld [vmem:[%s178 + $0x288] sm:$0xf]
                %343 = vst [vmem:[%s179 + $0x144] sm:$0xf] %v342
                %v344 = vld [vmem:[%s178 + $0x290] sm:$0xf]
                %345 = vst [vmem:[%s179 + $0x148] sm:$0xf] %v344
                %v346 = vld [vmem:[%s178 + $0x298] sm:$0xf]
                %347 = vst [vmem:[%s179 + $0x14c] sm:$0xf] %v346
                %v348 = vld [vmem:[%s178 + $0x2a0] sm:$0xf]
                %349 = vst [vmem:[%s179 + $0x150] sm:$0xf] %v348
                %v350 = vld [vmem:[%s178 + $0x2a8] sm:$0xf]
                %351 = vst [vmem:[%s179 + $0x154] sm:$0xf] %v350
                %v352 = vld [vmem:[%s178 + $0x2b0] sm:$0xf]
                %353 = vst [vmem:[%s179 + $0x158] sm:$0xf] %v352
                %v354 = vld [vmem:[%s178 + $0x2b8] sm:$0xf]
                %355 = vst [vmem:[%s179 + $0x15c] sm:$0xf] %v354
                %v356 = vld [vmem:[%s178 + $0x2c0] sm:$0xf]
                %357 = vst [vmem:[%s179 + $0x160] sm:$0xf] %v356
                %v358 = vld [vmem:[%s178 + $0x2c8] sm:$0xf]
                %359 = vst [vmem:[%s179 + $0x164] sm:$0xf] %v358
                %v360 = vld [vmem:[%s178 + $0x2d0] sm:$0xf]
                %361 = vst [vmem:[%s179 + $0x168] sm:$0xf] %v360
                %v362 = vld [vmem:[%s178 + $0x2d8] sm:$0xf]
                %363 = vst [vmem:[%s179 + $0x16c] sm:$0xf] %v362
                %v364 = vld [vmem:[%s178 + $0x2e0] sm:$0xf]
                %365 = vst [vmem:[%s179 + $0x170] sm:$0xf] %v364
                %v366 = vld [vmem:[%s178 + $0x2e8] sm:$0xf]
                %367 = vst [vmem:[%s179 + $0x174] sm:$0xf] %v366
                %v368 = vld [vmem:[%s178 + $0x2f0] sm:$0xf]
                %369 = vst [vmem:[%s179 + $0x178] sm:$0xf] %v368
                %v370 = vld [vmem:[%s178 + $0x2f8] sm:$0xf]
                %371 = vst [vmem:[%s179 + $0x17c] sm:$0xf] %v370
                %v372 = vld [vmem:[%s178 + $0x300] sm:$0xf]
                %373 = vst [vmem:[%s179 + $0x180] sm:$0xf] %v372
                %v374 = vld [vmem:[%s178 + $0x308] sm:$0xf]
                %375 = vst [vmem:[%s179 + $0x184] sm:$0xf] %v374
                %v376 = vld [vmem:[%s178 + $0x310] sm:$0xf]
                %377 = vst [vmem:[%s179 + $0x188] sm:$0xf] %v376
                %v378 = vld [vmem:[%s178 + $0x318] sm:$0xf]
                %379 = vst [vmem:[%s179 + $0x18c] sm:$0xf] %v378
                %v380 = vld [vmem:[%s178 + $0x320] sm:$0xf]
                %381 = vst [vmem:[%s179 + $0x190] sm:$0xf] %v380
                %v382 = vld [vmem:[%s178 + $0x328] sm:$0xf]
                %383 = vst [vmem:[%s179 + $0x194] sm:$0xf] %v382
                %v384 = vld [vmem:[%s178 + $0x330] sm:$0xf]
                %385 = vst [vmem:[%s179 + $0x198] sm:$0xf] %v384
                %v386 = vld [vmem:[%s178 + $0x338] sm:$0xf]
                %387 = vst [vmem:[%s179 + $0x19c] sm:$0xf] %v386
                %v388 = vld [vmem:[%s178 + $0x340] sm:$0xf]
                %389 = vst [vmem:[%s179 + $0x1a0] sm:$0xf] %v388
                %v390 = vld [vmem:[%s178 + $0x348] sm:$0xf]
                %391 = vst [vmem:[%s179 + $0x1a4] sm:$0xf] %v390
                %v392 = vld [vmem:[%s178 + $0x350] sm:$0xf]
                %393 = vst [vmem:[%s179 + $0x1a8] sm:$0xf] %v392
                %v394 = vld [vmem:[%s178 + $0x358] sm:$0xf]
                %395 = vst [vmem:[%s179 + $0x1ac] sm:$0xf] %v394
                %v396 = vld [vmem:[%s178 + $0x360] sm:$0xf]
                %397 = vst [vmem:[%s179 + $0x1b0] sm:$0xf] %v396
                %v398 = vld [vmem:[%s178 + $0x368] sm:$0xf]
                %399 = vst [vmem:[%s179 + $0x1b4] sm:$0xf] %v398
                %v400 = vld [vmem:[%s178 + $0x370] sm:$0xf]
                %401 = vst [vmem:[%s179 + $0x1b8] sm:$0xf] %v400
                %v402 = vld [vmem:[%s178 + $0x378] sm:$0xf]
                %403 = vst [vmem:[%s179 + $0x1bc] sm:$0xf] %v402
                %v404 = vld [vmem:[%s178 + $0x380] sm:$0xf]
                %405 = vst [vmem:[%s179 + $0x1c0] sm:$0xf] %v404
                %v406 = vld [vmem:[%s178 + $0x388] sm:$0xf]
                %407 = vst [vmem:[%s179 + $0x1c4] sm:$0xf] %v406
                %v408 = vld [vmem:[%s178 + $0x390] sm:$0xf]
                %409 = vst [vmem:[%s179 + $0x1c8] sm:$0xf] %v408
                %v410 = vld [vmem:[%s178 + $0x398] sm:$0xf]
                %411 = vst [vmem:[%s179 + $0x1cc] sm:$0xf] %v410
                %v412 = vld [vmem:[%s178 + $0x3a0] sm:$0xf]
                %413 = vst [vmem:[%s179 + $0x1d0] sm:$0xf] %v412
                %v414 = vld [vmem:[%s178 + $0x3a8] sm:$0xf]
                %415 = vst [vmem:[%s179 + $0x1d4] sm:$0xf] %v414
                %v416 = vld [vmem:[%s178 + $0x3b0] sm:$0xf]
                %417 = vst [vmem:[%s179 + $0x1d8] sm:$0xf] %v416
                %v418 = vld [vmem:[%s178 + $0x3b8] sm:$0xf]
                %419 = vst [vmem:[%s179 + $0x1dc] sm:$0xf] %v418
                %v420 = vld [vmem:[%s178 + $0x3c0] sm:$0xf]
                %421 = vst [vmem:[%s179 + $0x1e0] sm:$0xf] %v420
                %v422 = vld [vmem:[%s178 + $0x3c8] sm:$0xf]
                %423 = vst [vmem:[%s179 + $0x1e4] sm:$0xf] %v422
                %v424 = vld [vmem:[%s178 + $0x3d0] sm:$0xf]
                %425 = vst [vmem:[%s179 + $0x1e8] sm:$0xf] %v424
                %v426 = vld [vmem:[%s178 + $0x3d8] sm:$0xf]
                %427 = vst [vmem:[%s179 + $0x1ec] sm:$0xf] %v426
                %v428 = vld [vmem:[%s178 + $0x3e0] sm:$0xf]
                %429 = vst [vmem:[%s179 + $0x1f0] sm:$0xf] %v428
                %v430 = vld [vmem:[%s178 + $0x3e8] sm:$0xf]
                %431 = vst [vmem:[%s179 + $0x1f4] sm:$0xf] %v430
                %v432 = vld [vmem:[%s178 + $0x3f0] sm:$0xf]
                %433 = vst [vmem:[%s179 + $0x1f8] sm:$0xf] %v432
                %v434 = vld [vmem:[%s178 + $0x3f8] sm:$0xf]
                %435 = vst [vmem:[%s179 + $0x1fc] sm:$0xf] %v434
                %v436 = vld [vmem:[%s178 + $0x400] sm:$0xf]
                %437 = vst [vmem:[%s179 + $0x200] sm:$0xf] %v436
                %v438 = vld [vmem:[%s178 + $0x408] sm:$0xf]
                %439 = vst [vmem:[%s179 + $0x204] sm:$0xf] %v438
                %v440 = vld [vmem:[%s178 + $0x410] sm:$0xf]
                %441 = vst [vmem:[%s179 + $0x208] sm:$0xf] %v440
                %v442 = vld [vmem:[%s178 + $0x418] sm:$0xf]
                %443 = vst [vmem:[%s179 + $0x20c] sm:$0xf] %v442
                %v444 = vld [vmem:[%s178 + $0x420] sm:$0xf]
                %445 = vst [vmem:[%s179 + $0x210] sm:$0xf] %v444
                %v446 = vld [vmem:[%s178 + $0x428] sm:$0xf]
                %447 = vst [vmem:[%s179 + $0x214] sm:$0xf] %v446
                %v448 = vld [vmem:[%s178 + $0x430] sm:$0xf]
                %449 = vst [vmem:[%s179 + $0x218] sm:$0xf] %v448
                %v450 = vld [vmem:[%s178 + $0x438] sm:$0xf]
                %451 = vst [vmem:[%s179 + $0x21c] sm:$0xf] %v450
                %v452 = vld [vmem:[%s178 + $0x440] sm:$0xf]
                %453 = vst [vmem:[%s179 + $0x220] sm:$0xf] %v452
                %v454 = vld [vmem:[%s178 + $0x448] sm:$0xf]
                %455 = vst [vmem:[%s179 + $0x224] sm:$0xf] %v454
                %v456 = vld [vmem:[%s178 + $0x450] sm:$0xf]
                %457 = vst [vmem:[%s179 + $0x228] sm:$0xf] %v456
                %v458 = vld [vmem:[%s178 + $0x458] sm:$0xf]
                %459 = vst [vmem:[%s179 + $0x22c] sm:$0xf] %v458
                %v460 = vld [vmem:[%s178 + $0x460] sm:$0xf]
                %461 = vst [vmem:[%s179 + $0x230] sm:$0xf] %v460
                %v462 = vld [vmem:[%s178 + $0x468] sm:$0xf]
                %463 = vst [vmem:[%s179 + $0x234] sm:$0xf] %v462
                %v464 = vld [vmem:[%s178 + $0x470] sm:$0xf]
                %465 = vst [vmem:[%s179 + $0x238] sm:$0xf] %v464
                %v466 = vld [vmem:[%s178 + $0x478] sm:$0xf]
                %467 = vst [vmem:[%s179 + $0x23c] sm:$0xf] %v466
              $region41: #{generator_forward.10} parent=35 // loop_footer
                %s177 = sadd.s32 1, %s173
              $region42: #{generator_forward.10} parent=35 // loop_footer_branch
                %172 = sbr.rel target = $region38
              $region43: #{generator_forward.10} parent=35 // loop_exit
                _
            $region36: #{generator_forward.10} parent=27 // pred_fallthru
              _
          $region28: #{generator_forward.10} parent=23 // pred_fallthru
            _
          %775 = vnop
        $region24: #{generator_forward.10} parent=19 // pred_fallthru
          _
        // Predicated region
        $region62: #{generator_forward.10} parent=19 // pred_check
          %p776 = pneg %p93
        $region63: #{generator_forward.10} parent=19 // pred_check_branch
          %778 = sbr.rel (%p776) target = $region65
        $region64: #{generator_forward.10} parent=19 // pred_region
          %p779 = scmp.lt.s32.totalorder %s17, 1
          %s780 = scalar_select %p779, %s17, 1
          %s781 = scalar_lea.vmem %s2, %s780
        $region65: #{generator_forward.10} parent=19 // pred_fallthru
          _
      $region20: #{generator_forward.10} parent=5 // pred_fallthru
        _
      %p782 = scmp.le.s32.totalorder 1, %s9
      %p783 = scmp.lt.s32.totalorder %s9, 3
      %p784 = pnand %p782, %p783
      %p785 = pneg %p784
      // Predicated region
      $region66: #{generator_forward.10} parent=5 // pred_check
        _
      $region67: #{generator_forward.10} parent=5 // pred_check_branch
        %787 = sbr.rel (%p784) target = $region69
      $region68: #{generator_forward.10} parent=5 // pred_region
        %s788 = ssub.s32 %s9, 1
        %s789 = sand.u32 %s60, 1
        %s790 = sand.u32 %s60, 1
        %s791 = smul.addr %s790, 576
        %s792 = scalar_lea.vmem [#allocation2], %s791
        // Predicated region
        $region70: #{generator_forward.10} parent=68 // pred_check
          %p793 = pneg %p73
        $region71: #{generator_forward.10} parent=68 // pred_check_branch
          %795 = sbr.rel (%p793) target = $region73
        $region72: #{generator_forward.10} parent=68 // pred_region
          _
        $region73: #{generator_forward.10} parent=68 // pred_fallthru
          _
        %s796 = smul.u32 4, %s18
        %p797 = scmp.lt.s32.totalorder %s796, 3
        %s798 = scalar_select %p797, %s796, 3
        %s799 = smul.addr %s798, 9
        %s800 = smul.addr %s799, 4
        %s801 = scalar_lea.vmem %s0, %s800
        %p802 = pneg %p47
        %p803 = pneg %p44
        %s804 = sand.u32 %s60, 1
        %s805 = sand.u32 %s60, 1
        %s806 = smul.addr %s805, 576
        %s807 = scalar_lea.vmem [#allocation2], %s806
        %p808 = pneg %p73
        %p809 = pneg %p70
        %p810 = scmp.lt.s32.totalorder %s19, 1
        %s811 = scalar_select %p810, %s19, 1
        %s812 = scalar_lea.vmem %s2, %s811
        %p813 = pneg %p99
        %p814 = pneg %p96
        %p815 = pneg %p127
        %p816 = pneg %p124
        %s817 = sand.u32 %s114, 1
        %s818 = sand.u32 %s114, 1
        %s819 = smul.addr %s818, 16
        %s820 = scalar_lea.vmem [#allocation3], %s819
        %s821 = smul.u32 4, %s18
        %p822 = scmp.lt.s32.totalorder %s821, 3
        %s823 = scalar_select %p822, %s821, 3
        %s824 = smul.addr %s823, 9
        %s825 = smul.addr %s824, 4
        %s826 = scalar_lea.vmem %s0, %s825
        %s827 = smul.u32 4, %s18
        %p828 = scmp.lt.s32.totalorder %s19, 1
        %s829 = scalar_select %p828, %s19, 1
        %s830 = scalar_lea.vmem %s2, %s829
        %s831 = smul.u32 4, %s18
        %v833 = vld [vmem:[%s826] sm:$0xff]
        %v834 = vld [vmem:[%s826 + $0x8] sm:$0xff]
        %v835 = vld [vmem:[%s826 + $0x10] sm:$0xff]
        %v836 = vld [vmem:[%s826 + $0x18] sm:$0xff]
        %v837 = vld [vmem:[%s826 + $0x20] sm:$0xf]
        %v838 = vld [vmem:[%s826 + $0x24] sm:$0xff]
        %v839 = vld [vmem:[%s826 + $0x2c] sm:$0xff]
        %v840 = vld [vmem:[%s826 + $0x34] sm:$0xff]
        %v841 = vld [vmem:[%s826 + $0x3c] sm:$0xff]
        %v842 = vld [vmem:[%s826 + $0x44] sm:$0xf]
        %v843 = vld [vmem:[%s826 + $0x48] sm:$0xff]
        %v844 = vld [vmem:[%s826 + $0x50] sm:$0xff]
        %v845 = vld [vmem:[%s826 + $0x58] sm:$0xff]
        %v846 = vld [vmem:[%s826 + $0x60] sm:$0xff]
        %v847 = vld [vmem:[%s826 + $0x68] sm:$0xf]
        %v848 = vld [vmem:[%s826 + $0x6c] sm:$0xff]
        %v849 = vld [vmem:[%s826 + $0x74] sm:$0xff]
        %v850 = vld [vmem:[%s826 + $0x7c] sm:$0xff]
        %v851 = vld [vmem:[%s826 + $0x84] sm:$0xff]
        %v852 = vld [vmem:[%s826 + $0x8c] sm:$0xf]
        %v853 = vld [vmem:[%s792] sm:$0xf]
        %v854 = vld [vmem:[%s792 + $0x4] sm:$0xf]
        %v855 = vld [vmem:[%s792 + $0x8] sm:$0xf]
        %v856 = vld [vmem:[%s792 + $0xc] sm:$0xf]
        %v857 = vld [vmem:[%s792 + $0x10] sm:$0xf]
        %v858 = vld [vmem:[%s792 + $0x14] sm:$0xf]
        %v859 = vld [vmem:[%s792 + $0x18] sm:$0xf]
        %v860 = vld [vmem:[%s792 + $0x1c] sm:$0xf]
        %v861 = vld [vmem:[%s792 + $0x20] sm:$0xf]
        %v862 = vld [vmem:[%s792 + $0x24] sm:$0xf]
        %v863 = vld [vmem:[%s792 + $0x28] sm:$0xf]
        %v864 = vld [vmem:[%s792 + $0x2c] sm:$0xf]
        %v865 = vld [vmem:[%s792 + $0x30] sm:$0xf]
        %v866 = vld [vmem:[%s792 + $0x34] sm:$0xf]
        %v867 = vld [vmem:[%s792 + $0x38] sm:$0xf]
        %v868 = vld [vmem:[%s792 + $0x3c] sm:$0xf]
        %v869 = vld [vmem:[%s792 + $0x40] sm:$0xf]
        %v870 = vld [vmem:[%s792 + $0x44] sm:$0xf]
        %v871 = vld [vmem:[%s792 + $0x48] sm:$0xf]
        %v872 = vld [vmem:[%s792 + $0x4c] sm:$0xf]
        %v873 = vld [vmem:[%s792 + $0x50] sm:$0xf]
        %v874 = vld [vmem:[%s792 + $0x54] sm:$0xf]
        %v875 = vld [vmem:[%s792 + $0x58] sm:$0xf]
        %v876 = vld [vmem:[%s792 + $0x5c] sm:$0xf]
        %v877 = vld [vmem:[%s792 + $0x60] sm:$0xf]
        %v878 = vld [vmem:[%s792 + $0x64] sm:$0xf]
        %v879 = vld [vmem:[%s792 + $0x68] sm:$0xf]
        %v880 = vld [vmem:[%s792 + $0x6c] sm:$0xf]
        %v881 = vld [vmem:[%s792 + $0x70] sm:$0xf]
        %v882 = vld [vmem:[%s792 + $0x74] sm:$0xf]
        %v883 = vld [vmem:[%s792 + $0x78] sm:$0xf]
        %v884 = vld [vmem:[%s792 + $0x7c] sm:$0xf]
        %v885 = vld [vmem:[%s792 + $0x80] sm:$0xf]
        %v886 = vld [vmem:[%s792 + $0x84] sm:$0xf]
        %v887 = vld [vmem:[%s792 + $0x88] sm:$0xf]
        %v888 = vld [vmem:[%s792 + $0x8c] sm:$0xf]
        %v889 = vld [vmem:[%s792 + $0x90] sm:$0xf]
        %v890 = vld [vmem:[%s792 + $0x94] sm:$0xf]
        %v891 = vld [vmem:[%s792 + $0x98] sm:$0xf]
        %v892 = vld [vmem:[%s792 + $0x9c] sm:$0xf]
        %v893 = vld [vmem:[%s792 + $0xa0] sm:$0xf]
        %v894 = vld [vmem:[%s792 + $0xa4] sm:$0xf]
        %v895 = vld [vmem:[%s792 + $0xa8] sm:$0xf]
        %v896 = vld [vmem:[%s792 + $0xac] sm:$0xf]
        %v897 = vld [vmem:[%s792 + $0xb0] sm:$0xf]
        %v898 = vld [vmem:[%s792 + $0xb4] sm:$0xf]
        %v899 = vld [vmem:[%s792 + $0xb8] sm:$0xf]
        %v900 = vld [vmem:[%s792 + $0xbc] sm:$0xf]
        %v901 = vld [vmem:[%s792 + $0xc0] sm:$0xf]
        %v902 = vld [vmem:[%s792 + $0xc4] sm:$0xf]
        %v903 = vld [vmem:[%s792 + $0xc8] sm:$0xf]
        %v904 = vld [vmem:[%s792 + $0xcc] sm:$0xf]
        %v905 = vld [vmem:[%s792 + $0xd0] sm:$0xf]
        %v906 = vld [vmem:[%s792 + $0xd4] sm:$0xf]
        %v907 = vld [vmem:[%s792 + $0xd8] sm:$0xf]
        %v908 = vld [vmem:[%s792 + $0xdc] sm:$0xf]
        %v909 = vld [vmem:[%s792 + $0xe0] sm:$0xf]
        %v910 = vld [vmem:[%s792 + $0xe4] sm:$0xf]
        %v911 = vld [vmem:[%s792 + $0xe8] sm:$0xf]
        %v912 = vld [vmem:[%s792 + $0xec] sm:$0xf]
        %v913 = vld [vmem:[%s792 + $0xf0] sm:$0xf]
        %v914 = vld [vmem:[%s792 + $0xf4] sm:$0xf]
        %v915 = vld [vmem:[%s792 + $0xf8] sm:$0xf]
        %v916 = vld [vmem:[%s792 + $0xfc] sm:$0xf]
        %v917 = vld [vmem:[%s792 + $0x100] sm:$0xf]
        %v918 = vld [vmem:[%s792 + $0x104] sm:$0xf]
        %v919 = vld [vmem:[%s792 + $0x108] sm:$0xf]
        %v920 = vld [vmem:[%s792 + $0x10c] sm:$0xf]
        %v921 = vld [vmem:[%s792 + $0x110] sm:$0xf]
        %v922 = vld [vmem:[%s792 + $0x114] sm:$0xf]
        %v923 = vld [vmem:[%s792 + $0x118] sm:$0xf]
        %v924 = vld [vmem:[%s792 + $0x11c] sm:$0xf]
        %v925 = vld [vmem:[%s792 + $0x120] sm:$0xf]
        %v926 = vld [vmem:[%s792 + $0x124] sm:$0xf]
        %v927 = vld [vmem:[%s792 + $0x128] sm:$0xf]
        %v928 = vld [vmem:[%s792 + $0x12c] sm:$0xf]
        %v929 = vld [vmem:[%s792 + $0x130] sm:$0xf]
        %v930 = vld [vmem:[%s792 + $0x134] sm:$0xf]
        %v931 = vld [vmem:[%s792 + $0x138] sm:$0xf]
        %v932 = vld [vmem:[%s792 + $0x13c] sm:$0xf]
        %v933 = vld [vmem:[%s792 + $0x140] sm:$0xf]
        %v934 = vld [vmem:[%s792 + $0x144] sm:$0xf]
        %v935 = vld [vmem:[%s792 + $0x148] sm:$0xf]
        %v936 = vld [vmem:[%s792 + $0x14c] sm:$0xf]
        %v937 = vld [vmem:[%s792 + $0x150] sm:$0xf]
        %v938 = vld [vmem:[%s792 + $0x154] sm:$0xf]
        %v939 = vld [vmem:[%s792 + $0x158] sm:$0xf]
        %v940 = vld [vmem:[%s792 + $0x15c] sm:$0xf]
        %v941 = vld [vmem:[%s792 + $0x160] sm:$0xf]
        %v942 = vld [vmem:[%s792 + $0x164] sm:$0xf]
        %v943 = vld [vmem:[%s792 + $0x168] sm:$0xf]
        %v944 = vld [vmem:[%s792 + $0x16c] sm:$0xf]
        %v945 = vld [vmem:[%s792 + $0x170] sm:$0xf]
        %v946 = vld [vmem:[%s792 + $0x174] sm:$0xf]
        %v947 = vld [vmem:[%s792 + $0x178] sm:$0xf]
        %v948 = vld [vmem:[%s792 + $0x17c] sm:$0xf]
        %v949 = vld [vmem:[%s792 + $0x180] sm:$0xf]
        %v950 = vld [vmem:[%s792 + $0x184] sm:$0xf]
        %v951 = vld [vmem:[%s792 + $0x188] sm:$0xf]
        %v952 = vld [vmem:[%s792 + $0x18c] sm:$0xf]
        %v953 = vld [vmem:[%s792 + $0x190] sm:$0xf]
        %v954 = vld [vmem:[%s792 + $0x194] sm:$0xf]
        %v955 = vld [vmem:[%s792 + $0x198] sm:$0xf]
        %v956 = vld [vmem:[%s792 + $0x19c] sm:$0xf]
        %v957 = vld [vmem:[%s792 + $0x1a0] sm:$0xf]
        %v958 = vld [vmem:[%s792 + $0x1a4] sm:$0xf]
        %v959 = vld [vmem:[%s792 + $0x1a8] sm:$0xf]
        %v960 = vld [vmem:[%s792 + $0x1ac] sm:$0xf]
        %v961 = vld [vmem:[%s792 + $0x1b0] sm:$0xf]
        %v962 = vld [vmem:[%s792 + $0x1b4] sm:$0xf]
        %v963 = vld [vmem:[%s792 + $0x1b8] sm:$0xf]
        %v964 = vld [vmem:[%s792 + $0x1bc] sm:$0xf]
        %v965 = vld [vmem:[%s792 + $0x1c0] sm:$0xf]
        %v966 = vld [vmem:[%s792 + $0x1c4] sm:$0xf]
        %v967 = vld [vmem:[%s792 + $0x1c8] sm:$0xf]
        %v968 = vld [vmem:[%s792 + $0x1cc] sm:$0xf]
        %v969 = vld [vmem:[%s792 + $0x1d0] sm:$0xf]
        %v970 = vld [vmem:[%s792 + $0x1d4] sm:$0xf]
        %v971 = vld [vmem:[%s792 + $0x1d8] sm:$0xf]
        %v972 = vld [vmem:[%s792 + $0x1dc] sm:$0xf]
        %v973 = vld [vmem:[%s792 + $0x1e0] sm:$0xf]
        %v974 = vld [vmem:[%s792 + $0x1e4] sm:$0xf]
        %v975 = vld [vmem:[%s792 + $0x1e8] sm:$0xf]
        %v976 = vld [vmem:[%s792 + $0x1ec] sm:$0xf]
        %v977 = vld [vmem:[%s792 + $0x1f0] sm:$0xf]
        %v978 = vld [vmem:[%s792 + $0x1f4] sm:$0xf]
        %v979 = vld [vmem:[%s792 + $0x1f8] sm:$0xf]
        %v980 = vld [vmem:[%s792 + $0x1fc] sm:$0xf]
        %v981 = vld [vmem:[%s792 + $0x200] sm:$0xf]
        %v982 = vld [vmem:[%s792 + $0x204] sm:$0xf]
        %v983 = vld [vmem:[%s792 + $0x208] sm:$0xf]
        %v984 = vld [vmem:[%s792 + $0x20c] sm:$0xf]
        %v985 = vld [vmem:[%s792 + $0x210] sm:$0xf]
        %v986 = vld [vmem:[%s792 + $0x214] sm:$0xf]
        %v987 = vld [vmem:[%s792 + $0x218] sm:$0xf]
        %v988 = vld [vmem:[%s792 + $0x21c] sm:$0xf]
        %v989 = vld [vmem:[%s792 + $0x220] sm:$0xf]
        %v990 = vld [vmem:[%s792 + $0x224] sm:$0xf]
        %v991 = vld [vmem:[%s792 + $0x228] sm:$0xf]
        %v992 = vld [vmem:[%s792 + $0x22c] sm:$0xf]
        %v993 = vld [vmem:[%s792 + $0x230] sm:$0xf]
        %v994 = vld [vmem:[%s792 + $0x234] sm:$0xf]
        %v995 = vld [vmem:[%s792 + $0x238] sm:$0xf]
        %v996 = vld [vmem:[%s792 + $0x23c] sm:$0xf]
        %v997 = vld [vmem:[%s830] sm:$0x1]
        %v999 = vlaneseq
        %v1000 = vshrl.u32 %v999, 7
        %v1001 = vsub.s32 0, %v1000
        %v1002 = vrot.slane %v997, %v1001
        %v1024 = vunpack.c.l.b16 %v833
        %v1025 = vunpack.c.h.b16 %v833
        %v1026 = vunpack.c.l.b16 %v834
        %v1027 = vunpack.c.h.b16 %v834
        %v1028 = vunpack.c.l.b16 %v835
        %v1029 = vunpack.c.h.b16 %v835
        %v1030 = vunpack.c.l.b16 %v836
        %v1031 = vunpack.c.h.b16 %v836
        %v1032 = vunpack.c.l.b16 %v837
        %v1033 = vunpack.c.l.b16 %v838
        %v1034 = vunpack.c.h.b16 %v838
        %v1035 = vunpack.c.l.b16 %v839
        %v1036 = vunpack.c.h.b16 %v839
        %v1037 = vunpack.c.l.b16 %v840
        %v1038 = vunpack.c.h.b16 %v840
        %v1039 = vunpack.c.l.b16 %v841
        %v1040 = vunpack.c.h.b16 %v841
        %v1041 = vunpack.c.l.b16 %v842
        %v1042 = vunpack.c.l.b16 %v843
        %v1043 = vunpack.c.h.b16 %v843
        %v1044 = vunpack.c.l.b16 %v844
        %v1045 = vunpack.c.h.b16 %v844
        %v1046 = vunpack.c.l.b16 %v845
        %v1047 = vunpack.c.h.b16 %v845
        %v1048 = vunpack.c.l.b16 %v846
        %v1049 = vunpack.c.h.b16 %v846
        %v1050 = vunpack.c.l.b16 %v847
        %v1051 = vunpack.c.l.b16 %v848
        %v1052 = vunpack.c.h.b16 %v848
        %v1053 = vunpack.c.l.b16 %v849
        %v1054 = vunpack.c.h.b16 %v849
        %v1055 = vunpack.c.l.b16 %v850
        %v1056 = vunpack.c.h.b16 %v850
        %v1057 = vunpack.c.l.b16 %v851
        %v1058 = vunpack.c.h.b16 %v851
        %v1059 = vunpack.c.l.b16 %v852
        %v1060 = vpack.c.b16 %v1033, %v1024
        %v1061 = vpack.c.b16 %v1034, %v1025
        %v1062 = vpack.c.b16 %v1035, %v1026
        %v1063 = vpack.c.b16 %v1036, %v1027
        %v1064 = vpack.c.b16 %v1037, %v1028
        %v1065 = vpack.c.b16 %v1038, %v1029
        %v1066 = vpack.c.b16 %v1039, %v1030
        %v1067 = vpack.c.b16 %v1040, %v1031
        %v1068 = vpack.c.b16 %v1041, %v1032
        %v1069 = vpack.c.b16 %v1051, %v1042
        %v1070 = vpack.c.b16 %v1052, %v1043
        %v1071 = vpack.c.b16 %v1053, %v1044
        %v1072 = vpack.c.b16 %v1054, %v1045
        %v1073 = vpack.c.b16 %v1055, %v1046
        %v1074 = vpack.c.b16 %v1056, %v1047
        %v1075 = vpack.c.b16 %v1057, %v1048
        %v1076 = vpack.c.b16 %v1058, %v1049
        %v1077 = vpack.c.b16 %v1059, %v1050
        %v1240 = vunpack.c.l.b16 %v853
        %v1241 = vunpack.c.l.b16 %v854
        %v1242 = vunpack.c.l.b16 %v855
        %v1243 = vunpack.c.l.b16 %v856
        %v1244 = vunpack.c.l.b16 %v857
        %v1245 = vunpack.c.l.b16 %v858
        %v1246 = vunpack.c.l.b16 %v859
        %v1247 = vunpack.c.l.b16 %v860
        %v1248 = vunpack.c.l.b16 %v861
        %v1249 = vunpack.c.l.b16 %v862
        %v1250 = vunpack.c.l.b16 %v863
        %v1251 = vunpack.c.l.b16 %v864
        %v1252 = vunpack.c.l.b16 %v865
        %v1253 = vunpack.c.l.b16 %v866
        %v1254 = vunpack.c.l.b16 %v867
        %v1255 = vunpack.c.l.b16 %v868
        %v1256 = vunpack.c.l.b16 %v869
        %v1257 = vunpack.c.l.b16 %v870
        %v1258 = vunpack.c.l.b16 %v871
        %v1259 = vunpack.c.l.b16 %v872
        %v1260 = vunpack.c.l.b16 %v873
        %v1261 = vunpack.c.l.b16 %v874
        %v1262 = vunpack.c.l.b16 %v875
        %v1263 = vunpack.c.l.b16 %v876
        %v1264 = vunpack.c.l.b16 %v877
        %v1265 = vunpack.c.l.b16 %v878
        %v1266 = vunpack.c.l.b16 %v879
        %v1267 = vunpack.c.l.b16 %v880
        %v1268 = vunpack.c.l.b16 %v881
        %v1269 = vunpack.c.l.b16 %v882
        %v1270 = vunpack.c.l.b16 %v883
        %v1271 = vunpack.c.l.b16 %v884
        %v1272 = vunpack.c.l.b16 %v885
        %v1273 = vunpack.c.l.b16 %v886
        %v1274 = vunpack.c.l.b16 %v887
        %v1275 = vunpack.c.l.b16 %v888
        %v1276 = vunpack.c.l.b16 %v889
        %v1277 = vunpack.c.l.b16 %v890
        %v1278 = vunpack.c.l.b16 %v891
        %v1279 = vunpack.c.l.b16 %v892
        %v1280 = vunpack.c.l.b16 %v893
        %v1281 = vunpack.c.l.b16 %v894
        %v1282 = vunpack.c.l.b16 %v895
        %v1283 = vunpack.c.l.b16 %v896
        %v1284 = vunpack.c.l.b16 %v897
        %v1285 = vunpack.c.l.b16 %v898
        %v1286 = vunpack.c.l.b16 %v899
        %v1287 = vunpack.c.l.b16 %v900
        %v1288 = vunpack.c.l.b16 %v901
        %v1289 = vunpack.c.l.b16 %v902
        %v1290 = vunpack.c.l.b16 %v903
        %v1291 = vunpack.c.l.b16 %v904
        %v1292 = vunpack.c.l.b16 %v905
        %v1293 = vunpack.c.l.b16 %v906
        %v1294 = vunpack.c.l.b16 %v907
        %v1295 = vunpack.c.l.b16 %v908
        %v1296 = vunpack.c.l.b16 %v909
        %v1297 = vunpack.c.l.b16 %v910
        %v1298 = vunpack.c.l.b16 %v911
        %v1299 = vunpack.c.l.b16 %v912
        %v1300 = vunpack.c.l.b16 %v913
        %v1301 = vunpack.c.l.b16 %v914
        %v1302 = vunpack.c.l.b16 %v915
        %v1303 = vunpack.c.l.b16 %v916
        %v1304 = vunpack.c.l.b16 %v917
        %v1305 = vunpack.c.l.b16 %v918
        %v1306 = vunpack.c.l.b16 %v919
        %v1307 = vunpack.c.l.b16 %v920
        %v1308 = vunpack.c.l.b16 %v921
        %v1309 = vunpack.c.l.b16 %v922
        %v1310 = vunpack.c.l.b16 %v923
        %v1311 = vunpack.c.l.b16 %v924
        %v1312 = vunpack.c.l.b16 %v925
        %v1313 = vunpack.c.l.b16 %v926
        %v1314 = vunpack.c.l.b16 %v927
        %v1315 = vunpack.c.l.b16 %v928
        %v1316 = vunpack.c.l.b16 %v929
        %v1317 = vunpack.c.l.b16 %v930
        %v1318 = vunpack.c.l.b16 %v931
        %v1319 = vunpack.c.l.b16 %v932
        %v1320 = vunpack.c.l.b16 %v933
        %v1321 = vunpack.c.l.b16 %v934
        %v1322 = vunpack.c.l.b16 %v935
        %v1323 = vunpack.c.l.b16 %v936
        %v1324 = vunpack.c.l.b16 %v937
        %v1325 = vunpack.c.l.b16 %v938
        %v1326 = vunpack.c.l.b16 %v939
        %v1327 = vunpack.c.l.b16 %v940
        %v1328 = vunpack.c.l.b16 %v941
        %v1329 = vunpack.c.l.b16 %v942
        %v1330 = vunpack.c.l.b16 %v943
        %v1331 = vunpack.c.l.b16 %v944
        %v1332 = vunpack.c.l.b16 %v945
        %v1333 = vunpack.c.l.b16 %v946
        %v1334 = vunpack.c.l.b16 %v947
        %v1335 = vunpack.c.l.b16 %v948
        %v1336 = vunpack.c.l.b16 %v949
        %v1337 = vunpack.c.l.b16 %v950
        %v1338 = vunpack.c.l.b16 %v951
        %v1339 = vunpack.c.l.b16 %v952
        %v1340 = vunpack.c.l.b16 %v953
        %v1341 = vunpack.c.l.b16 %v954
        %v1342 = vunpack.c.l.b16 %v955
        %v1343 = vunpack.c.l.b16 %v956
        %v1344 = vunpack.c.l.b16 %v957
        %v1345 = vunpack.c.l.b16 %v958
        %v1346 = vunpack.c.l.b16 %v959
        %v1347 = vunpack.c.l.b16 %v960
        %v1348 = vunpack.c.l.b16 %v961
        %v1349 = vunpack.c.l.b16 %v962
        %v1350 = vunpack.c.l.b16 %v963
        %v1351 = vunpack.c.l.b16 %v964
        %v1352 = vunpack.c.l.b16 %v965
        %v1353 = vunpack.c.l.b16 %v966
        %v1354 = vunpack.c.l.b16 %v967
        %v1355 = vunpack.c.l.b16 %v968
        %v1356 = vunpack.c.l.b16 %v969
        %v1357 = vunpack.c.l.b16 %v970
        %v1358 = vunpack.c.l.b16 %v971
        %v1359 = vunpack.c.l.b16 %v972
        %v1360 = vunpack.c.l.b16 %v973
        %v1361 = vunpack.c.l.b16 %v974
        %v1362 = vunpack.c.l.b16 %v975
        %v1363 = vunpack.c.l.b16 %v976
        %v1364 = vunpack.c.l.b16 %v977
        %v1365 = vunpack.c.l.b16 %v978
        %v1366 = vunpack.c.l.b16 %v979
        %v1367 = vunpack.c.l.b16 %v980
        %v1368 = vunpack.c.l.b16 %v981
        %v1369 = vunpack.c.l.b16 %v982
        %v1370 = vunpack.c.l.b16 %v983
        %v1371 = vunpack.c.l.b16 %v984
        %v1372 = vunpack.c.l.b16 %v985
        %v1373 = vunpack.c.l.b16 %v986
        %v1374 = vunpack.c.l.b16 %v987
        %v1375 = vunpack.c.l.b16 %v988
        %v1376 = vunpack.c.l.b16 %v989
        %v1377 = vunpack.c.l.b16 %v990
        %v1378 = vunpack.c.l.b16 %v991
        %v1379 = vunpack.c.l.b16 %v992
        %v1380 = vunpack.c.l.b16 %v993
        %v1381 = vunpack.c.l.b16 %v994
        %v1382 = vunpack.c.l.b16 %v995
        %v1383 = vunpack.c.l.b16 %v996
        %v1384 = vpack.c.b16 %v1241, %v1240
        %v1385 = vpack.c.b16 %v1243, %v1242
        %v1386 = vpack.c.b16 %v1245, %v1244
        %v1387 = vpack.c.b16 %v1247, %v1246
        %v1388 = vpack.c.b16 %v1249, %v1248
        %v1389 = vpack.c.b16 %v1251, %v1250
        %v1390 = vpack.c.b16 %v1253, %v1252
        %v1391 = vpack.c.b16 %v1255, %v1254
        %v1392 = vpack.c.b16 %v1257, %v1256
        %v1393 = vpack.c.b16 %v1259, %v1258
        %v1394 = vpack.c.b16 %v1261, %v1260
        %v1395 = vpack.c.b16 %v1263, %v1262
        %v1396 = vpack.c.b16 %v1265, %v1264
        %v1397 = vpack.c.b16 %v1267, %v1266
        %v1398 = vpack.c.b16 %v1269, %v1268
        %v1399 = vpack.c.b16 %v1271, %v1270
        %v1400 = vpack.c.b16 %v1273, %v1272
        %v1401 = vpack.c.b16 %v1275, %v1274
        %v1402 = vpack.c.b16 %v1277, %v1276
        %v1403 = vpack.c.b16 %v1279, %v1278
        %v1404 = vpack.c.b16 %v1281, %v1280
        %v1405 = vpack.c.b16 %v1283, %v1282
        %v1406 = vpack.c.b16 %v1285, %v1284
        %v1407 = vpack.c.b16 %v1287, %v1286
        %v1408 = vpack.c.b16 %v1289, %v1288
        %v1409 = vpack.c.b16 %v1291, %v1290
        %v1410 = vpack.c.b16 %v1293, %v1292
        %v1411 = vpack.c.b16 %v1295, %v1294
        %v1412 = vpack.c.b16 %v1297, %v1296
        %v1413 = vpack.c.b16 %v1299, %v1298
        %v1414 = vpack.c.b16 %v1301, %v1300
        %v1415 = vpack.c.b16 %v1303, %v1302
        %v1416 = vpack.c.b16 %v1305, %v1304
        %v1417 = vpack.c.b16 %v1307, %v1306
        %v1418 = vpack.c.b16 %v1309, %v1308
        %v1419 = vpack.c.b16 %v1311, %v1310
        %v1420 = vpack.c.b16 %v1313, %v1312
        %v1421 = vpack.c.b16 %v1315, %v1314
        %v1422 = vpack.c.b16 %v1317, %v1316
        %v1423 = vpack.c.b16 %v1319, %v1318
        %v1424 = vpack.c.b16 %v1321, %v1320
        %v1425 = vpack.c.b16 %v1323, %v1322
        %v1426 = vpack.c.b16 %v1325, %v1324
        %v1427 = vpack.c.b16 %v1327, %v1326
        %v1428 = vpack.c.b16 %v1329, %v1328
        %v1429 = vpack.c.b16 %v1331, %v1330
        %v1430 = vpack.c.b16 %v1333, %v1332
        %v1431 = vpack.c.b16 %v1335, %v1334
        %v1432 = vpack.c.b16 %v1337, %v1336
        %v1433 = vpack.c.b16 %v1339, %v1338
        %v1434 = vpack.c.b16 %v1341, %v1340
        %v1435 = vpack.c.b16 %v1343, %v1342
        %v1436 = vpack.c.b16 %v1345, %v1344
        %v1437 = vpack.c.b16 %v1347, %v1346
        %v1438 = vpack.c.b16 %v1349, %v1348
        %v1439 = vpack.c.b16 %v1351, %v1350
        %v1440 = vpack.c.b16 %v1353, %v1352
        %v1441 = vpack.c.b16 %v1355, %v1354
        %v1442 = vpack.c.b16 %v1357, %v1356
        %v1443 = vpack.c.b16 %v1359, %v1358
        %v1444 = vpack.c.b16 %v1361, %v1360
        %v1445 = vpack.c.b16 %v1363, %v1362
        %v1446 = vpack.c.b16 %v1365, %v1364
        %v1447 = vpack.c.b16 %v1367, %v1366
        %v1448 = vpack.c.b16 %v1369, %v1368
        %v1449 = vpack.c.b16 %v1371, %v1370
        %v1450 = vpack.c.b16 %v1373, %v1372
        %v1451 = vpack.c.b16 %v1375, %v1374
        %v1452 = vpack.c.b16 %v1377, %v1376
        %v1453 = vpack.c.b16 %v1379, %v1378
        %v1454 = vpack.c.b16 %v1381, %v1380
        %v1455 = vpack.c.b16 %v1383, %v1382
        %1528 = vmatprep.subr.bf16.mxu0 0
        %1529 = vmatpush1.bf16.msra.mxu0 %v1384
        %1530 = vmatprep.subr.bf16.mxu0 0
        %1531 = vmatpush1.bf16.msra.mxu0 %v1385
        %1532 = vmatprep.subr.bf16.mxu0 0
        %1533 = vmatpush1.bf16.msra.mxu0 %v1386
        %1534 = vmatprep.subr.bf16.mxu0 0
        %1535 = vmatpush1.bf16.msra.mxu0 %v1387
        %1536 = vmatprep.subr.bf16.mxu0 0
        %1537 = vmatpush1.bf16.msra.mxu0 %v1388
        %1538 = vmatprep.subr.bf16.mxu0 0
        %1539 = vmatpush1.bf16.msra.mxu0 %v1389
        %1540 = vmatprep.subr.bf16.mxu0 0
        %1541 = vmatpush1.bf16.msra.mxu0 %v1390
        %1542 = vmatprep.subr.bf16.mxu0 0
        %1543 = vmatpush1.bf16.msra.mxu0 %v1391
        %1544 = vmatprep.subr.bf16.mxu0 0
        %1545 = vmatpush1.bf16.msra.mxu0 %v1392
        %1546 = vmatprep.subr.bf16.mxu0 0
        %1547 = vmatpush1.bf16.msra.mxu0 %v1393
        %1548 = vmatprep.subr.bf16.mxu0 0
        %1549 = vmatpush1.bf16.msra.mxu0 %v1394
        %1550 = vmatprep.subr.bf16.mxu0 0
        %1551 = vmatpush1.bf16.msra.mxu0 %v1395
        %1552 = vmatprep.subr.bf16.mxu0 0
        %1553 = vmatpush1.bf16.msra.mxu0 %v1396
        %1554 = vmatprep.subr.bf16.mxu0 0
        %1555 = vmatpush1.bf16.msra.mxu0 %v1397
        %1556 = vmatprep.subr.bf16.mxu0 0
        %1557 = vmatpush1.bf16.msra.mxu0 %v1398
        %1558 = vmatprep.subr.bf16.mxu0 0
        %1559 = vmatpush1.bf16.msra.mxu0 %v1399
        %1560 = vmatprep.mubr.bf16.mxu0 %v1061
        %1561 = vmatmul.mubr.bf16.gmra.mrb[0].mxu0 %v1060
        %v1562 = vpop.f32.mrb[0].mxu0
        %v1563 = vadd.f32 %v1002, %v1562
        %v1564 = vpop.f32.mrb[0].mxu0
        %v1565 = vpop.f32.mrb[0].mxu0
        %v1566 = vadd.f32 %v1002, %v1565
        %v1567 = vpop.f32.mrb[0].mxu0
        %1568 = vmatprep.mubr.bf16.mxu0 %v1070
        %1569 = vmatmul.mubr.bf16.gmra.mrb[0].mxu0 %v1069
        %v1570 = vpop.f32.mrb[0].mxu0
        %v1571 = vadd.f32 %v1002, %v1570
        %v1572 = vpop.f32.mrb[0].mxu0
        %v1573 = vpop.f32.mrb[0].mxu0
        %v1574 = vadd.f32 %v1002, %v1573
        %v1575 = vpop.f32.mrb[0].mxu0
        %1576 = vdwg.mxu0
        %1577 = vmatprep.subr.bf16.mxu0 0
        %1578 = vmatpush1.bf16.msra.mxu0 %v1400
        %1579 = vmatprep.subr.bf16.mxu0 0
        %1580 = vmatpush1.bf16.msra.mxu0 %v1401
        %1581 = vmatprep.subr.bf16.mxu0 0
        %1582 = vmatpush1.bf16.msra.mxu0 %v1402
        %1583 = vmatprep.subr.bf16.mxu0 0
        %1584 = vmatpush1.bf16.msra.mxu0 %v1403
        %1585 = vmatprep.subr.bf16.mxu0 0
        %1586 = vmatpush1.bf16.msra.mxu0 %v1404
        %1587 = vmatprep.subr.bf16.mxu0 0
        %1588 = vmatpush1.bf16.msra.mxu0 %v1405
        %1589 = vmatprep.subr.bf16.mxu0 0
        %1590 = vmatpush1.bf16.msra.mxu0 %v1406
        %1591 = vmatprep.subr.bf16.mxu0 0
        %1592 = vmatpush1.bf16.msra.mxu0 %v1407
        %1593 = vmatprep.subr.bf16.mxu0 0
        %1594 = vmatpush1.bf16.msra.mxu0 %v1408
        %1595 = vmatprep.subr.bf16.mxu0 0
        %1596 = vmatpush1.bf16.msra.mxu0 %v1409
        %1597 = vmatprep.subr.bf16.mxu0 0
        %1598 = vmatpush1.bf16.msra.mxu0 %v1410
        %1599 = vmatprep.subr.bf16.mxu0 0
        %1600 = vmatpush1.bf16.msra.mxu0 %v1411
        %1601 = vmatprep.subr.bf16.mxu0 0
        %1602 = vmatpush1.bf16.msra.mxu0 %v1412
        %1603 = vmatprep.subr.bf16.mxu0 0
        %1604 = vmatpush1.bf16.msra.mxu0 %v1413
        %1605 = vmatprep.subr.bf16.mxu0 0
        %1606 = vmatpush1.bf16.msra.mxu0 %v1414
        %1607 = vmatprep.subr.bf16.mxu0 0
        %1608 = vmatpush1.bf16.msra.mxu0 %v1415
        %1609 = vmatprep.mubr.bf16.mxu0 %v1063
        %1610 = vmatmul.mubr.bf16.gmra.mrb[0].mxu0 %v1062
        %v1611 = vpop.f32.mrb[0].mxu0
        %v1612 = vadd.f32 %v1563, %v1611
        %v1613 = vpop.f32.mrb[0].mxu0
        %v1614 = vpop.f32.mrb[0].mxu0
        %v1615 = vadd.f32 %v1566, %v1614
        %v1616 = vpop.f32.mrb[0].mxu0
        %1617 = vmatprep.mubr.bf16.mxu0 %v1072
        %1618 = vmatmul.mubr.bf16.gmra.mrb[0].mxu0 %v1071
        %v1619 = vpop.f32.mrb[0].mxu0
        %v1620 = vadd.f32 %v1571, %v1619
        %v1621 = vpop.f32.mrb[0].mxu0
        %v1622 = vpop.f32.mrb[0].mxu0
        %v1623 = vadd.f32 %v1574, %v1622
        %v1624 = vpop.f32.mrb[0].mxu0
        %1625 = vdwg.mxu0
        %1626 = vmatprep.subr.bf16.mxu0 0
        %1627 = vmatpush1.bf16.msra.mxu0 %v1416
        %1628 = vmatprep.subr.bf16.mxu0 0
        %1629 = vmatpush1.bf16.msra.mxu0 %v1417
        %1630 = vmatprep.subr.bf16.mxu0 0
        %1631 = vmatpush1.bf16.msra.mxu0 %v1418
        %1632 = vmatprep.subr.bf16.mxu0 0
        %1633 = vmatpush1.bf16.msra.mxu0 %v1419
        %1634 = vmatprep.subr.bf16.mxu0 0
        %1635 = vmatpush1.bf16.msra.mxu0 %v1420
        %1636 = vmatprep.subr.bf16.mxu0 0
        %1637 = vmatpush1.bf16.msra.mxu0 %v1421
        %1638 = vmatprep.subr.bf16.mxu0 0
        %1639 = vmatpush1.bf16.msra.mxu0 %v1422
        %1640 = vmatprep.subr.bf16.mxu0 0
        %1641 = vmatpush1.bf16.msra.mxu0 %v1423
        %1642 = vmatprep.subr.bf16.mxu0 0
        %1643 = vmatpush1.bf16.msra.mxu0 %v1424
        %1644 = vmatprep.subr.bf16.mxu0 0
        %1645 = vmatpush1.bf16.msra.mxu0 %v1425
        %1646 = vmatprep.subr.bf16.mxu0 0
        %1647 = vmatpush1.bf16.msra.mxu0 %v1426
        %1648 = vmatprep.subr.bf16.mxu0 0
        %1649 = vmatpush1.bf16.msra.mxu0 %v1427
        %1650 = vmatprep.subr.bf16.mxu0 0
        %1651 = vmatpush1.bf16.msra.mxu0 %v1428
        %1652 = vmatprep.subr.bf16.mxu0 0
        %1653 = vmatpush1.bf16.msra.mxu0 %v1429
        %1654 = vmatprep.subr.bf16.mxu0 0
        %1655 = vmatpush1.bf16.msra.mxu0 %v1430
        %1656 = vmatprep.subr.bf16.mxu0 0
        %1657 = vmatpush1.bf16.msra.mxu0 %v1431
        %1658 = vmatprep.mubr.bf16.mxu0 %v1065
        %1659 = vmatmul.mubr.bf16.gmra.mrb[0].mxu0 %v1064
        %v1660 = vpop.f32.mrb[0].mxu0
        %v1661 = vadd.f32 %v1612, %v1660
        %v1662 = vpop.f32.mrb[0].mxu0
        %v1663 = vpop.f32.mrb[0].mxu0
        %v1664 = vadd.f32 %v1615, %v1663
        %v1665 = vpop.f32.mrb[0].mxu0
        %1666 = vmatprep.mubr.bf16.mxu0 %v1074
        %1667 = vmatmul.mubr.bf16.gmra.mrb[0].mxu0 %v1073
        %v1668 = vpop.f32.mrb[0].mxu0
        %v1669 = vadd.f32 %v1620, %v1668
        %v1670 = vpop.f32.mrb[0].mxu0
        %v1671 = vpop.f32.mrb[0].mxu0
        %v1672 = vadd.f32 %v1623, %v1671
        %v1673 = vpop.f32.mrb[0].mxu0
        %1674 = vdwg.mxu0
        %1675 = vmatprep.subr.bf16.mxu0 0
        %1676 = vmatpush1.bf16.msra.mxu0 %v1432
        %1677 = vmatprep.subr.bf16.mxu0 0
        %1678 = vmatpush1.bf16.msra.mxu0 %v1433
        %1679 = vmatprep.subr.bf16.mxu0 0
        %1680 = vmatpush1.bf16.msra.mxu0 %v1434
        %1681 = vmatprep.subr.bf16.mxu0 0
        %1682 = vmatpush1.bf16.msra.mxu0 %v1435
        %1683 = vmatprep.subr.bf16.mxu0 0
        %1684 = vmatpush1.bf16.msra.mxu0 %v1436
        %1685 = vmatprep.subr.bf16.mxu0 0
        %1686 = vmatpush1.bf16.msra.mxu0 %v1437
        %1687 = vmatprep.subr.bf16.mxu0 0
        %1688 = vmatpush1.bf16.msra.mxu0 %v1438
        %1689 = vmatprep.subr.bf16.mxu0 0
        %1690 = vmatpush1.bf16.msra.mxu0 %v1439
        %1691 = vmatprep.subr.bf16.mxu0 0
        %1692 = vmatpush1.bf16.msra.mxu0 %v1440
        %1693 = vmatprep.subr.bf16.mxu0 0
        %1694 = vmatpush1.bf16.msra.mxu0 %v1441
        %1695 = vmatprep.subr.bf16.mxu0 0
        %1696 = vmatpush1.bf16.msra.mxu0 %v1442
        %1697 = vmatprep.subr.bf16.mxu0 0
        %1698 = vmatpush1.bf16.msra.mxu0 %v1443
        %1699 = vmatprep.subr.bf16.mxu0 0
        %1700 = vmatpush1.bf16.msra.mxu0 %v1444
        %1701 = vmatprep.subr.bf16.mxu0 0
        %1702 = vmatpush1.bf16.msra.mxu0 %v1445
        %1703 = vmatprep.subr.bf16.mxu0 0
        %1704 = vmatpush1.bf16.msra.mxu0 %v1446
        %1705 = vmatprep.subr.bf16.mxu0 0
        %1706 = vmatpush1.bf16.msra.mxu0 %v1447
        %1707 = vmatprep.mubr.bf16.mxu0 %v1067
        %1708 = vmatmul.mubr.bf16.gmra.mrb[0].mxu0 %v1066
        %v1709 = vpop.f32.mrb[0].mxu0
        %v1710 = vadd.f32 %v1661, %v1709
        %v1711 = vpop.f32.mrb[0].mxu0
        %v1712 = vpop.f32.mrb[0].mxu0
        %v1713 = vadd.f32 %v1664, %v1712
        %v1714 = vpop.f32.mrb[0].mxu0
        %1715 = vmatprep.mubr.bf16.mxu0 %v1076
        %1716 = vmatmul.mubr.bf16.gmra.mrb[0].mxu0 %v1075
        %v1717 = vpop.f32.mrb[0].mxu0
        %v1718 = vadd.f32 %v1669, %v1717
        %v1719 = vpop.f32.mrb[0].mxu0
        %v1720 = vpop.f32.mrb[0].mxu0
        %v1721 = vadd.f32 %v1672, %v1720
        %v1722 = vpop.f32.mrb[0].mxu0
        %1723 = vdwg.mxu0
        %1724 = vmatprep.subr.bf16.mxu0 0
        %1725 = vmatpush1.bf16.msra.mxu0 %v1448
        %1726 = vmatprep.subr.bf16.mxu0 0
        %1727 = vmatpush1.bf16.msra.mxu0 %v1449
        %1728 = vmatprep.subr.bf16.mxu0 0
        %1729 = vmatpush1.bf16.msra.mxu0 %v1450
        %1730 = vmatprep.subr.bf16.mxu0 0
        %1731 = vmatpush1.bf16.msra.mxu0 %v1451
        %1732 = vmatprep.subr.bf16.mxu0 0
        %1733 = vmatpush1.bf16.msra.mxu0 %v1452
        %1734 = vmatprep.subr.bf16.mxu0 0
        %1735 = vmatpush1.bf16.msra.mxu0 %v1453
        %1736 = vmatprep.subr.bf16.mxu0 0
        %1737 = vmatpush1.bf16.msra.mxu0 %v1454
        %1738 = vmatprep.subr.bf16.mxu0 0
        %1739 = vmatpush1.bf16.msra.mxu0 %v1455
        %1740 = vmatprep.subr.bf16.mxu0 0
        %1741 = vmatpush1.bf16.msra.mxu0 0
        %1742 = vmatprep.subr.bf16.mxu0 0
        %1743 = vmatpush1.bf16.msra.mxu0 0
        %1744 = vmatprep.subr.bf16.mxu0 0
        %1745 = vmatpush1.bf16.msra.mxu0 0
        %1746 = vmatprep.subr.bf16.mxu0 0
        %1747 = vmatpush1.bf16.msra.mxu0 0
        %1748 = vmatprep.subr.bf16.mxu0 0
        %1749 = vmatpush1.bf16.msra.mxu0 0
        %1750 = vmatprep.subr.bf16.mxu0 0
        %1751 = vmatpush1.bf16.msra.mxu0 0
        %1752 = vmatprep.subr.bf16.mxu0 0
        %1753 = vmatpush1.bf16.msra.mxu0 0
        %1754 = vmatprep.subr.bf16.mxu0 0
        %1755 = vmatpush1.bf16.msra.mxu0 0
        %1756 = vmatprep.mubr.bf16.mxu0 0
        %1757 = vmatmul.mubr.bf16.gmra.mrb[0].mxu0 %v1068
        %v1758 = vpop.f32.mrb[0].mxu0
        %v1759 = vadd.f32 %v1710, %v1758
        %v1760 = vpop.f32.mrb[0].mxu0
        %v1761 = vpop.f32.mrb[0].mxu0
        %v1762 = vadd.f32 %v1713, %v1761
        %v1763 = vpop.f32.mrb[0].mxu0
        %1764 = vmatprep.mubr.bf16.mxu0 0
        %1765 = vmatmul.mubr.bf16.gmra.mrb[0].mxu0 %v1077
        %v1766 = vpop.f32.mrb[0].mxu0
        %v1767 = vadd.f32 %v1718, %v1766
        %v1768 = vpop.f32.mrb[0].mxu0
        %v1769 = vpop.f32.mrb[0].mxu0
        %v1770 = vadd.f32 %v1721, %v1769
        %v1771 = vpop.f32.mrb[0].mxu0
        %1772 = vdwg.mxu0
        %v1773 = vmax.f32 %v1759, 0.0
        %v1774 = vmax.f32 %v1762, 0.0
        %v1775 = vmax.f32 %v1767, 0.0
        %v1776 = vmax.f32 %v1770, 0.0
        %v1777 = vpack.c.bf16 %v1774, %v1773
        %v1778 = vpack.c.bf16 %v1776, %v1775
        %v1781 = vunpack.c.l.b16 %v1777
        %v1782 = vunpack.c.h.b16 %v1777
        %v1783 = vunpack.c.l.b16 %v1778
        %v1784 = vunpack.c.h.b16 %v1778
        %v1785 = vpack.c.b16 %v1781, %v1781
        %v1786 = vpack.c.b16 %v1782, %v1782
        %v1787 = vpack.c.b16 %v1783, %v1783
        %v1788 = vpack.c.b16 %v1784, %v1784
        %1793 = vst [vmem:[%s820] sm:$0xf] %v1785
        %1794 = vst [vmem:[%s820 + $0x4] sm:$0xf] %v1786
        %1795 = vst [vmem:[%s820 + $0x8] sm:$0xf] %v1787
        %1796 = vst [vmem:[%s820 + $0xc] sm:$0xf] %v1788
        %s1797 = sand.u32 %s114, 1
        %s1798 = sand.u32 %s114, 1
        %s1799 = smul.addr %s1798, 16
        %s1800 = scalar_lea.vmem [#allocation3], %s1799
        // Predicated region
        $region74: #{generator_forward.10} parent=68 // pred_check
          %p1801 = pneg %p124
        $region75: #{generator_forward.10} parent=68 // pred_check_branch
          %1803 = sbr.rel (%p1801) target = $region77
        $region76: #{generator_forward.10} parent=68 // pred_region
          %s1804 = smul.u32 4, %s18
          %s1805 = smul.addr %s1804, 2
          %s1806 = sadd.s32 %s19, %s1805
          %s1807 = smul.addr %s1806, 4
          %s1808 = scalar_lea.vmem %s3, %s1807
          // Predicated region
          $region78: #{generator_forward.10} parent=76 // pred_check
            _
          $region79: #{generator_forward.10} parent=76 // pred_check_branch
            %1810 = sbr.rel (0) target = $region81
          $region80: #{generator_forward.10} parent=76 // pred_region
            // Predicated region
            $region82: #{generator_forward.10} parent=80 // pred_check
              _
            $region83: #{generator_forward.10} parent=80 // pred_check_branch
              %1812 = sbr.rel target = $region85
            $region84: #{generator_forward.10} parent=80 // pred_region
              // Predicated region
              $region97: #{generator_forward.10} parent=84 // pred_check
                _
              $region98: #{generator_forward.10} parent=84 // pred_check_branch
                %1833 = sbr.rel (0) target = $region100
              $region99: #{generator_forward.10} parent=84 // pred_region
                loop: start=0, step=1, limit=1
                $region101: #{generator_forward.10} parent=99 // loop_pre_header
                  _
                $region102: #{generator_forward.10} parent=99 // loop_header
                  %s1835 = sphi 0, %s1839
                  %p1836 = scmp.ge.s32.totalorder %s1835, 1
                  %s1840 = sphi %s1800, %s1800
                  %s1841 = sphi %s1808, %s1808
                $region103: #{generator_forward.10} parent=99 // loop_header_branch
                  %1838 = sbr.rel (%p1836) target = $region107
                $region104: #{generator_forward.10} parent=99 // loop_body
                  _
                $region105: #{generator_forward.10} parent=99 // loop_footer
                  %s1839 = sadd.s32 1, %s1835
                $region106: #{generator_forward.10} parent=99 // loop_footer_branch
                  %1834 = sbr.rel target = $region102
                $region107: #{generator_forward.10} parent=99 // loop_exit
                  _
                loop: start=0, step=1, limit=1
                $region108: #{generator_forward.10} parent=99 // loop_pre_header
                  _
                $region109: #{generator_forward.10} parent=99 // loop_header
                  %s1844 = sphi 0, %s1848
                  %p1845 = scmp.ge.s32.totalorder %s1844, 1
                  %s1849 = sphi %s1800, %s1800
                  %s1850 = sphi %s1808, %s1808
                $region110: #{generator_forward.10} parent=99 // loop_header_branch
                  %1847 = sbr.rel (%p1845) target = $region114
                $region111: #{generator_forward.10} parent=99 // loop_body
                  %v1851 = vld [vmem:[%s1849] sm:$0xf]
                  %1852 = vst [vmem:[%s1850] sm:$0xf] %v1851
                  %v1853 = vld [vmem:[%s1849 + $0x4] sm:$0xf]
                  %1854 = vst [vmem:[%s1850 + $0x8] sm:$0xf] %v1853
                  %v1855 = vld [vmem:[%s1849 + $0x8] sm:$0xf]
                  %1856 = vst [vmem:[%s1850 + $0x10] sm:$0xf] %v1855
                  %v1857 = vld [vmem:[%s1849 + $0xc] sm:$0xf]
                  %1858 = vst [vmem:[%s1850 + $0x18] sm:$0xf] %v1857
                $region112: #{generator_forward.10} parent=99 // loop_footer
                  %s1848 = sadd.s32 1, %s1844
                $region113: #{generator_forward.10} parent=99 // loop_footer_branch
                  %1843 = sbr.rel target = $region109
                $region114: #{generator_forward.10} parent=99 // loop_exit
                  _
              $region100: #{generator_forward.10} parent=84 // pred_fallthru
                _
            $region85: #{generator_forward.10} parent=80 // pred_fallthru
              _
            // Predicated region
            $region86: #{generator_forward.10} parent=80 // pred_check
              _
            $region87: #{generator_forward.10} parent=80 // pred_check_branch
              %1814 = sbr.rel (0) target = $region89
            $region88: #{generator_forward.10} parent=80 // pred_region
              loop: start=0, step=1, limit=1
              $region90: #{generator_forward.10} parent=88 // loop_pre_header
                _
              $region91: #{generator_forward.10} parent=88 // loop_header
                %s1817 = sphi 0, %s1821
                %p1818 = scmp.ge.s32.totalorder %s1817, 1
                %s1822 = sphi %s1800, %s1800
                %s1823 = sphi %s1808, %s1808
              $region92: #{generator_forward.10} parent=88 // loop_header_branch
                %1820 = sbr.rel (%p1818) target = $region96
              $region93: #{generator_forward.10} parent=88 // loop_body
                %v1824 = vld [vmem:[%s1822] sm:$0xf]
                %1825 = vst [vmem:[%s1823] sm:$0xf] %v1824
                %v1826 = vld [vmem:[%s1822 + $0x4] sm:$0xf]
                %1827 = vst [vmem:[%s1823 + $0x8] sm:$0xf] %v1826
                %v1828 = vld [vmem:[%s1822 + $0x8] sm:$0xf]
                %1829 = vst [vmem:[%s1823 + $0x10] sm:$0xf] %v1828
                %v1830 = vld [vmem:[%s1822 + $0xc] sm:$0xf]
                %1831 = vst [vmem:[%s1823 + $0x18] sm:$0xf] %v1830
              $region94: #{generator_forward.10} parent=88 // loop_footer
                %s1821 = sadd.s32 1, %s1817
              $region95: #{generator_forward.10} parent=88 // loop_footer_branch
                %1816 = sbr.rel target = $region91
              $region96: #{generator_forward.10} parent=88 // loop_exit
                _
            $region89: #{generator_forward.10} parent=80 // pred_fallthru
              _
          $region81: #{generator_forward.10} parent=76 // pred_fallthru
            _
          %1859 = vnop
        $region77: #{generator_forward.10} parent=68 // pred_fallthru
          _
      $region69: #{generator_forward.10} parent=5 // pred_fallthru
        _
      %p1860 = scmp.le.s32.totalorder 2, %s9
      // Predicated region
      $region115: #{generator_forward.10} parent=5 // pred_check
        %p1861 = pneg %p1860
      $region116: #{generator_forward.10} parent=5 // pred_check_branch
        %1863 = sbr.rel (%p1861) target = $region118
      $region117: #{generator_forward.10} parent=5 // pred_region
        %s1864 = ssub.s32 %s9, 2
        // Predicated region
        $region119: #{generator_forward.10} parent=117 // pred_check
          %p1865 = pneg %p130
        $region120: #{generator_forward.10} parent=117 // pred_check_branch
          %1867 = sbr.rel (%p1865) target = $region122
        $region121: #{generator_forward.10} parent=117 // pred_region
          %s1868 = sand.u32 %s115, 1
          %s1869 = sand.u32 %s115, 1
          %s1870 = smul.addr %s1869, 16
          %s1871 = scalar_lea.vmem [#allocation3], %s1870
        $region122: #{generator_forward.10} parent=117 // pred_fallthru
          _
      $region118: #{generator_forward.10} parent=5 // pred_fallthru
        _
    $region6: #{generator_forward.10} parent=1 // loop_footer
      %s13 = sadd.s32 1, %s9
    $region7: #{generator_forward.10} parent=1 // loop_footer_branch
      %8 = sbr.rel target = $region3
    $region8: #{generator_forward.10} parent=1 // loop_exit
      _

// kernel: generator_forward.11
$region0: #{generator_forward.11}
  #allocation0 [shape = 'u32[]', space=smem, size = 0x4, offset = 0x4, fixed_abs, tag = 'smem constant byte address 0x4 - core index']
  #allocation1 [shape = 'u32[144,128]{1,0:T(1,128)}', space=vmem, size = 0x12000, scoped, tag = 'internal scratch']
  %s0 = inlined_call_operand.vmem [shape: bf16[128,576], index: 0, kind: input, shape index: {}]
  %s1 = inlined_call_operand.vmem [shape: bf16[576,128], index: 1, kind: input, shape index: {}]
  %s2 = inlined_call_operand.vmem [shape: f32[1,128], index: 2, kind: input, shape index: {}]
  %s3 = inlined_call_operand.vmem [shape: f32[128,128], index: 3, kind: output, shape index: {}]
  %s4 = sld [smem:[#allocation0]]
  $region22: #{generator_forward.11} parent=0
    _
  %s6 = ssub.s32 1, %s4
  %s7 = scalar_select 0, %s6, %s4
  // Predicated region
  $region2: #{generator_forward.11} parent=0 // pred_check
    _
  $region3: #{generator_forward.11} parent=0 // pred_check_branch
    %9 = sbr.rel (0) target = $region5
  $region4: #{generator_forward.11} parent=0 // pred_region
    _
  $region5: #{generator_forward.11} parent=0 // pred_fallthru
    _
  // Predicated region
  $region6: #{generator_forward.11} parent=0 // pred_check
    _
  $region7: #{generator_forward.11} parent=0 // pred_check_branch
    %11 = sbr.rel (0) target = $region9
  $region8: #{generator_forward.11} parent=0 // pred_region
    _
  $region9: #{generator_forward.11} parent=0 // pred_fallthru
    _
  // Predicated region
  $region10: #{generator_forward.11} parent=0 // pred_check
    _
  $region11: #{generator_forward.11} parent=0 // pred_check_branch
    %13 = sbr.rel (0) target = $region13
  $region12: #{generator_forward.11} parent=0 // pred_region
    _
  $region13: #{generator_forward.11} parent=0 // pred_fallthru
    _
  %v15 = vld [vmem:[%s0] sm:$0xff]
  %v16 = vld [vmem:[%s0 + $0x8] sm:$0xff]
  %v17 = vld [vmem:[%s0 + $0x10] sm:$0xf]
  %v18 = vld [vmem:[%s0 + $0x14] sm:$0xff]
  %v19 = vld [vmem:[%s0 + $0x1c] sm:$0xff]
  %v20 = vld [vmem:[%s0 + $0x24] sm:$0xf]
  %v21 = vld [vmem:[%s0 + $0x28] sm:$0xff]
  %v22 = vld [vmem:[%s0 + $0x30] sm:$0xff]
  %v23 = vld [vmem:[%s0 + $0x38] sm:$0xf]
  %v24 = vld [vmem:[%s0 + $0x3c] sm:$0xff]
  %v25 = vld [vmem:[%s0 + $0x44] sm:$0xff]
  %v26 = vld [vmem:[%s0 + $0x4c] sm:$0xf]
  %v27 = vld [vmem:[%s0 + $0x50] sm:$0xff]
  %v28 = vld [vmem:[%s0 + $0x58] sm:$0xff]
  %v29 = vld [vmem:[%s0 + $0x60] sm:$0xf]
  %v30 = vld [vmem:[%s0 + $0x64] sm:$0xff]
  %v31 = vld [vmem:[%s0 + $0x6c] sm:$0xff]
  %v32 = vld [vmem:[%s0 + $0x74] sm:$0xf]
  %v33 = vld [vmem:[%s0 + $0x78] sm:$0xff]
  %v34 = vld [vmem:[%s0 + $0x80] sm:$0xff]
  %v35 = vld [vmem:[%s0 + $0x88] sm:$0xf]
  %v36 = vld [vmem:[%s0 + $0x8c] sm:$0xff]
  %v37 = vld [vmem:[%s0 + $0x94] sm:$0xff]
  %v38 = vld [vmem:[%s0 + $0x9c] sm:$0xf]
  %v39 = vld [vmem:[%s0 + $0xa0] sm:$0xff]
  %v40 = vld [vmem:[%s0 + $0xa8] sm:$0xff]
  %v41 = vld [vmem:[%s0 + $0xb0] sm:$0xf]
  %v42 = vld [vmem:[%s0 + $0xb4] sm:$0xff]
  %v43 = vld [vmem:[%s0 + $0xbc] sm:$0xff]
  %v44 = vld [vmem:[%s0 + $0xc4] sm:$0xf]
  %v45 = vld [vmem:[%s0 + $0xc8] sm:$0xff]
  %v46 = vld [vmem:[%s0 + $0xd0] sm:$0xff]
  %v47 = vld [vmem:[%s0 + $0xd8] sm:$0xf]
  %v48 = vld [vmem:[%s0 + $0xdc] sm:$0xff]
  %v49 = vld [vmem:[%s0 + $0xe4] sm:$0xff]
  %v50 = vld [vmem:[%s0 + $0xec] sm:$0xf]
  %v51 = vld [vmem:[%s0 + $0xf0] sm:$0xff]
  %v52 = vld [vmem:[%s0 + $0xf8] sm:$0xff]
  %v53 = vld [vmem:[%s0 + $0x100] sm:$0xf]
  %v54 = vld [vmem:[%s0 + $0x104] sm:$0xff]
  %v55 = vld [vmem:[%s0 + $0x10c] sm:$0xff]
  %v56 = vld [vmem:[%s0 + $0x114] sm:$0xf]
  %v57 = vld [vmem:[%s0 + $0x118] sm:$0xff]
  %v58 = vld [vmem:[%s0 + $0x120] sm:$0xff]
  %v59 = vld [vmem:[%s0 + $0x128] sm:$0xf]
  %v60 = vld [vmem:[%s0 + $0x12c] sm:$0xff]
  %v61 = vld [vmem:[%s0 + $0x134] sm:$0xff]
  %v62 = vld [vmem:[%s0 + $0x13c] sm:$0xf]
  %v63 = vld [vmem:[%s1] sm:$0xf]
  %v64 = vld [vmem:[%s1 + $0x4] sm:$0xf]
  %v65 = vld [vmem:[%s1 + $0x8] sm:$0xf]
  %v66 = vld [vmem:[%s1 + $0xc] sm:$0xf]
  %v67 = vld [vmem:[%s1 + $0x10] sm:$0xf]
  %v68 = vld [vmem:[%s1 + $0x14] sm:$0xf]
  %v69 = vld [vmem:[%s1 + $0x18] sm:$0xf]
  %v70 = vld [vmem:[%s1 + $0x1c] sm:$0xf]
  %v71 = vld [vmem:[%s1 + $0x20] sm:$0xf]
  %v72 = vld [vmem:[%s1 + $0x24] sm:$0xf]
  %v73 = vld [vmem:[%s1 + $0x28] sm:$0xf]
  %v74 = vld [vmem:[%s1 + $0x2c] sm:$0xf]
  %v75 = vld [vmem:[%s1 + $0x30] sm:$0xf]
  %v76 = vld [vmem:[%s1 + $0x34] sm:$0xf]
  %v77 = vld [vmem:[%s1 + $0x38] sm:$0xf]
  %v78 = vld [vmem:[%s1 + $0x3c] sm:$0xf]
  %v79 = vld [vmem:[%s1 + $0x40] sm:$0xf]
  %v80 = vld [vmem:[%s1 + $0x44] sm:$0xf]
  %v81 = vld [vmem:[%s1 + $0x48] sm:$0xf]
  %v82 = vld [vmem:[%s1 + $0x4c] sm:$0xf]
  %v83 = vld [vmem:[%s1 + $0x50] sm:$0xf]
  %v84 = vld [vmem:[%s1 + $0x54] sm:$0xf]
  %v85 = vld [vmem:[%s1 + $0x58] sm:$0xf]
  %v86 = vld [vmem:[%s1 + $0x5c] sm:$0xf]
  %v87 = vld [vmem:[%s1 + $0x60] sm:$0xf]
  %v88 = vld [vmem:[%s1 + $0x64] sm:$0xf]
  %v89 = vld [vmem:[%s1 + $0x68] sm:$0xf]
  %v90 = vld [vmem:[%s1 + $0x6c] sm:$0xf]
  %v91 = vld [vmem:[%s1 + $0x70] sm:$0xf]
  %v92 = vld [vmem:[%s1 + $0x74] sm:$0xf]
  %v93 = vld [vmem:[%s1 + $0x78] sm:$0xf]
  %v94 = vld [vmem:[%s1 + $0x7c] sm:$0xf]
  %v95 = vld [vmem:[%s1 + $0x80] sm:$0xf]
  %v96 = vld [vmem:[%s1 + $0x84] sm:$0xf]
  %v97 = vld [vmem:[%s1 + $0x88] sm:$0xf]
  %v98 = vld [vmem:[%s1 + $0x8c] sm:$0xf]
  %v99 = vld [vmem:[%s1 + $0x90] sm:$0xf]
  %v100 = vld [vmem:[%s1 + $0x94] sm:$0xf]
  %v101 = vld [vmem:[%s1 + $0x98] sm:$0xf]
  %v102 = vld [vmem:[%s1 + $0x9c] sm:$0xf]
  %v103 = vld [vmem:[%s1 + $0xa0] sm:$0xf]
  %v104 = vld [vmem:[%s1 + $0xa4] sm:$0xf]
  %v105 = vld [vmem:[%s1 + $0xa8] sm:$0xf]
  %v106 = vld [vmem:[%s1 + $0xac] sm:$0xf]
  %v107 = vld [vmem:[%s1 + $0xb0] sm:$0xf]
  %v108 = vld [vmem:[%s1 + $0xb4] sm:$0xf]
  %v109 = vld [vmem:[%s1 + $0xb8] sm:$0xf]
  %v110 = vld [vmem:[%s1 + $0xbc] sm:$0xf]
  %v111 = vld [vmem:[%s1 + $0xc0] sm:$0xf]
  %v112 = vld [vmem:[%s1 + $0xc4] sm:$0xf]
  %v113 = vld [vmem:[%s1 + $0xc8] sm:$0xf]
  %v114 = vld [vmem:[%s1 + $0xcc] sm:$0xf]
  %v115 = vld [vmem:[%s1 + $0xd0] sm:$0xf]
  %v116 = vld [vmem:[%s1 + $0xd4] sm:$0xf]
  %v117 = vld [vmem:[%s1 + $0xd8] sm:$0xf]
  %v118 = vld [vmem:[%s1 + $0xdc] sm:$0xf]
  %v119 = vld [vmem:[%s1 + $0xe0] sm:$0xf]
  %v120 = vld [vmem:[%s1 + $0xe4] sm:$0xf]
  %v121 = vld [vmem:[%s1 + $0xe8] sm:$0xf]
  %v122 = vld [vmem:[%s1 + $0xec] sm:$0xf]
  %v123 = vld [vmem:[%s1 + $0xf0] sm:$0xf]
  %v124 = vld [vmem:[%s1 + $0xf4] sm:$0xf]
  %v125 = vld [vmem:[%s1 + $0xf8] sm:$0xf]
  %v126 = vld [vmem:[%s1 + $0xfc] sm:$0xf]
  %v127 = vld [vmem:[%s1 + $0x100] sm:$0xf]
  %v128 = vld [vmem:[%s1 + $0x104] sm:$0xf]
  %v129 = vld [vmem:[%s1 + $0x108] sm:$0xf]
  %v130 = vld [vmem:[%s1 + $0x10c] sm:$0xf]
  %v131 = vld [vmem:[%s1 + $0x110] sm:$0xf]
  %v132 = vld [vmem:[%s1 + $0x114] sm:$0xf]
  %v133 = vld [vmem:[%s1 + $0x118] sm:$0xf]
  %v134 = vld [vmem:[%s1 + $0x11c] sm:$0xf]
  %v135 = vld [vmem:[%s2] sm:$0x1]
  %v137 = vlaneseq
  %v138 = vshrl.u32 %v137, 7
  %v139 = vsub.s32 0, %v138
  %v140 = vrot.slane %v135, %v139
  %v190 = vunpack.c.l.b16 %v15
  %v191 = vunpack.c.h.b16 %v15
  %v192 = vunpack.c.l.b16 %v16
  %v193 = vunpack.c.h.b16 %v16
  %v194 = vunpack.c.l.b16 %v17
  %v195 = vunpack.c.l.b16 %v18
  %v196 = vunpack.c.h.b16 %v18
  %v197 = vunpack.c.l.b16 %v19
  %v198 = vunpack.c.h.b16 %v19
  %v199 = vunpack.c.l.b16 %v20
  %v200 = vunpack.c.l.b16 %v21
  %v201 = vunpack.c.h.b16 %v21
  %v202 = vunpack.c.l.b16 %v22
  %v203 = vunpack.c.h.b16 %v22
  %v204 = vunpack.c.l.b16 %v23
  %v205 = vunpack.c.l.b16 %v24
  %v206 = vunpack.c.h.b16 %v24
  %v207 = vunpack.c.l.b16 %v25
  %v208 = vunpack.c.h.b16 %v25
  %v209 = vunpack.c.l.b16 %v26
  %v210 = vunpack.c.l.b16 %v27
  %v211 = vunpack.c.h.b16 %v27
  %v212 = vunpack.c.l.b16 %v28
  %v213 = vunpack.c.h.b16 %v28
  %v214 = vunpack.c.l.b16 %v29
  %v215 = vunpack.c.l.b16 %v30
  %v216 = vunpack.c.h.b16 %v30
  %v217 = vunpack.c.l.b16 %v31
  %v218 = vunpack.c.h.b16 %v31
  %v219 = vunpack.c.l.b16 %v32
  %v220 = vunpack.c.l.b16 %v33
  %v221 = vunpack.c.h.b16 %v33
  %v222 = vunpack.c.l.b16 %v34
  %v223 = vunpack.c.h.b16 %v34
  %v224 = vunpack.c.l.b16 %v35
  %v225 = vunpack.c.l.b16 %v36
  %v226 = vunpack.c.h.b16 %v36
  %v227 = vunpack.c.l.b16 %v37
  %v228 = vunpack.c.h.b16 %v37
  %v229 = vunpack.c.l.b16 %v38
  %v230 = vunpack.c.l.b16 %v39
  %v231 = vunpack.c.h.b16 %v39
  %v232 = vunpack.c.l.b16 %v40
  %v233 = vunpack.c.h.b16 %v40
  %v234 = vunpack.c.l.b16 %v41
  %v235 = vunpack.c.l.b16 %v42
  %v236 = vunpack.c.h.b16 %v42
  %v237 = vunpack.c.l.b16 %v43
  %v238 = vunpack.c.h.b16 %v43
  %v239 = vunpack.c.l.b16 %v44
  %v240 = vunpack.c.l.b16 %v45
  %v241 = vunpack.c.h.b16 %v45
  %v242 = vunpack.c.l.b16 %v46
  %v243 = vunpack.c.h.b16 %v46
  %v244 = vunpack.c.l.b16 %v47
  %v245 = vunpack.c.l.b16 %v48
  %v246 = vunpack.c.h.b16 %v48
  %v247 = vunpack.c.l.b16 %v49
  %v248 = vunpack.c.h.b16 %v49
  %v249 = vunpack.c.l.b16 %v50
  %v250 = vunpack.c.l.b16 %v51
  %v251 = vunpack.c.h.b16 %v51
  %v252 = vunpack.c.l.b16 %v52
  %v253 = vunpack.c.h.b16 %v52
  %v254 = vunpack.c.l.b16 %v53
  %v255 = vunpack.c.l.b16 %v54
  %v256 = vunpack.c.h.b16 %v54
  %v257 = vunpack.c.l.b16 %v55
  %v258 = vunpack.c.h.b16 %v55
  %v259 = vunpack.c.l.b16 %v56
  %v260 = vunpack.c.l.b16 %v57
  %v261 = vunpack.c.h.b16 %v57
  %v262 = vunpack.c.l.b16 %v58
  %v263 = vunpack.c.h.b16 %v58
  %v264 = vunpack.c.l.b16 %v59
  %v265 = vunpack.c.l.b16 %v60
  %v266 = vunpack.c.h.b16 %v60
  %v267 = vunpack.c.l.b16 %v61
  %v268 = vunpack.c.h.b16 %v61
  %v269 = vunpack.c.l.b16 %v62
  %v270 = vpack.c.b16 %v195, %v190
  %v271 = vpack.c.b16 %v196, %v191
  %v272 = vpack.c.b16 %v197, %v192
  %v273 = vpack.c.b16 %v198, %v193
  %v274 = vpack.c.b16 %v199, %v194
  %v275 = vpack.c.b16 %v205, %v200
  %v276 = vpack.c.b16 %v206, %v201
  %v277 = vpack.c.b16 %v207, %v202
  %v278 = vpack.c.b16 %v208, %v203
  %v279 = vpack.c.b16 %v209, %v204
  %v280 = vpack.c.b16 %v215, %v210
  %v281 = vpack.c.b16 %v216, %v211
  %v282 = vpack.c.b16 %v217, %v212
  %v283 = vpack.c.b16 %v218, %v213
  %v284 = vpack.c.b16 %v219, %v214
  %v285 = vpack.c.b16 %v225, %v220
  %v286 = vpack.c.b16 %v226, %v221
  %v287 = vpack.c.b16 %v227, %v222
  %v288 = vpack.c.b16 %v228, %v223
  %v289 = vpack.c.b16 %v229, %v224
  %v290 = vpack.c.b16 %v235, %v230
  %v291 = vpack.c.b16 %v236, %v231
  %v292 = vpack.c.b16 %v237, %v232
  %v293 = vpack.c.b16 %v238, %v233
  %v294 = vpack.c.b16 %v239, %v234
  %v295 = vpack.c.b16 %v245, %v240
  %v296 = vpack.c.b16 %v246, %v241
  %v297 = vpack.c.b16 %v247, %v242
  %v298 = vpack.c.b16 %v248, %v243
  %v299 = vpack.c.b16 %v249, %v244
  %v300 = vpack.c.b16 %v255, %v250
  %v301 = vpack.c.b16 %v256, %v251
  %v302 = vpack.c.b16 %v257, %v252
  %v303 = vpack.c.b16 %v258, %v253
  %v304 = vpack.c.b16 %v259, %v254
  %v305 = vpack.c.b16 %v265, %v260
  %v306 = vpack.c.b16 %v266, %v261
  %v307 = vpack.c.b16 %v267, %v262
  %v308 = vpack.c.b16 %v268, %v263
  %v309 = vpack.c.b16 %v269, %v264
  %v414 = vunpack.c.l.b16 %v63
  %v415 = vunpack.c.l.b16 %v64
  %v416 = vunpack.c.l.b16 %v65
  %v417 = vunpack.c.l.b16 %v66
  %v418 = vunpack.c.l.b16 %v67
  %v419 = vunpack.c.l.b16 %v68
  %v420 = vunpack.c.l.b16 %v69
  %v421 = vunpack.c.l.b16 %v70
  %v422 = vunpack.c.l.b16 %v71
  %v423 = vunpack.c.l.b16 %v72
  %v424 = vunpack.c.l.b16 %v73
  %v425 = vunpack.c.l.b16 %v74
  %v426 = vunpack.c.l.b16 %v75
  %v427 = vunpack.c.l.b16 %v76
  %v428 = vunpack.c.l.b16 %v77
  %v429 = vunpack.c.l.b16 %v78
  %v430 = vunpack.c.l.b16 %v79
  %v431 = vunpack.c.l.b16 %v80
  %v432 = vunpack.c.l.b16 %v81
  %v433 = vunpack.c.l.b16 %v82
  %v434 = vunpack.c.l.b16 %v83
  %v435 = vunpack.c.l.b16 %v84
  %v436 = vunpack.c.l.b16 %v85
  %v437 = vunpack.c.l.b16 %v86
  %v438 = vunpack.c.l.b16 %v87
  %v439 = vunpack.c.l.b16 %v88
  %v440 = vunpack.c.l.b16 %v89
  %v441 = vunpack.c.l.b16 %v90
  %v442 = vunpack.c.l.b16 %v91
  %v443 = vunpack.c.l.b16 %v92
  %v444 = vunpack.c.l.b16 %v93
  %v445 = vunpack.c.l.b16 %v94
  %v446 = vunpack.c.l.b16 %v95
  %v447 = vunpack.c.l.b16 %v96
  %v448 = vunpack.c.l.b16 %v97
  %v449 = vunpack.c.l.b16 %v98
  %v450 = vunpack.c.l.b16 %v99
  %v451 = vunpack.c.l.b16 %v100
  %v452 = vunpack.c.l.b16 %v101
  %v453 = vunpack.c.l.b16 %v102
  %v454 = vunpack.c.l.b16 %v103
  %v455 = vunpack.c.l.b16 %v104
  %v456 = vunpack.c.l.b16 %v105
  %v457 = vunpack.c.l.b16 %v106
  %v458 = vunpack.c.l.b16 %v107
  %v459 = vunpack.c.l.b16 %v108
  %v460 = vunpack.c.l.b16 %v109
  %v461 = vunpack.c.l.b16 %v110
  %v462 = vunpack.c.l.b16 %v111
  %v463 = vunpack.c.l.b16 %v112
  %v464 = vunpack.c.l.b16 %v113
  %v465 = vunpack.c.l.b16 %v114
  %v466 = vunpack.c.l.b16 %v115
  %v467 = vunpack.c.l.b16 %v116
  %v468 = vunpack.c.l.b16 %v117
  %v469 = vunpack.c.l.b16 %v118
  %v470 = vunpack.c.l.b16 %v119
  %v471 = vunpack.c.l.b16 %v120
  %v472 = vunpack.c.l.b16 %v121
  %v473 = vunpack.c.l.b16 %v122
  %v474 = vunpack.c.l.b16 %v123
  %v475 = vunpack.c.l.b16 %v124
  %v476 = vunpack.c.l.b16 %v125
  %v477 = vunpack.c.l.b16 %v126
  %v478 = vunpack.c.l.b16 %v127
  %v479 = vunpack.c.l.b16 %v128
  %v480 = vunpack.c.l.b16 %v129
  %v481 = vunpack.c.l.b16 %v130
  %v482 = vunpack.c.l.b16 %v131
  %v483 = vunpack.c.l.b16 %v132
  %v484 = vunpack.c.l.b16 %v133
  %v485 = vunpack.c.l.b16 %v134
  %v486 = vpack.c.b16 %v415, %v414
  %v487 = vpack.c.b16 %v417, %v416
  %v488 = vpack.c.b16 %v419, %v418
  %v489 = vpack.c.b16 %v421, %v420
  %v490 = vpack.c.b16 %v423, %v422
  %v491 = vpack.c.b16 %v425, %v424
  %v492 = vpack.c.b16 %v427, %v426
  %v493 = vpack.c.b16 %v429, %v428
  %v494 = vpack.c.b16 %v431, %v430
  %v495 = vpack.c.b16 %v433, %v432
  %v496 = vpack.c.b16 %v435, %v434
  %v497 = vpack.c.b16 %v437, %v436
  %v498 = vpack.c.b16 %v439, %v438
  %v499 = vpack.c.b16 %v441, %v440
  %v500 = vpack.c.b16 %v443, %v442
  %v501 = vpack.c.b16 %v445, %v444
  %v502 = vpack.c.b16 %v447, %v446
  %v503 = vpack.c.b16 %v449, %v448
  %v504 = vpack.c.b16 %v451, %v450
  %v505 = vpack.c.b16 %v453, %v452
  %v506 = vpack.c.b16 %v455, %v454
  %v507 = vpack.c.b16 %v457, %v456
  %v508 = vpack.c.b16 %v459, %v458
  %v509 = vpack.c.b16 %v461, %v460
  %v510 = vpack.c.b16 %v463, %v462
  %v511 = vpack.c.b16 %v465, %v464
  %v512 = vpack.c.b16 %v467, %v466
  %v513 = vpack.c.b16 %v469, %v468
  %v514 = vpack.c.b16 %v471, %v470
  %v515 = vpack.c.b16 %v473, %v472
  %v516 = vpack.c.b16 %v475, %v474
  %v517 = vpack.c.b16 %v477, %v476
  %v518 = vpack.c.b16 %v479, %v478
  %v519 = vpack.c.b16 %v481, %v480
  %v520 = vpack.c.b16 %v483, %v482
  %v521 = vpack.c.b16 %v485, %v484
  %vm558 = vcmask 523264
  %v560 = vsel %vm558, %v274, 0
  %v563 = vsel %vm558, %v279, 0
  %v566 = vsel %vm558, %v284, 0
  %v569 = vsel %vm558, %v289, 0
  %v572 = vsel %vm558, %v294, 0
  %v575 = vsel %vm558, %v299, 0
  %v578 = vsel %vm558, %v304, 0
  %v581 = vsel %vm558, %v309, 0
  %583 = vmatprep.subr.bf16.mxu0 0
  %584 = vmatpush1.bf16.msra.mxu0 %v486
  %585 = vmatprep.subr.bf16.mxu0 0
  %586 = vmatpush1.bf16.msra.mxu0 %v487
  %587 = vmatprep.subr.bf16.mxu0 0
  %588 = vmatpush1.bf16.msra.mxu0 %v488
  %589 = vmatprep.subr.bf16.mxu0 0
  %590 = vmatpush1.bf16.msra.mxu0 %v489
  %591 = vmatprep.subr.bf16.mxu0 0
  %592 = vmatpush1.bf16.msra.mxu0 %v490
  %593 = vmatprep.subr.bf16.mxu0 0
  %594 = vmatpush1.bf16.msra.mxu0 %v491
  %595 = vmatprep.subr.bf16.mxu0 0
  %596 = vmatpush1.bf16.msra.mxu0 %v492
  %597 = vmatprep.subr.bf16.mxu0 0
  %598 = vmatpush1.bf16.msra.mxu0 %v493
  %599 = vmatprep.subr.bf16.mxu0 0
  %600 = vmatpush1.bf16.msra.mxu0 %v494
  %601 = vmatprep.subr.bf16.mxu0 0
  %602 = vmatpush1.bf16.msra.mxu0 %v495
  %603 = vmatprep.subr.bf16.mxu0 0
  %604 = vmatpush1.bf16.msra.mxu0 %v496
  %605 = vmatprep.subr.bf16.mxu0 0
  %606 = vmatpush1.bf16.msra.mxu0 %v497
  %607 = vmatprep.subr.bf16.mxu0 0
  %608 = vmatpush1.bf16.msra.mxu0 %v498
  %609 = vmatprep.subr.bf16.mxu0 0
  %610 = vmatpush1.bf16.msra.mxu0 %v499
  %611 = vmatprep.subr.bf16.mxu0 0
  %612 = vmatpush1.bf16.msra.mxu0 %v500
  %613 = vmatprep.subr.bf16.mxu0 0
  %614 = vmatpush1.bf16.msra.mxu0 %v501
  %615 = vmatprep.mubr.bf16.mxu0 %v271
  %616 = vmatmul.mubr.bf16.gmra.mrb[0].mxu0 %v270
  %v617 = vpop.f32.mrb[0].mxu0
  %v618 = vadd.f32 %v140, %v617
  %v619 = vpop.f32.mrb[0].mxu0
  %v620 = vpop.f32.mrb[0].mxu0
  %v621 = vadd.f32 %v140, %v620
  %v622 = vpop.f32.mrb[0].mxu0
  %623 = vmatprep.mubr.bf16.mxu0 %v276
  %624 = vmatmul.mubr.bf16.gmra.mrb[0].mxu0 %v275
  %v625 = vpop.f32.mrb[0].mxu0
  %v626 = vadd.f32 %v140, %v625
  %v627 = vpop.f32.mrb[0].mxu0
  %v628 = vpop.f32.mrb[0].mxu0
  %v629 = vadd.f32 %v140, %v628
  %v630 = vpop.f32.mrb[0].mxu0
  %631 = vmatprep.mubr.bf16.mxu0 %v281
  %632 = vmatmul.mubr.bf16.gmra.mrb[0].mxu0 %v280
  %v633 = vpop.f32.mrb[0].mxu0
  %v634 = vadd.f32 %v140, %v633
  %v635 = vpop.f32.mrb[0].mxu0
  %v636 = vpop.f32.mrb[0].mxu0
  %v637 = vadd.f32 %v140, %v636
  %v638 = vpop.f32.mrb[0].mxu0
  %639 = vmatprep.mubr.bf16.mxu0 %v286
  %640 = vmatmul.mubr.bf16.gmra.mrb[0].mxu0 %v285
  %v641 = vpop.f32.mrb[0].mxu0
  %v642 = vadd.f32 %v140, %v641
  %v643 = vpop.f32.mrb[0].mxu0
  %v644 = vpop.f32.mrb[0].mxu0
  %v645 = vadd.f32 %v140, %v644
  %v646 = vpop.f32.mrb[0].mxu0
  %647 = vmatprep.mubr.bf16.mxu0 %v291
  %648 = vmatmul.mubr.bf16.gmra.mrb[0].mxu0 %v290
  %v649 = vpop.f32.mrb[0].mxu0
  %v650 = vadd.f32 %v140, %v649
  %v651 = vpop.f32.mrb[0].mxu0
  %v652 = vpop.f32.mrb[0].mxu0
  %v653 = vadd.f32 %v140, %v652
  %v654 = vpop.f32.mrb[0].mxu0
  %655 = vmatprep.mubr.bf16.mxu0 %v296
  %656 = vmatmul.mubr.bf16.gmra.mrb[0].mxu0 %v295
  %v657 = vpop.f32.mrb[0].mxu0
  %v658 = vadd.f32 %v140, %v657
  %v659 = vpop.f32.mrb[0].mxu0
  %v660 = vpop.f32.mrb[0].mxu0
  %v661 = vadd.f32 %v140, %v660
  %v662 = vpop.f32.mrb[0].mxu0
  %663 = vmatprep.mubr.bf16.mxu0 %v301
  %664 = vmatmul.mubr.bf16.gmra.mrb[0].mxu0 %v300
  %v665 = vpop.f32.mrb[0].mxu0
  %v666 = vadd.f32 %v140, %v665
  %v667 = vpop.f32.mrb[0].mxu0
  %v668 = vpop.f32.mrb[0].mxu0
  %v669 = vadd.f32 %v140, %v668
  %v670 = vpop.f32.mrb[0].mxu0
  %671 = vmatprep.mubr.bf16.mxu0 %v306
  %672 = vmatmul.mubr.bf16.gmra.mrb[0].mxu0 %v305
  %v673 = vpop.f32.mrb[0].mxu0
  %v674 = vadd.f32 %v140, %v673
  %v675 = vpop.f32.mrb[0].mxu0
  %v676 = vpop.f32.mrb[0].mxu0
  %v677 = vadd.f32 %v140, %v676
  %v678 = vpop.f32.mrb[0].mxu0
  %679 = vdwg.mxu0
  %680 = vmatprep.subr.bf16.mxu0 0
  %681 = vmatpush1.bf16.msra.mxu0 %v502
  %682 = vmatprep.subr.bf16.mxu0 0
  %683 = vmatpush1.bf16.msra.mxu0 %v503
  %684 = vmatprep.subr.bf16.mxu0 0
  %685 = vmatpush1.bf16.msra.mxu0 %v504
  %686 = vmatprep.subr.bf16.mxu0 0
  %687 = vmatpush1.bf16.msra.mxu0 %v505
  %688 = vmatprep.subr.bf16.mxu0 0
  %689 = vmatpush1.bf16.msra.mxu0 %v506
  %690 = vmatprep.subr.bf16.mxu0 0
  %691 = vmatpush1.bf16.msra.mxu0 %v507
  %692 = vmatprep.subr.bf16.mxu0 0
  %693 = vmatpush1.bf16.msra.mxu0 %v508
  %694 = vmatprep.subr.bf16.mxu0 0
  %695 = vmatpush1.bf16.msra.mxu0 %v509
  %696 = vmatprep.subr.bf16.mxu0 0
  %697 = vmatpush1.bf16.msra.mxu0 %v510
  %698 = vmatprep.subr.bf16.mxu0 0
  %699 = vmatpush1.bf16.msra.mxu0 %v511
  %700 = vmatprep.subr.bf16.mxu0 0
  %701 = vmatpush1.bf16.msra.mxu0 %v512
  %702 = vmatprep.subr.bf16.mxu0 0
  %703 = vmatpush1.bf16.msra.mxu0 %v513
  %704 = vmatprep.subr.bf16.mxu0 0
  %705 = vmatpush1.bf16.msra.mxu0 %v514
  %706 = vmatprep.subr.bf16.mxu0 0
  %707 = vmatpush1.bf16.msra.mxu0 %v515
  %708 = vmatprep.subr.bf16.mxu0 0
  %709 = vmatpush1.bf16.msra.mxu0 %v516
  %710 = vmatprep.subr.bf16.mxu0 0
  %711 = vmatpush1.bf16.msra.mxu0 %v517
  %712 = vmatprep.mubr.bf16.mxu0 %v273
  %713 = vmatmul.mubr.bf16.gmra.mrb[0].mxu0 %v272
  %v714 = vpop.f32.mrb[0].mxu0
  %v715 = vadd.f32 %v618, %v714
  %v716 = vpop.f32.mrb[0].mxu0
  %v717 = vpop.f32.mrb[0].mxu0
  %v718 = vadd.f32 %v621, %v717
  %v719 = vpop.f32.mrb[0].mxu0
  %720 = vmatprep.mubr.bf16.mxu0 %v278
  %721 = vmatmul.mubr.bf16.gmra.mrb[0].mxu0 %v277
  %v722 = vpop.f32.mrb[0].mxu0
  %v723 = vadd.f32 %v626, %v722
  %v724 = vpop.f32.mrb[0].mxu0
  %v725 = vpop.f32.mrb[0].mxu0
  %v726 = vadd.f32 %v629, %v725
  %v727 = vpop.f32.mrb[0].mxu0
  %728 = vmatprep.mubr.bf16.mxu0 %v283
  %729 = vmatmul.mubr.bf16.gmra.mrb[0].mxu0 %v282
  %v730 = vpop.f32.mrb[0].mxu0
  %v731 = vadd.f32 %v634, %v730
  %v732 = vpop.f32.mrb[0].mxu0
  %v733 = vpop.f32.mrb[0].mxu0
  %v734 = vadd.f32 %v637, %v733
  %v735 = vpop.f32.mrb[0].mxu0
  %736 = vmatprep.mubr.bf16.mxu0 %v288
  %737 = vmatmul.mubr.bf16.gmra.mrb[0].mxu0 %v287
  %v738 = vpop.f32.mrb[0].mxu0
  %v739 = vadd.f32 %v642, %v738
  %v740 = vpop.f32.mrb[0].mxu0
  %v741 = vpop.f32.mrb[0].mxu0
  %v742 = vadd.f32 %v645, %v741
  %v743 = vpop.f32.mrb[0].mxu0
  %744 = vmatprep.mubr.bf16.mxu0 %v293
  %745 = vmatmul.mubr.bf16.gmra.mrb[0].mxu0 %v292
  %v746 = vpop.f32.mrb[0].mxu0
  %v747 = vadd.f32 %v650, %v746
  %v748 = vpop.f32.mrb[0].mxu0
  %v749 = vpop.f32.mrb[0].mxu0
  %v750 = vadd.f32 %v653, %v749
  %v751 = vpop.f32.mrb[0].mxu0
  %752 = vmatprep.mubr.bf16.mxu0 %v298
  %753 = vmatmul.mubr.bf16.gmra.mrb[0].mxu0 %v297
  %v754 = vpop.f32.mrb[0].mxu0
  %v755 = vadd.f32 %v658, %v754
  %v756 = vpop.f32.mrb[0].mxu0
  %v757 = vpop.f32.mrb[0].mxu0
  %v758 = vadd.f32 %v661, %v757
  %v759 = vpop.f32.mrb[0].mxu0
  %760 = vmatprep.mubr.bf16.mxu0 %v303
  %761 = vmatmul.mubr.bf16.gmra.mrb[0].mxu0 %v302
  %v762 = vpop.f32.mrb[0].mxu0
  %v763 = vadd.f32 %v666, %v762
  %v764 = vpop.f32.mrb[0].mxu0
  %v765 = vpop.f32.mrb[0].mxu0
  %v766 = vadd.f32 %v669, %v765
  %v767 = vpop.f32.mrb[0].mxu0
  %768 = vmatprep.mubr.bf16.mxu0 %v308
  %769 = vmatmul.mubr.bf16.gmra.mrb[0].mxu0 %v307
  %v770 = vpop.f32.mrb[0].mxu0
  %v771 = vadd.f32 %v674, %v770
  %v772 = vpop.f32.mrb[0].mxu0
  %v773 = vpop.f32.mrb[0].mxu0
  %v774 = vadd.f32 %v677, %v773
  %v775 = vpop.f32.mrb[0].mxu0
  %776 = vdwg.mxu0
  %777 = vmatprep.subr.bf16.mxu0 0
  %778 = vmatpush1.bf16.msra.mxu0 %v518
  %779 = vmatprep.subr.bf16.mxu0 0
  %780 = vmatpush1.bf16.msra.mxu0 %v519
  %781 = vmatprep.subr.bf16.mxu0 0
  %782 = vmatpush1.bf16.msra.mxu0 %v520
  %783 = vmatprep.subr.bf16.mxu0 0
  %784 = vmatpush1.bf16.msra.mxu0 %v521
  %785 = vmatprep.subr.bf16.mxu0 0
  %786 = vmatpush1.bf16.msra.mxu0 0
  %787 = vmatprep.subr.bf16.mxu0 0
  %788 = vmatpush1.bf16.msra.mxu0 0
  %789 = vmatprep.subr.bf16.mxu0 0
  %790 = vmatpush1.bf16.msra.mxu0 0
  %791 = vmatprep.subr.bf16.mxu0 0
  %792 = vmatpush1.bf16.msra.mxu0 0
  %793 = vmatprep.subr.bf16.mxu0 0
  %794 = vmatpush1.bf16.msra.mxu0 0
  %795 = vmatprep.subr.bf16.mxu0 0
  %796 = vmatpush1.bf16.msra.mxu0 0
  %797 = vmatprep.subr.bf16.mxu0 0
  %798 = vmatpush1.bf16.msra.mxu0 0
  %799 = vmatprep.subr.bf16.mxu0 0
  %800 = vmatpush1.bf16.msra.mxu0 0
  %801 = vmatprep.subr.bf16.mxu0 0
  %802 = vmatpush1.bf16.msra.mxu0 0
  %803 = vmatprep.subr.bf16.mxu0 0
  %804 = vmatpush1.bf16.msra.mxu0 0
  %805 = vmatprep.subr.bf16.mxu0 0
  %806 = vmatpush1.bf16.msra.mxu0 0
  %807 = vmatprep.subr.bf16.mxu0 0
  %808 = vmatpush1.bf16.msra.mxu0 0
  %809 = vmatprep.mubr.bf16.mxu0 0
  %810 = vmatmul.mubr.bf16.gmra.mrb[0].mxu0 %v560
  %v811 = vpop.f32.mrb[0].mxu0
  %v812 = vadd.f32 %v715, %v811
  %v813 = vpop.f32.mrb[0].mxu0
  %v814 = vpop.f32.mrb[0].mxu0
  %v815 = vadd.f32 %v718, %v814
  %v816 = vpop.f32.mrb[0].mxu0
  %817 = vmatprep.mubr.bf16.mxu0 0
  %818 = vmatmul.mubr.bf16.gmra.mrb[0].mxu0 %v563
  %v819 = vpop.f32.mrb[0].mxu0
  %v820 = vadd.f32 %v723, %v819
  %v821 = vpop.f32.mrb[0].mxu0
  %v822 = vpop.f32.mrb[0].mxu0
  %v823 = vadd.f32 %v726, %v822
  %v824 = vpop.f32.mrb[0].mxu0
  %825 = vmatprep.mubr.bf16.mxu0 0
  %826 = vmatmul.mubr.bf16.gmra.mrb[0].mxu0 %v566
  %v827 = vpop.f32.mrb[0].mxu0
  %v828 = vadd.f32 %v731, %v827
  %v829 = vpop.f32.mrb[0].mxu0
  %v830 = vpop.f32.mrb[0].mxu0
  %v831 = vadd.f32 %v734, %v830
  %v832 = vpop.f32.mrb[0].mxu0
  %833 = vmatprep.mubr.bf16.mxu0 0
  %834 = vmatmul.mubr.bf16.gmra.mrb[0].mxu0 %v569
  %v835 = vpop.f32.mrb[0].mxu0
  %v836 = vadd.f32 %v739, %v835
  %v837 = vpop.f32.mrb[0].mxu0
  %v838 = vpop.f32.mrb[0].mxu0
  %v839 = vadd.f32 %v742, %v838
  %v840 = vpop.f32.mrb[0].mxu0
  %841 = vmatprep.mubr.bf16.mxu0 0
  %842 = vmatmul.mubr.bf16.gmra.mrb[0].mxu0 %v572
  %v843 = vpop.f32.mrb[0].mxu0
  %v844 = vadd.f32 %v747, %v843
  %v845 = vpop.f32.mrb[0].mxu0
  %v846 = vpop.f32.mrb[0].mxu0
  %v847 = vadd.f32 %v750, %v846
  %v848 = vpop.f32.mrb[0].mxu0
  %849 = vmatprep.mubr.bf16.mxu0 0
  %850 = vmatmul.mubr.bf16.gmra.mrb[0].mxu0 %v575
  %v851 = vpop.f32.mrb[0].mxu0
  %v852 = vadd.f32 %v755, %v851
  %v853 = vpop.f32.mrb[0].mxu0
  %v854 = vpop.f32.mrb[0].mxu0
  %v855 = vadd.f32 %v758, %v854
  %v856 = vpop.f32.mrb[0].mxu0
  %857 = vmatprep.mubr.bf16.mxu0 0
  %858 = vmatmul.mubr.bf16.gmra.mrb[0].mxu0 %v578
  %v859 = vpop.f32.mrb[0].mxu0
  %v860 = vadd.f32 %v763, %v859
  %v861 = vpop.f32.mrb[0].mxu0
  %v862 = vpop.f32.mrb[0].mxu0
  %v863 = vadd.f32 %v766, %v862
  %v864 = vpop.f32.mrb[0].mxu0
  %865 = vmatprep.mubr.bf16.mxu0 0
  %866 = vmatmul.mubr.bf16.gmra.mrb[0].mxu0 %v581
  %v867 = vpop.f32.mrb[0].mxu0
  %v868 = vadd.f32 %v771, %v867
  %v869 = vpop.f32.mrb[0].mxu0
  %v870 = vpop.f32.mrb[0].mxu0
  %v871 = vadd.f32 %v774, %v870
  %v872 = vpop.f32.mrb[0].mxu0
  %873 = vdwg.mxu0
  %v874 = vtanh.pop %v812
  %v875 = vtanh.pop %v815
  %v876 = vtanh.pop %v820
  %v877 = vtanh.pop %v823
  %v878 = vtanh.pop %v828
  %v879 = vtanh.pop %v831
  %v880 = vtanh.pop %v836
  %v881 = vtanh.pop %v839
  %v882 = vtanh.pop %v844
  %v883 = vtanh.pop %v847
  %v884 = vtanh.pop %v852
  %v885 = vtanh.pop %v855
  %v886 = vtanh.pop %v860
  %v887 = vtanh.pop %v863
  %v888 = vtanh.pop %v868
  %v889 = vtanh.pop %v871
  %890 = vst [vmem:[%s3] sm:$0xff] %v874
  %891 = vst [vmem:[%s3 + $0x8] sm:$0xff] %v875
  %892 = vst [vmem:[%s3 + $0x10] sm:$0xff] %v876
  %893 = vst [vmem:[%s3 + $0x18] sm:$0xff] %v877
  %894 = vst [vmem:[%s3 + $0x20] sm:$0xff] %v878
  %895 = vst [vmem:[%s3 + $0x28] sm:$0xff] %v879
  %896 = vst [vmem:[%s3 + $0x30] sm:$0xff] %v880
  %897 = vst [vmem:[%s3 + $0x38] sm:$0xff] %v881
  %898 = vst [vmem:[%s3 + $0x40] sm:$0xff] %v882
  %899 = vst [vmem:[%s3 + $0x48] sm:$0xff] %v883
  %900 = vst [vmem:[%s3 + $0x50] sm:$0xff] %v884
  %901 = vst [vmem:[%s3 + $0x58] sm:$0xff] %v885
  %902 = vst [vmem:[%s3 + $0x60] sm:$0xff] %v886
  %903 = vst [vmem:[%s3 + $0x68] sm:$0xff] %v887
  %904 = vst [vmem:[%s3 + $0x70] sm:$0xff] %v888
  %905 = vst [vmem:[%s3 + $0x78] sm:$0xff] %v889
  // Predicated region
  $region14: #{generator_forward.11} parent=0 // pred_check
    _
  $region15: #{generator_forward.11} parent=0 // pred_check_branch
    %907 = sbr.rel (0) target = $region17
  $region16: #{generator_forward.11} parent=0 // pred_region
    _
  $region17: #{generator_forward.11} parent=0 // pred_fallthru
    _
  // Predicated region
  $region18: #{generator_forward.11} parent=0 // pred_check
    _
  $region19: #{generator_forward.11} parent=0 // pred_check_branch
    %909 = sbr.rel (0) target = $region21
  $region20: #{generator_forward.11} parent=0 // pred_region
    _
  $region21: #{generator_forward.11} parent=0 // pred_fallthru
    _

</llo_original>
